<compile_context>
chip_gen: v7x
topology: tpu7x:2x2x1
jax: 0.10.0
libtpu: 0.0.40
codegen_flags: <defaults>
</compile_context>

<pallas_src>
import math
from functools import partial

import jax
import jax.numpy as jnp
from jax import lax
from jax.experimental import pallas as pl
from jax.experimental.pallas import tpu as pltpu


# ---------------------------------------------------------------------------
# Packed-parameter row / slot indices
# ---------------------------------------------------------------------------
_NUM_VEC_ROWS = 21
(_RP_LNG, _RP_LNB, _RP_BQ, _RP_BK, _RP_BV, _RP_BO,
 _SA_LNG, _SA_LNB, _SA_BQ, _SA_BK, _SA_BV, _SA_BO,
 _FF_LNG, _FF_LNB, _FF_B2,
 _RQ_BQ, _RQ_BK, _RQ_BV, _RQ_BO,
 _PF_B1, _PF_B2) = range(_NUM_VEC_ROWS)

(_RP_WQ, _RP_WK, _RP_WV, _RP_WO,
 _SA_WQ, _SA_WK, _SA_WV, _SA_WO,
 _RQ_WQ, _RQ_WK, _RQ_WV, _RQ_WO) = range(12)


def _layernorm(x, g, b, eps):
    mu = jnp.mean(x, axis=-1, keepdims=True)
    var = jnp.mean(jnp.square(x - mu), axis=-1, keepdims=True)
    return (x - mu) * lax.rsqrt(var + eps) * g + b


# ---------------------------------------------------------------------------
# Fused QueryTransformerBlock kernel (one grid step = NB batch*object elements)
# ---------------------------------------------------------------------------
def _fused_block_kernel(x_ref, pix_ref, qpe_ref, ppe_ref, mask_ref,
                        vec_ref, w_attn_ref, w_ff1_ref, b_ff1_ref, w_ff2_ref,
                        w_conv_ref, band_ref, x_out_ref, pix_out_ref,
                        *opt_refs,
                        nb, num_heads, head_dim, lq, plen,
                        conv_h, conv_w, ca_pad, eps, need_weights):
    f32, bf16 = jnp.float32, jnp.bfloat16
    D = num_heads * head_dim

    qw_ref = pw_ref = None
    if need_weights:
        qw_ref, pw_ref = opt_refs

    # Flatten the NB batch elements into the matmul M dimension.
    x = x_ref[...].astype(f32).reshape(nb * lq, D)
    qpe = qpe_ref[...].astype(f32).reshape(nb * lq, D)
    pix = pix_ref[...].astype(f32).reshape(nb * plen, D)
    ppe = ppe_ref[...].astype(f32).reshape(nb * plen, D)
    mask = mask_ref[...].astype(f32).reshape(nb * num_heads, lq, plen)
    vecs = vec_ref[...].astype(f32)                          # (21, D)

    def vrow(i):                                             # (1, D) f32
        return vecs[i:i + 1, :]

    def project(inp, w_idx, b_idx):
        # (M, D) f32 -> bf16 MXU matmul against packed bf16 weight, f32 accum.
        return (jnp.dot(inp.astype(bf16), w_attn_ref[w_idx],
                        preferred_element_type=f32) + vrow(b_idx))

    def split_heads(v_bf16, seq):
        # (nb*seq, D) bf16 -> (nb*H, seq, hd) bf16
        v3 = v_bf16.reshape(nb, seq, D)
        heads = [v3[:, :, h * head_dim:(h + 1) * head_dim]
                 for h in range(num_heads)]
        return jnp.stack(heads, axis=1).reshape(nb * num_heads, seq, head_dim)

    def attention(qp, kp, vp, sq, sk, wo_idx, bo_idx, add_mask):
        # qp: (nb*sq, D); kp/vp: (nb*sk, D).  1/sqrt(hd) already folded into wq.
        qh = split_heads(qp.astype(bf16), sq)
        kh = split_heads(kp.astype(bf16), sk)
        vh = split_heads(vp.astype(bf16), sk)
        logits = jnp.einsum('nqd,nkd->nqk', qh, kh,
                            preferred_element_type=f32)      # (nb*H, sq, sk) f32
        if add_mask is not None:
            logits = logits + add_mask
        m = jnp.max(logits, axis=-1, keepdims=True)
        e = jnp.exp(logits - m)
        s = jnp.sum(e, axis=-1, keepdims=True)
        probs = e * pl.reciprocal(s, approx=True)            # (nb*H, sq, sk) f32
        ctx = jnp.einsum('nqk,nkd->nqd', probs.astype(bf16), vh,
                         preferred_element_type=f32)         # (nb*H, sq, hd)
        # out-projection: accumulate per-head matmuls (no lane concat)
        ctx4 = ctx.reshape(nb, num_heads, sq, head_dim)
        wo = w_attn_ref[wo_idx]                              # (D, D) bf16
        out = None
        for h in range(num_heads):
            ch = ctx4[:, h].reshape(nb * sq, head_dim).astype(bf16)
            part = jnp.dot(ch, wo[h * head_dim:(h + 1) * head_dim, :],
                           preferred_element_type=f32)
            out = part if out is None else out + part
        return out + vrow(bo_idx), probs

    # ---- read_from_pixel: CrossAttention(norm=True, add_pe_to_qkv=[T,T,F]) + mask
    ln = _layernorm(x, vrow(_RP_LNG), vrow(_RP_LNB), eps)
    qp = project(ln + qpe, _RP_WQ, _RP_BQ)
    kp = project(pix + ppe, _RP_WK, _RP_BK)
    vp = project(pix, _RP_WV, _RP_BV)
    attn_o, probs = attention(qp, kp, vp, lq, plen, _RP_WO, _RP_BO, mask)
    x = ln + attn_o                                   # residual on post-norm x
    if need_weights:
        qw_ref[...] = probs.reshape(nb, num_heads, lq, plen).astype(qw_ref.dtype)

    # ---- query self-attention: SelfAttention(norm=True, add_pe_to_qkv=[T,T,F])
    ln = _layernorm(x, vrow(_SA_LNG), vrow(_SA_LNB), eps)
    qk_in = ln + qpe
    qp = project(qk_in, _SA_WQ, _SA_BQ)
    kp = project(qk_in, _SA_WK, _SA_BK)
    vp = project(ln, _SA_WV, _SA_BV)
    attn_o, _ = attention(qp, kp, vp, lq, lq, _SA_WO, _SA_BO, None)
    x = ln + attn_o

    # ---- FFN: x + W2 relu(W1 LN(x))  (residual on pre-norm x)
    ln = _layernorm(x, vrow(_FF_LNG), vrow(_FF_LNB), eps)
    h = jnp.maximum(jnp.dot(ln.astype(bf16), w_ff1_ref[...],
                            preferred_element_type=f32) + b_ff1_ref[...], 0.0)
    x = x + jnp.dot(h.astype(bf16), w_ff2_ref[...],
                    preferred_element_type=f32) + vrow(_FF_B2)
    x_out_ref[...] = x.reshape(nb, lq, D).astype(x_out_ref.dtype)

    # ---- read_from_query: CrossAttention(norm=False, add_pe_to_qkv=[T,T,F]), no mask
    qp = project(pix + ppe, _RQ_WQ, _RQ_BQ)           # query side = pixel (P rows)
    kp = project(x + qpe, _RQ_WK, _RQ_BK)
    vp = project(x, _RQ_WV, _RQ_BV)
    attn_o, probs = attention(qp, kp, vp, plen, lq, _RQ_WO, _RQ_BO, None)
    pix2 = pix + attn_o                               # (nb*P, D)
    if need_weights:
        # single batched transpose -> one lane-dense (NB, H, Lq, P) store
        probs_t = jnp.swapaxes(probs, -1, -2)         # (nb*H, Lq, P)
        pw_ref[...] = probs_t.reshape(nb, num_heads, lq, plen).astype(pw_ref.dtype)

    # ---- PixelFFN / CAResBlock on pixel + pixel_flat (channel-last, per element)
    fused_all = (pix + pix2).reshape(nb, plen, D)
    band = band_ref[...].astype(f32)

    def conv3x3(inp2d, w_idx, b_idx):
        # inp2d: (P, C) row-major over (conv_h, conv_w).  Tap accumulation:
        # nine (P, C) @ (C, C) matmuls into one f32 accumulator (no im2col buffer).
        inp3 = inp2d.reshape(conv_h, conv_w, D)
        zr = jnp.zeros((1, conv_w, D), f32)
        padded = jnp.concatenate([zr, inp3, zr], axis=0)          # (H+2, W, C)
        zc = jnp.zeros((conv_h + 2, 1, D), f32)
        padded = jnp.concatenate([zc, padded, zc], axis=1)        # (H+2, W+2, C)
        acc = None
        for dh in range(3):
            for dw in range(3):
                tap = padded[dh:dh + conv_h, dw:dw + conv_w, :]
                tap2 = tap.reshape(conv_h * conv_w, D).astype(bf16)
                t = dh * 3 + dw
                wt = w_conv_ref[w_idx, t * D:(t + 1) * D, :]      # (C, C) bf16
                part = jnp.dot(tap2, wt, preferred_element_type=f32)
                acc = part if acc is None else acc + part
        return acc + vrow(b_idx)                                  # (P, C)

    for i in range(nb):
        fused = fused_all[i]                                      # (P, C)
        h1 = conv3x3(jnp.maximum(fused, 0.0), 0, _PF_B1)
        h2 = conv3x3(jnp.maximum(h1, 0.0), 1, _PF_B2)
        # ECA: global avg pool -> 1D conv over channels (banded matmul) -> sigmoid
        pooled = jnp.mean(h2, axis=0, keepdims=True)              # (1, C)
        if ca_pad > 0:
            zp = jnp.zeros((1, ca_pad), f32)
            pooled = jnp.concatenate([zp, pooled, zp], axis=1)
        gate = jax.nn.sigmoid(jnp.dot(pooled, band,
                                      preferred_element_type=f32))  # (1, C)
        pix_out_ref[i] = (h2 * gate + fused).astype(pix_out_ref.dtype)


# ---------------------------------------------------------------------------
# Wrapper: one fused pallas_call for the whole block
# ---------------------------------------------------------------------------
def _pick_block_batch(total_b, lq, target_rows=128):
    best = 1
    for cand in range(1, total_b + 1):
        if total_b % cand:
            continue
        if cand > 1 and cand * lq > target_rows:
            continue
        if total_b >= 4 and (total_b // cand) < 2:
            continue  # keep >=2 grid steps so both v7x TensorCores get work
        best = cand
    return best


def _batched_spec(nb, shape):
    zeros = (0,) * len(shape)
    return pl.BlockSpec((nb,) + tuple(shape), lambda b: (b,) + zeros)


def _bcast_spec(shape):
    zeros = (0,) * len(shape)
    idx_map = lambda b: zeros
    try:
        # grid-invariant weights: single buffer (no wasted double-buffer)
        return pl.BlockSpec(tuple(shape), idx_map, pipeline_mode=pl.Buffered(1))
    except Exception:  # older jax without pipeline_mode on BlockSpec
        return pl.BlockSpec(tuple(shape), idx_map)


def _pack_params(params, num_heads, head_dim):
    """Pack the 38 parameter tensors into 7 arrays (bf16 MXU weights)."""
    D = num_heads * head_dim
    scale = 1.0 / math.sqrt(head_dim)      # folded into wq / bq
    rp, sa, ffp, rq, pf = (params["read_from_pixel"], params["self_attn"],
                           params["ffn"], params["read_from_query"],
                           params["pixel_ffn"])

    def row(v):
        return jnp.asarray(v, jnp.float32).reshape(1, D)

    vecs = jnp.concatenate([
        row(rp["ln_g"]), row(rp["ln_b"]),
        row(rp["bq"]) * scale, row(rp["bk"]), row(rp["bv"]), row(rp["bo"]),
        row(sa["ln_g"]), row(sa["ln_b"]),
        row(sa["bq"]) * scale, row(sa["bk"]), row(sa["bv"]), row(sa["bo"]),
        row(ffp["ln_g"]), row(ffp["ln_b"]), row(ffp["b2"]),
        row(rq["bq"]) * scale, row(rq["bk"]), row(rq["bv"]), row(rq["bo"]),
        row(pf["b1"]), row(pf["b2"]),
    ], axis=0)                                                 # (21, D) f32

    w_attn = jnp.stack([
        rp["wq"] * scale, rp["wk"], rp["wv"], rp["wo"],
        sa["wq"] * scale, sa["wk"], sa["wv"], sa["wo"],
        rq["wq"] * scale, rq["wk"], rq["wv"], rq["wo"],
    ], axis=0).astype(jnp.bfloat16)                            # (12, D, D)

    w_ff1 = jnp.asarray(ffp["w1"]).astype(jnp.bfloat16)        # (D, F)
    b_ff1 = jnp.asarray(ffp["b1"], jnp.float32).reshape(1, -1)  # (1, F)
    w_ff2 = jnp.asarray(ffp["w2"]).astype(jnp.bfloat16)        # (F, D)

    C = D
    # conv weights stored (kh, kw, Cin, Cout) -> (9C, C), tap order dh-major
    # (a real torch checkpoint would permute (Cout,Cin,kh,kw)->(kh,kw,Cin,Cout))
    w_conv = jnp.stack([jnp.asarray(pf["w1"]).reshape(9 * C, C),
                        jnp.asarray(pf["w2"]).reshape(9 * C, C)],
                       axis=0).astype(jnp.bfloat16)            # (2, 9C, C)
    band = jnp.asarray(pf["band"], jnp.float32)                # (C+k-1, C)
    return vecs, w_attn, w_ff1, b_ff1, w_ff2, w_conv, band


def query_transformer_block(x, pixel, query_pe, pixel_pe, attn_mask, params, *,
                            num_heads, num_queries, need_weights=False,
                            block_batch=None, weights_dtype=jnp.float32):
    bs, num_objects, C, Hs, Ws = pixel.shape
    B = bs * num_objects
    P = Hs * Ws
    D = x.shape[-1]
    head_dim = D // num_heads
    assert D == C and num_heads * head_dim == D

    nb = block_batch if block_batch is not None else _pick_block_batch(B, num_queries)
    assert B % nb == 0
    grid = (B // nb,)

    # pixel.flatten(3,4).flatten(0,1).transpose(1,2) -> (B, H*W, C) channel-last
    pixel_flat = pixel.reshape(B, C, P).transpose(0, 2, 1)
    # additive mask, PyTorch 3-D layout (B*num_heads, Lq, Lk); bf16 for DMA,
    # upcast to f32 inside the kernel before being added to the f32 logits.
    mask4d = attn_mask.reshape(B, num_heads, num_queries, P).astype(jnp.bfloat16)

    vecs, w_attn, w_ff1, b_ff1, w_ff2, w_conv, band = _pack_params(
        params, num_heads, head_dim)
    ca_k = band.shape[0] - C + 1          # static (derived from shape)
    ca_pad = (ca_k - 1) // 2

    inputs = [x, pixel_flat, query_pe, pixel_pe, mask4d,
              vecs, w_attn, w_ff1, b_ff1, w_ff2, w_conv, band]
    in_specs = ([_batched_spec(nb, (num_queries, D)),
                 _batched_spec(nb, (P, D)),
                 _batched_spec(nb, (num_queries, D)),
                 _batched_spec(nb, (P, D)),
                 _batched_spec(nb, (num_heads, num_queries, P))]
                + [_bcast_spec(a.shape) for a in inputs[5:]])

    out_shape = [jax.ShapeDtypeStruct((B, num_queries, D), x.dtype),
                 jax.ShapeDtypeStruct((B, P, C), pixel.dtype)]
    out_specs = [_batched_spec(nb, (num_queries, D)),
                 _batched_spec(nb, (P, C))]
    if need_weights:
        out_shape += [jax.ShapeDtypeStruct((B, num_heads, num_queries, P), weights_dtype),
                      jax.ShapeDtypeStruct((B, num_heads, num_queries, P), weights_dtype)]
        out_specs += [_batched_spec(nb, (num_heads, num_queries, P)),
                      _batched_spec(nb, (num_heads, num_queries, P))]

    kern = partial(_fused_block_kernel, nb=nb, num_heads=num_heads,
                   head_dim=head_dim, lq=num_queries, plen=P,
                   conv_h=Hs, conv_w=Ws, ca_pad=ca_pad, eps=1e-5,
                   need_weights=need_weights)

    outs = pl.pallas_call(
        kern,
        grid=grid,
        in_specs=in_specs,
        out_specs=out_specs,
        out_shape=out_shape,
        compiler_params=pltpu.CompilerParams(
            dimension_semantics=("parallel",),        # shards grid across TCs (v7x)
            vmem_limit_bytes=64 * 1024 * 1024),       # above default scoped limits
    )(*inputs)

    x_out = outs[0]
    pixel_out = outs[1].transpose(0, 2, 1).reshape(bs, num_objects, C, Hs, Ws)
    if need_weights:
        q_weights = outs[2].reshape(bs, num_objects, num_heads, num_queries, Hs, Ws)
        p_weights = outs[3].reshape(bs, num_objects, num_heads, num_queries, Hs, Ws)
    else:
        q_weights = p_weights = None
    return x_out, pixel_out, q_weights, p_weights


# ---------------------------------------------------------------------------
# Deterministic synthetic parameters
# ---------------------------------------------------------------------------
def init_params(key, D, Fdim):
    keys = iter(jax.random.split(key, 32))

    def nrm(shape, scale):
        return (scale * jax.random.normal(next(keys), shape)).astype(jnp.float32)

    def attn_params():
        return dict(
            ln_g=jnp.ones((1, D), jnp.float32), ln_b=jnp.zeros((1, D), jnp.float32),
            wq=nrm((D, D), D ** -0.5), bq=jnp.zeros((1, D), jnp.float32),
            wk=nrm((D, D), D ** -0.5), bk=jnp.zeros((1, D), jnp.float32),
            wv=nrm((D, D), D ** -0.5), bv=jnp.zeros((1, D), jnp.float32),
            wo=nrm((D, D), D ** -0.5), bo=jnp.zeros((1, D), jnp.float32),
        )

    C = D
    t = int((abs(math.log2(C)) + 1) // 2)
    ca_k = t if t % 2 else t + 1
    kca = nrm((ca_k,), 0.5)
    # banded matrix so that pooled_padded @ band == conv1d(pooled, kca, pad=(k-1)//2)
    rows = jnp.arange(C + ca_k - 1)[:, None]
    cols = jnp.arange(C)[None, :]
    band = jnp.zeros((C + ca_k - 1, C), jnp.float32)
    for j in range(ca_k):
        band = band + jnp.where(rows == cols + j, kca[j], 0.0)

    return dict(
        read_from_pixel=attn_params(),
        self_attn=attn_params(),
        ffn=dict(ln_g=jnp.ones((1, D), jnp.float32), ln_b=jnp.zeros((1, D), jnp.float32),
                 w1=nrm((D, Fdim), D ** -0.5), b1=jnp.zeros((1, Fdim), jnp.float32),
                 w2=nrm((Fdim, D), Fdim ** -0.5), b2=jnp.zeros((1, D), jnp.float32)),
        read_from_query=attn_params(),
        pixel_ffn=dict(w1=nrm((3, 3, C, C), (9 * C) ** -0.5),
                       b1=jnp.zeros((1, C), jnp.float32),
                       w2=nrm((3, 3, C, C), (9 * C) ** -0.5),
                       b2=jnp.zeros((1, C), jnp.float32),
                       band=band),
    )


if __name__ == "__main__":
    embed_dim, num_heads, num_queries, ff_dim = 32, 2, 8, 64
    bs, num_objects, H, W = 1, 2, 8, 8
    B = bs * num_objects
    P = H * W

    key = jax.random.PRNGKey(0)
    k_x, k_pix, k_qpe, k_ppe, k_mask = jax.random.split(key, 5)
    x = jax.random.normal(k_x, (B, num_queries, embed_dim), jnp.float32)
    pixel = jax.random.normal(k_pix, (bs, num_objects, embed_dim, H, W), jnp.float32)
    query_pe = jax.random.normal(k_qpe, (B, num_queries, embed_dim), jnp.float32)
    pixel_pe = jax.random.normal(k_ppe, (B, P, embed_dim), jnp.float32)
    # float additive attention mask, PyTorch 3-D shape (B*num_heads, Lq, Lk)
    mask_bits = jax.random.bernoulli(k_mask, 0.2, (B * num_heads, num_queries, P))
    attn_mask = jnp.where(mask_bits, -1e4, 0.0).astype(jnp.float32)

    params = init_params(jax.random.PRNGKey(42), embed_dim, ff_dim)

    fwd = jax.jit(partial(query_transformer_block, num_heads=num_heads,
                          num_queries=num_queries, need_weights=True))
    x_out, pixel_out, q_w, p_w = fwd(x, pixel, query_pe, pixel_pe, attn_mask, params)
    jax.block_until_ready((x_out, pixel_out, q_w, p_w))

    assert x_out.shape == (B, num_queries, embed_dim)
    assert pixel_out.shape == (bs, num_objects, embed_dim, H, W)
    assert q_w.shape == (bs, num_objects, num_heads, num_queries, H, W)
    assert p_w.shape == (bs, num_objects, num_heads, num_queries, H, W)
    print("KERNEL_OK")
</pallas_src>

<mosaic_0001>
module attributes {stable_mosaic.version = 11 : i64} {
  func.func @_fused_block_kernel(%arg0: i32, %arg1: memref<2x8x32xf32, #tpu.memory_space<vmem>>, %arg2: memref<2x64x32xf32, #tpu.memory_space<vmem>>, %arg3: memref<2x8x32xf32, #tpu.memory_space<vmem>>, %arg4: memref<2x64x32xf32, #tpu.memory_space<vmem>>, %arg5: memref<2x2x8x64xbf16, #tpu.memory_space<vmem>>, %arg6: memref<21x32xf32, #tpu.memory_space<vmem>>, %arg7: memref<12x32x32xbf16, #tpu.memory_space<vmem>>, %arg8: memref<32x64xbf16, #tpu.memory_space<vmem>>, %arg9: memref<1x64xf32, #tpu.memory_space<vmem>>, %arg10: memref<64x32xbf16, #tpu.memory_space<vmem>>, %arg11: memref<2x288x32xbf16, #tpu.memory_space<vmem>>, %arg12: memref<34x32xf32, #tpu.memory_space<vmem>>, %arg13: memref<2x8x32xf32, #tpu.memory_space<vmem>>, %arg14: memref<2x64x32xf32, #tpu.memory_space<vmem>>, %arg15: memref<2x2x8x64xf32, #tpu.memory_space<vmem>>, %arg16: memref<2x2x8x64xf32, #tpu.memory_space<vmem>>) attributes {dimension_semantics = [#tpu.dimension_semantics<parallel>], iteration_bounds = array<i64: 1>, scalar_prefetch = 0 : i64, scratch_operands = 0 : i64, tpu.core_type = #tpu.core_type<tc>, window_params = [{transform_indices = @transform_0, window_bounds = array<i64: 2, 8, 32>}, {transform_indices = @transform_1, window_bounds = array<i64: 2, 64, 32>}, {transform_indices = @transform_2, window_bounds = array<i64: 2, 8, 32>}, {transform_indices = @transform_3, window_bounds = array<i64: 2, 64, 32>}, {transform_indices = @transform_4, window_bounds = array<i64: 2, 2, 8, 64>}, {pipeline_mode = #tpu.pipeline_mode<synchronous>, transform_indices = @transform_5, window_bounds = array<i64: 21, 32>}, {pipeline_mode = #tpu.pipeline_mode<synchronous>, transform_indices = @transform_6, window_bounds = array<i64: 12, 32, 32>}, {pipeline_mode = #tpu.pipeline_mode<synchronous>, transform_indices = @transform_7, window_bounds = array<i64: 32, 64>}, {pipeline_mode = #tpu.pipeline_mode<synchronous>, transform_indices = @transform_8, window_bounds = array<i64: 1, 64>}, {pipeline_mode = #tpu.pipeline_mode<synchronous>, transform_indices = @transform_9, window_bounds = array<i64: 64, 32>}, {pipeline_mode = #tpu.pipeline_mode<synchronous>, transform_indices = @transform_10, window_bounds = array<i64: 2, 288, 32>}, {pipeline_mode = #tpu.pipeline_mode<synchronous>, transform_indices = @transform_11, window_bounds = array<i64: 34, 32>}, {transform_indices = @transform_12, window_bounds = array<i64: 2, 8, 32>}, {transform_indices = @transform_13, window_bounds = array<i64: 2, 64, 32>}, {transform_indices = @transform_14, window_bounds = array<i64: 2, 2, 8, 64>}, {transform_indices = @transform_15, window_bounds = array<i64: 2, 2, 8, 64>}]} {
    %c0 = arith.constant 0 : index
    %c0_0 = arith.constant 0 : index
    %c0_1 = arith.constant 0 : index
    %0 = vector.load %arg1[%c0, %c0_0, %c0_1] : memref<2x8x32xf32, #tpu.memory_space<vmem>>, vector<2x8x32xf32>
    %1 = vector.shape_cast %0 : vector<2x8x32xf32> to vector<16x32xf32>
    %c0_2 = arith.constant 0 : index
    %c0_3 = arith.constant 0 : index
    %c0_4 = arith.constant 0 : index
    %2 = vector.load %arg3[%c0_2, %c0_3, %c0_4] : memref<2x8x32xf32, #tpu.memory_space<vmem>>, vector<2x8x32xf32>
    %3 = vector.shape_cast %2 : vector<2x8x32xf32> to vector<16x32xf32>
    %c0_5 = arith.constant 0 : index
    %c0_6 = arith.constant 0 : index
    %c0_7 = arith.constant 0 : index
    %4 = vector.load %arg2[%c0_5, %c0_6, %c0_7] : memref<2x64x32xf32, #tpu.memory_space<vmem>>, vector<2x64x32xf32>
    %5 = vector.shape_cast %4 : vector<2x64x32xf32> to vector<128x32xf32>
    %c0_8 = arith.constant 0 : index
    %c0_9 = arith.constant 0 : index
    %c0_10 = arith.constant 0 : index
    %6 = vector.load %arg4[%c0_8, %c0_9, %c0_10] : memref<2x64x32xf32, #tpu.memory_space<vmem>>, vector<2x64x32xf32>
    %7 = vector.shape_cast %6 : vector<2x64x32xf32> to vector<128x32xf32>
    %c0_11 = arith.constant 0 : index
    %c0_12 = arith.constant 0 : index
    %c0_13 = arith.constant 0 : index
    %c0_14 = arith.constant 0 : index
    %8 = vector.load %arg5[%c0_11, %c0_12, %c0_13, %c0_14] : memref<2x2x8x64xbf16, #tpu.memory_space<vmem>>, vector<2x2x8x64xbf16>
    %9 = arith.extf %8 : vector<2x2x8x64xbf16> to vector<2x2x8x64xf32>
    %10 = vector.shape_cast %9 : vector<2x2x8x64xf32> to vector<4x8x64xf32>
    %c0_15 = arith.constant 0 : index
    %c0_16 = arith.constant 0 : index
    %11 = vector.load %arg6[%c0_15, %c0_16] : memref<21x32xf32, #tpu.memory_space<vmem>>, vector<21x32xf32>
    %12 = vector.extract_strided_slice %11 {offsets = [0, 0], sizes = [1, 32], strides = [1, 1]} : vector<21x32xf32> to vector<1x32xf32>
    %13 = vector.extract_strided_slice %11 {offsets = [1, 0], sizes = [1, 32], strides = [1, 1]} : vector<21x32xf32> to vector<1x32xf32>
    %cst = arith.constant dense<0.000000e+00> : vector<16xf32>
    %14 = vector.multi_reduction <add>, %1, %cst [1] : vector<16x32xf32> to vector<16xf32>
    %15 = vector.shape_cast %14 : vector<16xf32> to vector<16x1xf32>
    %cst_17 = arith.constant 3.200000e+01 : f32
    %16 = vector.broadcast %cst_17 : f32 to vector<16x1xf32>
    %17 = arith.divf %15, %16 : vector<16x1xf32>
    %18 = vector.broadcast %17 : vector<16x1xf32> to vector<16x32xf32>
    %19 = arith.subf %1, %18 : vector<16x32xf32>
    %20 = arith.mulf %19, %19 : vector<16x32xf32>
    %cst_18 = arith.constant dense<0.000000e+00> : vector<16xf32>
    %21 = vector.multi_reduction <add>, %20, %cst_18 [1] : vector<16x32xf32> to vector<16xf32>
    %22 = vector.shape_cast %21 : vector<16xf32> to vector<16x1xf32>
    %cst_19 = arith.constant 3.200000e+01 : f32
    %23 = vector.broadcast %cst_19 : f32 to vector<16x1xf32>
    %24 = arith.divf %22, %23 : vector<16x1xf32>
    %25 = vector.broadcast %17 : vector<16x1xf32> to vector<16x32xf32>
    %26 = arith.subf %1, %25 : vector<16x32xf32>
    %cst_20 = arith.constant 9.99999974E-6 : f32
    %27 = vector.broadcast %cst_20 : f32 to vector<16x1xf32>
    %28 = arith.addf %24, %27 : vector<16x1xf32>
    %29 = math.rsqrt %28 : vector<16x1xf32>
    %30 = vector.broadcast %29 : vector<16x1xf32> to vector<16x32xf32>
    %31 = arith.mulf %26, %30 : vector<16x32xf32>
    %32 = vector.broadcast %12 : vector<1x32xf32> to vector<16x32xf32>
    %33 = arith.mulf %31, %32 : vector<16x32xf32>
    %34 = vector.broadcast %13 : vector<1x32xf32> to vector<16x32xf32>
    %35 = arith.addf %33, %34 : vector<16x32xf32>
    %36 = arith.addf %35, %3 : vector<16x32xf32>
    %37 = arith.truncf %36 : vector<16x32xf32> to vector<16x32xbf16>
    %c0_21 = arith.constant 0 : index
    %c0_22 = arith.constant 0 : index
    %c0_23 = arith.constant 0 : index
    %38 = vector.load %arg7[%c0_21, %c0_22, %c0_23] : memref<12x32x32xbf16, #tpu.memory_space<vmem>>, vector<1x32x32xbf16>
    %39 = vector.shape_cast %38 : vector<1x32x32xbf16> to vector<32x32xbf16>
    %cst_24 = arith.constant dense<0.000000e+00> : vector<16x32xf32>
    %40 = tpu.matmul %37, %39, %cst_24 {dimension_numbers = #tpu.dot_dimension_numbers<[1], [0], [0], [1], [0, 0, 1, 1], [], []>} : vector<16x32xbf16>, vector<32x32xbf16>, vector<16x32xf32> -> vector<16x32xf32>
    %41 = vector.extract_strided_slice %11 {offsets = [2, 0], sizes = [1, 32], strides = [1, 1]} : vector<21x32xf32> to vector<1x32xf32>
    %42 = vector.broadcast %41 : vector<1x32xf32> to vector<16x32xf32>
    %43 = arith.addf %40, %42 : vector<16x32xf32>
    %44 = arith.addf %5, %7 : vector<128x32xf32>
    %45 = arith.truncf %44 : vector<128x32xf32> to vector<128x32xbf16>
    %c1 = arith.constant 1 : index
    %c0_25 = arith.constant 0 : index
    %c0_26 = arith.constant 0 : index
    %46 = vector.load %arg7[%c1, %c0_25, %c0_26] : memref<12x32x32xbf16, #tpu.memory_space<vmem>>, vector<1x32x32xbf16>
    %47 = vector.shape_cast %46 : vector<1x32x32xbf16> to vector<32x32xbf16>
    %cst_27 = arith.constant dense<0.000000e+00> : vector<128x32xf32>
    %48 = tpu.matmul %45, %47, %cst_27 {dimension_numbers = #tpu.dot_dimension_numbers<[1], [0], [0], [1], [0, 0, 1, 1], [], []>} : vector<128x32xbf16>, vector<32x32xbf16>, vector<128x32xf32> -> vector<128x32xf32>
    %49 = vector.extract_strided_slice %11 {offsets = [3, 0], sizes = [1, 32], strides = [1, 1]} : vector<21x32xf32> to vector<1x32xf32>
    %50 = vector.broadcast %49 : vector<1x32xf32> to vector<128x32xf32>
    %51 = arith.addf %48, %50 : vector<128x32xf32>
    %52 = arith.truncf %5 : vector<128x32xf32> to vector<128x32xbf16>
    %c2 = arith.constant 2 : index
    %c0_28 = arith.constant 0 : index
    %c0_29 = arith.constant 0 : index
    %53 = vector.load %arg7[%c2, %c0_28, %c0_29] : memref<12x32x32xbf16, #tpu.memory_space<vmem>>, vector<1x32x32xbf16>
    %54 = vector.shape_cast %53 : vector<1x32x32xbf16> to vector<32x32xbf16>
    %cst_30 = arith.constant dense<0.000000e+00> : vector<128x32xf32>
    %55 = tpu.matmul %52, %54, %cst_30 {dimension_numbers = #tpu.dot_dimension_numbers<[1], [0], [0], [1], [0, 0, 1, 1], [], []>} : vector<128x32xbf16>, vector<32x32xbf16>, vector<128x32xf32> -> vector<128x32xf32>
    %56 = vector.extract_strided_slice %11 {offsets = [4, 0], sizes = [1, 32], strides = [1, 1]} : vector<21x32xf32> to vector<1x32xf32>
    %57 = vector.broadcast %56 : vector<1x32xf32> to vector<128x32xf32>
    %58 = arith.addf %55, %57 : vector<128x32xf32>
    %59 = arith.truncf %43 : vector<16x32xf32> to vector<16x32xbf16>
    %60 = vector.shape_cast %59 : vector<16x32xbf16> to vector<2x8x32xbf16>
    %61 = vector.extract_strided_slice %60 {offsets = [0, 0, 0], sizes = [2, 8, 16], strides = [1, 1, 1]} : vector<2x8x32xbf16> to vector<2x8x16xbf16>
    %62 = vector.extract_strided_slice %60 {offsets = [0, 0, 16], sizes = [2, 8, 16], strides = [1, 1, 1]} : vector<2x8x32xbf16> to vector<2x8x16xbf16>
    %63 = vector.shape_cast %61 : vector<2x8x16xbf16> to vector<2x1x8x16xbf16>
    %64 = vector.shape_cast %62 : vector<2x8x16xbf16> to vector<2x1x8x16xbf16>
    %65 = tpu.concatenate %63, %64 in 1 : vector<2x1x8x16xbf16>, vector<2x1x8x16xbf16> -> vector<2x2x8x16xbf16>
    %66 = vector.shape_cast %65 : vector<2x2x8x16xbf16> to vector<4x8x16xbf16>
    %67 = arith.truncf %51 : vector<128x32xf32> to vector<128x32xbf16>
    %68 = vector.shape_cast %67 : vector<128x32xbf16> to vector<2x64x32xbf16>
    %69 = vector.extract_strided_slice %68 {offsets = [0, 0, 0], sizes = [2, 64, 16], strides = [1, 1, 1]} : vector<2x64x32xbf16> to vector<2x64x16xbf16>
    %70 = vector.extract_strided_slice %68 {offsets = [0, 0, 16], sizes = [2, 64, 16], strides = [1, 1, 1]} : vector<2x64x32xbf16> to vector<2x64x16xbf16>
    %71 = vector.shape_cast %69 : vector<2x64x16xbf16> to vector<2x1x64x16xbf16>
    %72 = vector.shape_cast %70 : vector<2x64x16xbf16> to vector<2x1x64x16xbf16>
    %73 = tpu.concatenate %71, %72 in 1 : vector<2x1x64x16xbf16>, vector<2x1x64x16xbf16> -> vector<2x2x64x16xbf16>
    %74 = vector.shape_cast %73 : vector<2x2x64x16xbf16> to vector<4x64x16xbf16>
    %75 = arith.truncf %58 : vector<128x32xf32> to vector<128x32xbf16>
    %76 = vector.shape_cast %75 : vector<128x32xbf16> to vector<2x64x32xbf16>
    %77 = vector.extract_strided_slice %76 {offsets = [0, 0, 0], sizes = [2, 64, 16], strides = [1, 1, 1]} : vector<2x64x32xbf16> to vector<2x64x16xbf16>
    %78 = vector.extract_strided_slice %76 {offsets = [0, 0, 16], sizes = [2, 64, 16], strides = [1, 1, 1]} : vector<2x64x32xbf16> to vector<2x64x16xbf16>
    %79 = vector.shape_cast %77 : vector<2x64x16xbf16> to vector<2x1x64x16xbf16>
    %80 = vector.shape_cast %78 : vector<2x64x16xbf16> to vector<2x1x64x16xbf16>
    %81 = tpu.concatenate %79, %80 in 1 : vector<2x1x64x16xbf16>, vector<2x1x64x16xbf16> -> vector<2x2x64x16xbf16>
    %82 = vector.shape_cast %81 : vector<2x2x64x16xbf16> to vector<4x64x16xbf16>
    "tpu.trace_start"() <{level = 10 : i32, message = "nqd,nkd->nqk"}> : () -> ()
    %cst_31 = arith.constant dense<0.000000e+00> : vector<4x8x64xf32>
    %83 = tpu.matmul %66, %74, %cst_31 {dimension_numbers = #tpu.dot_dimension_numbers<[2], [2], [1], [1], [0, 0, 0, 1, 1, 1], [0], [0]>} : vector<4x8x16xbf16>, vector<4x64x16xbf16>, vector<4x8x64xf32> -> vector<4x8x64xf32>
    "tpu.trace_stop"() : () -> ()
    %84 = arith.addf %83, %10 : vector<4x8x64xf32>
    %cst_32 = arith.constant dense<0xFF800000> : vector<4x8xf32>
    %85 = vector.multi_reduction <maximumf>, %84, %cst_32 [2] : vector<4x8x64xf32> to vector<4x8xf32>
    %86 = vector.shape_cast %85 : vector<4x8xf32> to vector<4x8x1xf32>
    %87 = vector.broadcast %86 : vector<4x8x1xf32> to vector<4x8x64xf32>
    %88 = arith.subf %84, %87 : vector<4x8x64xf32>
    %89 = math.exp %88 : vector<4x8x64xf32>
    %cst_33 = arith.constant dense<0.000000e+00> : vector<4x8xf32>
    %90 = vector.multi_reduction <add>, %89, %cst_33 [2] : vector<4x8x64xf32> to vector<4x8xf32>
    %91 = vector.shape_cast %90 : vector<4x8xf32> to vector<4x8x1xf32>
    %92 = tpu.reciprocal %91 {approx = true} : vector<4x8x1xf32> -> vector<4x8x1xf32>
    %93 = vector.broadcast %92 : vector<4x8x1xf32> to vector<4x8x64xf32>
    %94 = arith.mulf %89, %93 : vector<4x8x64xf32>
    %95 = arith.truncf %94 : vector<4x8x64xf32> to vector<4x8x64xbf16>
    "tpu.trace_start"() <{level = 10 : i32, message = "nqk,nkd->nqd"}> : () -> ()
    %cst_34 = arith.constant dense<0.000000e+00> : vector<4x8x16xf32>
    %96 = tpu.matmul %95, %82, %cst_34 {dimension_numbers = #tpu.dot_dimension_numbers<[2], [1], [1], [2], [0, 0, 0, 1, 1, 2], [0], [0]>} : vector<4x8x64xbf16>, vector<4x64x16xbf16>, vector<4x8x16xf32> -> vector<4x8x16xf32>
    "tpu.trace_stop"() : () -> ()
    %97 = vector.shape_cast %96 : vector<4x8x16xf32> to vector<2x2x8x16xf32>
    %c3 = arith.constant 3 : index
    %c0_35 = arith.constant 0 : index
    %c0_36 = arith.constant 0 : index
    %98 = vector.load %arg7[%c3, %c0_35, %c0_36] : memref<12x32x32xbf16, #tpu.memory_space<vmem>>, vector<1x32x32xbf16>
    %99 = vector.shape_cast %98 : vector<1x32x32xbf16> to vector<32x32xbf16>
    %100 = vector.extract_strided_slice %97 {offsets = [0, 0, 0, 0], sizes = [2, 1, 8, 16], strides = [1, 1, 1, 1]} : vector<2x2x8x16xf32> to vector<2x1x8x16xf32>
    %101 = vector.shape_cast %100 : vector<2x1x8x16xf32> to vector<2x8x16xf32>
    %102 = vector.shape_cast %101 : vector<2x8x16xf32> to vector<16x16xf32>
    %103 = arith.truncf %102 : vector<16x16xf32> to vector<16x16xbf16>
    %104 = vector.extract_strided_slice %99 {offsets = [0, 0], sizes = [16, 32], strides = [1, 1]} : vector<32x32xbf16> to vector<16x32xbf16>
    %cst_37 = arith.constant dense<0.000000e+00> : vector<16x32xf32>
    %105 = tpu.matmul %103, %104, %cst_37 {dimension_numbers = #tpu.dot_dimension_numbers<[1], [0], [0], [1], [0, 0, 1, 1], [], []>} : vector<16x16xbf16>, vector<16x32xbf16>, vector<16x32xf32> -> vector<16x32xf32>
    %106 = vector.extract_strided_slice %97 {offsets = [0, 1, 0, 0], sizes = [2, 1, 8, 16], strides = [1, 1, 1, 1]} : vector<2x2x8x16xf32> to vector<2x1x8x16xf32>
    %107 = vector.shape_cast %106 : vector<2x1x8x16xf32> to vector<2x8x16xf32>
    %108 = vector.shape_cast %107 : vector<2x8x16xf32> to vector<16x16xf32>
    %109 = arith.truncf %108 : vector<16x16xf32> to vector<16x16xbf16>
    %110 = vector.extract_strided_slice %99 {offsets = [16, 0], sizes = [16, 32], strides = [1, 1]} : vector<32x32xbf16> to vector<16x32xbf16>
    %cst_38 = arith.constant dense<0.000000e+00> : vector<16x32xf32>
    %111 = tpu.matmul %109, %110, %cst_38 {dimension_numbers = #tpu.dot_dimension_numbers<[1], [0], [0], [1], [0, 0, 1, 1], [], []>} : vector<16x16xbf16>, vector<16x32xbf16>, vector<16x32xf32> -> vector<16x32xf32>
    %112 = arith.addf %105, %111 : vector<16x32xf32>
    %113 = vector.extract_strided_slice %11 {offsets = [5, 0], sizes = [1, 32], strides = [1, 1]} : vector<21x32xf32> to vector<1x32xf32>
    %114 = vector.broadcast %113 : vector<1x32xf32> to vector<16x32xf32>
    %115 = arith.addf %112, %114 : vector<16x32xf32>
    %116 = arith.addf %35, %115 : vector<16x32xf32>
    %117 = vector.shape_cast %94 : vector<4x8x64xf32> to vector<2x2x8x64xf32>
    %c0_39 = arith.constant 0 : index
    %c0_40 = arith.constant 0 : index
    %c0_41 = arith.constant 0 : index
    %c0_42 = arith.constant 0 : index
    %118 = vector.load %arg15[%c0_39, %c0_40, %c0_41, %c0_42] : memref<2x2x8x64xf32, #tpu.memory_space<vmem>>, vector<2x2x8x64xf32>
    tpu.vector_store %arg15[%c0_39, %c0_40, %c0_41, %c0_42], %117 {strides = array<i32>} : memref<2x2x8x64xf32, #tpu.memory_space<vmem>>, vector<2x2x8x64xf32>,
    %119 = vector.extract_strided_slice %11 {offsets = [6, 0], sizes = [1, 32], strides = [1, 1]} : vector<21x32xf32> to vector<1x32xf32>
    %120 = vector.extract_strided_slice %11 {offsets = [7, 0], sizes = [1, 32], strides = [1, 1]} : vector<21x32xf32> to vector<1x32xf32>
    %cst_43 = arith.constant dense<0.000000e+00> : vector<16xf32>
    %121 = vector.multi_reduction <add>, %116, %cst_43 [1] : vector<16x32xf32> to vector<16xf32>
    %122 = vector.shape_cast %121 : vector<16xf32> to vector<16x1xf32>
    %cst_44 = arith.constant 3.200000e+01 : f32
    %123 = vector.broadcast %cst_44 : f32 to vector<16x1xf32>
    %124 = arith.divf %122, %123 : vector<16x1xf32>
    %125 = vector.broadcast %124 : vector<16x1xf32> to vector<16x32xf32>
    %126 = arith.subf %116, %125 : vector<16x32xf32>
    %127 = arith.mulf %126, %126 : vector<16x32xf32>
    %cst_45 = arith.constant dense<0.000000e+00> : vector<16xf32>
    %128 = vector.multi_reduction <add>, %127, %cst_45 [1] : vector<16x32xf32> to vector<16xf32>
    %129 = vector.shape_cast %128 : vector<16xf32> to vector<16x1xf32>
    %cst_46 = arith.constant 3.200000e+01 : f32
    %130 = vector.broadcast %cst_46 : f32 to vector<16x1xf32>
    %131 = arith.divf %129, %130 : vector<16x1xf32>
    %132 = vector.broadcast %124 : vector<16x1xf32> to vector<16x32xf32>
    %133 = arith.subf %116, %132 : vector<16x32xf32>
    %cst_47 = arith.constant 9.99999974E-6 : f32
    %134 = vector.broadcast %cst_47 : f32 to vector<16x1xf32>
    %135 = arith.addf %131, %134 : vector<16x1xf32>
    %136 = math.rsqrt %135 : vector<16x1xf32>
    %137 = vector.broadcast %136 : vector<16x1xf32> to vector<16x32xf32>
    %138 = arith.mulf %133, %137 : vector<16x32xf32>
    %139 = vector.broadcast %119 : vector<1x32xf32> to vector<16x32xf32>
    %140 = arith.mulf %138, %139 : vector<16x32xf32>
    %141 = vector.broadcast %120 : vector<1x32xf32> to vector<16x32xf32>
    %142 = arith.addf %140, %141 : vector<16x32xf32>
    %143 = arith.addf %142, %3 : vector<16x32xf32>
    %144 = arith.truncf %143 : vector<16x32xf32> to vector<16x32xbf16>
    %c4 = arith.constant 4 : index
    %c0_48 = arith.constant 0 : index
    %c0_49 = arith.constant 0 : index
    %145 = vector.load %arg7[%c4, %c0_48, %c0_49] : memref<12x32x32xbf16, #tpu.memory_space<vmem>>, vector<1x32x32xbf16>
    %146 = vector.shape_cast %145 : vector<1x32x32xbf16> to vector<32x32xbf16>
    %cst_50 = arith.constant dense<0.000000e+00> : vector<16x32xf32>
    %147 = tpu.matmul %144, %146, %cst_50 {dimension_numbers = #tpu.dot_dimension_numbers<[1], [0], [0], [1], [0, 0, 1, 1], [], []>} : vector<16x32xbf16>, vector<32x32xbf16>, vector<16x32xf32> -> vector<16x32xf32>
    %148 = vector.extract_strided_slice %11 {offsets = [8, 0], sizes = [1, 32], strides = [1, 1]} : vector<21x32xf32> to vector<1x32xf32>
    %149 = vector.broadcast %148 : vector<1x32xf32> to vector<16x32xf32>
    %150 = arith.addf %147, %149 : vector<16x32xf32>
    %151 = arith.truncf %143 : vector<16x32xf32> to vector<16x32xbf16>
    %c5 = arith.constant 5 : index
    %c0_51 = arith.constant 0 : index
    %c0_52 = arith.constant 0 : index
    %152 = vector.load %arg7[%c5, %c0_51, %c0_52] : memref<12x32x32xbf16, #tpu.memory_space<vmem>>, vector<1x32x32xbf16>
    %153 = vector.shape_cast %152 : vector<1x32x32xbf16> to vector<32x32xbf16>
    %cst_53 = arith.constant dense<0.000000e+00> : vector<16x32xf32>
    %154 = tpu.matmul %151, %153, %cst_53 {dimension_numbers = #tpu.dot_dimension_numbers<[1], [0], [0], [1], [0, 0, 1, 1], [], []>} : vector<16x32xbf16>, vector<32x32xbf16>, vector<16x32xf32> -> vector<16x32xf32>
    %155 = vector.extract_strided_slice %11 {offsets = [9, 0], sizes = [1, 32], strides = [1, 1]} : vector<21x32xf32> to vector<1x32xf32>
    %156 = vector.broadcast %155 : vector<1x32xf32> to vector<16x32xf32>
    %157 = arith.addf %154, %156 : vector<16x32xf32>
    %158 = arith.truncf %142 : vector<16x32xf32> to vector<16x32xbf16>
    %c6 = arith.constant 6 : index
    %c0_54 = arith.constant 0 : index
    %c0_55 = arith.constant 0 : index
    %159 = vector.load %arg7[%c6, %c0_54, %c0_55] : memref<12x32x32xbf16, #tpu.memory_space<vmem>>, vector<1x32x32xbf16>
    %160 = vector.shape_cast %159 : vector<1x32x32xbf16> to vector<32x32xbf16>
    %cst_56 = arith.constant dense<0.000000e+00> : vector<16x32xf32>
    %161 = tpu.matmul %158, %160, %cst_56 {dimension_numbers = #tpu.dot_dimension_numbers<[1], [0], [0], [1], [0, 0, 1, 1], [], []>} : vector<16x32xbf16>, vector<32x32xbf16>, vector<16x32xf32> -> vector<16x32xf32>
    %162 = vector.extract_strided_slice %11 {offsets = [10, 0], sizes = [1, 32], strides = [1, 1]} : vector<21x32xf32> to vector<1x32xf32>
    %163 = vector.broadcast %162 : vector<1x32xf32> to vector<16x32xf32>
    %164 = arith.addf %161, %163 : vector<16x32xf32>
    %165 = arith.truncf %150 : vector<16x32xf32> to vector<16x32xbf16>
    %166 = vector.shape_cast %165 : vector<16x32xbf16> to vector<2x8x32xbf16>
    %167 = vector.extract_strided_slice %166 {offsets = [0, 0, 0], sizes = [2, 8, 16], strides = [1, 1, 1]} : vector<2x8x32xbf16> to vector<2x8x16xbf16>
    %168 = vector.extract_strided_slice %166 {offsets = [0, 0, 16], sizes = [2, 8, 16], strides = [1, 1, 1]} : vector<2x8x32xbf16> to vector<2x8x16xbf16>
    %169 = vector.shape_cast %167 : vector<2x8x16xbf16> to vector<2x1x8x16xbf16>
    %170 = vector.shape_cast %168 : vector<2x8x16xbf16> to vector<2x1x8x16xbf16>
    %171 = tpu.concatenate %169, %170 in 1 : vector<2x1x8x16xbf16>, vector<2x1x8x16xbf16> -> vector<2x2x8x16xbf16>
    %172 = vector.shape_cast %171 : vector<2x2x8x16xbf16> to vector<4x8x16xbf16>
    %173 = arith.truncf %157 : vector<16x32xf32> to vector<16x32xbf16>
    %174 = vector.shape_cast %173 : vector<16x32xbf16> to vector<2x8x32xbf16>
    %175 = vector.extract_strided_slice %174 {offsets = [0, 0, 0], sizes = [2, 8, 16], strides = [1, 1, 1]} : vector<2x8x32xbf16> to vector<2x8x16xbf16>
    %176 = vector.extract_strided_slice %174 {offsets = [0, 0, 16], sizes = [2, 8, 16], strides = [1, 1, 1]} : vector<2x8x32xbf16> to vector<2x8x16xbf16>
    %177 = vector.shape_cast %175 : vector<2x8x16xbf16> to vector<2x1x8x16xbf16>
    %178 = vector.shape_cast %176 : vector<2x8x16xbf16> to vector<2x1x8x16xbf16>
    %179 = tpu.concatenate %177, %178 in 1 : vector<2x1x8x16xbf16>, vector<2x1x8x16xbf16> -> vector<2x2x8x16xbf16>
    %180 = vector.shape_cast %179 : vector<2x2x8x16xbf16> to vector<4x8x16xbf16>
    %181 = arith.truncf %164 : vector<16x32xf32> to vector<16x32xbf16>
    %182 = vector.shape_cast %181 : vector<16x32xbf16> to vector<2x8x32xbf16>
    %183 = vector.extract_strided_slice %182 {offsets = [0, 0, 0], sizes = [2, 8, 16], strides = [1, 1, 1]} : vector<2x8x32xbf16> to vector<2x8x16xbf16>
    %184 = vector.extract_strided_slice %182 {offsets = [0, 0, 16], sizes = [2, 8, 16], strides = [1, 1, 1]} : vector<2x8x32xbf16> to vector<2x8x16xbf16>
    %185 = vector.shape_cast %183 : vector<2x8x16xbf16> to vector<2x1x8x16xbf16>
    %186 = vector.shape_cast %184 : vector<2x8x16xbf16> to vector<2x1x8x16xbf16>
    %187 = tpu.concatenate %185, %186 in 1 : vector<2x1x8x16xbf16>, vector<2x1x8x16xbf16> -> vector<2x2x8x16xbf16>
    %188 = vector.shape_cast %187 : vector<2x2x8x16xbf16> to vector<4x8x16xbf16>
    "tpu.trace_start"() <{level = 10 : i32, message = "nqd,nkd->nqk"}> : () -> ()
    %cst_57 = arith.constant dense<0.000000e+00> : vector<4x8x8xf32>
    %189 = tpu.matmul %172, %180, %cst_57 {dimension_numbers = #tpu.dot_dimension_numbers<[2], [2], [1], [1], [0, 0, 0, 1, 1, 1], [0], [0]>} : vector<4x8x16xbf16>, vector<4x8x16xbf16>, vector<4x8x8xf32> -> vector<4x8x8xf32>
    "tpu.trace_stop"() : () -> ()
    %cst_58 = arith.constant dense<0xFF800000> : vector<4x8xf32>
    %190 = vector.multi_reduction <maximumf>, %189, %cst_58 [2] : vector<4x8x8xf32> to vector<4x8xf32>
    %191 = vector.shape_cast %190 : vector<4x8xf32> to vector<4x8x1xf32>
    %192 = vector.broadcast %191 : vector<4x8x1xf32> to vector<4x8x8xf32>
    %193 = arith.subf %189, %192 : vector<4x8x8xf32>
    %194 = math.exp %193 : vector<4x8x8xf32>
    %cst_59 = arith.constant dense<0.000000e+00> : vector<4x8xf32>
    %195 = vector.multi_reduction <add>, %194, %cst_59 [2] : vector<4x8x8xf32> to vector<4x8xf32>
    %196 = vector.shape_cast %195 : vector<4x8xf32> to vector<4x8x1xf32>
    %197 = tpu.reciprocal %196 {approx = true} : vector<4x8x1xf32> -> vector<4x8x1xf32>
    %198 = vector.broadcast %197 : vector<4x8x1xf32> to vector<4x8x8xf32>
    %199 = arith.mulf %194, %198 : vector<4x8x8xf32>
    %200 = arith.truncf %199 : vector<4x8x8xf32> to vector<4x8x8xbf16>
    "tpu.trace_start"() <{level = 10 : i32, message = "nqk,nkd->nqd"}> : () -> ()
    %cst_60 = arith.constant dense<0.000000e+00> : vector<4x8x16xf32>
    %201 = tpu.matmul %200, %188, %cst_60 {dimension_numbers = #tpu.dot_dimension_numbers<[2], [1], [1], [2], [0, 0, 0, 1, 1, 2], [0], [0]>} : vector<4x8x8xbf16>, vector<4x8x16xbf16>, vector<4x8x16xf32> -> vector<4x8x16xf32>
    "tpu.trace_stop"() : () -> ()
    %202 = vector.shape_cast %201 : vector<4x8x16xf32> to vector<2x2x8x16xf32>
    %c7 = arith.constant 7 : index
    %c0_61 = arith.constant 0 : index
    %c0_62 = arith.constant 0 : index
    %203 = vector.load %arg7[%c7, %c0_61, %c0_62] : memref<12x32x32xbf16, #tpu.memory_space<vmem>>, vector<1x32x32xbf16>
    %204 = vector.shape_cast %203 : vector<1x32x32xbf16> to vector<32x32xbf16>
    %205 = vector.extract_strided_slice %202 {offsets = [0, 0, 0, 0], sizes = [2, 1, 8, 16], strides = [1, 1, 1, 1]} : vector<2x2x8x16xf32> to vector<2x1x8x16xf32>
    %206 = vector.shape_cast %205 : vector<2x1x8x16xf32> to vector<2x8x16xf32>
    %207 = vector.shape_cast %206 : vector<2x8x16xf32> to vector<16x16xf32>
    %208 = arith.truncf %207 : vector<16x16xf32> to vector<16x16xbf16>
    %209 = vector.extract_strided_slice %204 {offsets = [0, 0], sizes = [16, 32], strides = [1, 1]} : vector<32x32xbf16> to vector<16x32xbf16>
    %cst_63 = arith.constant dense<0.000000e+00> : vector<16x32xf32>
    %210 = tpu.matmul %208, %209, %cst_63 {dimension_numbers = #tpu.dot_dimension_numbers<[1], [0], [0], [1], [0, 0, 1, 1], [], []>} : vector<16x16xbf16>, vector<16x32xbf16>, vector<16x32xf32> -> vector<16x32xf32>
    %211 = vector.extract_strided_slice %202 {offsets = [0, 1, 0, 0], sizes = [2, 1, 8, 16], strides = [1, 1, 1, 1]} : vector<2x2x8x16xf32> to vector<2x1x8x16xf32>
    %212 = vector.shape_cast %211 : vector<2x1x8x16xf32> to vector<2x8x16xf32>
    %213 = vector.shape_cast %212 : vector<2x8x16xf32> to vector<16x16xf32>
    %214 = arith.truncf %213 : vector<16x16xf32> to vector<16x16xbf16>
    %215 = vector.extract_strided_slice %204 {offsets = [16, 0], sizes = [16, 32], strides = [1, 1]} : vector<32x32xbf16> to vector<16x32xbf16>
    %cst_64 = arith.constant dense<0.000000e+00> : vector<16x32xf32>
    %216 = tpu.matmul %214, %215, %cst_64 {dimension_numbers = #tpu.dot_dimension_numbers<[1], [0], [0], [1], [0, 0, 1, 1], [], []>} : vector<16x16xbf16>, vector<16x32xbf16>, vector<16x32xf32> -> vector<16x32xf32>
    %217 = arith.addf %210, %216 : vector<16x32xf32>
    %218 = vector.extract_strided_slice %11 {offsets = [11, 0], sizes = [1, 32], strides = [1, 1]} : vector<21x32xf32> to vector<1x32xf32>
    %219 = vector.broadcast %218 : vector<1x32xf32> to vector<16x32xf32>
    %220 = arith.addf %217, %219 : vector<16x32xf32>
    %221 = arith.addf %142, %220 : vector<16x32xf32>
    %222 = vector.extract_strided_slice %11 {offsets = [12, 0], sizes = [1, 32], strides = [1, 1]} : vector<21x32xf32> to vector<1x32xf32>
    %223 = vector.extract_strided_slice %11 {offsets = [13, 0], sizes = [1, 32], strides = [1, 1]} : vector<21x32xf32> to vector<1x32xf32>
    %cst_65 = arith.constant dense<0.000000e+00> : vector<16xf32>
    %224 = vector.multi_reduction <add>, %221, %cst_65 [1] : vector<16x32xf32> to vector<16xf32>
    %225 = vector.shape_cast %224 : vector<16xf32> to vector<16x1xf32>
    %cst_66 = arith.constant 3.200000e+01 : f32
    %226 = vector.broadcast %cst_66 : f32 to vector<16x1xf32>
    %227 = arith.divf %225, %226 : vector<16x1xf32>
    %228 = vector.broadcast %227 : vector<16x1xf32> to vector<16x32xf32>
    %229 = arith.subf %221, %228 : vector<16x32xf32>
    %230 = arith.mulf %229, %229 : vector<16x32xf32>
    %cst_67 = arith.constant dense<0.000000e+00> : vector<16xf32>
    %231 = vector.multi_reduction <add>, %230, %cst_67 [1] : vector<16x32xf32> to vector<16xf32>
    %232 = vector.shape_cast %231 : vector<16xf32> to vector<16x1xf32>
    %cst_68 = arith.constant 3.200000e+01 : f32
    %233 = vector.broadcast %cst_68 : f32 to vector<16x1xf32>
    %234 = arith.divf %232, %233 : vector<16x1xf32>
    %235 = vector.broadcast %227 : vector<16x1xf32> to vector<16x32xf32>
    %236 = arith.subf %221, %235 : vector<16x32xf32>
    %cst_69 = arith.constant 9.99999974E-6 : f32
    %237 = vector.broadcast %cst_69 : f32 to vector<16x1xf32>
    %238 = arith.addf %234, %237 : vector<16x1xf32>
    %239 = math.rsqrt %238 : vector<16x1xf32>
    %240 = vector.broadcast %239 : vector<16x1xf32> to vector<16x32xf32>
    %241 = arith.mulf %236, %240 : vector<16x32xf32>
    %242 = vector.broadcast %222 : vector<1x32xf32> to vector<16x32xf32>
    %243 = arith.mulf %241, %242 : vector<16x32xf32>
    %244 = vector.broadcast %223 : vector<1x32xf32> to vector<16x32xf32>
    %245 = arith.addf %243, %244 : vector<16x32xf32>
    %246 = arith.truncf %245 : vector<16x32xf32> to vector<16x32xbf16>
    %c0_70 = arith.constant 0 : index
    %c0_71 = arith.constant 0 : index
    %247 = vector.load %arg8[%c0_70, %c0_71] : memref<32x64xbf16, #tpu.memory_space<vmem>>, vector<32x64xbf16>
    %cst_72 = arith.constant dense<0.000000e+00> : vector<16x64xf32>
    %248 = tpu.matmul %246, %247, %cst_72 {dimension_numbers = #tpu.dot_dimension_numbers<[1], [0], [0], [1], [0, 0, 1, 1], [], []>} : vector<16x32xbf16>, vector<32x64xbf16>, vector<16x64xf32> -> vector<16x64xf32>
    %c0_73 = arith.constant 0 : index
    %c0_74 = arith.constant 0 : index
    %249 = vector.load %arg9[%c0_73, %c0_74] : memref<1x64xf32, #tpu.memory_space<vmem>>, vector<1x64xf32>
    %250 = vector.broadcast %249 : vector<1x64xf32> to vector<16x64xf32>
    %251 = arith.addf %248, %250 : vector<16x64xf32>
    %cst_75 = arith.constant 0.000000e+00 : f32
    %252 = vector.broadcast %cst_75 : f32 to vector<16x64xf32>
    %253 = arith.maximumf %251, %252 : vector<16x64xf32>
    %254 = arith.truncf %253 : vector<16x64xf32> to vector<16x64xbf16>
    %c0_76 = arith.constant 0 : index
    %c0_77 = arith.constant 0 : index
    %255 = vector.load %arg10[%c0_76, %c0_77] : memref<64x32xbf16, #tpu.memory_space<vmem>>, vector<64x32xbf16>
    %cst_78 = arith.constant dense<0.000000e+00> : vector<16x32xf32>
    %256 = tpu.matmul %254, %255, %cst_78 {dimension_numbers = #tpu.dot_dimension_numbers<[1], [0], [0], [1], [0, 0, 1, 1], [], []>} : vector<16x64xbf16>, vector<64x32xbf16>, vector<16x32xf32> -> vector<16x32xf32>
    %257 = arith.addf %221, %256 : vector<16x32xf32>
    %258 = vector.extract_strided_slice %11 {offsets = [14, 0], sizes = [1, 32], strides = [1, 1]} : vector<21x32xf32> to vector<1x32xf32>
    %259 = vector.broadcast %258 : vector<1x32xf32> to vector<16x32xf32>
    %260 = arith.addf %257, %259 : vector<16x32xf32>
    %261 = vector.shape_cast %260 : vector<16x32xf32> to vector<2x8x32xf32>
    %c0_79 = arith.constant 0 : index
    %c0_80 = arith.constant 0 : index
    %c0_81 = arith.constant 0 : index
    %262 = vector.load %arg13[%c0_79, %c0_80, %c0_81] : memref<2x8x32xf32, #tpu.memory_space<vmem>>, vector<2x8x32xf32>
    tpu.vector_store %arg13[%c0_79, %c0_80, %c0_81], %261 {strides = array<i32>} : memref<2x8x32xf32, #tpu.memory_space<vmem>>, vector<2x8x32xf32>,
    %263 = arith.addf %5, %7 : vector<128x32xf32>
    %264 = arith.truncf %263 : vector<128x32xf32> to vector<128x32xbf16>
    %c8 = arith.constant 8 : index
    %c0_82 = arith.constant 0 : index
    %c0_83 = arith.constant 0 : index
    %265 = vector.load %arg7[%c8, %c0_82, %c0_83] : memref<12x32x32xbf16, #tpu.memory_space<vmem>>, vector<1x32x32xbf16>
    %266 = vector.shape_cast %265 : vector<1x32x32xbf16> to vector<32x32xbf16>
    %cst_84 = arith.constant dense<0.000000e+00> : vector<128x32xf32>
    %267 = tpu.matmul %264, %266, %cst_84 {dimension_numbers = #tpu.dot_dimension_numbers<[1], [0], [0], [1], [0, 0, 1, 1], [], []>} : vector<128x32xbf16>, vector<32x32xbf16>, vector<128x32xf32> -> vector<128x32xf32>
    %268 = vector.extract_strided_slice %11 {offsets = [15, 0], sizes = [1, 32], strides = [1, 1]} : vector<21x32xf32> to vector<1x32xf32>
    %269 = vector.broadcast %268 : vector<1x32xf32> to vector<128x32xf32>
    %270 = arith.addf %267, %269 : vector<128x32xf32>
    %271 = arith.addf %260, %3 : vector<16x32xf32>
    %272 = arith.truncf %271 : vector<16x32xf32> to vector<16x32xbf16>
    %c9 = arith.constant 9 : index
    %c0_85 = arith.constant 0 : index
    %c0_86 = arith.constant 0 : index
    %273 = vector.load %arg7[%c9, %c0_85, %c0_86] : memref<12x32x32xbf16, #tpu.memory_space<vmem>>, vector<1x32x32xbf16>
    %274 = vector.shape_cast %273 : vector<1x32x32xbf16> to vector<32x32xbf16>
    %cst_87 = arith.constant dense<0.000000e+00> : vector<16x32xf32>
    %275 = tpu.matmul %272, %274, %cst_87 {dimension_numbers = #tpu.dot_dimension_numbers<[1], [0], [0], [1], [0, 0, 1, 1], [], []>} : vector<16x32xbf16>, vector<32x32xbf16>, vector<16x32xf32> -> vector<16x32xf32>
    %276 = vector.extract_strided_slice %11 {offsets = [16, 0], sizes = [1, 32], strides = [1, 1]} : vector<21x32xf32> to vector<1x32xf32>
    %277 = vector.broadcast %276 : vector<1x32xf32> to vector<16x32xf32>
    %278 = arith.addf %275, %277 : vector<16x32xf32>
    %279 = arith.truncf %260 : vector<16x32xf32> to vector<16x32xbf16>
    %c10 = arith.constant 10 : index
    %c0_88 = arith.constant 0 : index
    %c0_89 = arith.constant 0 : index
    %280 = vector.load %arg7[%c10, %c0_88, %c0_89] : memref<12x32x32xbf16, #tpu.memory_space<vmem>>, vector<1x32x32xbf16>
    %281 = vector.shape_cast %280 : vector<1x32x32xbf16> to vector<32x32xbf16>
    %cst_90 = arith.constant dense<0.000000e+00> : vector<16x32xf32>
    %282 = tpu.matmul %279, %281, %cst_90 {dimension_numbers = #tpu.dot_dimension_numbers<[1], [0], [0], [1], [0, 0, 1, 1], [], []>} : vector<16x32xbf16>, vector<32x32xbf16>, vector<16x32xf32> -> vector<16x32xf32>
    %283 = vector.extract_strided_slice %11 {offsets = [17, 0], sizes = [1, 32], strides = [1, 1]} : vector<21x32xf32> to vector<1x32xf32>
    %284 = vector.broadcast %283 : vector<1x32xf32> to vector<16x32xf32>
    %285 = arith.addf %282, %284 : vector<16x32xf32>
    %286 = arith.truncf %270 : vector<128x32xf32> to vector<128x32xbf16>
    %287 = vector.shape_cast %286 : vector<128x32xbf16> to vector<2x64x32xbf16>
    %288 = vector.extract_strided_slice %287 {offsets = [0, 0, 0], sizes = [2, 64, 16], strides = [1, 1, 1]} : vector<2x64x32xbf16> to vector<2x64x16xbf16>
    %289 = vector.extract_strided_slice %287 {offsets = [0, 0, 16], sizes = [2, 64, 16], strides = [1, 1, 1]} : vector<2x64x32xbf16> to vector<2x64x16xbf16>
    %290 = vector.shape_cast %288 : vector<2x64x16xbf16> to vector<2x1x64x16xbf16>
    %291 = vector.shape_cast %289 : vector<2x64x16xbf16> to vector<2x1x64x16xbf16>
    %292 = tpu.concatenate %290, %291 in 1 : vector<2x1x64x16xbf16>, vector<2x1x64x16xbf16> -> vector<2x2x64x16xbf16>
    %293 = vector.shape_cast %292 : vector<2x2x64x16xbf16> to vector<4x64x16xbf16>
    %294 = arith.truncf %278 : vector<16x32xf32> to vector<16x32xbf16>
    %295 = vector.shape_cast %294 : vector<16x32xbf16> to vector<2x8x32xbf16>
    %296 = vector.extract_strided_slice %295 {offsets = [0, 0, 0], sizes = [2, 8, 16], strides = [1, 1, 1]} : vector<2x8x32xbf16> to vector<2x8x16xbf16>
    %297 = vector.extract_strided_slice %295 {offsets = [0, 0, 16], sizes = [2, 8, 16], strides = [1, 1, 1]} : vector<2x8x32xbf16> to vector<2x8x16xbf16>
    %298 = vector.shape_cast %296 : vector<2x8x16xbf16> to vector<2x1x8x16xbf16>
    %299 = vector.shape_cast %297 : vector<2x8x16xbf16> to vector<2x1x8x16xbf16>
    %300 = tpu.concatenate %298, %299 in 1 : vector<2x1x8x16xbf16>, vector<2x1x8x16xbf16> -> vector<2x2x8x16xbf16>
    %301 = vector.shape_cast %300 : vector<2x2x8x16xbf16> to vector<4x8x16xbf16>
    %302 = arith.truncf %285 : vector<16x32xf32> to vector<16x32xbf16>
    %303 = vector.shape_cast %302 : vector<16x32xbf16> to vector<2x8x32xbf16>
    %304 = vector.extract_strided_slice %303 {offsets = [0, 0, 0], sizes = [2, 8, 16], strides = [1, 1, 1]} : vector<2x8x32xbf16> to vector<2x8x16xbf16>
    %305 = vector.extract_strided_slice %303 {offsets = [0, 0, 16], sizes = [2, 8, 16], strides = [1, 1, 1]} : vector<2x8x32xbf16> to vector<2x8x16xbf16>
    %306 = vector.shape_cast %304 : vector<2x8x16xbf16> to vector<2x1x8x16xbf16>
    %307 = vector.shape_cast %305 : vector<2x8x16xbf16> to vector<2x1x8x16xbf16>
    %308 = tpu.concatenate %306, %307 in 1 : vector<2x1x8x16xbf16>, vector<2x1x8x16xbf16> -> vector<2x2x8x16xbf16>
    %309 = vector.shape_cast %308 : vector<2x2x8x16xbf16> to vector<4x8x16xbf16>
    "tpu.trace_start"() <{level = 10 : i32, message = "nqd,nkd->nqk"}> : () -> ()
    %cst_91 = arith.constant dense<0.000000e+00> : vector<4x64x8xf32>
    %310 = tpu.matmul %293, %301, %cst_91 {dimension_numbers = #tpu.dot_dimension_numbers<[2], [2], [1], [1], [0, 0, 0, 1, 1, 1], [0], [0]>} : vector<4x64x16xbf16>, vector<4x8x16xbf16>, vector<4x64x8xf32> -> vector<4x64x8xf32>
    "tpu.trace_stop"() : () -> ()
    %cst_92 = arith.constant dense<0xFF800000> : vector<4x64xf32>
    %311 = vector.multi_reduction <maximumf>, %310, %cst_92 [2] : vector<4x64x8xf32> to vector<4x64xf32>
    %312 = vector.shape_cast %311 : vector<4x64xf32> to vector<4x64x1xf32>
    %313 = vector.broadcast %312 : vector<4x64x1xf32> to vector<4x64x8xf32>
    %314 = arith.subf %310, %313 : vector<4x64x8xf32>
    %315 = math.exp %314 : vector<4x64x8xf32>
    %cst_93 = arith.constant dense<0.000000e+00> : vector<4x64xf32>
    %316 = vector.multi_reduction <add>, %315, %cst_93 [2] : vector<4x64x8xf32> to vector<4x64xf32>
    %317 = vector.shape_cast %316 : vector<4x64xf32> to vector<4x64x1xf32>
    %318 = tpu.reciprocal %317 {approx = true} : vector<4x64x1xf32> -> vector<4x64x1xf32>
    %319 = vector.broadcast %318 : vector<4x64x1xf32> to vector<4x64x8xf32>
    %320 = arith.mulf %315, %319 : vector<4x64x8xf32>
    %321 = arith.truncf %320 : vector<4x64x8xf32> to vector<4x64x8xbf16>
    "tpu.trace_start"() <{level = 10 : i32, message = "nqk,nkd->nqd"}> : () -> ()
    %cst_94 = arith.constant dense<0.000000e+00> : vector<4x64x16xf32>
    %322 = tpu.matmul %321, %309, %cst_94 {dimension_numbers = #tpu.dot_dimension_numbers<[2], [1], [1], [2], [0, 0, 0, 1, 1, 2], [0], [0]>} : vector<4x64x8xbf16>, vector<4x8x16xbf16>, vector<4x64x16xf32> -> vector<4x64x16xf32>
    "tpu.trace_stop"() : () -> ()
    %323 = vector.shape_cast %322 : vector<4x64x16xf32> to vector<2x2x64x16xf32>
    %c11 = arith.constant 11 : index
    %c0_95 = arith.constant 0 : index
    %c0_96 = arith.constant 0 : index
    %324 = vector.load %arg7[%c11, %c0_95, %c0_96] : memref<12x32x32xbf16, #tpu.memory_space<vmem>>, vector<1x32x32xbf16>
    %325 = vector.shape_cast %324 : vector<1x32x32xbf16> to vector<32x32xbf16>
    %326 = vector.extract_strided_slice %323 {offsets = [0, 0, 0, 0], sizes = [2, 1, 64, 16], strides = [1, 1, 1, 1]} : vector<2x2x64x16xf32> to vector<2x1x64x16xf32>
    %327 = vector.shape_cast %326 : vector<2x1x64x16xf32> to vector<2x64x16xf32>
    %328 = vector.shape_cast %327 : vector<2x64x16xf32> to vector<128x16xf32>
    %329 = arith.truncf %328 : vector<128x16xf32> to vector<128x16xbf16>
    %330 = vector.extract_strided_slice %325 {offsets = [0, 0], sizes = [16, 32], strides = [1, 1]} : vector<32x32xbf16> to vector<16x32xbf16>
    %cst_97 = arith.constant dense<0.000000e+00> : vector<128x32xf32>
    %331 = tpu.matmul %329, %330, %cst_97 {dimension_numbers = #tpu.dot_dimension_numbers<[1], [0], [0], [1], [0, 0, 1, 1], [], []>} : vector<128x16xbf16>, vector<16x32xbf16>, vector<128x32xf32> -> vector<128x32xf32>
    %332 = vector.extract_strided_slice %323 {offsets = [0, 1, 0, 0], sizes = [2, 1, 64, 16], strides = [1, 1, 1, 1]} : vector<2x2x64x16xf32> to vector<2x1x64x16xf32>
    %333 = vector.shape_cast %332 : vector<2x1x64x16xf32> to vector<2x64x16xf32>
    %334 = vector.shape_cast %333 : vector<2x64x16xf32> to vector<128x16xf32>
    %335 = arith.truncf %334 : vector<128x16xf32> to vector<128x16xbf16>
    %336 = vector.extract_strided_slice %325 {offsets = [16, 0], sizes = [16, 32], strides = [1, 1]} : vector<32x32xbf16> to vector<16x32xbf16>
    %cst_98 = arith.constant dense<0.000000e+00> : vector<128x32xf32>
    %337 = tpu.matmul %335, %336, %cst_98 {dimension_numbers = #tpu.dot_dimension_numbers<[1], [0], [0], [1], [0, 0, 1, 1], [], []>} : vector<128x16xbf16>, vector<16x32xbf16>, vector<128x32xf32> -> vector<128x32xf32>
    %338 = arith.addf %331, %337 : vector<128x32xf32>
    %339 = vector.extract_strided_slice %11 {offsets = [18, 0], sizes = [1, 32], strides = [1, 1]} : vector<21x32xf32> to vector<1x32xf32>
    %340 = vector.broadcast %339 : vector<1x32xf32> to vector<128x32xf32>
    %341 = arith.addf %338, %340 : vector<128x32xf32>
    %342 = arith.addf %5, %341 : vector<128x32xf32>
    %343 = tpu.transpose %320, [0, 2, 1] : vector<4x64x8xf32> -> vector<4x8x64xf32>
    %344 = vector.shape_cast %343 : vector<4x8x64xf32> to vector<2x2x8x64xf32>
    %c0_99 = arith.constant 0 : index
    %c0_100 = arith.constant 0 : index
    %c0_101 = arith.constant 0 : index
    %c0_102 = arith.constant 0 : index
    %345 = vector.load %arg16[%c0_99, %c0_100, %c0_101, %c0_102] : memref<2x2x8x64xf32, #tpu.memory_space<vmem>>, vector<2x2x8x64xf32>
    tpu.vector_store %arg16[%c0_99, %c0_100, %c0_101, %c0_102], %344 {strides = array<i32>} : memref<2x2x8x64xf32, #tpu.memory_space<vmem>>, vector<2x2x8x64xf32>,
    %346 = arith.addf %5, %342 : vector<128x32xf32>
    %347 = vector.shape_cast %346 : vector<128x32xf32> to vector<2x64x32xf32>
    %c0_103 = arith.constant 0 : index
    %c0_104 = arith.constant 0 : index
    %348 = vector.load %arg12[%c0_103, %c0_104] : memref<34x32xf32, #tpu.memory_space<vmem>>, vector<34x32xf32>
    %349 = vector.extract_strided_slice %347 {offsets = [0, 0, 0], sizes = [1, 64, 32], strides = [1, 1, 1]} : vector<2x64x32xf32> to vector<1x64x32xf32>
    %350 = vector.shape_cast %349 : vector<1x64x32xf32> to vector<64x32xf32>
    %cst_105 = arith.constant 0.000000e+00 : f32
    %351 = vector.broadcast %cst_105 : f32 to vector<64x32xf32>
    %352 = arith.maximumf %350, %351 : vector<64x32xf32>
    %353 = vector.shape_cast %352 : vector<64x32xf32> to vector<8x8x32xf32>
    %cst_106 = arith.constant 0.000000e+00 : f32
    %354 = vector.broadcast %cst_106 : f32 to vector<1x8x32xf32>
    %355 = tpu.concatenate %354, %353, %354 in 0 : vector<1x8x32xf32>, vector<8x8x32xf32>, vector<1x8x32xf32> -> vector<10x8x32xf32>
    %cst_107 = arith.constant 0.000000e+00 : f32
    %356 = vector.broadcast %cst_107 : f32 to vector<10x1x32xf32>
    %357 = tpu.concatenate %356, %355, %356 in 1 : vector<10x1x32xf32>, vector<10x8x32xf32>, vector<10x1x32xf32> -> vector<10x10x32xf32>
    %358 = vector.extract_strided_slice %357 {offsets = [0, 0, 0], sizes = [8, 8, 32], strides = [1, 1, 1]} : vector<10x10x32xf32> to vector<8x8x32xf32>
    %359 = vector.shape_cast %358 : vector<8x8x32xf32> to vector<64x32xf32>
    %360 = arith.truncf %359 : vector<64x32xf32> to vector<64x32xbf16>
    %c0_108 = arith.constant 0 : index
    %c0_109 = arith.constant 0 : index
    %c0_110 = arith.constant 0 : index
    %361 = vector.load %arg11[%c0_108, %c0_109, %c0_110] : memref<2x288x32xbf16, #tpu.memory_space<vmem>>, vector<1x32x32xbf16>
    %362 = vector.shape_cast %361 : vector<1x32x32xbf16> to vector<32x32xbf16>
    %cst_111 = arith.constant dense<0.000000e+00> : vector<64x32xf32>
    %363 = tpu.matmul %360, %362, %cst_111 {dimension_numbers = #tpu.dot_dimension_numbers<[1], [0], [0], [1], [0, 0, 1, 1], [], []>} : vector<64x32xbf16>, vector<32x32xbf16>, vector<64x32xf32> -> vector<64x32xf32>
    %364 = vector.extract_strided_slice %357 {offsets = [0, 1, 0], sizes = [8, 8, 32], strides = [1, 1, 1]} : vector<10x10x32xf32> to vector<8x8x32xf32>
    %365 = vector.shape_cast %364 : vector<8x8x32xf32> to vector<64x32xf32>
    %366 = arith.truncf %365 : vector<64x32xf32> to vector<64x32xbf16>
    %c0_112 = arith.constant 0 : index
    %c32 = arith.constant 32 : index
    %c0_113 = arith.constant 0 : index
    %367 = vector.load %arg11[%c0_112, %c32, %c0_113] : memref<2x288x32xbf16, #tpu.memory_space<vmem>>, vector<1x32x32xbf16>
    %368 = vector.shape_cast %367 : vector<1x32x32xbf16> to vector<32x32xbf16>
    %cst_114 = arith.constant dense<0.000000e+00> : vector<64x32xf32>
    %369 = tpu.matmul %366, %368, %cst_114 {dimension_numbers = #tpu.dot_dimension_numbers<[1], [0], [0], [1], [0, 0, 1, 1], [], []>} : vector<64x32xbf16>, vector<32x32xbf16>, vector<64x32xf32> -> vector<64x32xf32>
    %370 = arith.addf %363, %369 : vector<64x32xf32>
    %371 = vector.extract_strided_slice %357 {offsets = [0, 2, 0], sizes = [8, 8, 32], strides = [1, 1, 1]} : vector<10x10x32xf32> to vector<8x8x32xf32>
    %372 = vector.shape_cast %371 : vector<8x8x32xf32> to vector<64x32xf32>
    %373 = arith.truncf %372 : vector<64x32xf32> to vector<64x32xbf16>
    %c0_115 = arith.constant 0 : index
    %c64 = arith.constant 64 : index
    %c0_116 = arith.constant 0 : index
    %374 = vector.load %arg11[%c0_115, %c64, %c0_116] : memref<2x288x32xbf16, #tpu.memory_space<vmem>>, vector<1x32x32xbf16>
    %375 = vector.shape_cast %374 : vector<1x32x32xbf16> to vector<32x32xbf16>
    %cst_117 = arith.constant dense<0.000000e+00> : vector<64x32xf32>
    %376 = tpu.matmul %373, %375, %cst_117 {dimension_numbers = #tpu.dot_dimension_numbers<[1], [0], [0], [1], [0, 0, 1, 1], [], []>} : vector<64x32xbf16>, vector<32x32xbf16>, vector<64x32xf32> -> vector<64x32xf32>
    %377 = arith.addf %370, %376 : vector<64x32xf32>
    %378 = vector.extract_strided_slice %357 {offsets = [1, 0, 0], sizes = [8, 8, 32], strides = [1, 1, 1]} : vector<10x10x32xf32> to vector<8x8x32xf32>
    %379 = vector.shape_cast %378 : vector<8x8x32xf32> to vector<64x32xf32>
    %380 = arith.truncf %379 : vector<64x32xf32> to vector<64x32xbf16>
    %c0_118 = arith.constant 0 : index
    %c96 = arith.constant 96 : index
    %c0_119 = arith.constant 0 : index
    %381 = vector.load %arg11[%c0_118, %c96, %c0_119] : memref<2x288x32xbf16, #tpu.memory_space<vmem>>, vector<1x32x32xbf16>
    %382 = vector.shape_cast %381 : vector<1x32x32xbf16> to vector<32x32xbf16>
    %cst_120 = arith.constant dense<0.000000e+00> : vector<64x32xf32>
    %383 = tpu.matmul %380, %382, %cst_120 {dimension_numbers = #tpu.dot_dimension_numbers<[1], [0], [0], [1], [0, 0, 1, 1], [], []>} : vector<64x32xbf16>, vector<32x32xbf16>, vector<64x32xf32> -> vector<64x32xf32>
    %384 = arith.addf %377, %383 : vector<64x32xf32>
    %385 = vector.extract_strided_slice %357 {offsets = [1, 1, 0], sizes = [8, 8, 32], strides = [1, 1, 1]} : vector<10x10x32xf32> to vector<8x8x32xf32>
    %386 = vector.shape_cast %385 : vector<8x8x32xf32> to vector<64x32xf32>
    %387 = arith.truncf %386 : vector<64x32xf32> to vector<64x32xbf16>
    %c0_121 = arith.constant 0 : index
    %c128 = arith.constant 128 : index
    %c0_122 = arith.constant 0 : index
    %388 = vector.load %arg11[%c0_121, %c128, %c0_122] : memref<2x288x32xbf16, #tpu.memory_space<vmem>>, vector<1x32x32xbf16>
    %389 = vector.shape_cast %388 : vector<1x32x32xbf16> to vector<32x32xbf16>
    %cst_123 = arith.constant dense<0.000000e+00> : vector<64x32xf32>
    %390 = tpu.matmul %387, %389, %cst_123 {dimension_numbers = #tpu.dot_dimension_numbers<[1], [0], [0], [1], [0, 0, 1, 1], [], []>} : vector<64x32xbf16>, vector<32x32xbf16>, vector<64x32xf32> -> vector<64x32xf32>
    %391 = arith.addf %384, %390 : vector<64x32xf32>
    %392 = vector.extract_strided_slice %357 {offsets = [1, 2, 0], sizes = [8, 8, 32], strides = [1, 1, 1]} : vector<10x10x32xf32> to vector<8x8x32xf32>
    %393 = vector.shape_cast %392 : vector<8x8x32xf32> to vector<64x32xf32>
    %394 = arith.truncf %393 : vector<64x32xf32> to vector<64x32xbf16>
    %c0_124 = arith.constant 0 : index
    %c160 = arith.constant 160 : index
    %c0_125 = arith.constant 0 : index
    %395 = vector.load %arg11[%c0_124, %c160, %c0_125] : memref<2x288x32xbf16, #tpu.memory_space<vmem>>, vector<1x32x32xbf16>
    %396 = vector.shape_cast %395 : vector<1x32x32xbf16> to vector<32x32xbf16>
    %cst_126 = arith.constant dense<0.000000e+00> : vector<64x32xf32>
    %397 = tpu.matmul %394, %396, %cst_126 {dimension_numbers = #tpu.dot_dimension_numbers<[1], [0], [0], [1], [0, 0, 1, 1], [], []>} : vector<64x32xbf16>, vector<32x32xbf16>, vector<64x32xf32> -> vector<64x32xf32>
    %398 = arith.addf %391, %397 : vector<64x32xf32>
    %399 = vector.extract_strided_slice %357 {offsets = [2, 0, 0], sizes = [8, 8, 32], strides = [1, 1, 1]} : vector<10x10x32xf32> to vector<8x8x32xf32>
    %400 = vector.shape_cast %399 : vector<8x8x32xf32> to vector<64x32xf32>
    %401 = arith.truncf %400 : vector<64x32xf32> to vector<64x32xbf16>
    %c0_127 = arith.constant 0 : index
    %c192 = arith.constant 192 : index
    %c0_128 = arith.constant 0 : index
    %402 = vector.load %arg11[%c0_127, %c192, %c0_128] : memref<2x288x32xbf16, #tpu.memory_space<vmem>>, vector<1x32x32xbf16>
    %403 = vector.shape_cast %402 : vector<1x32x32xbf16> to vector<32x32xbf16>
    %cst_129 = arith.constant dense<0.000000e+00> : vector<64x32xf32>
    %404 = tpu.matmul %401, %403, %cst_129 {dimension_numbers = #tpu.dot_dimension_numbers<[1], [0], [0], [1], [0, 0, 1, 1], [], []>} : vector<64x32xbf16>, vector<32x32xbf16>, vector<64x32xf32> -> vector<64x32xf32>
    %405 = arith.addf %398, %404 : vector<64x32xf32>
    %406 = vector.extract_strided_slice %357 {offsets = [2, 1, 0], sizes = [8, 8, 32], strides = [1, 1, 1]} : vector<10x10x32xf32> to vector<8x8x32xf32>
    %407 = vector.shape_cast %406 : vector<8x8x32xf32> to vector<64x32xf32>
    %408 = arith.truncf %407 : vector<64x32xf32> to vector<64x32xbf16>
    %c0_130 = arith.constant 0 : index
    %c224 = arith.constant 224 : index
    %c0_131 = arith.constant 0 : index
    %409 = vector.load %arg11[%c0_130, %c224, %c0_131] : memref<2x288x32xbf16, #tpu.memory_space<vmem>>, vector<1x32x32xbf16>
    %410 = vector.shape_cast %409 : vector<1x32x32xbf16> to vector<32x32xbf16>
    %cst_132 = arith.constant dense<0.000000e+00> : vector<64x32xf32>
    %411 = tpu.matmul %408, %410, %cst_132 {dimension_numbers = #tpu.dot_dimension_numbers<[1], [0], [0], [1], [0, 0, 1, 1], [], []>} : vector<64x32xbf16>, vector<32x32xbf16>, vector<64x32xf32> -> vector<64x32xf32>
    %412 = arith.addf %405, %411 : vector<64x32xf32>
    %413 = vector.extract_strided_slice %357 {offsets = [2, 2, 0], sizes = [8, 8, 32], strides = [1, 1, 1]} : vector<10x10x32xf32> to vector<8x8x32xf32>
    %414 = vector.shape_cast %413 : vector<8x8x32xf32> to vector<64x32xf32>
    %415 = arith.truncf %414 : vector<64x32xf32> to vector<64x32xbf16>
    %c0_133 = arith.constant 0 : index
    %c256 = arith.constant 256 : index
    %c0_134 = arith.constant 0 : index
    %416 = vector.load %arg11[%c0_133, %c256, %c0_134] : memref<2x288x32xbf16, #tpu.memory_space<vmem>>, vector<1x32x32xbf16>
    %417 = vector.shape_cast %416 : vector<1x32x32xbf16> to vector<32x32xbf16>
    %cst_135 = arith.constant dense<0.000000e+00> : vector<64x32xf32>
    %418 = tpu.matmul %415, %417, %cst_135 {dimension_numbers = #tpu.dot_dimension_numbers<[1], [0], [0], [1], [0, 0, 1, 1], [], []>} : vector<64x32xbf16>, vector<32x32xbf16>, vector<64x32xf32> -> vector<64x32xf32>
    %419 = arith.addf %412, %418 : vector<64x32xf32>
    %420 = vector.extract_strided_slice %11 {offsets = [19, 0], sizes = [1, 32], strides = [1, 1]} : vector<21x32xf32> to vector<1x32xf32>
    %421 = vector.broadcast %420 : vector<1x32xf32> to vector<64x32xf32>
    %422 = arith.addf %419, %421 : vector<64x32xf32>
    %cst_136 = arith.constant 0.000000e+00 : f32
    %423 = vector.broadcast %cst_136 : f32 to vector<64x32xf32>
    %424 = arith.maximumf %422, %423 : vector<64x32xf32>
    %425 = vector.shape_cast %424 : vector<64x32xf32> to vector<8x8x32xf32>
    %cst_137 = arith.constant 0.000000e+00 : f32
    %426 = vector.broadcast %cst_137 : f32 to vector<1x8x32xf32>
    %427 = tpu.concatenate %426, %425, %426 in 0 : vector<1x8x32xf32>, vector<8x8x32xf32>, vector<1x8x32xf32> -> vector<10x8x32xf32>
    %cst_138 = arith.constant 0.000000e+00 : f32
    %428 = vector.broadcast %cst_138 : f32 to vector<10x1x32xf32>
    %429 = tpu.concatenate %428, %427, %428 in 1 : vector<10x1x32xf32>, vector<10x8x32xf32>, vector<10x1x32xf32> -> vector<10x10x32xf32>
    %430 = vector.extract_strided_slice %429 {offsets = [0, 0, 0], sizes = [8, 8, 32], strides = [1, 1, 1]} : vector<10x10x32xf32> to vector<8x8x32xf32>
    %431 = vector.shape_cast %430 : vector<8x8x32xf32> to vector<64x32xf32>
    %432 = arith.truncf %431 : vector<64x32xf32> to vector<64x32xbf16>
    %c1_139 = arith.constant 1 : index
    %c0_140 = arith.constant 0 : index
    %c0_141 = arith.constant 0 : index
    %433 = vector.load %arg11[%c1_139, %c0_140, %c0_141] : memref<2x288x32xbf16, #tpu.memory_space<vmem>>, vector<1x32x32xbf16>
    %434 = vector.shape_cast %433 : vector<1x32x32xbf16> to vector<32x32xbf16>
    %cst_142 = arith.constant dense<0.000000e+00> : vector<64x32xf32>
    %435 = tpu.matmul %432, %434, %cst_142 {dimension_numbers = #tpu.dot_dimension_numbers<[1], [0], [0], [1], [0, 0, 1, 1], [], []>} : vector<64x32xbf16>, vector<32x32xbf16>, vector<64x32xf32> -> vector<64x32xf32>
    %436 = vector.extract_strided_slice %429 {offsets = [0, 1, 0], sizes = [8, 8, 32], strides = [1, 1, 1]} : vector<10x10x32xf32> to vector<8x8x32xf32>
    %437 = vector.shape_cast %436 : vector<8x8x32xf32> to vector<64x32xf32>
    %438 = arith.truncf %437 : vector<64x32xf32> to vector<64x32xbf16>
    %c1_143 = arith.constant 1 : index
    %c32_144 = arith.constant 32 : index
    %c0_145 = arith.constant 0 : index
    %439 = vector.load %arg11[%c1_143, %c32_144, %c0_145] : memref<2x288x32xbf16, #tpu.memory_space<vmem>>, vector<1x32x32xbf16>
    %440 = vector.shape_cast %439 : vector<1x32x32xbf16> to vector<32x32xbf16>
    %cst_146 = arith.constant dense<0.000000e+00> : vector<64x32xf32>
    %441 = tpu.matmul %438, %440, %cst_146 {dimension_numbers = #tpu.dot_dimension_numbers<[1], [0], [0], [1], [0, 0, 1, 1], [], []>} : vector<64x32xbf16>, vector<32x32xbf16>, vector<64x32xf32> -> vector<64x32xf32>
    %442 = arith.addf %435, %441 : vector<64x32xf32>
    %443 = vector.extract_strided_slice %429 {offsets = [0, 2, 0], sizes = [8, 8, 32], strides = [1, 1, 1]} : vector<10x10x32xf32> to vector<8x8x32xf32>
    %444 = vector.shape_cast %443 : vector<8x8x32xf32> to vector<64x32xf32>
    %445 = arith.truncf %444 : vector<64x32xf32> to vector<64x32xbf16>
    %c1_147 = arith.constant 1 : index
    %c64_148 = arith.constant 64 : index
    %c0_149 = arith.constant 0 : index
    %446 = vector.load %arg11[%c1_147, %c64_148, %c0_149] : memref<2x288x32xbf16, #tpu.memory_space<vmem>>, vector<1x32x32xbf16>
    %447 = vector.shape_cast %446 : vector<1x32x32xbf16> to vector<32x32xbf16>
    %cst_150 = arith.constant dense<0.000000e+00> : vector<64x32xf32>
    %448 = tpu.matmul %445, %447, %cst_150 {dimension_numbers = #tpu.dot_dimension_numbers<[1], [0], [0], [1], [0, 0, 1, 1], [], []>} : vector<64x32xbf16>, vector<32x32xbf16>, vector<64x32xf32> -> vector<64x32xf32>
    %449 = arith.addf %442, %448 : vector<64x32xf32>
    %450 = vector.extract_strided_slice %429 {offsets = [1, 0, 0], sizes = [8, 8, 32], strides = [1, 1, 1]} : vector<10x10x32xf32> to vector<8x8x32xf32>
    %451 = vector.shape_cast %450 : vector<8x8x32xf32> to vector<64x32xf32>
    %452 = arith.truncf %451 : vector<64x32xf32> to vector<64x32xbf16>
    %c1_151 = arith.constant 1 : index
    %c96_152 = arith.constant 96 : index
    %c0_153 = arith.constant 0 : index
    %453 = vector.load %arg11[%c1_151, %c96_152, %c0_153] : memref<2x288x32xbf16, #tpu.memory_space<vmem>>, vector<1x32x32xbf16>
    %454 = vector.shape_cast %453 : vector<1x32x32xbf16> to vector<32x32xbf16>
    %cst_154 = arith.constant dense<0.000000e+00> : vector<64x32xf32>
    %455 = tpu.matmul %452, %454, %cst_154 {dimension_numbers = #tpu.dot_dimension_numbers<[1], [0], [0], [1], [0, 0, 1, 1], [], []>} : vector<64x32xbf16>, vector<32x32xbf16>, vector<64x32xf32> -> vector<64x32xf32>
    %456 = arith.addf %449, %455 : vector<64x32xf32>
    %457 = vector.extract_strided_slice %429 {offsets = [1, 1, 0], sizes = [8, 8, 32], strides = [1, 1, 1]} : vector<10x10x32xf32> to vector<8x8x32xf32>
    %458 = vector.shape_cast %457 : vector<8x8x32xf32> to vector<64x32xf32>
    %459 = arith.truncf %458 : vector<64x32xf32> to vector<64x32xbf16>
    %c1_155 = arith.constant 1 : index
    %c128_156 = arith.constant 128 : index
    %c0_157 = arith.constant 0 : index
    %460 = vector.load %arg11[%c1_155, %c128_156, %c0_157] : memref<2x288x32xbf16, #tpu.memory_space<vmem>>, vector<1x32x32xbf16>
    %461 = vector.shape_cast %460 : vector<1x32x32xbf16> to vector<32x32xbf16>
    %cst_158 = arith.constant dense<0.000000e+00> : vector<64x32xf32>
    %462 = tpu.matmul %459, %461, %cst_158 {dimension_numbers = #tpu.dot_dimension_numbers<[1], [0], [0], [1], [0, 0, 1, 1], [], []>} : vector<64x32xbf16>, vector<32x32xbf16>, vector<64x32xf32> -> vector<64x32xf32>
    %463 = arith.addf %456, %462 : vector<64x32xf32>
    %464 = vector.extract_strided_slice %429 {offsets = [1, 2, 0], sizes = [8, 8, 32], strides = [1, 1, 1]} : vector<10x10x32xf32> to vector<8x8x32xf32>
    %465 = vector.shape_cast %464 : vector<8x8x32xf32> to vector<64x32xf32>
    %466 = arith.truncf %465 : vector<64x32xf32> to vector<64x32xbf16>
    %c1_159 = arith.constant 1 : index
    %c160_160 = arith.constant 160 : index
    %c0_161 = arith.constant 0 : index
    %467 = vector.load %arg11[%c1_159, %c160_160, %c0_161] : memref<2x288x32xbf16, #tpu.memory_space<vmem>>, vector<1x32x32xbf16>
    %468 = vector.shape_cast %467 : vector<1x32x32xbf16> to vector<32x32xbf16>
    %cst_162 = arith.constant dense<0.000000e+00> : vector<64x32xf32>
    %469 = tpu.matmul %466, %468, %cst_162 {dimension_numbers = #tpu.dot_dimension_numbers<[1], [0], [0], [1], [0, 0, 1, 1], [], []>} : vector<64x32xbf16>, vector<32x32xbf16>, vector<64x32xf32> -> vector<64x32xf32>
    %470 = arith.addf %463, %469 : vector<64x32xf32>
    %471 = vector.extract_strided_slice %429 {offsets = [2, 0, 0], sizes = [8, 8, 32], strides = [1, 1, 1]} : vector<10x10x32xf32> to vector<8x8x32xf32>
    %472 = vector.shape_cast %471 : vector<8x8x32xf32> to vector<64x32xf32>
    %473 = arith.truncf %472 : vector<64x32xf32> to vector<64x32xbf16>
    %c1_163 = arith.constant 1 : index
    %c192_164 = arith.constant 192 : index
    %c0_165 = arith.constant 0 : index
    %474 = vector.load %arg11[%c1_163, %c192_164, %c0_165] : memref<2x288x32xbf16, #tpu.memory_space<vmem>>, vector<1x32x32xbf16>
    %475 = vector.shape_cast %474 : vector<1x32x32xbf16> to vector<32x32xbf16>
    %cst_166 = arith.constant dense<0.000000e+00> : vector<64x32xf32>
    %476 = tpu.matmul %473, %475, %cst_166 {dimension_numbers = #tpu.dot_dimension_numbers<[1], [0], [0], [1], [0, 0, 1, 1], [], []>} : vector<64x32xbf16>, vector<32x32xbf16>, vector<64x32xf32> -> vector<64x32xf32>
    %477 = arith.addf %470, %476 : vector<64x32xf32>
    %478 = vector.extract_strided_slice %429 {offsets = [2, 1, 0], sizes = [8, 8, 32], strides = [1, 1, 1]} : vector<10x10x32xf32> to vector<8x8x32xf32>
    %479 = vector.shape_cast %478 : vector<8x8x32xf32> to vector<64x32xf32>
    %480 = arith.truncf %479 : vector<64x32xf32> to vector<64x32xbf16>
    %c1_167 = arith.constant 1 : index
    %c224_168 = arith.constant 224 : index
    %c0_169 = arith.constant 0 : index
    %481 = vector.load %arg11[%c1_167, %c224_168, %c0_169] : memref<2x288x32xbf16, #tpu.memory_space<vmem>>, vector<1x32x32xbf16>
    %482 = vector.shape_cast %481 : vector<1x32x32xbf16> to vector<32x32xbf16>
    %cst_170 = arith.constant dense<0.000000e+00> : vector<64x32xf32>
    %483 = tpu.matmul %480, %482, %cst_170 {dimension_numbers = #tpu.dot_dimension_numbers<[1], [0], [0], [1], [0, 0, 1, 1], [], []>} : vector<64x32xbf16>, vector<32x32xbf16>, vector<64x32xf32> -> vector<64x32xf32>
    %484 = arith.addf %477, %483 : vector<64x32xf32>
    %485 = vector.extract_strided_slice %429 {offsets = [2, 2, 0], sizes = [8, 8, 32], strides = [1, 1, 1]} : vector<10x10x32xf32> to vector<8x8x32xf32>
    %486 = vector.shape_cast %485 : vector<8x8x32xf32> to vector<64x32xf32>
    %487 = arith.truncf %486 : vector<64x32xf32> to vector<64x32xbf16>
    %c1_171 = arith.constant 1 : index
    %c256_172 = arith.constant 256 : index
    %c0_173 = arith.constant 0 : index
    %488 = vector.load %arg11[%c1_171, %c256_172, %c0_173] : memref<2x288x32xbf16, #tpu.memory_space<vmem>>, vector<1x32x32xbf16>
    %489 = vector.shape_cast %488 : vector<1x32x32xbf16> to vector<32x32xbf16>
    %cst_174 = arith.constant dense<0.000000e+00> : vector<64x32xf32>
    %490 = tpu.matmul %487, %489, %cst_174 {dimension_numbers = #tpu.dot_dimension_numbers<[1], [0], [0], [1], [0, 0, 1, 1], [], []>} : vector<64x32xbf16>, vector<32x32xbf16>, vector<64x32xf32> -> vector<64x32xf32>
    %491 = arith.addf %484, %490 : vector<64x32xf32>
    %492 = vector.extract_strided_slice %11 {offsets = [20, 0], sizes = [1, 32], strides = [1, 1]} : vector<21x32xf32> to vector<1x32xf32>
    %493 = vector.broadcast %492 : vector<1x32xf32> to vector<64x32xf32>
    %494 = arith.addf %491, %493 : vector<64x32xf32>
    %cst_175 = arith.constant dense<0.000000e+00> : vector<32xf32>
    %495 = vector.multi_reduction <add>, %494, %cst_175 [0] : vector<64x32xf32> to vector<32xf32>
    %496 = vector.shape_cast %495 : vector<32xf32> to vector<1x32xf32>
    %cst_176 = arith.constant 6.400000e+01 : f32
    %497 = vector.broadcast %cst_176 : f32 to vector<1x32xf32>
    %498 = arith.divf %496, %497 : vector<1x32xf32>
    %cst_177 = arith.constant 0.000000e+00 : f32
    %499 = vector.broadcast %cst_177 : f32 to vector<1x1xf32>
    %500 = tpu.concatenate %499, %498, %499 in 1 : vector<1x1xf32>, vector<1x32xf32>, vector<1x1xf32> -> vector<1x34xf32>
    %cst_178 = arith.constant dense<0.000000e+00> : vector<1x32xf32>
    %501 = tpu.matmul %500, %348, %cst_178 {dimension_numbers = #tpu.dot_dimension_numbers<[1], [0], [0], [1], [0, 0, 1, 1], [], []>} : vector<1x34xf32>, vector<34x32xf32>, vector<1x32xf32> -> vector<1x32xf32>
    %502 = arith.negf %501 : vector<1x32xf32>
    %503 = math.exp %502 : vector<1x32xf32>
    %cst_179 = arith.constant 1.000000e+00 : f32
    %504 = vector.broadcast %cst_179 : f32 to vector<1x32xf32>
    %505 = arith.addf %504, %503 : vector<1x32xf32>
    %506 = arith.divf %504, %505 : vector<1x32xf32>
    %507 = vector.broadcast %506 : vector<1x32xf32> to vector<64x32xf32>
    %508 = arith.mulf %494, %507 : vector<64x32xf32>
    %509 = arith.addf %508, %350 : vector<64x32xf32>
    %c0_180 = arith.constant 0 : index
    %c0_181 = arith.constant 0 : index
    %c0_182 = arith.constant 0 : index
    %510 = vector.load %arg14[%c0_180, %c0_181, %c0_182] : memref<2x64x32xf32, #tpu.memory_space<vmem>>, vector<1x64x32xf32>
    %511 = vector.shape_cast %510 : vector<1x64x32xf32> to vector<64x32xf32>
    %512 = vector.shape_cast %509 : vector<64x32xf32> to vector<1x64x32xf32>
    tpu.vector_store %arg14[%c0_180, %c0_181, %c0_182], %512 {strides = array<i32>} : memref<2x64x32xf32, #tpu.memory_space<vmem>>, vector<1x64x32xf32>,
    %513 = vector.extract_strided_slice %347 {offsets = [1, 0, 0], sizes = [1, 64, 32], strides = [1, 1, 1]} : vector<2x64x32xf32> to vector<1x64x32xf32>
    %514 = vector.shape_cast %513 : vector<1x64x32xf32> to vector<64x32xf32>
    %cst_183 = arith.constant 0.000000e+00 : f32
    %515 = vector.broadcast %cst_183 : f32 to vector<64x32xf32>
    %516 = arith.maximumf %514, %515 : vector<64x32xf32>
    %517 = vector.shape_cast %516 : vector<64x32xf32> to vector<8x8x32xf32>
    %cst_184 = arith.constant 0.000000e+00 : f32
    %518 = vector.broadcast %cst_184 : f32 to vector<1x8x32xf32>
    %519 = tpu.concatenate %518, %517, %518 in 0 : vector<1x8x32xf32>, vector<8x8x32xf32>, vector<1x8x32xf32> -> vector<10x8x32xf32>
    %cst_185 = arith.constant 0.000000e+00 : f32
    %520 = vector.broadcast %cst_185 : f32 to vector<10x1x32xf32>
    %521 = tpu.concatenate %520, %519, %520 in 1 : vector<10x1x32xf32>, vector<10x8x32xf32>, vector<10x1x32xf32> -> vector<10x10x32xf32>
    %522 = vector.extract_strided_slice %521 {offsets = [0, 0, 0], sizes = [8, 8, 32], strides = [1, 1, 1]} : vector<10x10x32xf32> to vector<8x8x32xf32>
    %523 = vector.shape_cast %522 : vector<8x8x32xf32> to vector<64x32xf32>
    %524 = arith.truncf %523 : vector<64x32xf32> to vector<64x32xbf16>
    %c0_186 = arith.constant 0 : index
    %c0_187 = arith.constant 0 : index
    %c0_188 = arith.constant 0 : index
    %525 = vector.load %arg11[%c0_186, %c0_187, %c0_188] : memref<2x288x32xbf16, #tpu.memory_space<vmem>>, vector<1x32x32xbf16>
    %526 = vector.shape_cast %525 : vector<1x32x32xbf16> to vector<32x32xbf16>
    %cst_189 = arith.constant dense<0.000000e+00> : vector<64x32xf32>
    %527 = tpu.matmul %524, %526, %cst_189 {dimension_numbers = #tpu.dot_dimension_numbers<[1], [0], [0], [1], [0, 0, 1, 1], [], []>} : vector<64x32xbf16>, vector<32x32xbf16>, vector<64x32xf32> -> vector<64x32xf32>
    %528 = vector.extract_strided_slice %521 {offsets = [0, 1, 0], sizes = [8, 8, 32], strides = [1, 1, 1]} : vector<10x10x32xf32> to vector<8x8x32xf32>
    %529 = vector.shape_cast %528 : vector<8x8x32xf32> to vector<64x32xf32>
    %530 = arith.truncf %529 : vector<64x32xf32> to vector<64x32xbf16>
    %c0_190 = arith.constant 0 : index
    %c32_191 = arith.constant 32 : index
    %c0_192 = arith.constant 0 : index
    %531 = vector.load %arg11[%c0_190, %c32_191, %c0_192] : memref<2x288x32xbf16, #tpu.memory_space<vmem>>, vector<1x32x32xbf16>
    %532 = vector.shape_cast %531 : vector<1x32x32xbf16> to vector<32x32xbf16>
    %cst_193 = arith.constant dense<0.000000e+00> : vector<64x32xf32>
    %533 = tpu.matmul %530, %532, %cst_193 {dimension_numbers = #tpu.dot_dimension_numbers<[1], [0], [0], [1], [0, 0, 1, 1], [], []>} : vector<64x32xbf16>, vector<32x32xbf16>, vector<64x32xf32> -> vector<64x32xf32>
    %534 = arith.addf %527, %533 : vector<64x32xf32>
    %535 = vector.extract_strided_slice %521 {offsets = [0, 2, 0], sizes = [8, 8, 32], strides = [1, 1, 1]} : vector<10x10x32xf32> to vector<8x8x32xf32>
    %536 = vector.shape_cast %535 : vector<8x8x32xf32> to vector<64x32xf32>
    %537 = arith.truncf %536 : vector<64x32xf32> to vector<64x32xbf16>
    %c0_194 = arith.constant 0 : index
    %c64_195 = arith.constant 64 : index
    %c0_196 = arith.constant 0 : index
    %538 = vector.load %arg11[%c0_194, %c64_195, %c0_196] : memref<2x288x32xbf16, #tpu.memory_space<vmem>>, vector<1x32x32xbf16>
    %539 = vector.shape_cast %538 : vector<1x32x32xbf16> to vector<32x32xbf16>
    %cst_197 = arith.constant dense<0.000000e+00> : vector<64x32xf32>
    %540 = tpu.matmul %537, %539, %cst_197 {dimension_numbers = #tpu.dot_dimension_numbers<[1], [0], [0], [1], [0, 0, 1, 1], [], []>} : vector<64x32xbf16>, vector<32x32xbf16>, vector<64x32xf32> -> vector<64x32xf32>
    %541 = arith.addf %534, %540 : vector<64x32xf32>
    %542 = vector.extract_strided_slice %521 {offsets = [1, 0, 0], sizes = [8, 8, 32], strides = [1, 1, 1]} : vector<10x10x32xf32> to vector<8x8x32xf32>
    %543 = vector.shape_cast %542 : vector<8x8x32xf32> to vector<64x32xf32>
    %544 = arith.truncf %543 : vector<64x32xf32> to vector<64x32xbf16>
    %c0_198 = arith.constant 0 : index
    %c96_199 = arith.constant 96 : index
    %c0_200 = arith.constant 0 : index
    %545 = vector.load %arg11[%c0_198, %c96_199, %c0_200] : memref<2x288x32xbf16, #tpu.memory_space<vmem>>, vector<1x32x32xbf16>
    %546 = vector.shape_cast %545 : vector<1x32x32xbf16> to vector<32x32xbf16>
    %cst_201 = arith.constant dense<0.000000e+00> : vector<64x32xf32>
    %547 = tpu.matmul %544, %546, %cst_201 {dimension_numbers = #tpu.dot_dimension_numbers<[1], [0], [0], [1], [0, 0, 1, 1], [], []>} : vector<64x32xbf16>, vector<32x32xbf16>, vector<64x32xf32> -> vector<64x32xf32>
    %548 = arith.addf %541, %547 : vector<64x32xf32>
    %549 = vector.extract_strided_slice %521 {offsets = [1, 1, 0], sizes = [8, 8, 32], strides = [1, 1, 1]} : vector<10x10x32xf32> to vector<8x8x32xf32>
    %550 = vector.shape_cast %549 : vector<8x8x32xf32> to vector<64x32xf32>
    %551 = arith.truncf %550 : vector<64x32xf32> to vector<64x32xbf16>
    %c0_202 = arith.constant 0 : index
    %c128_203 = arith.constant 128 : index
    %c0_204 = arith.constant 0 : index
    %552 = vector.load %arg11[%c0_202, %c128_203, %c0_204] : memref<2x288x32xbf16, #tpu.memory_space<vmem>>, vector<1x32x32xbf16>
    %553 = vector.shape_cast %552 : vector<1x32x32xbf16> to vector<32x32xbf16>
    %cst_205 = arith.constant dense<0.000000e+00> : vector<64x32xf32>
    %554 = tpu.matmul %551, %553, %cst_205 {dimension_numbers = #tpu.dot_dimension_numbers<[1], [0], [0], [1], [0, 0, 1, 1], [], []>} : vector<64x32xbf16>, vector<32x32xbf16>, vector<64x32xf32> -> vector<64x32xf32>
    %555 = arith.addf %548, %554 : vector<64x32xf32>
    %556 = vector.extract_strided_slice %521 {offsets = [1, 2, 0], sizes = [8, 8, 32], strides = [1, 1, 1]} : vector<10x10x32xf32> to vector<8x8x32xf32>
    %557 = vector.shape_cast %556 : vector<8x8x32xf32> to vector<64x32xf32>
    %558 = arith.truncf %557 : vector<64x32xf32> to vector<64x32xbf16>
    %c0_206 = arith.constant 0 : index
    %c160_207 = arith.constant 160 : index
    %c0_208 = arith.constant 0 : index
    %559 = vector.load %arg11[%c0_206, %c160_207, %c0_208] : memref<2x288x32xbf16, #tpu.memory_space<vmem>>, vector<1x32x32xbf16>
    %560 = vector.shape_cast %559 : vector<1x32x32xbf16> to vector<32x32xbf16>
    %cst_209 = arith.constant dense<0.000000e+00> : vector<64x32xf32>
    %561 = tpu.matmul %558, %560, %cst_209 {dimension_numbers = #tpu.dot_dimension_numbers<[1], [0], [0], [1], [0, 0, 1, 1], [], []>} : vector<64x32xbf16>, vector<32x32xbf16>, vector<64x32xf32> -> vector<64x32xf32>
    %562 = arith.addf %555, %561 : vector<64x32xf32>
    %563 = vector.extract_strided_slice %521 {offsets = [2, 0, 0], sizes = [8, 8, 32], strides = [1, 1, 1]} : vector<10x10x32xf32> to vector<8x8x32xf32>
    %564 = vector.shape_cast %563 : vector<8x8x32xf32> to vector<64x32xf32>
    %565 = arith.truncf %564 : vector<64x32xf32> to vector<64x32xbf16>
    %c0_210 = arith.constant 0 : index
    %c192_211 = arith.constant 192 : index
    %c0_212 = arith.constant 0 : index
    %566 = vector.load %arg11[%c0_210, %c192_211, %c0_212] : memref<2x288x32xbf16, #tpu.memory_space<vmem>>, vector<1x32x32xbf16>
    %567 = vector.shape_cast %566 : vector<1x32x32xbf16> to vector<32x32xbf16>
    %cst_213 = arith.constant dense<0.000000e+00> : vector<64x32xf32>
    %568 = tpu.matmul %565, %567, %cst_213 {dimension_numbers = #tpu.dot_dimension_numbers<[1], [0], [0], [1], [0, 0, 1, 1], [], []>} : vector<64x32xbf16>, vector<32x32xbf16>, vector<64x32xf32> -> vector<64x32xf32>
    %569 = arith.addf %562, %568 : vector<64x32xf32>
    %570 = vector.extract_strided_slice %521 {offsets = [2, 1, 0], sizes = [8, 8, 32], strides = [1, 1, 1]} : vector<10x10x32xf32> to vector<8x8x32xf32>
    %571 = vector.shape_cast %570 : vector<8x8x32xf32> to vector<64x32xf32>
    %572 = arith.truncf %571 : vector<64x32xf32> to vector<64x32xbf16>
    %c0_214 = arith.constant 0 : index
    %c224_215 = arith.constant 224 : index
    %c0_216 = arith.constant 0 : index
    %573 = vector.load %arg11[%c0_214, %c224_215, %c0_216] : memref<2x288x32xbf16, #tpu.memory_space<vmem>>, vector<1x32x32xbf16>
    %574 = vector.shape_cast %573 : vector<1x32x32xbf16> to vector<32x32xbf16>
    %cst_217 = arith.constant dense<0.000000e+00> : vector<64x32xf32>
    %575 = tpu.matmul %572, %574, %cst_217 {dimension_numbers = #tpu.dot_dimension_numbers<[1], [0], [0], [1], [0, 0, 1, 1], [], []>} : vector<64x32xbf16>, vector<32x32xbf16>, vector<64x32xf32> -> vector<64x32xf32>
    %576 = arith.addf %569, %575 : vector<64x32xf32>
    %577 = vector.extract_strided_slice %521 {offsets = [2, 2, 0], sizes = [8, 8, 32], strides = [1, 1, 1]} : vector<10x10x32xf32> to vector<8x8x32xf32>
    %578 = vector.shape_cast %577 : vector<8x8x32xf32> to vector<64x32xf32>
    %579 = arith.truncf %578 : vector<64x32xf32> to vector<64x32xbf16>
    %c0_218 = arith.constant 0 : index
    %c256_219 = arith.constant 256 : index
    %c0_220 = arith.constant 0 : index
    %580 = vector.load %arg11[%c0_218, %c256_219, %c0_220] : memref<2x288x32xbf16, #tpu.memory_space<vmem>>, vector<1x32x32xbf16>
    %581 = vector.shape_cast %580 : vector<1x32x32xbf16> to vector<32x32xbf16>
    %cst_221 = arith.constant dense<0.000000e+00> : vector<64x32xf32>
    %582 = tpu.matmul %579, %581, %cst_221 {dimension_numbers = #tpu.dot_dimension_numbers<[1], [0], [0], [1], [0, 0, 1, 1], [], []>} : vector<64x32xbf16>, vector<32x32xbf16>, vector<64x32xf32> -> vector<64x32xf32>
    %583 = arith.addf %576, %582 : vector<64x32xf32>
    %584 = vector.extract_strided_slice %11 {offsets = [19, 0], sizes = [1, 32], strides = [1, 1]} : vector<21x32xf32> to vector<1x32xf32>
    %585 = vector.broadcast %584 : vector<1x32xf32> to vector<64x32xf32>
    %586 = arith.addf %583, %585 : vector<64x32xf32>
    %cst_222 = arith.constant 0.000000e+00 : f32
    %587 = vector.broadcast %cst_222 : f32 to vector<64x32xf32>
    %588 = arith.maximumf %586, %587 : vector<64x32xf32>
    %589 = vector.shape_cast %588 : vector<64x32xf32> to vector<8x8x32xf32>
    %cst_223 = arith.constant 0.000000e+00 : f32
    %590 = vector.broadcast %cst_223 : f32 to vector<1x8x32xf32>
    %591 = tpu.concatenate %590, %589, %590 in 0 : vector<1x8x32xf32>, vector<8x8x32xf32>, vector<1x8x32xf32> -> vector<10x8x32xf32>
    %cst_224 = arith.constant 0.000000e+00 : f32
    %592 = vector.broadcast %cst_224 : f32 to vector<10x1x32xf32>
    %593 = tpu.concatenate %592, %591, %592 in 1 : vector<10x1x32xf32>, vector<10x8x32xf32>, vector<10x1x32xf32> -> vector<10x10x32xf32>
    %594 = vector.extract_strided_slice %593 {offsets = [0, 0, 0], sizes = [8, 8, 32], strides = [1, 1, 1]} : vector<10x10x32xf32> to vector<8x8x32xf32>
    %595 = vector.shape_cast %594 : vector<8x8x32xf32> to vector<64x32xf32>
    %596 = arith.truncf %595 : vector<64x32xf32> to vector<64x32xbf16>
    %c1_225 = arith.constant 1 : index
    %c0_226 = arith.constant 0 : index
    %c0_227 = arith.constant 0 : index
    %597 = vector.load %arg11[%c1_225, %c0_226, %c0_227] : memref<2x288x32xbf16, #tpu.memory_space<vmem>>, vector<1x32x32xbf16>
    %598 = vector.shape_cast %597 : vector<1x32x32xbf16> to vector<32x32xbf16>
    %cst_228 = arith.constant dense<0.000000e+00> : vector<64x32xf32>
    %599 = tpu.matmul %596, %598, %cst_228 {dimension_numbers = #tpu.dot_dimension_numbers<[1], [0], [0], [1], [0, 0, 1, 1], [], []>} : vector<64x32xbf16>, vector<32x32xbf16>, vector<64x32xf32> -> vector<64x32xf32>
    %600 = vector.extract_strided_slice %593 {offsets = [0, 1, 0], sizes = [8, 8, 32], strides = [1, 1, 1]} : vector<10x10x32xf32> to vector<8x8x32xf32>
    %601 = vector.shape_cast %600 : vector<8x8x32xf32> to vector<64x32xf32>
    %602 = arith.truncf %601 : vector<64x32xf32> to vector<64x32xbf16>
    %c1_229 = arith.constant 1 : index
    %c32_230 = arith.constant 32 : index
    %c0_231 = arith.constant 0 : index
    %603 = vector.load %arg11[%c1_229, %c32_230, %c0_231] : memref<2x288x32xbf16, #tpu.memory_space<vmem>>, vector<1x32x32xbf16>
    %604 = vector.shape_cast %603 : vector<1x32x32xbf16> to vector<32x32xbf16>
    %cst_232 = arith.constant dense<0.000000e+00> : vector<64x32xf32>
    %605 = tpu.matmul %602, %604, %cst_232 {dimension_numbers = #tpu.dot_dimension_numbers<[1], [0], [0], [1], [0, 0, 1, 1], [], []>} : vector<64x32xbf16>, vector<32x32xbf16>, vector<64x32xf32> -> vector<64x32xf32>
    %606 = arith.addf %599, %605 : vector<64x32xf32>
    %607 = vector.extract_strided_slice %593 {offsets = [0, 2, 0], sizes = [8, 8, 32], strides = [1, 1, 1]} : vector<10x10x32xf32> to vector<8x8x32xf32>
    %608 = vector.shape_cast %607 : vector<8x8x32xf32> to vector<64x32xf32>
    %609 = arith.truncf %608 : vector<64x32xf32> to vector<64x32xbf16>
    %c1_233 = arith.constant 1 : index
    %c64_234 = arith.constant 64 : index
    %c0_235 = arith.constant 0 : index
    %610 = vector.load %arg11[%c1_233, %c64_234, %c0_235] : memref<2x288x32xbf16, #tpu.memory_space<vmem>>, vector<1x32x32xbf16>
    %611 = vector.shape_cast %610 : vector<1x32x32xbf16> to vector<32x32xbf16>
    %cst_236 = arith.constant dense<0.000000e+00> : vector<64x32xf32>
    %612 = tpu.matmul %609, %611, %cst_236 {dimension_numbers = #tpu.dot_dimension_numbers<[1], [0], [0], [1], [0, 0, 1, 1], [], []>} : vector<64x32xbf16>, vector<32x32xbf16>, vector<64x32xf32> -> vector<64x32xf32>
    %613 = arith.addf %606, %612 : vector<64x32xf32>
    %614 = vector.extract_strided_slice %593 {offsets = [1, 0, 0], sizes = [8, 8, 32], strides = [1, 1, 1]} : vector<10x10x32xf32> to vector<8x8x32xf32>
    %615 = vector.shape_cast %614 : vector<8x8x32xf32> to vector<64x32xf32>
    %616 = arith.truncf %615 : vector<64x32xf32> to vector<64x32xbf16>
    %c1_237 = arith.constant 1 : index
    %c96_238 = arith.constant 96 : index
    %c0_239 = arith.constant 0 : index
    %617 = vector.load %arg11[%c1_237, %c96_238, %c0_239] : memref<2x288x32xbf16, #tpu.memory_space<vmem>>, vector<1x32x32xbf16>
    %618 = vector.shape_cast %617 : vector<1x32x32xbf16> to vector<32x32xbf16>
    %cst_240 = arith.constant dense<0.000000e+00> : vector<64x32xf32>
    %619 = tpu.matmul %616, %618, %cst_240 {dimension_numbers = #tpu.dot_dimension_numbers<[1], [0], [0], [1], [0, 0, 1, 1], [], []>} : vector<64x32xbf16>, vector<32x32xbf16>, vector<64x32xf32> -> vector<64x32xf32>
    %620 = arith.addf %613, %619 : vector<64x32xf32>
    %621 = vector.extract_strided_slice %593 {offsets = [1, 1, 0], sizes = [8, 8, 32], strides = [1, 1, 1]} : vector<10x10x32xf32> to vector<8x8x32xf32>
    %622 = vector.shape_cast %621 : vector<8x8x32xf32> to vector<64x32xf32>
    %623 = arith.truncf %622 : vector<64x32xf32> to vector<64x32xbf16>
    %c1_241 = arith.constant 1 : index
    %c128_242 = arith.constant 128 : index
    %c0_243 = arith.constant 0 : index
    %624 = vector.load %arg11[%c1_241, %c128_242, %c0_243] : memref<2x288x32xbf16, #tpu.memory_space<vmem>>, vector<1x32x32xbf16>
    %625 = vector.shape_cast %624 : vector<1x32x32xbf16> to vector<32x32xbf16>
    %cst_244 = arith.constant dense<0.000000e+00> : vector<64x32xf32>
    %626 = tpu.matmul %623, %625, %cst_244 {dimension_numbers = #tpu.dot_dimension_numbers<[1], [0], [0], [1], [0, 0, 1, 1], [], []>} : vector<64x32xbf16>, vector<32x32xbf16>, vector<64x32xf32> -> vector<64x32xf32>
    %627 = arith.addf %620, %626 : vector<64x32xf32>
    %628 = vector.extract_strided_slice %593 {offsets = [1, 2, 0], sizes = [8, 8, 32], strides = [1, 1, 1]} : vector<10x10x32xf32> to vector<8x8x32xf32>
    %629 = vector.shape_cast %628 : vector<8x8x32xf32> to vector<64x32xf32>
    %630 = arith.truncf %629 : vector<64x32xf32> to vector<64x32xbf16>
    %c1_245 = arith.constant 1 : index
    %c160_246 = arith.constant 160 : index
    %c0_247 = arith.constant 0 : index
    %631 = vector.load %arg11[%c1_245, %c160_246, %c0_247] : memref<2x288x32xbf16, #tpu.memory_space<vmem>>, vector<1x32x32xbf16>
    %632 = vector.shape_cast %631 : vector<1x32x32xbf16> to vector<32x32xbf16>
    %cst_248 = arith.constant dense<0.000000e+00> : vector<64x32xf32>
    %633 = tpu.matmul %630, %632, %cst_248 {dimension_numbers = #tpu.dot_dimension_numbers<[1], [0], [0], [1], [0, 0, 1, 1], [], []>} : vector<64x32xbf16>, vector<32x32xbf16>, vector<64x32xf32> -> vector<64x32xf32>
    %634 = arith.addf %627, %633 : vector<64x32xf32>
    %635 = vector.extract_strided_slice %593 {offsets = [2, 0, 0], sizes = [8, 8, 32], strides = [1, 1, 1]} : vector<10x10x32xf32> to vector<8x8x32xf32>
    %636 = vector.shape_cast %635 : vector<8x8x32xf32> to vector<64x32xf32>
    %637 = arith.truncf %636 : vector<64x32xf32> to vector<64x32xbf16>
    %c1_249 = arith.constant 1 : index
    %c192_250 = arith.constant 192 : index
    %c0_251 = arith.constant 0 : index
    %638 = vector.load %arg11[%c1_249, %c192_250, %c0_251] : memref<2x288x32xbf16, #tpu.memory_space<vmem>>, vector<1x32x32xbf16>
    %639 = vector.shape_cast %638 : vector<1x32x32xbf16> to vector<32x32xbf16>
    %cst_252 = arith.constant dense<0.000000e+00> : vector<64x32xf32>
    %640 = tpu.matmul %637, %639, %cst_252 {dimension_numbers = #tpu.dot_dimension_numbers<[1], [0], [0], [1], [0, 0, 1, 1], [], []>} : vector<64x32xbf16>, vector<32x32xbf16>, vector<64x32xf32> -> vector<64x32xf32>
    %641 = arith.addf %634, %640 : vector<64x32xf32>
    %642 = vector.extract_strided_slice %593 {offsets = [2, 1, 0], sizes = [8, 8, 32], strides = [1, 1, 1]} : vector<10x10x32xf32> to vector<8x8x32xf32>
    %643 = vector.shape_cast %642 : vector<8x8x32xf32> to vector<64x32xf32>
    %644 = arith.truncf %643 : vector<64x32xf32> to vector<64x32xbf16>
    %c1_253 = arith.constant 1 : index
    %c224_254 = arith.constant 224 : index
    %c0_255 = arith.constant 0 : index
    %645 = vector.load %arg11[%c1_253, %c224_254, %c0_255] : memref<2x288x32xbf16, #tpu.memory_space<vmem>>, vector<1x32x32xbf16>
    %646 = vector.shape_cast %645 : vector<1x32x32xbf16> to vector<32x32xbf16>
    %cst_256 = arith.constant dense<0.000000e+00> : vector<64x32xf32>
    %647 = tpu.matmul %644, %646, %cst_256 {dimension_numbers = #tpu.dot_dimension_numbers<[1], [0], [0], [1], [0, 0, 1, 1], [], []>} : vector<64x32xbf16>, vector<32x32xbf16>, vector<64x32xf32> -> vector<64x32xf32>
    %648 = arith.addf %641, %647 : vector<64x32xf32>
    %649 = vector.extract_strided_slice %593 {offsets = [2, 2, 0], sizes = [8, 8, 32], strides = [1, 1, 1]} : vector<10x10x32xf32> to vector<8x8x32xf32>
    %650 = vector.shape_cast %649 : vector<8x8x32xf32> to vector<64x32xf32>
    %651 = arith.truncf %650 : vector<64x32xf32> to vector<64x32xbf16>
    %c1_257 = arith.constant 1 : index
    %c256_258 = arith.constant 256 : index
    %c0_259 = arith.constant 0 : index
    %652 = vector.load %arg11[%c1_257, %c256_258, %c0_259] : memref<2x288x32xbf16, #tpu.memory_space<vmem>>, vector<1x32x32xbf16>
    %653 = vector.shape_cast %652 : vector<1x32x32xbf16> to vector<32x32xbf16>
    %cst_260 = arith.constant dense<0.000000e+00> : vector<64x32xf32>
    %654 = tpu.matmul %651, %653, %cst_260 {dimension_numbers = #tpu.dot_dimension_numbers<[1], [0], [0], [1], [0, 0, 1, 1], [], []>} : vector<64x32xbf16>, vector<32x32xbf16>, vector<64x32xf32> -> vector<64x32xf32>
    %655 = arith.addf %648, %654 : vector<64x32xf32>
    %656 = vector.extract_strided_slice %11 {offsets = [20, 0], sizes = [1, 32], strides = [1, 1]} : vector<21x32xf32> to vector<1x32xf32>
    %657 = vector.broadcast %656 : vector<1x32xf32> to vector<64x32xf32>
    %658 = arith.addf %655, %657 : vector<64x32xf32>
    %cst_261 = arith.constant dense<0.000000e+00> : vector<32xf32>
    %659 = vector.multi_reduction <add>, %658, %cst_261 [0] : vector<64x32xf32> to vector<32xf32>
    %660 = vector.shape_cast %659 : vector<32xf32> to vector<1x32xf32>
    %cst_262 = arith.constant 6.400000e+01 : f32
    %661 = vector.broadcast %cst_262 : f32 to vector<1x32xf32>
    %662 = arith.divf %660, %661 : vector<1x32xf32>
    %cst_263 = arith.constant 0.000000e+00 : f32
    %663 = vector.broadcast %cst_263 : f32 to vector<1x1xf32>
    %664 = tpu.concatenate %663, %662, %663 in 1 : vector<1x1xf32>, vector<1x32xf32>, vector<1x1xf32> -> vector<1x34xf32>
    %cst_264 = arith.constant dense<0.000000e+00> : vector<1x32xf32>
    %665 = tpu.matmul %664, %348, %cst_264 {dimension_numbers = #tpu.dot_dimension_numbers<[1], [0], [0], [1], [0, 0, 1, 1], [], []>} : vector<1x34xf32>, vector<34x32xf32>, vector<1x32xf32> -> vector<1x32xf32>
    %666 = arith.negf %665 : vector<1x32xf32>
    %667 = math.exp %666 : vector<1x32xf32>
    %cst_265 = arith.constant 1.000000e+00 : f32
    %668 = vector.broadcast %cst_265 : f32 to vector<1x32xf32>
    %669 = arith.addf %668, %667 : vector<1x32xf32>
    %670 = arith.divf %668, %669 : vector<1x32xf32>
    %671 = vector.broadcast %670 : vector<1x32xf32> to vector<64x32xf32>
    %672 = arith.mulf %658, %671 : vector<64x32xf32>
    %673 = arith.addf %672, %514 : vector<64x32xf32>
    %c1_266 = arith.constant 1 : index
    %c0_267 = arith.constant 0 : index
    %c0_268 = arith.constant 0 : index
    %674 = vector.load %arg14[%c1_266, %c0_267, %c0_268] : memref<2x64x32xf32, #tpu.memory_space<vmem>>, vector<1x64x32xf32>
    %675 = vector.shape_cast %674 : vector<1x64x32xf32> to vector<64x32xf32>
    %676 = vector.shape_cast %673 : vector<64x32xf32> to vector<1x64x32xf32>
    tpu.vector_store %arg14[%c1_266, %c0_267, %c0_268], %676 {strides = array<i32>} : memref<2x64x32xf32, #tpu.memory_space<vmem>>, vector<1x64x32xf32>,
    return
  }
  func.func @transform_0(%arg0: i32) -> (i32, i32, i32) {
    %c0_i32 = arith.constant 0 : i32
    %c0_i32_0 = arith.constant 0 : i32
    %c0_i32_1 = arith.constant 0 : i32
    return %arg0, %c0_i32, %c0_i32_0 : i32, i32, i32
  }
  func.func @transform_1(%arg0: i32) -> (i32, i32, i32) {
    %c0_i32 = arith.constant 0 : i32
    %c0_i32_0 = arith.constant 0 : i32
    %c0_i32_1 = arith.constant 0 : i32
    return %arg0, %c0_i32, %c0_i32_0 : i32, i32, i32
  }
  func.func @transform_2(%arg0: i32) -> (i32, i32, i32) {
    %c0_i32 = arith.constant 0 : i32
    %c0_i32_0 = arith.constant 0 : i32
    %c0_i32_1 = arith.constant 0 : i32
    return %arg0, %c0_i32, %c0_i32_0 : i32, i32, i32
  }
  func.func @transform_3(%arg0: i32) -> (i32, i32, i32) {
    %c0_i32 = arith.constant 0 : i32
    %c0_i32_0 = arith.constant 0 : i32
    %c0_i32_1 = arith.constant 0 : i32
    return %arg0, %c0_i32, %c0_i32_0 : i32, i32, i32
  }
  func.func @transform_4(%arg0: i32) -> (i32, i32, i32, i32) {
    %c0_i32 = arith.constant 0 : i32
    %c0_i32_0 = arith.constant 0 : i32
    %c0_i32_1 = arith.constant 0 : i32
    %c0_i32_2 = arith.constant 0 : i32
    return %arg0, %c0_i32, %c0_i32_0, %c0_i32_1 : i32, i32, i32, i32
  }
  func.func @transform_5(%arg0: i32) -> (i32, i32) {
    %c0_i32 = arith.constant 0 : i32
    %c0_i32_0 = arith.constant 0 : i32
    %c0_i32_1 = arith.constant 0 : i32
    return %c0_i32, %c0_i32_0 : i32, i32
  }
  func.func @transform_6(%arg0: i32) -> (i32, i32, i32) {
    %c0_i32 = arith.constant 0 : i32
    %c0_i32_0 = arith.constant 0 : i32
    %c0_i32_1 = arith.constant 0 : i32
    %c0_i32_2 = arith.constant 0 : i32
    return %c0_i32, %c0_i32_0, %c0_i32_1 : i32, i32, i32
  }
  func.func @transform_7(%arg0: i32) -> (i32, i32) {
    %c0_i32 = arith.constant 0 : i32
    %c0_i32_0 = arith.constant 0 : i32
    %c0_i32_1 = arith.constant 0 : i32
    return %c0_i32, %c0_i32_0 : i32, i32
  }
  func.func @transform_8(%arg0: i32) -> (i32, i32) {
    %c0_i32 = arith.constant 0 : i32
    %c0_i32_0 = arith.constant 0 : i32
    %c0_i32_1 = arith.constant 0 : i32
    return %c0_i32, %c0_i32_0 : i32, i32
  }
  func.func @transform_9(%arg0: i32) -> (i32, i32) {
    %c0_i32 = arith.constant 0 : i32
    %c0_i32_0 = arith.constant 0 : i32
    %c0_i32_1 = arith.constant 0 : i32
    return %c0_i32, %c0_i32_0 : i32, i32
  }
  func.func @transform_10(%arg0: i32) -> (i32, i32, i32) {
    %c0_i32 = arith.constant 0 : i32
    %c0_i32_0 = arith.constant 0 : i32
    %c0_i32_1 = arith.constant 0 : i32
    %c0_i32_2 = arith.constant 0 : i32
    return %c0_i32, %c0_i32_0, %c0_i32_1 : i32, i32, i32
  }
  func.func @transform_11(%arg0: i32) -> (i32, i32) {
    %c0_i32 = arith.constant 0 : i32
    %c0_i32_0 = arith.constant 0 : i32
    %c0_i32_1 = arith.constant 0 : i32
    return %c0_i32, %c0_i32_0 : i32, i32
  }
  func.func @transform_12(%arg0: i32) -> (i32, i32, i32) {
    %c0_i32 = arith.constant 0 : i32
    %c0_i32_0 = arith.constant 0 : i32
    %c0_i32_1 = arith.constant 0 : i32
    return %arg0, %c0_i32, %c0_i32_0 : i32, i32, i32
  }
  func.func @transform_13(%arg0: i32) -> (i32, i32, i32) {
    %c0_i32 = arith.constant 0 : i32
    %c0_i32_0 = arith.constant 0 : i32
    %c0_i32_1 = arith.constant 0 : i32
    return %arg0, %c0_i32, %c0_i32_0 : i32, i32, i32
  }
  func.func @transform_14(%arg0: i32) -> (i32, i32, i32, i32) {
    %c0_i32 = arith.constant 0 : i32
    %c0_i32_0 = arith.constant 0 : i32
    %c0_i32_1 = arith.constant 0 : i32
    %c0_i32_2 = arith.constant 0 : i32
    return %arg0, %c0_i32, %c0_i32_0, %c0_i32_1 : i32, i32, i32, i32
  }
  func.func @transform_15(%arg0: i32) -> (i32, i32, i32, i32) {
    %c0_i32 = arith.constant 0 : i32
    %c0_i32_0 = arith.constant 0 : i32
    %c0_i32_1 = arith.constant 0 : i32
    %c0_i32_2 = arith.constant 0 : i32
    return %arg0, %c0_i32, %c0_i32_0, %c0_i32_1 : i32, i32, i32, i32
  }
}

</mosaic_0001>

<llo_original>
// kernel: query_transformer_block.1
$region0: #{query_transformer_block.1}
  #allocation0 [shape = 'u32[]', space=smem, size = 0x4, offset = 0x4, fixed_abs, tag = 'smem constant byte address 0x4 - core index']
  #allocation1 [shape = 'u32[144,128]{1,0:T(1,128)}', space=vmem, size = 0x12000, scoped, tag = 'internal scratch']
  %s0 = inlined_call_operand.hbm [shape: f32[2,8,32], index: 0, kind: input, shape index: {}]
  %s1 = inlined_call_operand.hbm [shape: f32[2,64,32], index: 1, kind: input, shape index: {}]
  %s2 = inlined_call_operand.hbm [shape: f32[2,8,32], index: 2, kind: input, shape index: {}]
  %s3 = inlined_call_operand.hbm [shape: f32[2,64,32], index: 3, kind: input, shape index: {}]
  %s4 = inlined_call_operand.hbm [shape: bf16[2,2,8,64], index: 4, kind: input, shape index: {}]
  %s5 = inlined_call_operand.hbm [shape: f32[21,32], index: 5, kind: input, shape index: {}]
  %s6 = inlined_call_operand.hbm [shape: bf16[12,32,32], index: 6, kind: input, shape index: {}]
  %s7 = inlined_call_operand.hbm [shape: bf16[32,64], index: 7, kind: input, shape index: {}]
  %s8 = inlined_call_operand.hbm [shape: f32[1,64], index: 8, kind: input, shape index: {}]
  %s9 = inlined_call_operand.hbm [shape: bf16[64,32], index: 9, kind: input, shape index: {}]
  %s10 = inlined_call_operand.hbm [shape: bf16[2,288,32], index: 10, kind: input, shape index: {}]
  %s11 = inlined_call_operand.hbm [shape: f32[34,32], index: 11, kind: input, shape index: {}]
  %s12 = inlined_call_operand.hbm [shape: f32[2,8,32], index: 12, kind: output, shape index: {0}]
  %s13 = inlined_call_operand.hbm [shape: f32[2,64,32], index: 13, kind: output, shape index: {1}]
  %s14 = inlined_call_operand.hbm [shape: f32[2,2,8,64], index: 14, kind: output, shape index: {2}]
  %s15 = inlined_call_operand.hbm [shape: f32[2,2,8,64], index: 15, kind: output, shape index: {3}]
  %16 = xla_tuple %s12, %s13, %s14, %s15
  %s17 = sld [smem:[#allocation0]]
  $region130: #{query_transformer_block.1} parent=0
    _
  %s19 = ssub.s32 1, %s17
  %s20 = scalar_select 0, %s19, %s17
  $region1: #{query_transformer_block.1} parent=0
    #allocation2 [shape = 'u8[8192]{0}', space=vmem, size = 0x2000, scoped, tag = 'input window, operand 0, single buffered']
    #allocation3 [shape = 's32[1]{0}', space=sflag, size = 0x4, scoped, tag = 'scoped memory for query_transformer_block.1']
    #allocation4 [shape = 's32[1]{0}', space=sflag, size = 0x4, scoped, tag = 'scoped memory for query_transformer_block.1']
    #allocation5 [shape = 'u8[65536]{0}', space=vmem, size = 0x10000, scoped, tag = 'input window, operand 1, single buffered']
    #allocation6 [shape = 's32[1]{0}', space=sflag, size = 0x4, scoped, tag = 'scoped memory for query_transformer_block.1']
    #allocation7 [shape = 'u8[8192]{0}', space=vmem, size = 0x2000, scoped, tag = 'input window, operand 2, single buffered']
    #allocation8 [shape = 'u8[65536]{0}', space=vmem, size = 0x10000, scoped, tag = 'input window, operand 3, single buffered']
    #allocation9 [shape = 's32[1]{0}', space=sflag, size = 0x4, scoped, tag = 'scoped memory for query_transformer_block.1']
    #allocation10 [shape = 'u8[8192]{0}', space=vmem, size = 0x2000, scoped, tag = 'input window, operand 4, single buffered']
    #allocation11 [shape = 'u8[12288]{0}', space=vmem, size = 0x3000, scoped, tag = 'input window, operand 5, single buffered']
    #allocation12 [shape = 's32[1]{0}', space=sflag, size = 0x4, scoped, tag = 'scoped memory for query_transformer_block.1']
    #allocation13 [shape = 'u8[98304]{0}', space=vmem, size = 0x18000, scoped, tag = 'input window, operand 6, single buffered']
    #allocation14 [shape = 'u8[8192]{0}', space=vmem, size = 0x2000, scoped, tag = 'input window, operand 7, single buffered']
    #allocation15 [shape = 's32[1]{0}', space=sflag, size = 0x4, scoped, tag = 'scoped memory for query_transformer_block.1']
    #allocation16 [shape = 'u8[512]{0}', space=vmem, size = 0x400, scoped, tag = 'input window, operand 8, single buffered']
    #allocation17 [shape = 'u8[16384]{0}', space=vmem, size = 0x4000, scoped, tag = 'input window, operand 9, single buffered']
    #allocation18 [shape = 's32[1]{0}', space=sflag, size = 0x4, scoped, tag = 'scoped memory for query_transformer_block.1']
    #allocation19 [shape = 'u8[147456]{0}', space=vmem, size = 0x24000, scoped, tag = 'input window, operand 10, single buffered']
    #allocation20 [shape = 'u8[20480]{0}', space=vmem, size = 0x5000, scoped, tag = 'input window, operand 11, single buffered']
    #allocation21 [shape = 's32[1]{0}', space=sflag, size = 0x4, scoped, tag = 'scoped memory for query_transformer_block.1']
    #allocation22 [shape = 'u8[8192]{0}', space=vmem, size = 0x2000, scoped, tag = 'output window, operand 0, single buffered']
    #allocation23 [shape = 'u8[65536]{0}', space=vmem, size = 0x10000, scoped, tag = 'output window, operand 1, single buffered']
    #allocation24 [shape = 's32[1]{0}', space=sflag, size = 0x4, scoped, tag = 'scoped memory for query_transformer_block.1']
    #allocation25 [shape = 'u8[16384]{0}', space=vmem, size = 0x4000, scoped, tag = 'output window, operand 2, single buffered']
    #allocation26 [shape = 'u8[16384]{0}', space=vmem, size = 0x4000, scoped, tag = 'output window, operand 3, single buffered']
    #allocation27 [shape = 's32[1]{0}', space=sflag, size = 0x4, scoped, tag = 'scoped memory for query_transformer_block.1']
    %21 = vsyncpa [#allocation3], 0
    %22 = vsyncpa [#allocation6], 0
    %23 = vsyncpa [#allocation9], 0
    %24 = vsyncpa [#allocation12], 0
    %25 = vsyncpa [#allocation15], 0
    %26 = vsyncpa [#allocation18], 0
    %27 = vsyncpa [#allocation21], 0
    %28 = vsyncpa [#allocation4], 0
    %29 = vsyncpa [#allocation24], 0
    %30 = vsyncpa [#allocation27], 0
    // Predicated region
    $region2: #{query_transformer_block.1} parent=1 // pred_check
      _
    $region3: #{query_transformer_block.1} parent=1 // pred_check_branch
      %32 = sbr.rel (0) target = $region5
    $region4: #{query_transformer_block.1} parent=1 // pred_region
      %s34 = ssub.s32 256, 256
      %35 = vsyncadd [#allocation3], %s34
      %s36 = sshll.u32 [#allocation2], 4
      %s37 = int_to_ptr.vmem [resolvable:$true] %s36
      %42 = dma.hbm_to_vmem [thread:$0]  %s0, 256, %s37, [#allocation3], 128, 128, 8
    $region5: #{query_transformer_block.1} parent=1 // pred_fallthru
      _
    // Predicated region
    $region6: #{query_transformer_block.1} parent=1 // pred_check
      _
    $region7: #{query_transformer_block.1} parent=1 // pred_check_branch
      %44 = sbr.rel (0) target = $region9
    $region8: #{query_transformer_block.1} parent=1 // pred_region
      %s46 = ssub.s32 2048, 2048
      %47 = vsyncadd [#allocation6], %s46
      %s48 = sshll.u32 [#allocation5], 4
      %s49 = int_to_ptr.vmem [resolvable:$true] %s48
      %54 = dma.hbm_to_vmem [thread:$0]  %s1, 2048, %s49, [#allocation6], 128, 128, 8
    $region9: #{query_transformer_block.1} parent=1 // pred_fallthru
      _
    // Predicated region
    $region10: #{query_transformer_block.1} parent=1 // pred_check
      _
    $region11: #{query_transformer_block.1} parent=1 // pred_check_branch
      %56 = sbr.rel (0) target = $region13
    $region12: #{query_transformer_block.1} parent=1 // pred_region
      %s58 = ssub.s32 256, 256
      %59 = vsyncadd [#allocation6], %s58
      %s60 = sshll.u32 [#allocation7], 4
      %s61 = int_to_ptr.vmem [resolvable:$true] %s60
      %66 = dma.hbm_to_vmem [thread:$0]  %s2, 256, %s61, [#allocation6], 128, 128, 8
    $region13: #{query_transformer_block.1} parent=1 // pred_fallthru
      _
    // Predicated region
    $region14: #{query_transformer_block.1} parent=1 // pred_check
      _
    $region15: #{query_transformer_block.1} parent=1 // pred_check_branch
      %68 = sbr.rel (0) target = $region17
    $region16: #{query_transformer_block.1} parent=1 // pred_region
      %s70 = ssub.s32 2048, 2048
      %71 = vsyncadd [#allocation9], %s70
      %s72 = sshll.u32 [#allocation8], 4
      %s73 = int_to_ptr.vmem [resolvable:$true] %s72
      %78 = dma.hbm_to_vmem [thread:$0]  %s3, 2048, %s73, [#allocation9], 128, 128, 8
    $region17: #{query_transformer_block.1} parent=1 // pred_fallthru
      _
    // Predicated region
    $region18: #{query_transformer_block.1} parent=1 // pred_check
      _
    $region19: #{query_transformer_block.1} parent=1 // pred_check_branch
      %80 = sbr.rel (0) target = $region21
    $region20: #{query_transformer_block.1} parent=1 // pred_region
      %s82 = ssub.s32 256, 256
      %83 = vsyncadd [#allocation9], %s82
      %s84 = sshll.u32 [#allocation10], 4
      %s85 = int_to_ptr.vmem [resolvable:$true] %s84
      %90 = dma.hbm_to_vmem [thread:$0]  %s4, 256, %s85, [#allocation9], 64, 64, 4
    $region21: #{query_transformer_block.1} parent=1 // pred_fallthru
      _
    // Predicated region
    $region22: #{query_transformer_block.1} parent=1 // pred_check
      _
    $region23: #{query_transformer_block.1} parent=1 // pred_check_branch
      %92 = sbr.rel (0) target = $region25
    $region24: #{query_transformer_block.1} parent=1 // pred_region
      %s94 = ssub.s32 384, 384
      %95 = vsyncadd [#allocation12], %s94
      %s96 = sshll.u32 [#allocation11], 4
      %s97 = int_to_ptr.vmem [resolvable:$true] %s96
      %102 = dma.hbm_to_vmem [thread:$0]  %s5, 384, %s97, [#allocation12], 128, 128, 8
    $region25: #{query_transformer_block.1} parent=1 // pred_fallthru
      _
    // Predicated region
    $region26: #{query_transformer_block.1} parent=1 // pred_check
      _
    $region27: #{query_transformer_block.1} parent=1 // pred_check_branch
      %104 = sbr.rel (0) target = $region29
    $region28: #{query_transformer_block.1} parent=1 // pred_region
      %s106 = ssub.s32 3072, 3072
      %107 = vsyncadd [#allocation12], %s106
      %s108 = sshll.u32 [#allocation13], 4
      %s109 = int_to_ptr.vmem [resolvable:$true] %s108
      %114 = dma.hbm_to_vmem [thread:$0]  %s6, 3072, %s109, [#allocation12], 64, 64, 4
    $region29: #{query_transformer_block.1} parent=1 // pred_fallthru
      _
    // Predicated region
    $region30: #{query_transformer_block.1} parent=1 // pred_check
      _
    $region31: #{query_transformer_block.1} parent=1 // pred_check_branch
      %116 = sbr.rel (0) target = $region33
    $region32: #{query_transformer_block.1} parent=1 // pred_region
      %s118 = ssub.s32 256, 256
      %119 = vsyncadd [#allocation15], %s118
      %s120 = sshll.u32 [#allocation14], 4
      %s121 = int_to_ptr.vmem [resolvable:$true] %s120
      %126 = dma.hbm_to_vmem [thread:$0]  %s7, 256, %s121, [#allocation15], 64, 64, 4
    $region33: #{query_transformer_block.1} parent=1 // pred_fallthru
      _
    // Predicated region
    $region34: #{query_transformer_block.1} parent=1 // pred_check
      _
    $region35: #{query_transformer_block.1} parent=1 // pred_check_branch
      %128 = sbr.rel (0) target = $region37
    $region36: #{query_transformer_block.1} parent=1 // pred_region
      %s130 = ssub.s32 16, 16
      %131 = vsyncadd [#allocation15], %s130
      %s133 = sshll.u32 [#allocation16], 4
      %s134 = int_to_ptr.vmem [resolvable:$true] %s133
      %136 = dma.hbm_to_vmem [thread:$0]  %s8, 16, %s134, [#allocation15]
    $region37: #{query_transformer_block.1} parent=1 // pred_fallthru
      _
    // Predicated region
    $region38: #{query_transformer_block.1} parent=1 // pred_check
      _
    $region39: #{query_transformer_block.1} parent=1 // pred_check_branch
      %138 = sbr.rel (0) target = $region41
    $region40: #{query_transformer_block.1} parent=1 // pred_region
      %s140 = ssub.s32 512, 512
      %141 = vsyncadd [#allocation18], %s140
      %s142 = sshll.u32 [#allocation17], 4
      %s143 = int_to_ptr.vmem [resolvable:$true] %s142
      %148 = dma.hbm_to_vmem [thread:$0]  %s9, 512, %s143, [#allocation18], 64, 64, 4
    $region41: #{query_transformer_block.1} parent=1 // pred_fallthru
      _
    // Predicated region
    $region42: #{query_transformer_block.1} parent=1 // pred_check
      _
    $region43: #{query_transformer_block.1} parent=1 // pred_check_branch
      %150 = sbr.rel (0) target = $region45
    $region44: #{query_transformer_block.1} parent=1 // pred_region
      %s152 = ssub.s32 4608, 4608
      %153 = vsyncadd [#allocation18], %s152
      %s154 = sshll.u32 [#allocation19], 4
      %s155 = int_to_ptr.vmem [resolvable:$true] %s154
      %160 = dma.hbm_to_vmem [thread:$0]  %s10, 4608, %s155, [#allocation18], 64, 64, 4
    $region45: #{query_transformer_block.1} parent=1 // pred_fallthru
      _
    // Predicated region
    $region46: #{query_transformer_block.1} parent=1 // pred_check
      _
    $region47: #{query_transformer_block.1} parent=1 // pred_check_branch
      %162 = sbr.rel (0) target = $region49
    $region48: #{query_transformer_block.1} parent=1 // pred_region
      %s164 = ssub.s32 640, 640
      %165 = vsyncadd [#allocation21], %s164
      %s166 = sshll.u32 [#allocation20], 4
      %s167 = int_to_ptr.vmem [resolvable:$true] %s166
      %172 = dma.hbm_to_vmem [thread:$0]  %s11, 640, %s167, [#allocation21], 128, 128, 8
    $region49: #{query_transformer_block.1} parent=1 // pred_fallthru
      _
    // Predicated region
    $region50: #{query_transformer_block.1} parent=1 // pred_check
      _
    $region51: #{query_transformer_block.1} parent=1 // pred_check_branch
      %174 = sbr.rel (0) target = $region53
    $region52: #{query_transformer_block.1} parent=1 // pred_region
      %175 = dma.done [#allocation3], 256
    $region53: #{query_transformer_block.1} parent=1 // pred_fallthru
      _
    // Predicated region
    $region54: #{query_transformer_block.1} parent=1 // pred_check
      _
    $region55: #{query_transformer_block.1} parent=1 // pred_check_branch
      %177 = sbr.rel (0) target = $region57
    $region56: #{query_transformer_block.1} parent=1 // pred_region
      %178 = dma.done [#allocation6], 2048
    $region57: #{query_transformer_block.1} parent=1 // pred_fallthru
      _
    // Predicated region
    $region58: #{query_transformer_block.1} parent=1 // pred_check
      _
    $region59: #{query_transformer_block.1} parent=1 // pred_check_branch
      %180 = sbr.rel (0) target = $region61
    $region60: #{query_transformer_block.1} parent=1 // pred_region
      %181 = dma.done [#allocation6], 256
    $region61: #{query_transformer_block.1} parent=1 // pred_fallthru
      _
    // Predicated region
    $region62: #{query_transformer_block.1} parent=1 // pred_check
      _
    $region63: #{query_transformer_block.1} parent=1 // pred_check_branch
      %183 = sbr.rel (0) target = $region65
    $region64: #{query_transformer_block.1} parent=1 // pred_region
      %184 = dma.done [#allocation9], 2048
    $region65: #{query_transformer_block.1} parent=1 // pred_fallthru
      _
    // Predicated region
    $region66: #{query_transformer_block.1} parent=1 // pred_check
      _
    $region67: #{query_transformer_block.1} parent=1 // pred_check_branch
      %186 = sbr.rel (0) target = $region69
    $region68: #{query_transformer_block.1} parent=1 // pred_region
      %187 = dma.done [#allocation9], 256
    $region69: #{query_transformer_block.1} parent=1 // pred_fallthru
      _
    // Predicated region
    $region70: #{query_transformer_block.1} parent=1 // pred_check
      _
    $region71: #{query_transformer_block.1} parent=1 // pred_check_branch
      %189 = sbr.rel (0) target = $region73
    $region72: #{query_transformer_block.1} parent=1 // pred_region
      %190 = dma.done [#allocation12], 384
    $region73: #{query_transformer_block.1} parent=1 // pred_fallthru
      _
    // Predicated region
    $region74: #{query_transformer_block.1} parent=1 // pred_check
      _
    $region75: #{query_transformer_block.1} parent=1 // pred_check_branch
      %192 = sbr.rel (0) target = $region77
    $region76: #{query_transformer_block.1} parent=1 // pred_region
      %193 = dma.done [#allocation12], 3072
    $region77: #{query_transformer_block.1} parent=1 // pred_fallthru
      _
    // Predicated region
    $region78: #{query_transformer_block.1} parent=1 // pred_check
      _
    $region79: #{query_transformer_block.1} parent=1 // pred_check_branch
      %195 = sbr.rel (0) target = $region81
    $region80: #{query_transformer_block.1} parent=1 // pred_region
      %196 = dma.done [#allocation15], 256
    $region81: #{query_transformer_block.1} parent=1 // pred_fallthru
      _
    // Predicated region
    $region82: #{query_transformer_block.1} parent=1 // pred_check
      _
    $region83: #{query_transformer_block.1} parent=1 // pred_check_branch
      %198 = sbr.rel (0) target = $region85
    $region84: #{query_transformer_block.1} parent=1 // pred_region
      %199 = dma.done [#allocation15], 16
    $region85: #{query_transformer_block.1} parent=1 // pred_fallthru
      _
    // Predicated region
    $region86: #{query_transformer_block.1} parent=1 // pred_check
      _
    $region87: #{query_transformer_block.1} parent=1 // pred_check_branch
      %201 = sbr.rel (0) target = $region89
    $region88: #{query_transformer_block.1} parent=1 // pred_region
      %202 = dma.done [#allocation18], 512
    $region89: #{query_transformer_block.1} parent=1 // pred_fallthru
      _
    // Predicated region
    $region90: #{query_transformer_block.1} parent=1 // pred_check
      _
    $region91: #{query_transformer_block.1} parent=1 // pred_check_branch
      %204 = sbr.rel (0) target = $region93
    $region92: #{query_transformer_block.1} parent=1 // pred_region
      %205 = dma.done [#allocation18], 4608
    $region93: #{query_transformer_block.1} parent=1 // pred_fallthru
      _
    // Predicated region
    $region94: #{query_transformer_block.1} parent=1 // pred_check
      _
    $region95: #{query_transformer_block.1} parent=1 // pred_check_branch
      %207 = sbr.rel (0) target = $region97
    $region96: #{query_transformer_block.1} parent=1 // pred_region
      %208 = dma.done [#allocation21], 640
    $region97: #{query_transformer_block.1} parent=1 // pred_fallthru
      _
    %v210 = vld [vmem:[#allocation2] sm:$0xff]
    %v211 = vld [vmem:[#allocation2 + $0x8] sm:$0xff]
    %v212 = vld [vmem:[#allocation7] sm:$0xff]
    %v213 = vld [vmem:[#allocation7 + $0x8] sm:$0xff]
    %v214 = vld [vmem:[#allocation5] sm:$0xff]
    %v215 = vld [vmem:[#allocation5 + $0x8] sm:$0xff]
    %v216 = vld [vmem:[#allocation5 + $0x10] sm:$0xff]
    %v217 = vld [vmem:[#allocation5 + $0x18] sm:$0xff]
    %v218 = vld [vmem:[#allocation5 + $0x20] sm:$0xff]
    %v219 = vld [vmem:[#allocation5 + $0x28] sm:$0xff]
    %v220 = vld [vmem:[#allocation5 + $0x30] sm:$0xff]
    %v221 = vld [vmem:[#allocation5 + $0x38] sm:$0xff]
    %v222 = vld [vmem:[#allocation5 + $0x40] sm:$0xff]
    %v223 = vld [vmem:[#allocation5 + $0x48] sm:$0xff]
    %v224 = vld [vmem:[#allocation5 + $0x50] sm:$0xff]
    %v225 = vld [vmem:[#allocation5 + $0x58] sm:$0xff]
    %v226 = vld [vmem:[#allocation5 + $0x60] sm:$0xff]
    %v227 = vld [vmem:[#allocation5 + $0x68] sm:$0xff]
    %v228 = vld [vmem:[#allocation5 + $0x70] sm:$0xff]
    %v229 = vld [vmem:[#allocation5 + $0x78] sm:$0xff]
    %v230 = vld [vmem:[#allocation8] sm:$0xff]
    %v231 = vld [vmem:[#allocation8 + $0x8] sm:$0xff]
    %v232 = vld [vmem:[#allocation8 + $0x10] sm:$0xff]
    %v233 = vld [vmem:[#allocation8 + $0x18] sm:$0xff]
    %v234 = vld [vmem:[#allocation8 + $0x20] sm:$0xff]
    %v235 = vld [vmem:[#allocation8 + $0x28] sm:$0xff]
    %v236 = vld [vmem:[#allocation8 + $0x30] sm:$0xff]
    %v237 = vld [vmem:[#allocation8 + $0x38] sm:$0xff]
    %v238 = vld [vmem:[#allocation8 + $0x40] sm:$0xff]
    %v239 = vld [vmem:[#allocation8 + $0x48] sm:$0xff]
    %v240 = vld [vmem:[#allocation8 + $0x50] sm:$0xff]
    %v241 = vld [vmem:[#allocation8 + $0x58] sm:$0xff]
    %v242 = vld [vmem:[#allocation8 + $0x60] sm:$0xff]
    %v243 = vld [vmem:[#allocation8 + $0x68] sm:$0xff]
    %v244 = vld [vmem:[#allocation8 + $0x70] sm:$0xff]
    %v245 = vld [vmem:[#allocation8 + $0x78] sm:$0xff]
    %v246 = vld [vmem:[#allocation10] sm:$0xf]
    %v247 = vld [vmem:[#allocation10 + $0x4] sm:$0xf]
    %v248 = vld [vmem:[#allocation10 + $0x8] sm:$0xf]
    %v249 = vld [vmem:[#allocation10 + $0xc] sm:$0xf]
    %v250 = vunpack.c.l.bf16 %v246
    %v251 = vunpack.c.l.bf16 %v247
    %v252 = vunpack.c.l.bf16 %v248
    %v253 = vunpack.c.l.bf16 %v249
    %v254 = vld [vmem:[#allocation11] sm:$0xff]
    %v255 = vld [vmem:[#allocation11 + $0x8] sm:$0xff]
    %v256 = vld [vmem:[#allocation11 + $0x10] sm:$0x1f]
    %vm257 = vcmask 261120
    %v258 = vsel %vm257, %v210, 0.0
    %259 = vadd.xlane.f32.xlu0 %v258
    %v260 = vpop.xlane.xlu0 %259
    %v261 = vsel %vm257, %v211, 0.0
    %262 = vadd.xlane.f32.xlu0 %v261
    %v263 = vpop.xlane.xlu0 %262
    %v264 = vrcp.pop 32.0
    %v265 = vmul.f32 %v260, %v264
    %v266 = vmul.f32 %v263, %v264
    %v267 = vsub.f32 %v210, %v265
    %v268 = vsub.f32 %v211, %v266
    %v269 = vmul.f32 %v267, %v267
    %v270 = vmul.f32 %v268, %v268
    %v271 = vsel %vm257, %v269, 0.0
    %272 = vadd.xlane.f32.xlu0 %v271
    %v273 = vpop.xlane.xlu0 %272
    %v274 = vsel %vm257, %v270, 0.0
    %275 = vadd.xlane.f32.xlu0 %v274
    %v276 = vpop.xlane.xlu0 %275
    %v277 = vmul.f32 %v273, %v264
    %v278 = vmul.f32 %v276, %v264
    %v279 = vadd.f32 %v277, 1e-05
    %v280 = vadd.f32 %v278, 1e-05
    %v281 = vrsqrt.pop %v279
    %v282 = vrsqrt.pop %v280
    %v283 = vmul.f32 %v267, %v281
    %v284 = vmul.f32 %v268, %v282
    %v285 = vlaneseq
    %v286 = vshrl.u32 %v285, 7
    %v287 = vsub.s32 0, %v286
    %v288 = vrot.slane %v254, %v287
    %v289 = vmul.f32 %v283, %v288
    %v290 = vmul.f32 %v284, %v288
    %v291 = vlaneseq
    %v292 = vshrl.u32 %v291, 7
    %v293 = vsub.s32 1, %v292
    %v294 = vrot.slane %v254, %v293
    %v295 = vadd.f32 %v289, %v294
    %v296 = vadd.f32 %v290, %v294
    %v297 = vadd.f32 %v295, %v212
    %v298 = vadd.f32 %v296, %v213
    %v299 = vpack.c.bf16 %v298, %v297
    %v300 = vld [vmem:[#allocation13] sm:$0xf]
    %v301 = vld [vmem:[#allocation13 + $0x4] sm:$0xf]
    %v302 = vld [vmem:[#allocation13 + $0x8] sm:$0xf]
    %v303 = vld [vmem:[#allocation13 + $0xc] sm:$0xf]
    %v304 = vlaneseq
    %v305 = vshrl.u32 %v304, 7
    %v306 = vsub.s32 2, %v305
    %v307 = vrot.slane %v254, %v306
    %v312 = vunpack.c.l.b16 %v300
    %v313 = vunpack.c.l.b16 %v301
    %v314 = vunpack.c.l.b16 %v302
    %v315 = vunpack.c.l.b16 %v303
    %v316 = vpack.c.b16 %v313, %v312
    %v317 = vpack.c.b16 %v315, %v314
    %v321 = vsel %vm257, %v299, 0
    %323 = vmatprep.subr.bf16.mxu0 0
    %324 = vmatpush1.bf16.msra.mxu0 %v316
    %325 = vmatprep.subr.bf16.mxu0 0
    %326 = vmatpush1.bf16.msra.mxu0 %v317
    %327 = vmatprep.subr.bf16.mxu0 0
    %328 = vmatpush1.bf16.msra.mxu0 0
    %329 = vmatprep.subr.bf16.mxu0 0
    %330 = vmatpush1.bf16.msra.mxu0 0
    %331 = vmatprep.subr.bf16.mxu0 0
    %332 = vmatpush1.bf16.msra.mxu0 0
    %333 = vmatprep.subr.bf16.mxu0 0
    %334 = vmatpush1.bf16.msra.mxu0 0
    %335 = vmatprep.subr.bf16.mxu0 0
    %336 = vmatpush1.bf16.msra.mxu0 0
    %337 = vmatprep.subr.bf16.mxu0 0
    %338 = vmatpush1.bf16.msra.mxu0 0
    %339 = vmatprep.subr.bf16.mxu0 0
    %340 = vmatpush1.bf16.msra.mxu0 0
    %341 = vmatprep.subr.bf16.mxu0 0
    %342 = vmatpush1.bf16.msra.mxu0 0
    %343 = vmatprep.subr.bf16.mxu0 0
    %344 = vmatpush1.bf16.msra.mxu0 0
    %345 = vmatprep.subr.bf16.mxu0 0
    %346 = vmatpush1.bf16.msra.mxu0 0
    %347 = vmatprep.subr.bf16.mxu0 0
    %348 = vmatpush1.bf16.msra.mxu0 0
    %349 = vmatprep.subr.bf16.mxu0 0
    %350 = vmatpush1.bf16.msra.mxu0 0
    %351 = vmatprep.subr.bf16.mxu0 0
    %352 = vmatpush1.bf16.msra.mxu0 0
    %353 = vmatprep.subr.bf16.mxu0 0
    %354 = vmatpush1.bf16.msra.mxu0 0
    %355 = vmatprep.mubr.bf16.mxu0 0
    %356 = vmatmul.mubr.bf16.gmra.mrb[0].mxu0 %v321
    %v357 = vpop.f32.mrb[0].mxu0
    %v358 = vadd.f32 %v307, %v357
    %v359 = vpop.f32.mrb[0].mxu0
    %v360 = vpop.f32.mrb[0].mxu0
    %v361 = vadd.f32 %v307, %v360
    %v362 = vpop.f32.mrb[0].mxu0
    %363 = vdwg.mxu0
    %v364 = vadd.f32 %v214, %v230
    %v365 = vadd.f32 %v215, %v231
    %v366 = vadd.f32 %v216, %v232
    %v367 = vadd.f32 %v217, %v233
    %v368 = vadd.f32 %v218, %v234
    %v369 = vadd.f32 %v219, %v235
    %v370 = vadd.f32 %v220, %v236
    %v371 = vadd.f32 %v221, %v237
    %v372 = vadd.f32 %v222, %v238
    %v373 = vadd.f32 %v223, %v239
    %v374 = vadd.f32 %v224, %v240
    %v375 = vadd.f32 %v225, %v241
    %v376 = vadd.f32 %v226, %v242
    %v377 = vadd.f32 %v227, %v243
    %v378 = vadd.f32 %v228, %v244
    %v379 = vadd.f32 %v229, %v245
    %v380 = vpack.c.bf16 %v365, %v364
    %v381 = vpack.c.bf16 %v367, %v366
    %v382 = vpack.c.bf16 %v369, %v368
    %v383 = vpack.c.bf16 %v371, %v370
    %v384 = vpack.c.bf16 %v373, %v372
    %v385 = vpack.c.bf16 %v375, %v374
    %v386 = vpack.c.bf16 %v377, %v376
    %v387 = vpack.c.bf16 %v379, %v378
    %s388 = scalar_lea.vmem [#allocation13], 16
    %v389 = vld [vmem:[%s388] sm:$0xf]
    %v390 = vld [vmem:[%s388 + $0x4] sm:$0xf]
    %v391 = vld [vmem:[%s388 + $0x8] sm:$0xf]
    %v392 = vld [vmem:[%s388 + $0xc] sm:$0xf]
    %v393 = vlaneseq
    %v394 = vshrl.u32 %v393, 7
    %v395 = vsub.s32 3, %v394
    %v396 = vrot.slane %v254, %v395
    %v401 = vunpack.c.l.b16 %v389
    %v402 = vunpack.c.l.b16 %v390
    %v403 = vunpack.c.l.b16 %v391
    %v404 = vunpack.c.l.b16 %v392
    %v405 = vpack.c.b16 %v402, %v401
    %v406 = vpack.c.b16 %v404, %v403
    %v410 = vsel %vm257, %v380, 0
    %v413 = vsel %vm257, %v381, 0
    %v416 = vsel %vm257, %v382, 0
    %v419 = vsel %vm257, %v383, 0
    %v422 = vsel %vm257, %v384, 0
    %v425 = vsel %vm257, %v385, 0
    %v428 = vsel %vm257, %v386, 0
    %v431 = vsel %vm257, %v387, 0
    %433 = vmatprep.subr.bf16.mxu0 0
    %434 = vmatpush1.bf16.msra.mxu0 %v405
    %435 = vmatprep.subr.bf16.mxu0 0
    %436 = vmatpush1.bf16.msra.mxu0 %v406
    %437 = vmatprep.subr.bf16.mxu0 0
    %438 = vmatpush1.bf16.msra.mxu0 0
    %439 = vmatprep.subr.bf16.mxu0 0
    %440 = vmatpush1.bf16.msra.mxu0 0
    %441 = vmatprep.subr.bf16.mxu0 0
    %442 = vmatpush1.bf16.msra.mxu0 0
    %443 = vmatprep.subr.bf16.mxu0 0
    %444 = vmatpush1.bf16.msra.mxu0 0
    %445 = vmatprep.subr.bf16.mxu0 0
    %446 = vmatpush1.bf16.msra.mxu0 0
    %447 = vmatprep.subr.bf16.mxu0 0
    %448 = vmatpush1.bf16.msra.mxu0 0
    %449 = vmatprep.subr.bf16.mxu0 0
    %450 = vmatpush1.bf16.msra.mxu0 0
    %451 = vmatprep.subr.bf16.mxu0 0
    %452 = vmatpush1.bf16.msra.mxu0 0
    %453 = vmatprep.subr.bf16.mxu0 0
    %454 = vmatpush1.bf16.msra.mxu0 0
    %455 = vmatprep.subr.bf16.mxu0 0
    %456 = vmatpush1.bf16.msra.mxu0 0
    %457 = vmatprep.subr.bf16.mxu0 0
    %458 = vmatpush1.bf16.msra.mxu0 0
    %459 = vmatprep.subr.bf16.mxu0 0
    %460 = vmatpush1.bf16.msra.mxu0 0
    %461 = vmatprep.subr.bf16.mxu0 0
    %462 = vmatpush1.bf16.msra.mxu0 0
    %463 = vmatprep.subr.bf16.mxu0 0
    %464 = vmatpush1.bf16.msra.mxu0 0
    %465 = vmatprep.mubr.bf16.mxu0 0
    %466 = vmatmul.mubr.bf16.gmra.mrb[0].mxu0 %v410
    %v467 = vpop.f32.mrb[0].mxu0
    %v468 = vadd.f32 %v396, %v467
    %v469 = vpop.f32.mrb[0].mxu0
    %v470 = vpop.f32.mrb[0].mxu0
    %v471 = vadd.f32 %v396, %v470
    %v472 = vpop.f32.mrb[0].mxu0
    %473 = vmatprep.mubr.bf16.mxu0 0
    %474 = vmatmul.mubr.bf16.gmra.mrb[0].mxu0 %v413
    %v475 = vpop.f32.mrb[0].mxu0
    %v476 = vadd.f32 %v396, %v475
    %v477 = vpop.f32.mrb[0].mxu0
    %v478 = vpop.f32.mrb[0].mxu0
    %v479 = vadd.f32 %v396, %v478
    %v480 = vpop.f32.mrb[0].mxu0
    %481 = vmatprep.mubr.bf16.mxu0 0
    %482 = vmatmul.mubr.bf16.gmra.mrb[0].mxu0 %v416
    %v483 = vpop.f32.mrb[0].mxu0
    %v484 = vadd.f32 %v396, %v483
    %v485 = vpop.f32.mrb[0].mxu0
    %v486 = vpop.f32.mrb[0].mxu0
    %v487 = vadd.f32 %v396, %v486
    %v488 = vpop.f32.mrb[0].mxu0
    %489 = vmatprep.mubr.bf16.mxu0 0
    %490 = vmatmul.mubr.bf16.gmra.mrb[0].mxu0 %v419
    %v491 = vpop.f32.mrb[0].mxu0
    %v492 = vadd.f32 %v396, %v491
    %v493 = vpop.f32.mrb[0].mxu0
    %v494 = vpop.f32.mrb[0].mxu0
    %v495 = vadd.f32 %v396, %v494
    %v496 = vpop.f32.mrb[0].mxu0
    %497 = vmatprep.mubr.bf16.mxu0 0
    %498 = vmatmul.mubr.bf16.gmra.mrb[0].mxu0 %v422
    %v499 = vpop.f32.mrb[0].mxu0
    %v500 = vadd.f32 %v396, %v499
    %v501 = vpop.f32.mrb[0].mxu0
    %v502 = vpop.f32.mrb[0].mxu0
    %v503 = vadd.f32 %v396, %v502
    %v504 = vpop.f32.mrb[0].mxu0
    %505 = vmatprep.mubr.bf16.mxu0 0
    %506 = vmatmul.mubr.bf16.gmra.mrb[0].mxu0 %v425
    %v507 = vpop.f32.mrb[0].mxu0
    %v508 = vadd.f32 %v396, %v507
    %v509 = vpop.f32.mrb[0].mxu0
    %v510 = vpop.f32.mrb[0].mxu0
    %v511 = vadd.f32 %v396, %v510
    %v512 = vpop.f32.mrb[0].mxu0
    %513 = vmatprep.mubr.bf16.mxu0 0
    %514 = vmatmul.mubr.bf16.gmra.mrb[0].mxu0 %v428
    %v515 = vpop.f32.mrb[0].mxu0
    %v516 = vadd.f32 %v396, %v515
    %v517 = vpop.f32.mrb[0].mxu0
    %v518 = vpop.f32.mrb[0].mxu0
    %v519 = vadd.f32 %v396, %v518
    %v520 = vpop.f32.mrb[0].mxu0
    %521 = vmatprep.mubr.bf16.mxu0 0
    %522 = vmatmul.mubr.bf16.gmra.mrb[0].mxu0 %v431
    %v523 = vpop.f32.mrb[0].mxu0
    %v524 = vadd.f32 %v396, %v523
    %v525 = vpop.f32.mrb[0].mxu0
    %v526 = vpop.f32.mrb[0].mxu0
    %v527 = vadd.f32 %v396, %v526
    %v528 = vpop.f32.mrb[0].mxu0
    %529 = vdwg.mxu0
    %v530 = vpack.c.bf16 %v215, %v214
    %v531 = vpack.c.bf16 %v217, %v216
    %v532 = vpack.c.bf16 %v219, %v218
    %v533 = vpack.c.bf16 %v221, %v220
    %v534 = vpack.c.bf16 %v223, %v222
    %v535 = vpack.c.bf16 %v225, %v224
    %v536 = vpack.c.bf16 %v227, %v226
    %v537 = vpack.c.bf16 %v229, %v228
    %s538 = scalar_lea.vmem [#allocation13], 32
    %v539 = vld [vmem:[%s538] sm:$0xf]
    %v540 = vld [vmem:[%s538 + $0x4] sm:$0xf]
    %v541 = vld [vmem:[%s538 + $0x8] sm:$0xf]
    %v542 = vld [vmem:[%s538 + $0xc] sm:$0xf]
    %v543 = vlaneseq
    %v544 = vshrl.u32 %v543, 7
    %v545 = vsub.s32 4, %v544
    %v546 = vrot.slane %v254, %v545
    %v551 = vunpack.c.l.b16 %v539
    %v552 = vunpack.c.l.b16 %v540
    %v553 = vunpack.c.l.b16 %v541
    %v554 = vunpack.c.l.b16 %v542
    %v555 = vpack.c.b16 %v552, %v551
    %v556 = vpack.c.b16 %v554, %v553
    %v560 = vsel %vm257, %v530, 0
    %v563 = vsel %vm257, %v531, 0
    %v566 = vsel %vm257, %v532, 0
    %v569 = vsel %vm257, %v533, 0
    %v572 = vsel %vm257, %v534, 0
    %v575 = vsel %vm257, %v535, 0
    %v578 = vsel %vm257, %v536, 0
    %v581 = vsel %vm257, %v537, 0
    %583 = vmatprep.subr.bf16.mxu0 0
    %584 = vmatpush1.bf16.msra.mxu0 %v555
    %585 = vmatprep.subr.bf16.mxu0 0
    %586 = vmatpush1.bf16.msra.mxu0 %v556
    %587 = vmatprep.subr.bf16.mxu0 0
    %588 = vmatpush1.bf16.msra.mxu0 0
    %589 = vmatprep.subr.bf16.mxu0 0
    %590 = vmatpush1.bf16.msra.mxu0 0
    %591 = vmatprep.subr.bf16.mxu0 0
    %592 = vmatpush1.bf16.msra.mxu0 0
    %593 = vmatprep.subr.bf16.mxu0 0
    %594 = vmatpush1.bf16.msra.mxu0 0
    %595 = vmatprep.subr.bf16.mxu0 0
    %596 = vmatpush1.bf16.msra.mxu0 0
    %597 = vmatprep.subr.bf16.mxu0 0
    %598 = vmatpush1.bf16.msra.mxu0 0
    %599 = vmatprep.subr.bf16.mxu0 0
    %600 = vmatpush1.bf16.msra.mxu0 0
    %601 = vmatprep.subr.bf16.mxu0 0
    %602 = vmatpush1.bf16.msra.mxu0 0
    %603 = vmatprep.subr.bf16.mxu0 0
    %604 = vmatpush1.bf16.msra.mxu0 0
    %605 = vmatprep.subr.bf16.mxu0 0
    %606 = vmatpush1.bf16.msra.mxu0 0
    %607 = vmatprep.subr.bf16.mxu0 0
    %608 = vmatpush1.bf16.msra.mxu0 0
    %609 = vmatprep.subr.bf16.mxu0 0
    %610 = vmatpush1.bf16.msra.mxu0 0
    %611 = vmatprep.subr.bf16.mxu0 0
    %612 = vmatpush1.bf16.msra.mxu0 0
    %613 = vmatprep.subr.bf16.mxu0 0
    %614 = vmatpush1.bf16.msra.mxu0 0
    %615 = vmatprep.mubr.bf16.mxu0 0
    %616 = vmatmul.mubr.bf16.gmra.mrb[0].mxu0 %v560
    %v617 = vpop.f32.mrb[0].mxu0
    %v618 = vadd.f32 %v546, %v617
    %v619 = vpop.f32.mrb[0].mxu0
    %v620 = vpop.f32.mrb[0].mxu0
    %v621 = vadd.f32 %v546, %v620
    %v622 = vpop.f32.mrb[0].mxu0
    %623 = vmatprep.mubr.bf16.mxu0 0
    %624 = vmatmul.mubr.bf16.gmra.mrb[0].mxu0 %v563
    %v625 = vpop.f32.mrb[0].mxu0
    %v626 = vadd.f32 %v546, %v625
    %v627 = vpop.f32.mrb[0].mxu0
    %v628 = vpop.f32.mrb[0].mxu0
    %v629 = vadd.f32 %v546, %v628
    %v630 = vpop.f32.mrb[0].mxu0
    %631 = vmatprep.mubr.bf16.mxu0 0
    %632 = vmatmul.mubr.bf16.gmra.mrb[0].mxu0 %v566
    %v633 = vpop.f32.mrb[0].mxu0
    %v634 = vadd.f32 %v546, %v633
    %v635 = vpop.f32.mrb[0].mxu0
    %v636 = vpop.f32.mrb[0].mxu0
    %v637 = vadd.f32 %v546, %v636
    %v638 = vpop.f32.mrb[0].mxu0
    %639 = vmatprep.mubr.bf16.mxu0 0
    %640 = vmatmul.mubr.bf16.gmra.mrb[0].mxu0 %v569
    %v641 = vpop.f32.mrb[0].mxu0
    %v642 = vadd.f32 %v546, %v641
    %v643 = vpop.f32.mrb[0].mxu0
    %v644 = vpop.f32.mrb[0].mxu0
    %v645 = vadd.f32 %v546, %v644
    %v646 = vpop.f32.mrb[0].mxu0
    %647 = vmatprep.mubr.bf16.mxu0 0
    %648 = vmatmul.mubr.bf16.gmra.mrb[0].mxu0 %v572
    %v649 = vpop.f32.mrb[0].mxu0
    %v650 = vadd.f32 %v546, %v649
    %v651 = vpop.f32.mrb[0].mxu0
    %v652 = vpop.f32.mrb[0].mxu0
    %v653 = vadd.f32 %v546, %v652
    %v654 = vpop.f32.mrb[0].mxu0
    %655 = vmatprep.mubr.bf16.mxu0 0
    %656 = vmatmul.mubr.bf16.gmra.mrb[0].mxu0 %v575
    %v657 = vpop.f32.mrb[0].mxu0
    %v658 = vadd.f32 %v546, %v657
    %v659 = vpop.f32.mrb[0].mxu0
    %v660 = vpop.f32.mrb[0].mxu0
    %v661 = vadd.f32 %v546, %v660
    %v662 = vpop.f32.mrb[0].mxu0
    %663 = vmatprep.mubr.bf16.mxu0 0
    %664 = vmatmul.mubr.bf16.gmra.mrb[0].mxu0 %v578
    %v665 = vpop.f32.mrb[0].mxu0
    %v666 = vadd.f32 %v546, %v665
    %v667 = vpop.f32.mrb[0].mxu0
    %v668 = vpop.f32.mrb[0].mxu0
    %v669 = vadd.f32 %v546, %v668
    %v670 = vpop.f32.mrb[0].mxu0
    %671 = vmatprep.mubr.bf16.mxu0 0
    %672 = vmatmul.mubr.bf16.gmra.mrb[0].mxu0 %v581
    %v673 = vpop.f32.mrb[0].mxu0
    %v674 = vadd.f32 %v546, %v673
    %v675 = vpop.f32.mrb[0].mxu0
    %v676 = vpop.f32.mrb[0].mxu0
    %v677 = vadd.f32 %v546, %v676
    %v678 = vpop.f32.mrb[0].mxu0
    %679 = vdwg.mxu0
    %v680 = vpack.c.bf16 %v361, %v358
    %v682 = vunpack.c.l.b16 %v680
    %v683 = vunpack.c.h.b16 %v680
    %v684 = vpack.c.b16 %v682, %v682
    %v685 = vpack.c.b16 %v683, %v683
    %686 = vrot.lane.b32.xlu0 %v684, 112
    %v687 = vpop.permute.xlu0 %686
    %688 = vrot.lane.b32.xlu0 %v685, 112
    %v689 = vpop.permute.xlu0 %688
    %v690 = vpack.c.bf16 %v471, %v468
    %v691 = vpack.c.bf16 %v479, %v476
    %v692 = vpack.c.bf16 %v487, %v484
    %v693 = vpack.c.bf16 %v495, %v492
    %v694 = vpack.c.bf16 %v503, %v500
    %v695 = vpack.c.bf16 %v511, %v508
    %v696 = vpack.c.bf16 %v519, %v516
    %v697 = vpack.c.bf16 %v527, %v524
    %706 = vrot.lane.b32.xlu0 %v690, 112
    %v707 = vpop.permute.xlu0 %706
    %708 = vrot.lane.b32.xlu0 %v691, 112
    %v709 = vpop.permute.xlu0 %708
    %710 = vrot.lane.b32.xlu0 %v692, 112
    %v711 = vpop.permute.xlu0 %710
    %712 = vrot.lane.b32.xlu0 %v693, 112
    %v713 = vpop.permute.xlu0 %712
    %714 = vrot.lane.b32.xlu0 %v694, 112
    %v715 = vpop.permute.xlu0 %714
    %716 = vrot.lane.b32.xlu0 %v695, 112
    %v717 = vpop.permute.xlu0 %716
    %718 = vrot.lane.b32.xlu0 %v696, 112
    %v719 = vpop.permute.xlu0 %718
    %720 = vrot.lane.b32.xlu0 %v697, 112
    %v721 = vpop.permute.xlu0 %720
    %v722 = vpack.c.bf16 %v621, %v618
    %v723 = vpack.c.bf16 %v629, %v626
    %v724 = vpack.c.bf16 %v637, %v634
    %v725 = vpack.c.bf16 %v645, %v642
    %v726 = vpack.c.bf16 %v653, %v650
    %v727 = vpack.c.bf16 %v661, %v658
    %v728 = vpack.c.bf16 %v669, %v666
    %v729 = vpack.c.bf16 %v677, %v674
    %738 = vrot.lane.b32.xlu0 %v722, 112
    %v739 = vpop.permute.xlu0 %738
    %740 = vrot.lane.b32.xlu0 %v723, 112
    %v741 = vpop.permute.xlu0 %740
    %742 = vrot.lane.b32.xlu0 %v724, 112
    %v743 = vpop.permute.xlu0 %742
    %744 = vrot.lane.b32.xlu0 %v725, 112
    %v745 = vpop.permute.xlu0 %744
    %746 = vrot.lane.b32.xlu0 %v726, 112
    %v747 = vpop.permute.xlu0 %746
    %748 = vrot.lane.b32.xlu0 %v727, 112
    %v749 = vpop.permute.xlu0 %748
    %750 = vrot.lane.b32.xlu0 %v728, 112
    %v751 = vpop.permute.xlu0 %750
    %752 = vrot.lane.b32.xlu0 %v729, 112
    %v753 = vpop.permute.xlu0 %752
    %vm762 = vcmask 130048
    %v764 = vsel %vm762, %v684, 0
    %v767 = vsel %vm762, %v690, 0
    %v770 = vsel %vm762, %v691, 0
    %v773 = vsel %vm762, %v692, 0
    %v776 = vsel %vm762, %v693, 0
    %778 = vmatprep.subr.bf16.mxu0 0
    %779 = vmatpush1.bf16.xpose.msra.mxu0 %v767
    %780 = vmatprep.subr.bf16.mxu0 0
    %781 = vmatpush1.bf16.xpose.msra.mxu0 %v770
    %782 = vmatprep.subr.bf16.mxu0 0
    %783 = vmatpush1.bf16.xpose.msra.mxu0 %v773
    %784 = vmatprep.subr.bf16.mxu0 0
    %785 = vmatpush1.bf16.xpose.msra.mxu0 %v776
    %786 = vmatprep.subr.bf16.mxu0 0
    %787 = vmatpush1.bf16.xpose.msra.mxu0 0
    %788 = vmatprep.subr.bf16.mxu0 0
    %789 = vmatpush1.bf16.xpose.msra.mxu0 0
    %790 = vmatprep.subr.bf16.mxu0 0
    %791 = vmatpush1.bf16.xpose.msra.mxu0 0
    %792 = vmatprep.subr.bf16.mxu0 0
    %793 = vmatpush1.bf16.xpose.msra.mxu0 0
    %794 = vmatprep.subr.bf16.mxu0 0
    %795 = vmatpush1.bf16.xpose.msra.mxu0 0
    %796 = vmatprep.subr.bf16.mxu0 0
    %797 = vmatpush1.bf16.xpose.msra.mxu0 0
    %798 = vmatprep.subr.bf16.mxu0 0
    %799 = vmatpush1.bf16.xpose.msra.mxu0 0
    %800 = vmatprep.subr.bf16.mxu0 0
    %801 = vmatpush1.bf16.xpose.msra.mxu0 0
    %802 = vmatprep.subr.bf16.mxu0 0
    %803 = vmatpush1.bf16.xpose.msra.mxu0 0
    %804 = vmatprep.subr.bf16.mxu0 0
    %805 = vmatpush1.bf16.xpose.msra.mxu0 0
    %806 = vmatprep.subr.bf16.mxu0 0
    %807 = vmatpush1.bf16.xpose.msra.mxu0 0
    %808 = vmatprep.subr.bf16.mxu0 0
    %809 = vmatpush1.bf16.xpose.msra.mxu0 0
    %810 = vmatprep.mubr.bf16.mxu0 0
    %811 = vmatmul.mubr.bf16.gmra.mrb[0].mxu0 %v764
    %v812 = vpop.f32.mrb[0].mxu0
    %v813 = vadd.f32 %v250, %v812
    %v814 = vpop.f32.mrb[0].mxu0
    %v815 = vpop.f32.mrb[0].mxu0
    %v816 = vpop.f32.mrb[0].mxu0
    %817 = vdwg.mxu0
    %v819 = vsel %vm762, %v687, 0
    %v822 = vsel %vm762, %v707, 0
    %v825 = vsel %vm762, %v709, 0
    %v828 = vsel %vm762, %v711, 0
    %v831 = vsel %vm762, %v713, 0
    %833 = vmatprep.subr.bf16.mxu0 0
    %834 = vmatpush1.bf16.xpose.msra.mxu0 %v822
    %835 = vmatprep.subr.bf16.mxu0 0
    %836 = vmatpush1.bf16.xpose.msra.mxu0 %v825
    %837 = vmatprep.subr.bf16.mxu0 0
    %838 = vmatpush1.bf16.xpose.msra.mxu0 %v828
    %839 = vmatprep.subr.bf16.mxu0 0
    %840 = vmatpush1.bf16.xpose.msra.mxu0 %v831
    %841 = vmatprep.subr.bf16.mxu0 0
    %842 = vmatpush1.bf16.xpose.msra.mxu0 0
    %843 = vmatprep.subr.bf16.mxu0 0
    %844 = vmatpush1.bf16.xpose.msra.mxu0 0
    %845 = vmatprep.subr.bf16.mxu0 0
    %846 = vmatpush1.bf16.xpose.msra.mxu0 0
    %847 = vmatprep.subr.bf16.mxu0 0
    %848 = vmatpush1.bf16.xpose.msra.mxu0 0
    %849 = vmatprep.subr.bf16.mxu0 0
    %850 = vmatpush1.bf16.xpose.msra.mxu0 0
    %851 = vmatprep.subr.bf16.mxu0 0
    %852 = vmatpush1.bf16.xpose.msra.mxu0 0
    %853 = vmatprep.subr.bf16.mxu0 0
    %854 = vmatpush1.bf16.xpose.msra.mxu0 0
    %855 = vmatprep.subr.bf16.mxu0 0
    %856 = vmatpush1.bf16.xpose.msra.mxu0 0
    %857 = vmatprep.subr.bf16.mxu0 0
    %858 = vmatpush1.bf16.xpose.msra.mxu0 0
    %859 = vmatprep.subr.bf16.mxu0 0
    %860 = vmatpush1.bf16.xpose.msra.mxu0 0
    %861 = vmatprep.subr.bf16.mxu0 0
    %862 = vmatpush1.bf16.xpose.msra.mxu0 0
    %863 = vmatprep.subr.bf16.mxu0 0
    %864 = vmatpush1.bf16.xpose.msra.mxu0 0
    %865 = vmatprep.mubr.bf16.mxu0 0
    %866 = vmatmul.mubr.bf16.gmra.mrb[0].mxu0 %v819
    %v867 = vpop.f32.mrb[0].mxu0
    %v868 = vadd.f32 %v251, %v867
    %v869 = vpop.f32.mrb[0].mxu0
    %v870 = vpop.f32.mrb[0].mxu0
    %v871 = vpop.f32.mrb[0].mxu0
    %872 = vdwg.mxu0
    %v874 = vsel %vm762, %v685, 0
    %v877 = vsel %vm762, %v694, 0
    %v880 = vsel %vm762, %v695, 0
    %v883 = vsel %vm762, %v696, 0
    %v886 = vsel %vm762, %v697, 0
    %888 = vmatprep.subr.bf16.mxu0 0
    %889 = vmatpush1.bf16.xpose.msra.mxu0 %v877
    %890 = vmatprep.subr.bf16.mxu0 0
    %891 = vmatpush1.bf16.xpose.msra.mxu0 %v880
    %892 = vmatprep.subr.bf16.mxu0 0
    %893 = vmatpush1.bf16.xpose.msra.mxu0 %v883
    %894 = vmatprep.subr.bf16.mxu0 0
    %895 = vmatpush1.bf16.xpose.msra.mxu0 %v886
    %896 = vmatprep.subr.bf16.mxu0 0
    %897 = vmatpush1.bf16.xpose.msra.mxu0 0
    %898 = vmatprep.subr.bf16.mxu0 0
    %899 = vmatpush1.bf16.xpose.msra.mxu0 0
    %900 = vmatprep.subr.bf16.mxu0 0
    %901 = vmatpush1.bf16.xpose.msra.mxu0 0
    %902 = vmatprep.subr.bf16.mxu0 0
    %903 = vmatpush1.bf16.xpose.msra.mxu0 0
    %904 = vmatprep.subr.bf16.mxu0 0
    %905 = vmatpush1.bf16.xpose.msra.mxu0 0
    %906 = vmatprep.subr.bf16.mxu0 0
    %907 = vmatpush1.bf16.xpose.msra.mxu0 0
    %908 = vmatprep.subr.bf16.mxu0 0
    %909 = vmatpush1.bf16.xpose.msra.mxu0 0
    %910 = vmatprep.subr.bf16.mxu0 0
    %911 = vmatpush1.bf16.xpose.msra.mxu0 0
    %912 = vmatprep.subr.bf16.mxu0 0
    %913 = vmatpush1.bf16.xpose.msra.mxu0 0
    %914 = vmatprep.subr.bf16.mxu0 0
    %915 = vmatpush1.bf16.xpose.msra.mxu0 0
    %916 = vmatprep.subr.bf16.mxu0 0
    %917 = vmatpush1.bf16.xpose.msra.mxu0 0
    %918 = vmatprep.subr.bf16.mxu0 0
    %919 = vmatpush1.bf16.xpose.msra.mxu0 0
    %920 = vmatprep.mubr.bf16.mxu0 0
    %921 = vmatmul.mubr.bf16.gmra.mrb[0].mxu0 %v874
    %v922 = vpop.f32.mrb[0].mxu0
    %v923 = vadd.f32 %v252, %v922
    %v924 = vpop.f32.mrb[0].mxu0
    %v925 = vpop.f32.mrb[0].mxu0
    %v926 = vpop.f32.mrb[0].mxu0
    %927 = vdwg.mxu0
    %v929 = vsel %vm762, %v689, 0
    %v932 = vsel %vm762, %v715, 0
    %v935 = vsel %vm762, %v717, 0
    %v938 = vsel %vm762, %v719, 0
    %v941 = vsel %vm762, %v721, 0
    %943 = vmatprep.subr.bf16.mxu0 0
    %944 = vmatpush1.bf16.xpose.msra.mxu0 %v932
    %945 = vmatprep.subr.bf16.mxu0 0
    %946 = vmatpush1.bf16.xpose.msra.mxu0 %v935
    %947 = vmatprep.subr.bf16.mxu0 0
    %948 = vmatpush1.bf16.xpose.msra.mxu0 %v938
    %949 = vmatprep.subr.bf16.mxu0 0
    %950 = vmatpush1.bf16.xpose.msra.mxu0 %v941
    %951 = vmatprep.subr.bf16.mxu0 0
    %952 = vmatpush1.bf16.xpose.msra.mxu0 0
    %953 = vmatprep.subr.bf16.mxu0 0
    %954 = vmatpush1.bf16.xpose.msra.mxu0 0
    %955 = vmatprep.subr.bf16.mxu0 0
    %956 = vmatpush1.bf16.xpose.msra.mxu0 0
    %957 = vmatprep.subr.bf16.mxu0 0
    %958 = vmatpush1.bf16.xpose.msra.mxu0 0
    %959 = vmatprep.subr.bf16.mxu0 0
    %960 = vmatpush1.bf16.xpose.msra.mxu0 0
    %961 = vmatprep.subr.bf16.mxu0 0
    %962 = vmatpush1.bf16.xpose.msra.mxu0 0
    %963 = vmatprep.subr.bf16.mxu0 0
    %964 = vmatpush1.bf16.xpose.msra.mxu0 0
    %965 = vmatprep.subr.bf16.mxu0 0
    %966 = vmatpush1.bf16.xpose.msra.mxu0 0
    %967 = vmatprep.subr.bf16.mxu0 0
    %968 = vmatpush1.bf16.xpose.msra.mxu0 0
    %969 = vmatprep.subr.bf16.mxu0 0
    %970 = vmatpush1.bf16.xpose.msra.mxu0 0
    %971 = vmatprep.subr.bf16.mxu0 0
    %972 = vmatpush1.bf16.xpose.msra.mxu0 0
    %973 = vmatprep.subr.bf16.mxu0 0
    %974 = vmatpush1.bf16.xpose.msra.mxu0 0
    %975 = vmatprep.mubr.bf16.mxu0 0
    %976 = vmatmul.mubr.bf16.gmra.mrb[0].mxu0 %v929
    %v977 = vpop.f32.mrb[0].mxu0
    %v978 = vadd.f32 %v253, %v977
    %v979 = vpop.f32.mrb[0].mxu0
    %v980 = vpop.f32.mrb[0].mxu0
    %v981 = vpop.f32.mrb[0].mxu0
    %982 = vdwg.mxu0
    %vm983 = vcmask 523264
    %v984 = vsel %vm983, %v813, -inf
    %985 = vmax.xlane.f32.xlu0 %v984
    %v986 = vpop.xlane.xlu0 %985
    %v987 = vsel %vm983, %v868, -inf
    %988 = vmax.xlane.f32.xlu0 %v987
    %v989 = vpop.xlane.xlu0 %988
    %v990 = vsel %vm983, %v923, -inf
    %991 = vmax.xlane.f32.xlu0 %v990
    %v992 = vpop.xlane.xlu0 %991
    %v993 = vsel %vm983, %v978, -inf
    %994 = vmax.xlane.f32.xlu0 %v993
    %v995 = vpop.xlane.xlu0 %994
    %v996 = vsub.f32 %v813, %v986
    %v997 = vsub.f32 %v868, %v989
    %v998 = vsub.f32 %v923, %v992
    %v999 = vsub.f32 %v978, %v995
    %v1000 = vmul.f32 %v996, 1.442695
    %v1001 = vpow.pop %v1000
    %v1002 = vmul.f32 %v997, 1.442695
    %v1003 = vpow.pop %v1002
    %v1004 = vmul.f32 %v998, 1.442695
    %v1005 = vpow.pop %v1004
    %v1006 = vmul.f32 %v999, 1.442695
    %v1007 = vpow.pop %v1006
    %v1008 = vsel %vm983, %v1001, 0.0
    %1009 = vadd.xlane.f32.xlu0 %v1008
    %v1010 = vpop.xlane.xlu0 %1009
    %v1011 = vsel %vm983, %v1003, 0.0
    %1012 = vadd.xlane.f32.xlu0 %v1011
    %v1013 = vpop.xlane.xlu0 %1012
    %v1014 = vsel %vm983, %v1005, 0.0
    %1015 = vadd.xlane.f32.xlu0 %v1014
    %v1016 = vpop.xlane.xlu0 %1015
    %v1017 = vsel %vm983, %v1007, 0.0
    %1018 = vadd.xlane.f32.xlu0 %v1017
    %v1019 = vpop.xlane.xlu0 %1018
    %v1020 = vrcp.pop %v1010
    %v1021 = vrcp.pop %v1013
    %v1022 = vrcp.pop %v1016
    %v1023 = vrcp.pop %v1019
    %v1024 = vmul.f32 %v1001, %v1020
    %v1025 = vmul.f32 %v1003, %v1021
    %v1026 = vmul.f32 %v1005, %v1022
    %v1027 = vmul.f32 %v1007, %v1023
    %v1028 = vpack.c.bf16 %v1024, %v1024
    %v1029 = vpack.c.bf16 %v1025, %v1025
    %v1030 = vpack.c.bf16 %v1026, %v1026
    %v1031 = vpack.c.bf16 %v1027, %v1027
    %v1033 = vsel %vm983, %v1028, 0
    %1035 = vmatprep.subr.bf16.mxu0 0
    %1036 = vmatpush1.bf16.msra.mxu0 %v722
    %1037 = vmatprep.subr.bf16.mxu0 0
    %1038 = vmatpush1.bf16.msra.mxu0 %v723
    %1039 = vmatprep.subr.bf16.mxu0 0
    %1040 = vmatpush1.bf16.msra.mxu0 %v724
    %1041 = vmatprep.subr.bf16.mxu0 0
    %1042 = vmatpush1.bf16.msra.mxu0 %v725
    %1043 = vmatprep.subr.bf16.mxu0 0
    %1044 = vmatpush1.bf16.msra.mxu0 0
    %1045 = vmatprep.subr.bf16.mxu0 0
    %1046 = vmatpush1.bf16.msra.mxu0 0
    %1047 = vmatprep.subr.bf16.mxu0 0
    %1048 = vmatpush1.bf16.msra.mxu0 0
    %1049 = vmatprep.subr.bf16.mxu0 0
    %1050 = vmatpush1.bf16.msra.mxu0 0
    %1051 = vmatprep.subr.bf16.mxu0 0
    %1052 = vmatpush1.bf16.msra.mxu0 0
    %1053 = vmatprep.subr.bf16.mxu0 0
    %1054 = vmatpush1.bf16.msra.mxu0 0
    %1055 = vmatprep.subr.bf16.mxu0 0
    %1056 = vmatpush1.bf16.msra.mxu0 0
    %1057 = vmatprep.subr.bf16.mxu0 0
    %1058 = vmatpush1.bf16.msra.mxu0 0
    %1059 = vmatprep.subr.bf16.mxu0 0
    %1060 = vmatpush1.bf16.msra.mxu0 0
    %1061 = vmatprep.subr.bf16.mxu0 0
    %1062 = vmatpush1.bf16.msra.mxu0 0
    %1063 = vmatprep.subr.bf16.mxu0 0
    %1064 = vmatpush1.bf16.msra.mxu0 0
    %1065 = vmatprep.subr.bf16.mxu0 0
    %1066 = vmatpush1.bf16.msra.mxu0 0
    %1067 = vmatprep.mubr.bf16.mxu0 0
    %1068 = vmatmul.mubr.bf16.gmra.mrb[0].mxu0 %v1033
    %v1069 = vpop.f32.mrb[0].mxu0
    %v1070 = vadd.f32 0.0, %v1069
    %v1071 = vpop.f32.mrb[0].mxu0
    %v1072 = vpop.f32.mrb[0].mxu0
    %v1073 = vpop.f32.mrb[0].mxu0
    %1074 = vdwg.mxu0
    %v1076 = vsel %vm983, %v1029, 0
    %1078 = vmatprep.subr.bf16.mxu0 0
    %1079 = vmatpush1.bf16.msra.mxu0 %v739
    %1080 = vmatprep.subr.bf16.mxu0 0
    %1081 = vmatpush1.bf16.msra.mxu0 %v741
    %1082 = vmatprep.subr.bf16.mxu0 0
    %1083 = vmatpush1.bf16.msra.mxu0 %v743
    %1084 = vmatprep.subr.bf16.mxu0 0
    %1085 = vmatpush1.bf16.msra.mxu0 %v745
    %1086 = vmatprep.subr.bf16.mxu0 0
    %1087 = vmatpush1.bf16.msra.mxu0 0
    %1088 = vmatprep.subr.bf16.mxu0 0
    %1089 = vmatpush1.bf16.msra.mxu0 0
    %1090 = vmatprep.subr.bf16.mxu0 0
    %1091 = vmatpush1.bf16.msra.mxu0 0
    %1092 = vmatprep.subr.bf16.mxu0 0
    %1093 = vmatpush1.bf16.msra.mxu0 0
    %1094 = vmatprep.subr.bf16.mxu0 0
    %1095 = vmatpush1.bf16.msra.mxu0 0
    %1096 = vmatprep.subr.bf16.mxu0 0
    %1097 = vmatpush1.bf16.msra.mxu0 0
    %1098 = vmatprep.subr.bf16.mxu0 0
    %1099 = vmatpush1.bf16.msra.mxu0 0
    %1100 = vmatprep.subr.bf16.mxu0 0
    %1101 = vmatpush1.bf16.msra.mxu0 0
    %1102 = vmatprep.subr.bf16.mxu0 0
    %1103 = vmatpush1.bf16.msra.mxu0 0
    %1104 = vmatprep.subr.bf16.mxu0 0
    %1105 = vmatpush1.bf16.msra.mxu0 0
    %1106 = vmatprep.subr.bf16.mxu0 0
    %1107 = vmatpush1.bf16.msra.mxu0 0
    %1108 = vmatprep.subr.bf16.mxu0 0
    %1109 = vmatpush1.bf16.msra.mxu0 0
    %1110 = vmatprep.mubr.bf16.mxu0 0
    %1111 = vmatmul.mubr.bf16.gmra.mrb[0].mxu0 %v1076
    %v1112 = vpop.f32.mrb[0].mxu0
    %v1113 = vadd.f32 0.0, %v1112
    %v1114 = vpop.f32.mrb[0].mxu0
    %v1115 = vpop.f32.mrb[0].mxu0
    %v1116 = vpop.f32.mrb[0].mxu0
    %1117 = vdwg.mxu0
    %v1119 = vsel %vm983, %v1030, 0
    %1121 = vmatprep.subr.bf16.mxu0 0
    %1122 = vmatpush1.bf16.msra.mxu0 %v726
    %1123 = vmatprep.subr.bf16.mxu0 0
    %1124 = vmatpush1.bf16.msra.mxu0 %v727
    %1125 = vmatprep.subr.bf16.mxu0 0
    %1126 = vmatpush1.bf16.msra.mxu0 %v728
    %1127 = vmatprep.subr.bf16.mxu0 0
    %1128 = vmatpush1.bf16.msra.mxu0 %v729
    %1129 = vmatprep.subr.bf16.mxu0 0
    %1130 = vmatpush1.bf16.msra.mxu0 0
    %1131 = vmatprep.subr.bf16.mxu0 0
    %1132 = vmatpush1.bf16.msra.mxu0 0
    %1133 = vmatprep.subr.bf16.mxu0 0
    %1134 = vmatpush1.bf16.msra.mxu0 0
    %1135 = vmatprep.subr.bf16.mxu0 0
    %1136 = vmatpush1.bf16.msra.mxu0 0
    %1137 = vmatprep.subr.bf16.mxu0 0
    %1138 = vmatpush1.bf16.msra.mxu0 0
    %1139 = vmatprep.subr.bf16.mxu0 0
    %1140 = vmatpush1.bf16.msra.mxu0 0
    %1141 = vmatprep.subr.bf16.mxu0 0
    %1142 = vmatpush1.bf16.msra.mxu0 0
    %1143 = vmatprep.subr.bf16.mxu0 0
    %1144 = vmatpush1.bf16.msra.mxu0 0
    %1145 = vmatprep.subr.bf16.mxu0 0
    %1146 = vmatpush1.bf16.msra.mxu0 0
    %1147 = vmatprep.subr.bf16.mxu0 0
    %1148 = vmatpush1.bf16.msra.mxu0 0
    %1149 = vmatprep.subr.bf16.mxu0 0
    %1150 = vmatpush1.bf16.msra.mxu0 0
    %1151 = vmatprep.subr.bf16.mxu0 0
    %1152 = vmatpush1.bf16.msra.mxu0 0
    %1153 = vmatprep.mubr.bf16.mxu0 0
    %1154 = vmatmul.mubr.bf16.gmra.mrb[0].mxu0 %v1119
    %v1155 = vpop.f32.mrb[0].mxu0
    %v1156 = vadd.f32 0.0, %v1155
    %v1157 = vpop.f32.mrb[0].mxu0
    %v1158 = vpop.f32.mrb[0].mxu0
    %v1159 = vpop.f32.mrb[0].mxu0
    %1160 = vdwg.mxu0
    %v1162 = vsel %vm983, %v1031, 0
    %1164 = vmatprep.subr.bf16.mxu0 0
    %1165 = vmatpush1.bf16.msra.mxu0 %v747
    %1166 = vmatprep.subr.bf16.mxu0 0
    %1167 = vmatpush1.bf16.msra.mxu0 %v749
    %1168 = vmatprep.subr.bf16.mxu0 0
    %1169 = vmatpush1.bf16.msra.mxu0 %v751
    %1170 = vmatprep.subr.bf16.mxu0 0
    %1171 = vmatpush1.bf16.msra.mxu0 %v753
    %1172 = vmatprep.subr.bf16.mxu0 0
    %1173 = vmatpush1.bf16.msra.mxu0 0
    %1174 = vmatprep.subr.bf16.mxu0 0
    %1175 = vmatpush1.bf16.msra.mxu0 0
    %1176 = vmatprep.subr.bf16.mxu0 0
    %1177 = vmatpush1.bf16.msra.mxu0 0
    %1178 = vmatprep.subr.bf16.mxu0 0
    %1179 = vmatpush1.bf16.msra.mxu0 0
    %1180 = vmatprep.subr.bf16.mxu0 0
    %1181 = vmatpush1.bf16.msra.mxu0 0
    %1182 = vmatprep.subr.bf16.mxu0 0
    %1183 = vmatpush1.bf16.msra.mxu0 0
    %1184 = vmatprep.subr.bf16.mxu0 0
    %1185 = vmatpush1.bf16.msra.mxu0 0
    %1186 = vmatprep.subr.bf16.mxu0 0
    %1187 = vmatpush1.bf16.msra.mxu0 0
    %1188 = vmatprep.subr.bf16.mxu0 0
    %1189 = vmatpush1.bf16.msra.mxu0 0
    %1190 = vmatprep.subr.bf16.mxu0 0
    %1191 = vmatpush1.bf16.msra.mxu0 0
    %1192 = vmatprep.subr.bf16.mxu0 0
    %1193 = vmatpush1.bf16.msra.mxu0 0
    %1194 = vmatprep.subr.bf16.mxu0 0
    %1195 = vmatpush1.bf16.msra.mxu0 0
    %1196 = vmatprep.mubr.bf16.mxu0 0
    %1197 = vmatmul.mubr.bf16.gmra.mrb[0].mxu0 %v1162
    %v1198 = vpop.f32.mrb[0].mxu0
    %v1199 = vadd.f32 0.0, %v1198
    %v1200 = vpop.f32.mrb[0].mxu0
    %v1201 = vpop.f32.mrb[0].mxu0
    %v1202 = vpop.f32.mrb[0].mxu0
    %1203 = vdwg.mxu0
    %s1204 = scalar_lea.vmem [#allocation13], 48
    %v1205 = vld [vmem:[%s1204] sm:$0xf]
    %v1206 = vld [vmem:[%s1204 + $0x4] sm:$0xf]
    %v1207 = vld [vmem:[%s1204 + $0x8] sm:$0xf]
    %v1208 = vld [vmem:[%s1204 + $0xc] sm:$0xf]
    %v1209 = vpack.c.bf16 %v1156, %v1070
    %v1210 = vpack.c.bf16 %v1199, %v1113
    %v1213 = vunpack.c.l.b16 %v1207
    %v1214 = vunpack.c.l.b16 %v1208
    %v1215 = vpack.c.b16 %v1214, %v1213
    %v1218 = vsel %vm762, %v1210, 0
    %1220 = vmatprep.subr.bf16.mxu0 0
    %1221 = vmatpush1.bf16.msra.mxu0 %v1215
    %1222 = vmatprep.subr.bf16.mxu0 0
    %1223 = vmatpush1.bf16.msra.mxu0 0
    %1224 = vmatprep.subr.bf16.mxu0 0
    %1225 = vmatpush1.bf16.msra.mxu0 0
    %1226 = vmatprep.subr.bf16.mxu0 0
    %1227 = vmatpush1.bf16.msra.mxu0 0
    %1228 = vmatprep.subr.bf16.mxu0 0
    %1229 = vmatpush1.bf16.msra.mxu0 0
    %1230 = vmatprep.subr.bf16.mxu0 0
    %1231 = vmatpush1.bf16.msra.mxu0 0
    %1232 = vmatprep.subr.bf16.mxu0 0
    %1233 = vmatpush1.bf16.msra.mxu0 0
    %1234 = vmatprep.subr.bf16.mxu0 0
    %1235 = vmatpush1.bf16.msra.mxu0 0
    %1236 = vmatprep.subr.bf16.mxu0 0
    %1237 = vmatpush1.bf16.msra.mxu0 0
    %1238 = vmatprep.subr.bf16.mxu0 0
    %1239 = vmatpush1.bf16.msra.mxu0 0
    %1240 = vmatprep.subr.bf16.mxu0 0
    %1241 = vmatpush1.bf16.msra.mxu0 0
    %1242 = vmatprep.subr.bf16.mxu0 0
    %1243 = vmatpush1.bf16.msra.mxu0 0
    %1244 = vmatprep.subr.bf16.mxu0 0
    %1245 = vmatpush1.bf16.msra.mxu0 0
    %1246 = vmatprep.subr.bf16.mxu0 0
    %1247 = vmatpush1.bf16.msra.mxu0 0
    %1248 = vmatprep.subr.bf16.mxu0 0
    %1249 = vmatpush1.bf16.msra.mxu0 0
    %1250 = vmatprep.subr.bf16.mxu0 0
    %1251 = vmatpush1.bf16.msra.mxu0 0
    %1252 = vmatprep.mubr.bf16.mxu0 0
    %1253 = vmatmul.mubr.bf16.gmra.mrb[0].mxu0 %v1218
    %v1254 = vpop.f32.mrb[0].mxu0
    %v1255 = vadd.f32 0.0, %v1254
    %v1256 = vpop.f32.mrb[0].mxu0
    %v1257 = vpop.f32.mrb[0].mxu0
    %v1258 = vadd.f32 0.0, %v1257
    %v1259 = vpop.f32.mrb[0].mxu0
    %1260 = vdwg.mxu0
    %v1263 = vunpack.c.l.b16 %v1205
    %v1264 = vunpack.c.l.b16 %v1206
    %v1265 = vpack.c.b16 %v1264, %v1263
    %v1268 = vsel %vm762, %v1209, 0
    %1270 = vmatprep.subr.bf16.mxu0 0
    %1271 = vmatpush1.bf16.msra.mxu0 %v1265
    %1272 = vmatprep.subr.bf16.mxu0 0
    %1273 = vmatpush1.bf16.msra.mxu0 0
    %1274 = vmatprep.subr.bf16.mxu0 0
    %1275 = vmatpush1.bf16.msra.mxu0 0
    %1276 = vmatprep.subr.bf16.mxu0 0
    %1277 = vmatpush1.bf16.msra.mxu0 0
    %1278 = vmatprep.subr.bf16.mxu0 0
    %1279 = vmatpush1.bf16.msra.mxu0 0
    %1280 = vmatprep.subr.bf16.mxu0 0
    %1281 = vmatpush1.bf16.msra.mxu0 0
    %1282 = vmatprep.subr.bf16.mxu0 0
    %1283 = vmatpush1.bf16.msra.mxu0 0
    %1284 = vmatprep.subr.bf16.mxu0 0
    %1285 = vmatpush1.bf16.msra.mxu0 0
    %1286 = vmatprep.subr.bf16.mxu0 0
    %1287 = vmatpush1.bf16.msra.mxu0 0
    %1288 = vmatprep.subr.bf16.mxu0 0
    %1289 = vmatpush1.bf16.msra.mxu0 0
    %1290 = vmatprep.subr.bf16.mxu0 0
    %1291 = vmatpush1.bf16.msra.mxu0 0
    %1292 = vmatprep.subr.bf16.mxu0 0
    %1293 = vmatpush1.bf16.msra.mxu0 0
    %1294 = vmatprep.subr.bf16.mxu0 0
    %1295 = vmatpush1.bf16.msra.mxu0 0
    %1296 = vmatprep.subr.bf16.mxu0 0
    %1297 = vmatpush1.bf16.msra.mxu0 0
    %1298 = vmatprep.subr.bf16.mxu0 0
    %1299 = vmatpush1.bf16.msra.mxu0 0
    %1300 = vmatprep.subr.bf16.mxu0 0
    %1301 = vmatpush1.bf16.msra.mxu0 0
    %1302 = vmatprep.mubr.bf16.mxu0 0
    %1303 = vmatmul.mubr.bf16.gmra.mrb[0].mxu0 %v1268
    %v1304 = vpop.f32.mrb[0].mxu0
    %v1305 = vadd.f32 %v1255, %v1304
    %v1306 = vpop.f32.mrb[0].mxu0
    %v1307 = vpop.f32.mrb[0].mxu0
    %v1308 = vadd.f32 %v1258, %v1307
    %v1309 = vpop.f32.mrb[0].mxu0
    %1310 = vdwg.mxu0
    %v1311 = vlaneseq
    %v1312 = vshrl.u32 %v1311, 7
    %v1313 = vsub.s32 5, %v1312
    %v1314 = vrot.slane %v254, %v1313
    %v1315 = vadd.f32 %v1305, %v1314
    %v1316 = vadd.f32 %v1308, %v1314
    %v1317 = vadd.f32 %v295, %v1315
    %v1318 = vadd.f32 %v296, %v1316
    %1319 = vst.msk [vmem:[#allocation25] sm:$0xff] %vm983, %v1024
    %1320 = vst.msk [vmem:[#allocation25 + $0x8] sm:$0xff] %vm983, %v1025
    %1321 = vst.msk [vmem:[#allocation25 + $0x10] sm:$0xff] %vm983, %v1026
    %1322 = vst.msk [vmem:[#allocation25 + $0x18] sm:$0xff] %vm983, %v1027
    %v1323 = vsel %vm257, %v1317, 0.0
    %1324 = vadd.xlane.f32.xlu0 %v1323
    %v1325 = vpop.xlane.xlu0 %1324
    %v1326 = vsel %vm257, %v1318, 0.0
    %1327 = vadd.xlane.f32.xlu0 %v1326
    %v1328 = vpop.xlane.xlu0 %1327
    %v1329 = vmul.f32 %v1325, %v264
    %v1330 = vmul.f32 %v1328, %v264
    %v1331 = vsub.f32 %v1317, %v1329
    %v1332 = vsub.f32 %v1318, %v1330
    %v1333 = vmul.f32 %v1331, %v1331
    %v1334 = vmul.f32 %v1332, %v1332
    %v1335 = vsel %vm257, %v1333, 0.0
    %1336 = vadd.xlane.f32.xlu0 %v1335
    %v1337 = vpop.xlane.xlu0 %1336
    %v1338 = vsel %vm257, %v1334, 0.0
    %1339 = vadd.xlane.f32.xlu0 %v1338
    %v1340 = vpop.xlane.xlu0 %1339
    %v1341 = vmul.f32 %v1337, %v264
    %v1342 = vmul.f32 %v1340, %v264
    %v1343 = vadd.f32 %v1341, 1e-05
    %v1344 = vadd.f32 %v1342, 1e-05
    %v1345 = vrsqrt.pop %v1343
    %v1346 = vrsqrt.pop %v1344
    %v1347 = vmul.f32 %v1331, %v1345
    %v1348 = vmul.f32 %v1332, %v1346
    %v1349 = vlaneseq
    %v1350 = vshrl.u32 %v1349, 7
    %v1351 = vsub.s32 6, %v1350
    %v1352 = vrot.slane %v254, %v1351
    %v1353 = vmul.f32 %v1347, %v1352
    %v1354 = vmul.f32 %v1348, %v1352
    %v1355 = vlaneseq
    %v1356 = vshrl.u32 %v1355, 7
    %v1357 = vsub.s32 7, %v1356
    %v1358 = vrot.slane %v254, %v1357
    %v1359 = vadd.f32 %v1353, %v1358
    %v1360 = vadd.f32 %v1354, %v1358
    %v1361 = vadd.f32 %v1359, %v212
    %v1362 = vadd.f32 %v1360, %v213
    %v1363 = vpack.c.bf16 %v1362, %v1361
    %s1364 = scalar_lea.vmem [#allocation13], 64
    %v1365 = vld [vmem:[%s1364] sm:$0xf]
    %v1366 = vld [vmem:[%s1364 + $0x4] sm:$0xf]
    %v1367 = vld [vmem:[%s1364 + $0x8] sm:$0xf]
    %v1368 = vld [vmem:[%s1364 + $0xc] sm:$0xf]
    %v1369 = vlaneseq
    %v1370 = vshrl.u32 %v1369, 7
    %v1371 = vsub.s32 0, %v1370
    %v1372 = vrot.slane %v255, %v1371
    %v1377 = vunpack.c.l.b16 %v1365
    %v1378 = vunpack.c.l.b16 %v1366
    %v1379 = vunpack.c.l.b16 %v1367
    %v1380 = vunpack.c.l.b16 %v1368
    %v1381 = vpack.c.b16 %v1378, %v1377
    %v1382 = vpack.c.b16 %v1380, %v1379
    %v1386 = vsel %vm257, %v1363, 0
    %1388 = vmatprep.subr.bf16.mxu0 0
    %1389 = vmatpush1.bf16.msra.mxu0 %v1381
    %1390 = vmatprep.subr.bf16.mxu0 0
    %1391 = vmatpush1.bf16.msra.mxu0 %v1382
    %1392 = vmatprep.subr.bf16.mxu0 0
    %1393 = vmatpush1.bf16.msra.mxu0 0
    %1394 = vmatprep.subr.bf16.mxu0 0
    %1395 = vmatpush1.bf16.msra.mxu0 0
    %1396 = vmatprep.subr.bf16.mxu0 0
    %1397 = vmatpush1.bf16.msra.mxu0 0
    %1398 = vmatprep.subr.bf16.mxu0 0
    %1399 = vmatpush1.bf16.msra.mxu0 0
    %1400 = vmatprep.subr.bf16.mxu0 0
    %1401 = vmatpush1.bf16.msra.mxu0 0
    %1402 = vmatprep.subr.bf16.mxu0 0
    %1403 = vmatpush1.bf16.msra.mxu0 0
    %1404 = vmatprep.subr.bf16.mxu0 0
    %1405 = vmatpush1.bf16.msra.mxu0 0
    %1406 = vmatprep.subr.bf16.mxu0 0
    %1407 = vmatpush1.bf16.msra.mxu0 0
    %1408 = vmatprep.subr.bf16.mxu0 0
    %1409 = vmatpush1.bf16.msra.mxu0 0
    %1410 = vmatprep.subr.bf16.mxu0 0
    %1411 = vmatpush1.bf16.msra.mxu0 0
    %1412 = vmatprep.subr.bf16.mxu0 0
    %1413 = vmatpush1.bf16.msra.mxu0 0
    %1414 = vmatprep.subr.bf16.mxu0 0
    %1415 = vmatpush1.bf16.msra.mxu0 0
    %1416 = vmatprep.subr.bf16.mxu0 0
    %1417 = vmatpush1.bf16.msra.mxu0 0
    %1418 = vmatprep.subr.bf16.mxu0 0
    %1419 = vmatpush1.bf16.msra.mxu0 0
    %1420 = vmatprep.mubr.bf16.mxu0 0
    %1421 = vmatmul.mubr.bf16.gmra.mrb[0].mxu0 %v1386
    %v1422 = vpop.f32.mrb[0].mxu0
    %v1423 = vadd.f32 %v1372, %v1422
    %v1424 = vpop.f32.mrb[0].mxu0
    %v1425 = vpop.f32.mrb[0].mxu0
    %v1426 = vadd.f32 %v1372, %v1425
    %v1427 = vpop.f32.mrb[0].mxu0
    %1428 = vdwg.mxu0
    %s1429 = scalar_lea.vmem [#allocation13], 80
    %v1430 = vld [vmem:[%s1429] sm:$0xf]
    %v1431 = vld [vmem:[%s1429 + $0x4] sm:$0xf]
    %v1432 = vld [vmem:[%s1429 + $0x8] sm:$0xf]
    %v1433 = vld [vmem:[%s1429 + $0xc] sm:$0xf]
    %v1434 = vlaneseq
    %v1435 = vshrl.u32 %v1434, 7
    %v1436 = vsub.s32 1, %v1435
    %v1437 = vrot.slane %v255, %v1436
    %v1442 = vunpack.c.l.b16 %v1430
    %v1443 = vunpack.c.l.b16 %v1431
    %v1444 = vunpack.c.l.b16 %v1432
    %v1445 = vunpack.c.l.b16 %v1433
    %v1446 = vpack.c.b16 %v1443, %v1442
    %v1447 = vpack.c.b16 %v1445, %v1444
    %1450 = vmatprep.subr.bf16.mxu0 0
    %1451 = vmatpush1.bf16.msra.mxu0 %v1446
    %1452 = vmatprep.subr.bf16.mxu0 0
    %1453 = vmatpush1.bf16.msra.mxu0 %v1447
    %1454 = vmatprep.subr.bf16.mxu0 0
    %1455 = vmatpush1.bf16.msra.mxu0 0
    %1456 = vmatprep.subr.bf16.mxu0 0
    %1457 = vmatpush1.bf16.msra.mxu0 0
    %1458 = vmatprep.subr.bf16.mxu0 0
    %1459 = vmatpush1.bf16.msra.mxu0 0
    %1460 = vmatprep.subr.bf16.mxu0 0
    %1461 = vmatpush1.bf16.msra.mxu0 0
    %1462 = vmatprep.subr.bf16.mxu0 0
    %1463 = vmatpush1.bf16.msra.mxu0 0
    %1464 = vmatprep.subr.bf16.mxu0 0
    %1465 = vmatpush1.bf16.msra.mxu0 0
    %1466 = vmatprep.subr.bf16.mxu0 0
    %1467 = vmatpush1.bf16.msra.mxu0 0
    %1468 = vmatprep.subr.bf16.mxu0 0
    %1469 = vmatpush1.bf16.msra.mxu0 0
    %1470 = vmatprep.subr.bf16.mxu0 0
    %1471 = vmatpush1.bf16.msra.mxu0 0
    %1472 = vmatprep.subr.bf16.mxu0 0
    %1473 = vmatpush1.bf16.msra.mxu0 0
    %1474 = vmatprep.subr.bf16.mxu0 0
    %1475 = vmatpush1.bf16.msra.mxu0 0
    %1476 = vmatprep.subr.bf16.mxu0 0
    %1477 = vmatpush1.bf16.msra.mxu0 0
    %1478 = vmatprep.subr.bf16.mxu0 0
    %1479 = vmatpush1.bf16.msra.mxu0 0
    %1480 = vmatprep.subr.bf16.mxu0 0
    %1481 = vmatpush1.bf16.msra.mxu0 0
    %1482 = vmatprep.mubr.bf16.mxu0 0
    %1483 = vmatmul.mubr.bf16.gmra.mrb[0].mxu0 %v1386
    %v1484 = vpop.f32.mrb[0].mxu0
    %v1485 = vadd.f32 %v1437, %v1484
    %v1486 = vpop.f32.mrb[0].mxu0
    %v1487 = vpop.f32.mrb[0].mxu0
    %v1488 = vadd.f32 %v1437, %v1487
    %v1489 = vpop.f32.mrb[0].mxu0
    %1490 = vdwg.mxu0
    %v1491 = vpack.c.bf16 %v1360, %v1359
    %s1492 = scalar_lea.vmem [#allocation13], 96
    %v1493 = vld [vmem:[%s1492] sm:$0xf]
    %v1494 = vld [vmem:[%s1492 + $0x4] sm:$0xf]
    %v1495 = vld [vmem:[%s1492 + $0x8] sm:$0xf]
    %v1496 = vld [vmem:[%s1492 + $0xc] sm:$0xf]
    %v1497 = vlaneseq
    %v1498 = vshrl.u32 %v1497, 7
    %v1499 = vsub.s32 2, %v1498
    %v1500 = vrot.slane %v255, %v1499
    %v1505 = vunpack.c.l.b16 %v1493
    %v1506 = vunpack.c.l.b16 %v1494
    %v1507 = vunpack.c.l.b16 %v1495
    %v1508 = vunpack.c.l.b16 %v1496
    %v1509 = vpack.c.b16 %v1506, %v1505
    %v1510 = vpack.c.b16 %v1508, %v1507
    %v1514 = vsel %vm257, %v1491, 0
    %1516 = vmatprep.subr.bf16.mxu0 0
    %1517 = vmatpush1.bf16.msra.mxu0 %v1509
    %1518 = vmatprep.subr.bf16.mxu0 0
    %1519 = vmatpush1.bf16.msra.mxu0 %v1510
    %1520 = vmatprep.subr.bf16.mxu0 0
    %1521 = vmatpush1.bf16.msra.mxu0 0
    %1522 = vmatprep.subr.bf16.mxu0 0
    %1523 = vmatpush1.bf16.msra.mxu0 0
    %1524 = vmatprep.subr.bf16.mxu0 0
    %1525 = vmatpush1.bf16.msra.mxu0 0
    %1526 = vmatprep.subr.bf16.mxu0 0
    %1527 = vmatpush1.bf16.msra.mxu0 0
    %1528 = vmatprep.subr.bf16.mxu0 0
    %1529 = vmatpush1.bf16.msra.mxu0 0
    %1530 = vmatprep.subr.bf16.mxu0 0
    %1531 = vmatpush1.bf16.msra.mxu0 0
    %1532 = vmatprep.subr.bf16.mxu0 0
    %1533 = vmatpush1.bf16.msra.mxu0 0
    %1534 = vmatprep.subr.bf16.mxu0 0
    %1535 = vmatpush1.bf16.msra.mxu0 0
    %1536 = vmatprep.subr.bf16.mxu0 0
    %1537 = vmatpush1.bf16.msra.mxu0 0
    %1538 = vmatprep.subr.bf16.mxu0 0
    %1539 = vmatpush1.bf16.msra.mxu0 0
    %1540 = vmatprep.subr.bf16.mxu0 0
    %1541 = vmatpush1.bf16.msra.mxu0 0
    %1542 = vmatprep.subr.bf16.mxu0 0
    %1543 = vmatpush1.bf16.msra.mxu0 0
    %1544 = vmatprep.subr.bf16.mxu0 0
    %1545 = vmatpush1.bf16.msra.mxu0 0
    %1546 = vmatprep.subr.bf16.mxu0 0
    %1547 = vmatpush1.bf16.msra.mxu0 0
    %1548 = vmatprep.mubr.bf16.mxu0 0
    %1549 = vmatmul.mubr.bf16.gmra.mrb[0].mxu0 %v1514
    %v1550 = vpop.f32.mrb[0].mxu0
    %v1551 = vadd.f32 %v1500, %v1550
    %v1552 = vpop.f32.mrb[0].mxu0
    %v1553 = vpop.f32.mrb[0].mxu0
    %v1554 = vadd.f32 %v1500, %v1553
    %v1555 = vpop.f32.mrb[0].mxu0
    %1556 = vdwg.mxu0
    %v1557 = vpack.c.bf16 %v1426, %v1423
    %v1559 = vunpack.c.l.b16 %v1557
    %v1560 = vunpack.c.h.b16 %v1557
    %v1561 = vpack.c.b16 %v1559, %v1559
    %v1562 = vpack.c.b16 %v1560, %v1560
    %1563 = vrot.lane.b32.xlu0 %v1561, 112
    %v1564 = vpop.permute.xlu0 %1563
    %1565 = vrot.lane.b32.xlu0 %v1562, 112
    %v1566 = vpop.permute.xlu0 %1565
    %v1567 = vpack.c.bf16 %v1488, %v1485
    %v1569 = vunpack.c.l.b16 %v1567
    %v1570 = vunpack.c.h.b16 %v1567
    %v1571 = vpack.c.b16 %v1569, %v1569
    %v1572 = vpack.c.b16 %v1570, %v1570
    %1573 = vrot.lane.b32.xlu0 %v1571, 112
    %v1574 = vpop.permute.xlu0 %1573
    %1575 = vrot.lane.b32.xlu0 %v1572, 112
    %v1576 = vpop.permute.xlu0 %1575
    %v1577 = vpack.c.bf16 %v1554, %v1551
    %v1579 = vunpack.c.l.b16 %v1577
    %v1580 = vunpack.c.h.b16 %v1577
    %v1581 = vpack.c.b16 %v1579, %v1579
    %v1582 = vpack.c.b16 %v1580, %v1580
    %1583 = vrot.lane.b32.xlu0 %v1581, 112
    %v1584 = vpop.permute.xlu0 %1583
    %1585 = vrot.lane.b32.xlu0 %v1582, 112
    %v1586 = vpop.permute.xlu0 %1585
    %v1588 = vsel %vm762, %v1561, 0
    %v1591 = vsel %vm762, %v1571, 0
    %1593 = vmatprep.subr.bf16.mxu0 0
    %1594 = vmatpush1.bf16.xpose.msra.mxu0 %v1591
    %1595 = vmatprep.subr.bf16.mxu0 0
    %1596 = vmatpush1.bf16.xpose.msra.mxu0 0
    %1597 = vmatprep.subr.bf16.mxu0 0
    %1598 = vmatpush1.bf16.xpose.msra.mxu0 0
    %1599 = vmatprep.subr.bf16.mxu0 0
    %1600 = vmatpush1.bf16.xpose.msra.mxu0 0
    %1601 = vmatprep.subr.bf16.mxu0 0
    %1602 = vmatpush1.bf16.xpose.msra.mxu0 0
    %1603 = vmatprep.subr.bf16.mxu0 0
    %1604 = vmatpush1.bf16.xpose.msra.mxu0 0
    %1605 = vmatprep.subr.bf16.mxu0 0
    %1606 = vmatpush1.bf16.xpose.msra.mxu0 0
    %1607 = vmatprep.subr.bf16.mxu0 0
    %1608 = vmatpush1.bf16.xpose.msra.mxu0 0
    %1609 = vmatprep.subr.bf16.mxu0 0
    %1610 = vmatpush1.bf16.xpose.msra.mxu0 0
    %1611 = vmatprep.subr.bf16.mxu0 0
    %1612 = vmatpush1.bf16.xpose.msra.mxu0 0
    %1613 = vmatprep.subr.bf16.mxu0 0
    %1614 = vmatpush1.bf16.xpose.msra.mxu0 0
    %1615 = vmatprep.subr.bf16.mxu0 0
    %1616 = vmatpush1.bf16.xpose.msra.mxu0 0
    %1617 = vmatprep.subr.bf16.mxu0 0
    %1618 = vmatpush1.bf16.xpose.msra.mxu0 0
    %1619 = vmatprep.subr.bf16.mxu0 0
    %1620 = vmatpush1.bf16.xpose.msra.mxu0 0
    %1621 = vmatprep.subr.bf16.mxu0 0
    %1622 = vmatpush1.bf16.xpose.msra.mxu0 0
    %1623 = vmatprep.subr.bf16.mxu0 0
    %1624 = vmatpush1.bf16.xpose.msra.mxu0 0
    %1625 = vmatprep.mubr.bf16.mxu0 0
    %1626 = vmatmul.mubr.bf16.gmra.mrb[0].mxu0 %v1588
    %v1627 = vpop.f32.mrb[0].mxu0
    %v1628 = vadd.f32 0.0, %v1627
    %v1629 = vpop.f32.mrb[0].mxu0
    %v1630 = vpop.f32.mrb[0].mxu0
    %v1631 = vpop.f32.mrb[0].mxu0
    %1632 = vdwg.mxu0
    %v1634 = vsel %vm762, %v1564, 0
    %v1637 = vsel %vm762, %v1574, 0
    %1639 = vmatprep.subr.bf16.mxu0 0
    %1640 = vmatpush1.bf16.xpose.msra.mxu0 %v1637
    %1641 = vmatprep.subr.bf16.mxu0 0
    %1642 = vmatpush1.bf16.xpose.msra.mxu0 0
    %1643 = vmatprep.subr.bf16.mxu0 0
    %1644 = vmatpush1.bf16.xpose.msra.mxu0 0
    %1645 = vmatprep.subr.bf16.mxu0 0
    %1646 = vmatpush1.bf16.xpose.msra.mxu0 0
    %1647 = vmatprep.subr.bf16.mxu0 0
    %1648 = vmatpush1.bf16.xpose.msra.mxu0 0
    %1649 = vmatprep.subr.bf16.mxu0 0
    %1650 = vmatpush1.bf16.xpose.msra.mxu0 0
    %1651 = vmatprep.subr.bf16.mxu0 0
    %1652 = vmatpush1.bf16.xpose.msra.mxu0 0
    %1653 = vmatprep.subr.bf16.mxu0 0
    %1654 = vmatpush1.bf16.xpose.msra.mxu0 0
    %1655 = vmatprep.subr.bf16.mxu0 0
    %1656 = vmatpush1.bf16.xpose.msra.mxu0 0
    %1657 = vmatprep.subr.bf16.mxu0 0
    %1658 = vmatpush1.bf16.xpose.msra.mxu0 0
    %1659 = vmatprep.subr.bf16.mxu0 0
    %1660 = vmatpush1.bf16.xpose.msra.mxu0 0
    %1661 = vmatprep.subr.bf16.mxu0 0
    %1662 = vmatpush1.bf16.xpose.msra.mxu0 0
    %1663 = vmatprep.subr.bf16.mxu0 0
    %1664 = vmatpush1.bf16.xpose.msra.mxu0 0
    %1665 = vmatprep.subr.bf16.mxu0 0
    %1666 = vmatpush1.bf16.xpose.msra.mxu0 0
    %1667 = vmatprep.subr.bf16.mxu0 0
    %1668 = vmatpush1.bf16.xpose.msra.mxu0 0
    %1669 = vmatprep.subr.bf16.mxu0 0
    %1670 = vmatpush1.bf16.xpose.msra.mxu0 0
    %1671 = vmatprep.mubr.bf16.mxu0 0
    %1672 = vmatmul.mubr.bf16.gmra.mrb[0].mxu0 %v1634
    %v1673 = vpop.f32.mrb[0].mxu0
    %v1674 = vadd.f32 0.0, %v1673
    %v1675 = vpop.f32.mrb[0].mxu0
    %v1676 = vpop.f32.mrb[0].mxu0
    %v1677 = vpop.f32.mrb[0].mxu0
    %1678 = vdwg.mxu0
    %v1680 = vsel %vm762, %v1562, 0
    %v1683 = vsel %vm762, %v1572, 0
    %1685 = vmatprep.subr.bf16.mxu0 0
    %1686 = vmatpush1.bf16.xpose.msra.mxu0 %v1683
    %1687 = vmatprep.subr.bf16.mxu0 0
    %1688 = vmatpush1.bf16.xpose.msra.mxu0 0
    %1689 = vmatprep.subr.bf16.mxu0 0
    %1690 = vmatpush1.bf16.xpose.msra.mxu0 0
    %1691 = vmatprep.subr.bf16.mxu0 0
    %1692 = vmatpush1.bf16.xpose.msra.mxu0 0
    %1693 = vmatprep.subr.bf16.mxu0 0
    %1694 = vmatpush1.bf16.xpose.msra.mxu0 0
    %1695 = vmatprep.subr.bf16.mxu0 0
    %1696 = vmatpush1.bf16.xpose.msra.mxu0 0
    %1697 = vmatprep.subr.bf16.mxu0 0
    %1698 = vmatpush1.bf16.xpose.msra.mxu0 0
    %1699 = vmatprep.subr.bf16.mxu0 0
    %1700 = vmatpush1.bf16.xpose.msra.mxu0 0
    %1701 = vmatprep.subr.bf16.mxu0 0
    %1702 = vmatpush1.bf16.xpose.msra.mxu0 0
    %1703 = vmatprep.subr.bf16.mxu0 0
    %1704 = vmatpush1.bf16.xpose.msra.mxu0 0
    %1705 = vmatprep.subr.bf16.mxu0 0
    %1706 = vmatpush1.bf16.xpose.msra.mxu0 0
    %1707 = vmatprep.subr.bf16.mxu0 0
    %1708 = vmatpush1.bf16.xpose.msra.mxu0 0
    %1709 = vmatprep.subr.bf16.mxu0 0
    %1710 = vmatpush1.bf16.xpose.msra.mxu0 0
    %1711 = vmatprep.subr.bf16.mxu0 0
    %1712 = vmatpush1.bf16.xpose.msra.mxu0 0
    %1713 = vmatprep.subr.bf16.mxu0 0
    %1714 = vmatpush1.bf16.xpose.msra.mxu0 0
    %1715 = vmatprep.subr.bf16.mxu0 0
    %1716 = vmatpush1.bf16.xpose.msra.mxu0 0
    %1717 = vmatprep.mubr.bf16.mxu0 0
    %1718 = vmatmul.mubr.bf16.gmra.mrb[0].mxu0 %v1680
    %v1719 = vpop.f32.mrb[0].mxu0
    %v1720 = vadd.f32 0.0, %v1719
    %v1721 = vpop.f32.mrb[0].mxu0
    %v1722 = vpop.f32.mrb[0].mxu0
    %v1723 = vpop.f32.mrb[0].mxu0
    %1724 = vdwg.mxu0
    %v1726 = vsel %vm762, %v1566, 0
    %v1729 = vsel %vm762, %v1576, 0
    %1731 = vmatprep.subr.bf16.mxu0 0
    %1732 = vmatpush1.bf16.xpose.msra.mxu0 %v1729
    %1733 = vmatprep.subr.bf16.mxu0 0
    %1734 = vmatpush1.bf16.xpose.msra.mxu0 0
    %1735 = vmatprep.subr.bf16.mxu0 0
    %1736 = vmatpush1.bf16.xpose.msra.mxu0 0
    %1737 = vmatprep.subr.bf16.mxu0 0
    %1738 = vmatpush1.bf16.xpose.msra.mxu0 0
    %1739 = vmatprep.subr.bf16.mxu0 0
    %1740 = vmatpush1.bf16.xpose.msra.mxu0 0
    %1741 = vmatprep.subr.bf16.mxu0 0
    %1742 = vmatpush1.bf16.xpose.msra.mxu0 0
    %1743 = vmatprep.subr.bf16.mxu0 0
    %1744 = vmatpush1.bf16.xpose.msra.mxu0 0
    %1745 = vmatprep.subr.bf16.mxu0 0
    %1746 = vmatpush1.bf16.xpose.msra.mxu0 0
    %1747 = vmatprep.subr.bf16.mxu0 0
    %1748 = vmatpush1.bf16.xpose.msra.mxu0 0
    %1749 = vmatprep.subr.bf16.mxu0 0
    %1750 = vmatpush1.bf16.xpose.msra.mxu0 0
    %1751 = vmatprep.subr.bf16.mxu0 0
    %1752 = vmatpush1.bf16.xpose.msra.mxu0 0
    %1753 = vmatprep.subr.bf16.mxu0 0
    %1754 = vmatpush1.bf16.xpose.msra.mxu0 0
    %1755 = vmatprep.subr.bf16.mxu0 0
    %1756 = vmatpush1.bf16.xpose.msra.mxu0 0
    %1757 = vmatprep.subr.bf16.mxu0 0
    %1758 = vmatpush1.bf16.xpose.msra.mxu0 0
    %1759 = vmatprep.subr.bf16.mxu0 0
    %1760 = vmatpush1.bf16.xpose.msra.mxu0 0
    %1761 = vmatprep.subr.bf16.mxu0 0
    %1762 = vmatpush1.bf16.xpose.msra.mxu0 0
    %1763 = vmatprep.mubr.bf16.mxu0 0
    %1764 = vmatmul.mubr.bf16.gmra.mrb[0].mxu0 %v1726
    %v1765 = vpop.f32.mrb[0].mxu0
    %v1766 = vadd.f32 0.0, %v1765
    %v1767 = vpop.f32.mrb[0].mxu0
    %v1768 = vpop.f32.mrb[0].mxu0
    %v1769 = vpop.f32.mrb[0].mxu0
    %1770 = vdwg.mxu0
    %vm1771 = vcmask 64512
    %v1772 = vsel %vm1771, %v1628, -inf
    %1773 = vmax.xlane.f32.xlu0 %v1772
    %v1774 = vpop.xlane.xlu0 %1773
    %v1775 = vsel %vm1771, %v1674, -inf
    %1776 = vmax.xlane.f32.xlu0 %v1775
    %v1777 = vpop.xlane.xlu0 %1776
    %v1778 = vsel %vm1771, %v1720, -inf
    %1779 = vmax.xlane.f32.xlu0 %v1778
    %v1780 = vpop.xlane.xlu0 %1779
    %v1781 = vsel %vm1771, %v1766, -inf
    %1782 = vmax.xlane.f32.xlu0 %v1781
    %v1783 = vpop.xlane.xlu0 %1782
    %v1784 = vsub.f32 %v1628, %v1774
    %v1785 = vsub.f32 %v1674, %v1777
    %v1786 = vsub.f32 %v1720, %v1780
    %v1787 = vsub.f32 %v1766, %v1783
    %v1788 = vmul.f32 %v1784, 1.442695
    %v1789 = vpow.pop %v1788
    %v1790 = vmul.f32 %v1785, 1.442695
    %v1791 = vpow.pop %v1790
    %v1792 = vmul.f32 %v1786, 1.442695
    %v1793 = vpow.pop %v1792
    %v1794 = vmul.f32 %v1787, 1.442695
    %v1795 = vpow.pop %v1794
    %v1796 = vsel %vm1771, %v1789, 0.0
    %1797 = vadd.xlane.f32.xlu0 %v1796
    %v1798 = vpop.xlane.xlu0 %1797
    %v1799 = vsel %vm1771, %v1791, 0.0
    %1800 = vadd.xlane.f32.xlu0 %v1799
    %v1801 = vpop.xlane.xlu0 %1800
    %v1802 = vsel %vm1771, %v1793, 0.0
    %1803 = vadd.xlane.f32.xlu0 %v1802
    %v1804 = vpop.xlane.xlu0 %1803
    %v1805 = vsel %vm1771, %v1795, 0.0
    %1806 = vadd.xlane.f32.xlu0 %v1805
    %v1807 = vpop.xlane.xlu0 %1806
    %v1808 = vrcp.pop %v1798
    %v1809 = vrcp.pop %v1801
    %v1810 = vrcp.pop %v1804
    %v1811 = vrcp.pop %v1807
    %v1812 = vmul.f32 %v1789, %v1808
    %v1813 = vmul.f32 %v1791, %v1809
    %v1814 = vmul.f32 %v1793, %v1810
    %v1815 = vmul.f32 %v1795, %v1811
    %v1816 = vpack.c.bf16 %v1812, %v1812
    %v1817 = vpack.c.bf16 %v1813, %v1813
    %v1818 = vpack.c.bf16 %v1814, %v1814
    %v1819 = vpack.c.bf16 %v1815, %v1815
    %v1821 = vsel %vm1771, %v1816, 0
    %vm1823 = vcmask 1043456
    %v1825 = vsel %vm1823, %v1581, 0
    %1827 = vmatprep.subr.bf16.mxu0 0
    %1828 = vmatpush1.bf16.msra.mxu0 %v1825
    %1829 = vmatprep.subr.bf16.mxu0 0
    %1830 = vmatpush1.bf16.msra.mxu0 0
    %1831 = vmatprep.subr.bf16.mxu0 0
    %1832 = vmatpush1.bf16.msra.mxu0 0
    %1833 = vmatprep.subr.bf16.mxu0 0
    %1834 = vmatpush1.bf16.msra.mxu0 0
    %1835 = vmatprep.subr.bf16.mxu0 0
    %1836 = vmatpush1.bf16.msra.mxu0 0
    %1837 = vmatprep.subr.bf16.mxu0 0
    %1838 = vmatpush1.bf16.msra.mxu0 0
    %1839 = vmatprep.subr.bf16.mxu0 0
    %1840 = vmatpush1.bf16.msra.mxu0 0
    %1841 = vmatprep.subr.bf16.mxu0 0
    %1842 = vmatpush1.bf16.msra.mxu0 0
    %1843 = vmatprep.subr.bf16.mxu0 0
    %1844 = vmatpush1.bf16.msra.mxu0 0
    %1845 = vmatprep.subr.bf16.mxu0 0
    %1846 = vmatpush1.bf16.msra.mxu0 0
    %1847 = vmatprep.subr.bf16.mxu0 0
    %1848 = vmatpush1.bf16.msra.mxu0 0
    %1849 = vmatprep.subr.bf16.mxu0 0
    %1850 = vmatpush1.bf16.msra.mxu0 0
    %1851 = vmatprep.subr.bf16.mxu0 0
    %1852 = vmatpush1.bf16.msra.mxu0 0
    %1853 = vmatprep.subr.bf16.mxu0 0
    %1854 = vmatpush1.bf16.msra.mxu0 0
    %1855 = vmatprep.subr.bf16.mxu0 0
    %1856 = vmatpush1.bf16.msra.mxu0 0
    %1857 = vmatprep.subr.bf16.mxu0 0
    %1858 = vmatpush1.bf16.msra.mxu0 0
    %1859 = vmatprep.mubr.bf16.mxu0 0
    %1860 = vmatmul.mubr.bf16.gmra.mrb[0].mxu0 %v1821
    %v1861 = vpop.f32.mrb[0].mxu0
    %v1862 = vadd.f32 0.0, %v1861
    %v1863 = vpop.f32.mrb[0].mxu0
    %v1864 = vpop.f32.mrb[0].mxu0
    %v1865 = vpop.f32.mrb[0].mxu0
    %1866 = vdwg.mxu0
    %v1868 = vsel %vm1771, %v1817, 0
    %v1871 = vsel %vm1823, %v1584, 0
    %1873 = vmatprep.subr.bf16.mxu0 0
    %1874 = vmatpush1.bf16.msra.mxu0 %v1871
    %1875 = vmatprep.subr.bf16.mxu0 0
    %1876 = vmatpush1.bf16.msra.mxu0 0
    %1877 = vmatprep.subr.bf16.mxu0 0
    %1878 = vmatpush1.bf16.msra.mxu0 0
    %1879 = vmatprep.subr.bf16.mxu0 0
    %1880 = vmatpush1.bf16.msra.mxu0 0
    %1881 = vmatprep.subr.bf16.mxu0 0
    %1882 = vmatpush1.bf16.msra.mxu0 0
    %1883 = vmatprep.subr.bf16.mxu0 0
    %1884 = vmatpush1.bf16.msra.mxu0 0
    %1885 = vmatprep.subr.bf16.mxu0 0
    %1886 = vmatpush1.bf16.msra.mxu0 0
    %1887 = vmatprep.subr.bf16.mxu0 0
    %1888 = vmatpush1.bf16.msra.mxu0 0
    %1889 = vmatprep.subr.bf16.mxu0 0
    %1890 = vmatpush1.bf16.msra.mxu0 0
    %1891 = vmatprep.subr.bf16.mxu0 0
    %1892 = vmatpush1.bf16.msra.mxu0 0
    %1893 = vmatprep.subr.bf16.mxu0 0
    %1894 = vmatpush1.bf16.msra.mxu0 0
    %1895 = vmatprep.subr.bf16.mxu0 0
    %1896 = vmatpush1.bf16.msra.mxu0 0
    %1897 = vmatprep.subr.bf16.mxu0 0
    %1898 = vmatpush1.bf16.msra.mxu0 0
    %1899 = vmatprep.subr.bf16.mxu0 0
    %1900 = vmatpush1.bf16.msra.mxu0 0
    %1901 = vmatprep.subr.bf16.mxu0 0
    %1902 = vmatpush1.bf16.msra.mxu0 0
    %1903 = vmatprep.subr.bf16.mxu0 0
    %1904 = vmatpush1.bf16.msra.mxu0 0
    %1905 = vmatprep.mubr.bf16.mxu0 0
    %1906 = vmatmul.mubr.bf16.gmra.mrb[0].mxu0 %v1868
    %v1907 = vpop.f32.mrb[0].mxu0
    %v1908 = vadd.f32 0.0, %v1907
    %v1909 = vpop.f32.mrb[0].mxu0
    %v1910 = vpop.f32.mrb[0].mxu0
    %v1911 = vpop.f32.mrb[0].mxu0
    %1912 = vdwg.mxu0
    %v1914 = vsel %vm1771, %v1818, 0
    %v1917 = vsel %vm1823, %v1582, 0
    %1919 = vmatprep.subr.bf16.mxu0 0
    %1920 = vmatpush1.bf16.msra.mxu0 %v1917
    %1921 = vmatprep.subr.bf16.mxu0 0
    %1922 = vmatpush1.bf16.msra.mxu0 0
    %1923 = vmatprep.subr.bf16.mxu0 0
    %1924 = vmatpush1.bf16.msra.mxu0 0
    %1925 = vmatprep.subr.bf16.mxu0 0
    %1926 = vmatpush1.bf16.msra.mxu0 0
    %1927 = vmatprep.subr.bf16.mxu0 0
    %1928 = vmatpush1.bf16.msra.mxu0 0
    %1929 = vmatprep.subr.bf16.mxu0 0
    %1930 = vmatpush1.bf16.msra.mxu0 0
    %1931 = vmatprep.subr.bf16.mxu0 0
    %1932 = vmatpush1.bf16.msra.mxu0 0
    %1933 = vmatprep.subr.bf16.mxu0 0
    %1934 = vmatpush1.bf16.msra.mxu0 0
    %1935 = vmatprep.subr.bf16.mxu0 0
    %1936 = vmatpush1.bf16.msra.mxu0 0
    %1937 = vmatprep.subr.bf16.mxu0 0
    %1938 = vmatpush1.bf16.msra.mxu0 0
    %1939 = vmatprep.subr.bf16.mxu0 0
    %1940 = vmatpush1.bf16.msra.mxu0 0
    %1941 = vmatprep.subr.bf16.mxu0 0
    %1942 = vmatpush1.bf16.msra.mxu0 0
    %1943 = vmatprep.subr.bf16.mxu0 0
    %1944 = vmatpush1.bf16.msra.mxu0 0
    %1945 = vmatprep.subr.bf16.mxu0 0
    %1946 = vmatpush1.bf16.msra.mxu0 0
    %1947 = vmatprep.subr.bf16.mxu0 0
    %1948 = vmatpush1.bf16.msra.mxu0 0
    %1949 = vmatprep.subr.bf16.mxu0 0
    %1950 = vmatpush1.bf16.msra.mxu0 0
    %1951 = vmatprep.mubr.bf16.mxu0 0
    %1952 = vmatmul.mubr.bf16.gmra.mrb[0].mxu0 %v1914
    %v1953 = vpop.f32.mrb[0].mxu0
    %v1954 = vadd.f32 0.0, %v1953
    %v1955 = vpop.f32.mrb[0].mxu0
    %v1956 = vpop.f32.mrb[0].mxu0
    %v1957 = vpop.f32.mrb[0].mxu0
    %1958 = vdwg.mxu0
    %v1960 = vsel %vm1771, %v1819, 0
    %v1963 = vsel %vm1823, %v1586, 0
    %1965 = vmatprep.subr.bf16.mxu0 0
    %1966 = vmatpush1.bf16.msra.mxu0 %v1963
    %1967 = vmatprep.subr.bf16.mxu0 0
    %1968 = vmatpush1.bf16.msra.mxu0 0
    %1969 = vmatprep.subr.bf16.mxu0 0
    %1970 = vmatpush1.bf16.msra.mxu0 0
    %1971 = vmatprep.subr.bf16.mxu0 0
    %1972 = vmatpush1.bf16.msra.mxu0 0
    %1973 = vmatprep.subr.bf16.mxu0 0
    %1974 = vmatpush1.bf16.msra.mxu0 0
    %1975 = vmatprep.subr.bf16.mxu0 0
    %1976 = vmatpush1.bf16.msra.mxu0 0
    %1977 = vmatprep.subr.bf16.mxu0 0
    %1978 = vmatpush1.bf16.msra.mxu0 0
    %1979 = vmatprep.subr.bf16.mxu0 0
    %1980 = vmatpush1.bf16.msra.mxu0 0
    %1981 = vmatprep.subr.bf16.mxu0 0
    %1982 = vmatpush1.bf16.msra.mxu0 0
    %1983 = vmatprep.subr.bf16.mxu0 0
    %1984 = vmatpush1.bf16.msra.mxu0 0
    %1985 = vmatprep.subr.bf16.mxu0 0
    %1986 = vmatpush1.bf16.msra.mxu0 0
    %1987 = vmatprep.subr.bf16.mxu0 0
    %1988 = vmatpush1.bf16.msra.mxu0 0
    %1989 = vmatprep.subr.bf16.mxu0 0
    %1990 = vmatpush1.bf16.msra.mxu0 0
    %1991 = vmatprep.subr.bf16.mxu0 0
    %1992 = vmatpush1.bf16.msra.mxu0 0
    %1993 = vmatprep.subr.bf16.mxu0 0
    %1994 = vmatpush1.bf16.msra.mxu0 0
    %1995 = vmatprep.subr.bf16.mxu0 0
    %1996 = vmatpush1.bf16.msra.mxu0 0
    %1997 = vmatprep.mubr.bf16.mxu0 0
    %1998 = vmatmul.mubr.bf16.gmra.mrb[0].mxu0 %v1960
    %v1999 = vpop.f32.mrb[0].mxu0
    %v2000 = vadd.f32 0.0, %v1999
    %v2001 = vpop.f32.mrb[0].mxu0
    %v2002 = vpop.f32.mrb[0].mxu0
    %v2003 = vpop.f32.mrb[0].mxu0
    %2004 = vdwg.mxu0
    %s2005 = scalar_lea.vmem [#allocation13], 112
    %v2006 = vld [vmem:[%s2005] sm:$0xf]
    %v2007 = vld [vmem:[%s2005 + $0x4] sm:$0xf]
    %v2008 = vld [vmem:[%s2005 + $0x8] sm:$0xf]
    %v2009 = vld [vmem:[%s2005 + $0xc] sm:$0xf]
    %v2010 = vpack.c.bf16 %v1954, %v1862
    %v2011 = vpack.c.bf16 %v2000, %v1908
    %v2014 = vunpack.c.l.b16 %v2008
    %v2015 = vunpack.c.l.b16 %v2009
    %v2016 = vpack.c.b16 %v2015, %v2014
    %v2019 = vsel %vm762, %v2011, 0
    %2021 = vmatprep.subr.bf16.mxu0 0
    %2022 = vmatpush1.bf16.msra.mxu0 %v2016
    %2023 = vmatprep.subr.bf16.mxu0 0
    %2024 = vmatpush1.bf16.msra.mxu0 0
    %2025 = vmatprep.subr.bf16.mxu0 0
    %2026 = vmatpush1.bf16.msra.mxu0 0
    %2027 = vmatprep.subr.bf16.mxu0 0
    %2028 = vmatpush1.bf16.msra.mxu0 0
    %2029 = vmatprep.subr.bf16.mxu0 0
    %2030 = vmatpush1.bf16.msra.mxu0 0
    %2031 = vmatprep.subr.bf16.mxu0 0
    %2032 = vmatpush1.bf16.msra.mxu0 0
    %2033 = vmatprep.subr.bf16.mxu0 0
    %2034 = vmatpush1.bf16.msra.mxu0 0
    %2035 = vmatprep.subr.bf16.mxu0 0
    %2036 = vmatpush1.bf16.msra.mxu0 0
    %2037 = vmatprep.subr.bf16.mxu0 0
    %2038 = vmatpush1.bf16.msra.mxu0 0
    %2039 = vmatprep.subr.bf16.mxu0 0
    %2040 = vmatpush1.bf16.msra.mxu0 0
    %2041 = vmatprep.subr.bf16.mxu0 0
    %2042 = vmatpush1.bf16.msra.mxu0 0
    %2043 = vmatprep.subr.bf16.mxu0 0
    %2044 = vmatpush1.bf16.msra.mxu0 0
    %2045 = vmatprep.subr.bf16.mxu0 0
    %2046 = vmatpush1.bf16.msra.mxu0 0
    %2047 = vmatprep.subr.bf16.mxu0 0
    %2048 = vmatpush1.bf16.msra.mxu0 0
    %2049 = vmatprep.subr.bf16.mxu0 0
    %2050 = vmatpush1.bf16.msra.mxu0 0
    %2051 = vmatprep.subr.bf16.mxu0 0
    %2052 = vmatpush1.bf16.msra.mxu0 0
    %2053 = vmatprep.mubr.bf16.mxu0 0
    %2054 = vmatmul.mubr.bf16.gmra.mrb[0].mxu0 %v2019
    %v2055 = vpop.f32.mrb[0].mxu0
    %v2056 = vadd.f32 0.0, %v2055
    %v2057 = vpop.f32.mrb[0].mxu0
    %v2058 = vpop.f32.mrb[0].mxu0
    %v2059 = vadd.f32 0.0, %v2058
    %v2060 = vpop.f32.mrb[0].mxu0
    %2061 = vdwg.mxu0
    %v2064 = vunpack.c.l.b16 %v2006
    %v2065 = vunpack.c.l.b16 %v2007
    %v2066 = vpack.c.b16 %v2065, %v2064
    %v2069 = vsel %vm762, %v2010, 0
    %2071 = vmatprep.subr.bf16.mxu0 0
    %2072 = vmatpush1.bf16.msra.mxu0 %v2066
    %2073 = vmatprep.subr.bf16.mxu0 0
    %2074 = vmatpush1.bf16.msra.mxu0 0
    %2075 = vmatprep.subr.bf16.mxu0 0
    %2076 = vmatpush1.bf16.msra.mxu0 0
    %2077 = vmatprep.subr.bf16.mxu0 0
    %2078 = vmatpush1.bf16.msra.mxu0 0
    %2079 = vmatprep.subr.bf16.mxu0 0
    %2080 = vmatpush1.bf16.msra.mxu0 0
    %2081 = vmatprep.subr.bf16.mxu0 0
    %2082 = vmatpush1.bf16.msra.mxu0 0
    %2083 = vmatprep.subr.bf16.mxu0 0
    %2084 = vmatpush1.bf16.msra.mxu0 0
    %2085 = vmatprep.subr.bf16.mxu0 0
    %2086 = vmatpush1.bf16.msra.mxu0 0
    %2087 = vmatprep.subr.bf16.mxu0 0
    %2088 = vmatpush1.bf16.msra.mxu0 0
    %2089 = vmatprep.subr.bf16.mxu0 0
    %2090 = vmatpush1.bf16.msra.mxu0 0
    %2091 = vmatprep.subr.bf16.mxu0 0
    %2092 = vmatpush1.bf16.msra.mxu0 0
    %2093 = vmatprep.subr.bf16.mxu0 0
    %2094 = vmatpush1.bf16.msra.mxu0 0
    %2095 = vmatprep.subr.bf16.mxu0 0
    %2096 = vmatpush1.bf16.msra.mxu0 0
    %2097 = vmatprep.subr.bf16.mxu0 0
    %2098 = vmatpush1.bf16.msra.mxu0 0
    %2099 = vmatprep.subr.bf16.mxu0 0
    %2100 = vmatpush1.bf16.msra.mxu0 0
    %2101 = vmatprep.subr.bf16.mxu0 0
    %2102 = vmatpush1.bf16.msra.mxu0 0
    %2103 = vmatprep.mubr.bf16.mxu0 0
    %2104 = vmatmul.mubr.bf16.gmra.mrb[0].mxu0 %v2069
    %v2105 = vpop.f32.mrb[0].mxu0
    %v2106 = vadd.f32 %v2056, %v2105
    %v2107 = vpop.f32.mrb[0].mxu0
    %v2108 = vpop.f32.mrb[0].mxu0
    %v2109 = vadd.f32 %v2059, %v2108
    %v2110 = vpop.f32.mrb[0].mxu0
    %2111 = vdwg.mxu0
    %v2112 = vlaneseq
    %v2113 = vshrl.u32 %v2112, 7
    %v2114 = vsub.s32 3, %v2113
    %v2115 = vrot.slane %v255, %v2114
    %v2116 = vadd.f32 %v2106, %v2115
    %v2117 = vadd.f32 %v2109, %v2115
    %v2118 = vadd.f32 %v1359, %v2116
    %v2119 = vadd.f32 %v1360, %v2117
    %v2120 = vsel %vm257, %v2118, 0.0
    %2121 = vadd.xlane.f32.xlu0 %v2120
    %v2122 = vpop.xlane.xlu0 %2121
    %v2123 = vsel %vm257, %v2119, 0.0
    %2124 = vadd.xlane.f32.xlu0 %v2123
    %v2125 = vpop.xlane.xlu0 %2124
    %v2126 = vmul.f32 %v2122, %v264
    %v2127 = vmul.f32 %v2125, %v264
    %v2128 = vsub.f32 %v2118, %v2126
    %v2129 = vsub.f32 %v2119, %v2127
    %v2130 = vmul.f32 %v2128, %v2128
    %v2131 = vmul.f32 %v2129, %v2129
    %v2132 = vsel %vm257, %v2130, 0.0
    %2133 = vadd.xlane.f32.xlu0 %v2132
    %v2134 = vpop.xlane.xlu0 %2133
    %v2135 = vsel %vm257, %v2131, 0.0
    %2136 = vadd.xlane.f32.xlu0 %v2135
    %v2137 = vpop.xlane.xlu0 %2136
    %v2138 = vmul.f32 %v2134, %v264
    %v2139 = vmul.f32 %v2137, %v264
    %v2140 = vadd.f32 %v2138, 1e-05
    %v2141 = vadd.f32 %v2139, 1e-05
    %v2142 = vrsqrt.pop %v2140
    %v2143 = vrsqrt.pop %v2141
    %v2144 = vmul.f32 %v2128, %v2142
    %v2145 = vmul.f32 %v2129, %v2143
    %v2146 = vlaneseq
    %v2147 = vshrl.u32 %v2146, 7
    %v2148 = vsub.s32 4, %v2147
    %v2149 = vrot.slane %v255, %v2148
    %v2150 = vmul.f32 %v2144, %v2149
    %v2151 = vmul.f32 %v2145, %v2149
    %v2152 = vlaneseq
    %v2153 = vshrl.u32 %v2152, 7
    %v2154 = vsub.s32 5, %v2153
    %v2155 = vrot.slane %v255, %v2154
    %v2156 = vadd.f32 %v2150, %v2155
    %v2157 = vadd.f32 %v2151, %v2155
    %v2158 = vpack.c.bf16 %v2157, %v2156
    %v2159 = vld [vmem:[#allocation14] sm:$0xf]
    %v2160 = vld [vmem:[#allocation14 + $0x4] sm:$0xf]
    %v2161 = vld [vmem:[#allocation14 + $0x8] sm:$0xf]
    %v2162 = vld [vmem:[#allocation14 + $0xc] sm:$0xf]
    %v2163 = vld [vmem:[#allocation16] sm:$0x1]
    %v2165 = vlaneseq
    %v2166 = vshrl.u32 %v2165, 7
    %v2167 = vsub.s32 0, %v2166
    %v2168 = vrot.slane %v2163, %v2167
    %v2174 = vunpack.c.l.b16 %v2159
    %v2175 = vunpack.c.l.b16 %v2160
    %v2176 = vunpack.c.l.b16 %v2161
    %v2177 = vunpack.c.l.b16 %v2162
    %v2178 = vpack.c.b16 %v2175, %v2174
    %v2179 = vpack.c.b16 %v2177, %v2176
    %v2183 = vsel %vm257, %v2158, 0
    %2185 = vmatprep.subr.bf16.mxu0 0
    %2186 = vmatpush1.bf16.msra.mxu0 %v2178
    %2187 = vmatprep.subr.bf16.mxu0 0
    %2188 = vmatpush1.bf16.msra.mxu0 %v2179
    %2189 = vmatprep.subr.bf16.mxu0 0
    %2190 = vmatpush1.bf16.msra.mxu0 0
    %2191 = vmatprep.subr.bf16.mxu0 0
    %2192 = vmatpush1.bf16.msra.mxu0 0
    %2193 = vmatprep.subr.bf16.mxu0 0
    %2194 = vmatpush1.bf16.msra.mxu0 0
    %2195 = vmatprep.subr.bf16.mxu0 0
    %2196 = vmatpush1.bf16.msra.mxu0 0
    %2197 = vmatprep.subr.bf16.mxu0 0
    %2198 = vmatpush1.bf16.msra.mxu0 0
    %2199 = vmatprep.subr.bf16.mxu0 0
    %2200 = vmatpush1.bf16.msra.mxu0 0
    %2201 = vmatprep.subr.bf16.mxu0 0
    %2202 = vmatpush1.bf16.msra.mxu0 0
    %2203 = vmatprep.subr.bf16.mxu0 0
    %2204 = vmatpush1.bf16.msra.mxu0 0
    %2205 = vmatprep.subr.bf16.mxu0 0
    %2206 = vmatpush1.bf16.msra.mxu0 0
    %2207 = vmatprep.subr.bf16.mxu0 0
    %2208 = vmatpush1.bf16.msra.mxu0 0
    %2209 = vmatprep.subr.bf16.mxu0 0
    %2210 = vmatpush1.bf16.msra.mxu0 0
    %2211 = vmatprep.subr.bf16.mxu0 0
    %2212 = vmatpush1.bf16.msra.mxu0 0
    %2213 = vmatprep.subr.bf16.mxu0 0
    %2214 = vmatpush1.bf16.msra.mxu0 0
    %2215 = vmatprep.subr.bf16.mxu0 0
    %2216 = vmatpush1.bf16.msra.mxu0 0
    %2217 = vmatprep.mubr.bf16.mxu0 0
    %2218 = vmatmul.mubr.bf16.gmra.mrb[0].mxu0 %v2183
    %v2219 = vpop.f32.mrb[0].mxu0
    %v2220 = vadd.f32 %v2168, %v2219
    %v2221 = vpop.f32.mrb[0].mxu0
    %v2222 = vpop.f32.mrb[0].mxu0
    %v2223 = vadd.f32 %v2168, %v2222
    %v2224 = vpop.f32.mrb[0].mxu0
    %2225 = vdwg.mxu0
    %v2226 = vmax.f32 %v2220, 0.0
    %v2227 = vmax.f32 %v2223, 0.0
    %v2228 = vpack.c.bf16 %v2227, %v2226
    %v2229 = vld [vmem:[#allocation17] sm:$0xf]
    %v2230 = vld [vmem:[#allocation17 + $0x4] sm:$0xf]
    %v2231 = vld [vmem:[#allocation17 + $0x8] sm:$0xf]
    %v2232 = vld [vmem:[#allocation17 + $0xc] sm:$0xf]
    %v2233 = vld [vmem:[#allocation17 + $0x10] sm:$0xf]
    %v2234 = vld [vmem:[#allocation17 + $0x14] sm:$0xf]
    %v2235 = vld [vmem:[#allocation17 + $0x18] sm:$0xf]
    %v2236 = vld [vmem:[#allocation17 + $0x1c] sm:$0xf]
    %v2245 = vunpack.c.l.b16 %v2229
    %v2246 = vunpack.c.l.b16 %v2230
    %v2247 = vunpack.c.l.b16 %v2231
    %v2248 = vunpack.c.l.b16 %v2232
    %v2249 = vunpack.c.l.b16 %v2233
    %v2250 = vunpack.c.l.b16 %v2234
    %v2251 = vunpack.c.l.b16 %v2235
    %v2252 = vunpack.c.l.b16 %v2236
    %v2253 = vpack.c.b16 %v2246, %v2245
    %v2254 = vpack.c.b16 %v2248, %v2247
    %v2255 = vpack.c.b16 %v2250, %v2249
    %v2256 = vpack.c.b16 %v2252, %v2251
    %v2262 = vsel %vm983, %v2228, 0
    %2264 = vmatprep.subr.bf16.mxu0 0
    %2265 = vmatpush1.bf16.msra.mxu0 %v2253
    %2266 = vmatprep.subr.bf16.mxu0 0
    %2267 = vmatpush1.bf16.msra.mxu0 %v2254
    %2268 = vmatprep.subr.bf16.mxu0 0
    %2269 = vmatpush1.bf16.msra.mxu0 %v2255
    %2270 = vmatprep.subr.bf16.mxu0 0
    %2271 = vmatpush1.bf16.msra.mxu0 %v2256
    %2272 = vmatprep.subr.bf16.mxu0 0
    %2273 = vmatpush1.bf16.msra.mxu0 0
    %2274 = vmatprep.subr.bf16.mxu0 0
    %2275 = vmatpush1.bf16.msra.mxu0 0
    %2276 = vmatprep.subr.bf16.mxu0 0
    %2277 = vmatpush1.bf16.msra.mxu0 0
    %2278 = vmatprep.subr.bf16.mxu0 0
    %2279 = vmatpush1.bf16.msra.mxu0 0
    %2280 = vmatprep.subr.bf16.mxu0 0
    %2281 = vmatpush1.bf16.msra.mxu0 0
    %2282 = vmatprep.subr.bf16.mxu0 0
    %2283 = vmatpush1.bf16.msra.mxu0 0
    %2284 = vmatprep.subr.bf16.mxu0 0
    %2285 = vmatpush1.bf16.msra.mxu0 0
    %2286 = vmatprep.subr.bf16.mxu0 0
    %2287 = vmatpush1.bf16.msra.mxu0 0
    %2288 = vmatprep.subr.bf16.mxu0 0
    %2289 = vmatpush1.bf16.msra.mxu0 0
    %2290 = vmatprep.subr.bf16.mxu0 0
    %2291 = vmatpush1.bf16.msra.mxu0 0
    %2292 = vmatprep.subr.bf16.mxu0 0
    %2293 = vmatpush1.bf16.msra.mxu0 0
    %2294 = vmatprep.subr.bf16.mxu0 0
    %2295 = vmatpush1.bf16.msra.mxu0 0
    %2296 = vmatprep.mubr.bf16.mxu0 0
    %2297 = vmatmul.mubr.bf16.gmra.mrb[0].mxu0 %v2262
    %v2298 = vpop.f32.mrb[0].mxu0
    %v2299 = vadd.f32 0.0, %v2298
    %v2300 = vpop.f32.mrb[0].mxu0
    %v2301 = vpop.f32.mrb[0].mxu0
    %v2302 = vadd.f32 0.0, %v2301
    %v2303 = vpop.f32.mrb[0].mxu0
    %2304 = vdwg.mxu0
    %v2305 = vadd.f32 %v2118, %v2299
    %v2306 = vadd.f32 %v2119, %v2302
    %v2307 = vlaneseq
    %v2308 = vshrl.u32 %v2307, 7
    %v2309 = vsub.s32 6, %v2308
    %v2310 = vrot.slane %v255, %v2309
    %v2311 = vadd.f32 %v2305, %v2310
    %v2312 = vadd.f32 %v2306, %v2310
    %2313 = vst.msk [vmem:[#allocation22] sm:$0xff] %vm257, %v2311
    %2314 = vst.msk [vmem:[#allocation22 + $0x8] sm:$0xff] %vm257, %v2312
    %s2315 = scalar_lea.vmem [#allocation13], 128
    %v2316 = vld [vmem:[%s2315] sm:$0xf]
    %v2317 = vld [vmem:[%s2315 + $0x4] sm:$0xf]
    %v2318 = vld [vmem:[%s2315 + $0x8] sm:$0xf]
    %v2319 = vld [vmem:[%s2315 + $0xc] sm:$0xf]
    %v2320 = vlaneseq
    %v2321 = vshrl.u32 %v2320, 7
    %v2322 = vsub.s32 7, %v2321
    %v2323 = vrot.slane %v255, %v2322
    %v2328 = vunpack.c.l.b16 %v2316
    %v2329 = vunpack.c.l.b16 %v2317
    %v2330 = vunpack.c.l.b16 %v2318
    %v2331 = vunpack.c.l.b16 %v2319
    %v2332 = vpack.c.b16 %v2329, %v2328
    %v2333 = vpack.c.b16 %v2331, %v2330
    %2336 = vmatprep.subr.bf16.mxu0 0
    %2337 = vmatpush1.bf16.msra.mxu0 %v2332
    %2338 = vmatprep.subr.bf16.mxu0 0
    %2339 = vmatpush1.bf16.msra.mxu0 %v2333
    %2340 = vmatprep.subr.bf16.mxu0 0
    %2341 = vmatpush1.bf16.msra.mxu0 0
    %2342 = vmatprep.subr.bf16.mxu0 0
    %2343 = vmatpush1.bf16.msra.mxu0 0
    %2344 = vmatprep.subr.bf16.mxu0 0
    %2345 = vmatpush1.bf16.msra.mxu0 0
    %2346 = vmatprep.subr.bf16.mxu0 0
    %2347 = vmatpush1.bf16.msra.mxu0 0
    %2348 = vmatprep.subr.bf16.mxu0 0
    %2349 = vmatpush1.bf16.msra.mxu0 0
    %2350 = vmatprep.subr.bf16.mxu0 0
    %2351 = vmatpush1.bf16.msra.mxu0 0
    %2352 = vmatprep.subr.bf16.mxu0 0
    %2353 = vmatpush1.bf16.msra.mxu0 0
    %2354 = vmatprep.subr.bf16.mxu0 0
    %2355 = vmatpush1.bf16.msra.mxu0 0
    %2356 = vmatprep.subr.bf16.mxu0 0
    %2357 = vmatpush1.bf16.msra.mxu0 0
    %2358 = vmatprep.subr.bf16.mxu0 0
    %2359 = vmatpush1.bf16.msra.mxu0 0
    %2360 = vmatprep.subr.bf16.mxu0 0
    %2361 = vmatpush1.bf16.msra.mxu0 0
    %2362 = vmatprep.subr.bf16.mxu0 0
    %2363 = vmatpush1.bf16.msra.mxu0 0
    %2364 = vmatprep.subr.bf16.mxu0 0
    %2365 = vmatpush1.bf16.msra.mxu0 0
    %2366 = vmatprep.subr.bf16.mxu0 0
    %2367 = vmatpush1.bf16.msra.mxu0 0
    %2368 = vmatprep.mubr.bf16.mxu0 0
    %2369 = vmatmul.mubr.bf16.gmra.mrb[0].mxu0 %v410
    %v2370 = vpop.f32.mrb[0].mxu0
    %v2371 = vadd.f32 %v2323, %v2370
    %v2372 = vpop.f32.mrb[0].mxu0
    %v2373 = vpop.f32.mrb[0].mxu0
    %v2374 = vadd.f32 %v2323, %v2373
    %v2375 = vpop.f32.mrb[0].mxu0
    %2376 = vmatprep.mubr.bf16.mxu0 0
    %2377 = vmatmul.mubr.bf16.gmra.mrb[0].mxu0 %v413
    %v2378 = vpop.f32.mrb[0].mxu0
    %v2379 = vadd.f32 %v2323, %v2378
    %v2380 = vpop.f32.mrb[0].mxu0
    %v2381 = vpop.f32.mrb[0].mxu0
    %v2382 = vadd.f32 %v2323, %v2381
    %v2383 = vpop.f32.mrb[0].mxu0
    %2384 = vmatprep.mubr.bf16.mxu0 0
    %2385 = vmatmul.mubr.bf16.gmra.mrb[0].mxu0 %v416
    %v2386 = vpop.f32.mrb[0].mxu0
    %v2387 = vadd.f32 %v2323, %v2386
    %v2388 = vpop.f32.mrb[0].mxu0
    %v2389 = vpop.f32.mrb[0].mxu0
    %v2390 = vadd.f32 %v2323, %v2389
    %v2391 = vpop.f32.mrb[0].mxu0
    %2392 = vmatprep.mubr.bf16.mxu0 0
    %2393 = vmatmul.mubr.bf16.gmra.mrb[0].mxu0 %v419
    %v2394 = vpop.f32.mrb[0].mxu0
    %v2395 = vadd.f32 %v2323, %v2394
    %v2396 = vpop.f32.mrb[0].mxu0
    %v2397 = vpop.f32.mrb[0].mxu0
    %v2398 = vadd.f32 %v2323, %v2397
    %v2399 = vpop.f32.mrb[0].mxu0
    %2400 = vmatprep.mubr.bf16.mxu0 0
    %2401 = vmatmul.mubr.bf16.gmra.mrb[0].mxu0 %v422
    %v2402 = vpop.f32.mrb[0].mxu0
    %v2403 = vadd.f32 %v2323, %v2402
    %v2404 = vpop.f32.mrb[0].mxu0
    %v2405 = vpop.f32.mrb[0].mxu0
    %v2406 = vadd.f32 %v2323, %v2405
    %v2407 = vpop.f32.mrb[0].mxu0
    %2408 = vmatprep.mubr.bf16.mxu0 0
    %2409 = vmatmul.mubr.bf16.gmra.mrb[0].mxu0 %v425
    %v2410 = vpop.f32.mrb[0].mxu0
    %v2411 = vadd.f32 %v2323, %v2410
    %v2412 = vpop.f32.mrb[0].mxu0
    %v2413 = vpop.f32.mrb[0].mxu0
    %v2414 = vadd.f32 %v2323, %v2413
    %v2415 = vpop.f32.mrb[0].mxu0
    %2416 = vmatprep.mubr.bf16.mxu0 0
    %2417 = vmatmul.mubr.bf16.gmra.mrb[0].mxu0 %v428
    %v2418 = vpop.f32.mrb[0].mxu0
    %v2419 = vadd.f32 %v2323, %v2418
    %v2420 = vpop.f32.mrb[0].mxu0
    %v2421 = vpop.f32.mrb[0].mxu0
    %v2422 = vadd.f32 %v2323, %v2421
    %v2423 = vpop.f32.mrb[0].mxu0
    %2424 = vmatprep.mubr.bf16.mxu0 0
    %2425 = vmatmul.mubr.bf16.gmra.mrb[0].mxu0 %v431
    %v2426 = vpop.f32.mrb[0].mxu0
    %v2427 = vadd.f32 %v2323, %v2426
    %v2428 = vpop.f32.mrb[0].mxu0
    %v2429 = vpop.f32.mrb[0].mxu0
    %v2430 = vadd.f32 %v2323, %v2429
    %v2431 = vpop.f32.mrb[0].mxu0
    %2432 = vdwg.mxu0
    %v2433 = vadd.f32 %v2311, %v212
    %v2434 = vadd.f32 %v2312, %v213
    %v2435 = vpack.c.bf16 %v2434, %v2433
    %s2436 = scalar_lea.vmem [#allocation13], 144
    %v2437 = vld [vmem:[%s2436] sm:$0xf]
    %v2438 = vld [vmem:[%s2436 + $0x4] sm:$0xf]
    %v2439 = vld [vmem:[%s2436 + $0x8] sm:$0xf]
    %v2440 = vld [vmem:[%s2436 + $0xc] sm:$0xf]
    %v2441 = vlaneseq
    %v2442 = vshrl.u32 %v2441, 7
    %v2443 = vsub.s32 0, %v2442
    %v2444 = vrot.slane %v256, %v2443
    %v2449 = vunpack.c.l.b16 %v2437
    %v2450 = vunpack.c.l.b16 %v2438
    %v2451 = vunpack.c.l.b16 %v2439
    %v2452 = vunpack.c.l.b16 %v2440
    %v2453 = vpack.c.b16 %v2450, %v2449
    %v2454 = vpack.c.b16 %v2452, %v2451
    %v2458 = vsel %vm257, %v2435, 0
    %2460 = vmatprep.subr.bf16.mxu0 0
    %2461 = vmatpush1.bf16.msra.mxu0 %v2453
    %2462 = vmatprep.subr.bf16.mxu0 0
    %2463 = vmatpush1.bf16.msra.mxu0 %v2454
    %2464 = vmatprep.subr.bf16.mxu0 0
    %2465 = vmatpush1.bf16.msra.mxu0 0
    %2466 = vmatprep.subr.bf16.mxu0 0
    %2467 = vmatpush1.bf16.msra.mxu0 0
    %2468 = vmatprep.subr.bf16.mxu0 0
    %2469 = vmatpush1.bf16.msra.mxu0 0
    %2470 = vmatprep.subr.bf16.mxu0 0
    %2471 = vmatpush1.bf16.msra.mxu0 0
    %2472 = vmatprep.subr.bf16.mxu0 0
    %2473 = vmatpush1.bf16.msra.mxu0 0
    %2474 = vmatprep.subr.bf16.mxu0 0
    %2475 = vmatpush1.bf16.msra.mxu0 0
    %2476 = vmatprep.subr.bf16.mxu0 0
    %2477 = vmatpush1.bf16.msra.mxu0 0
    %2478 = vmatprep.subr.bf16.mxu0 0
    %2479 = vmatpush1.bf16.msra.mxu0 0
    %2480 = vmatprep.subr.bf16.mxu0 0
    %2481 = vmatpush1.bf16.msra.mxu0 0
    %2482 = vmatprep.subr.bf16.mxu0 0
    %2483 = vmatpush1.bf16.msra.mxu0 0
    %2484 = vmatprep.subr.bf16.mxu0 0
    %2485 = vmatpush1.bf16.msra.mxu0 0
    %2486 = vmatprep.subr.bf16.mxu0 0
    %2487 = vmatpush1.bf16.msra.mxu0 0
    %2488 = vmatprep.subr.bf16.mxu0 0
    %2489 = vmatpush1.bf16.msra.mxu0 0
    %2490 = vmatprep.subr.bf16.mxu0 0
    %2491 = vmatpush1.bf16.msra.mxu0 0
    %2492 = vmatprep.mubr.bf16.mxu0 0
    %2493 = vmatmul.mubr.bf16.gmra.mrb[0].mxu0 %v2458
    %v2494 = vpop.f32.mrb[0].mxu0
    %v2495 = vadd.f32 %v2444, %v2494
    %v2496 = vpop.f32.mrb[0].mxu0
    %v2497 = vpop.f32.mrb[0].mxu0
    %v2498 = vadd.f32 %v2444, %v2497
    %v2499 = vpop.f32.mrb[0].mxu0
    %2500 = vdwg.mxu0
    %v2501 = vpack.c.bf16 %v2312, %v2311
    %s2502 = scalar_lea.vmem [#allocation13], 160
    %v2503 = vld [vmem:[%s2502] sm:$0xf]
    %v2504 = vld [vmem:[%s2502 + $0x4] sm:$0xf]
    %v2505 = vld [vmem:[%s2502 + $0x8] sm:$0xf]
    %v2506 = vld [vmem:[%s2502 + $0xc] sm:$0xf]
    %v2507 = vlaneseq
    %v2508 = vshrl.u32 %v2507, 7
    %v2509 = vsub.s32 1, %v2508
    %v2510 = vrot.slane %v256, %v2509
    %v2515 = vunpack.c.l.b16 %v2503
    %v2516 = vunpack.c.l.b16 %v2504
    %v2517 = vunpack.c.l.b16 %v2505
    %v2518 = vunpack.c.l.b16 %v2506
    %v2519 = vpack.c.b16 %v2516, %v2515
    %v2520 = vpack.c.b16 %v2518, %v2517
    %v2524 = vsel %vm257, %v2501, 0
    %2526 = vmatprep.subr.bf16.mxu0 0
    %2527 = vmatpush1.bf16.msra.mxu0 %v2519
    %2528 = vmatprep.subr.bf16.mxu0 0
    %2529 = vmatpush1.bf16.msra.mxu0 %v2520
    %2530 = vmatprep.subr.bf16.mxu0 0
    %2531 = vmatpush1.bf16.msra.mxu0 0
    %2532 = vmatprep.subr.bf16.mxu0 0
    %2533 = vmatpush1.bf16.msra.mxu0 0
    %2534 = vmatprep.subr.bf16.mxu0 0
    %2535 = vmatpush1.bf16.msra.mxu0 0
    %2536 = vmatprep.subr.bf16.mxu0 0
    %2537 = vmatpush1.bf16.msra.mxu0 0
    %2538 = vmatprep.subr.bf16.mxu0 0
    %2539 = vmatpush1.bf16.msra.mxu0 0
    %2540 = vmatprep.subr.bf16.mxu0 0
    %2541 = vmatpush1.bf16.msra.mxu0 0
    %2542 = vmatprep.subr.bf16.mxu0 0
    %2543 = vmatpush1.bf16.msra.mxu0 0
    %2544 = vmatprep.subr.bf16.mxu0 0
    %2545 = vmatpush1.bf16.msra.mxu0 0
    %2546 = vmatprep.subr.bf16.mxu0 0
    %2547 = vmatpush1.bf16.msra.mxu0 0
    %2548 = vmatprep.subr.bf16.mxu0 0
    %2549 = vmatpush1.bf16.msra.mxu0 0
    %2550 = vmatprep.subr.bf16.mxu0 0
    %2551 = vmatpush1.bf16.msra.mxu0 0
    %2552 = vmatprep.subr.bf16.mxu0 0
    %2553 = vmatpush1.bf16.msra.mxu0 0
    %2554 = vmatprep.subr.bf16.mxu0 0
    %2555 = vmatpush1.bf16.msra.mxu0 0
    %2556 = vmatprep.subr.bf16.mxu0 0
    %2557 = vmatpush1.bf16.msra.mxu0 0
    %2558 = vmatprep.mubr.bf16.mxu0 0
    %2559 = vmatmul.mubr.bf16.gmra.mrb[0].mxu0 %v2524
    %v2560 = vpop.f32.mrb[0].mxu0
    %v2561 = vadd.f32 %v2510, %v2560
    %v2562 = vpop.f32.mrb[0].mxu0
    %v2563 = vpop.f32.mrb[0].mxu0
    %v2564 = vadd.f32 %v2510, %v2563
    %v2565 = vpop.f32.mrb[0].mxu0
    %2566 = vdwg.mxu0
    %v2567 = vpack.c.bf16 %v2374, %v2371
    %v2568 = vpack.c.bf16 %v2382, %v2379
    %v2569 = vpack.c.bf16 %v2390, %v2387
    %v2570 = vpack.c.bf16 %v2398, %v2395
    %v2571 = vpack.c.bf16 %v2406, %v2403
    %v2572 = vpack.c.bf16 %v2414, %v2411
    %v2573 = vpack.c.bf16 %v2422, %v2419
    %v2574 = vpack.c.bf16 %v2430, %v2427
    %2583 = vrot.lane.b32.xlu0 %v2567, 112
    %v2584 = vpop.permute.xlu0 %2583
    %2585 = vrot.lane.b32.xlu0 %v2568, 112
    %v2586 = vpop.permute.xlu0 %2585
    %2587 = vrot.lane.b32.xlu0 %v2569, 112
    %v2588 = vpop.permute.xlu0 %2587
    %2589 = vrot.lane.b32.xlu0 %v2570, 112
    %v2590 = vpop.permute.xlu0 %2589
    %2591 = vrot.lane.b32.xlu0 %v2571, 112
    %v2592 = vpop.permute.xlu0 %2591
    %2593 = vrot.lane.b32.xlu0 %v2572, 112
    %v2594 = vpop.permute.xlu0 %2593
    %2595 = vrot.lane.b32.xlu0 %v2573, 112
    %v2596 = vpop.permute.xlu0 %2595
    %2597 = vrot.lane.b32.xlu0 %v2574, 112
    %v2598 = vpop.permute.xlu0 %2597
    %v2599 = vpack.c.bf16 %v2498, %v2495
    %v2601 = vunpack.c.l.b16 %v2599
    %v2602 = vunpack.c.h.b16 %v2599
    %v2603 = vpack.c.b16 %v2601, %v2601
    %v2604 = vpack.c.b16 %v2602, %v2602
    %2605 = vrot.lane.b32.xlu0 %v2603, 112
    %v2606 = vpop.permute.xlu0 %2605
    %2607 = vrot.lane.b32.xlu0 %v2604, 112
    %v2608 = vpop.permute.xlu0 %2607
    %v2609 = vpack.c.bf16 %v2564, %v2561
    %v2611 = vunpack.c.l.b16 %v2609
    %v2612 = vunpack.c.h.b16 %v2609
    %v2613 = vpack.c.b16 %v2611, %v2611
    %v2614 = vpack.c.b16 %v2612, %v2612
    %2615 = vrot.lane.b32.xlu0 %v2613, 112
    %v2616 = vpop.permute.xlu0 %2615
    %2617 = vrot.lane.b32.xlu0 %v2614, 112
    %v2618 = vpop.permute.xlu0 %2617
    %v2620 = vsel %vm762, %v2567, 0
    %v2623 = vsel %vm762, %v2568, 0
    %v2626 = vsel %vm762, %v2569, 0
    %v2629 = vsel %vm762, %v2570, 0
    %v2632 = vsel %vm762, %v2603, 0
    %2634 = vmatprep.subr.bf16.mxu0 0
    %2635 = vmatpush1.bf16.xpose.msra.mxu0 %v2632
    %2636 = vmatprep.subr.bf16.mxu0 0
    %2637 = vmatpush1.bf16.xpose.msra.mxu0 0
    %2638 = vmatprep.subr.bf16.mxu0 0
    %2639 = vmatpush1.bf16.xpose.msra.mxu0 0
    %2640 = vmatprep.subr.bf16.mxu0 0
    %2641 = vmatpush1.bf16.xpose.msra.mxu0 0
    %2642 = vmatprep.subr.bf16.mxu0 0
    %2643 = vmatpush1.bf16.xpose.msra.mxu0 0
    %2644 = vmatprep.subr.bf16.mxu0 0
    %2645 = vmatpush1.bf16.xpose.msra.mxu0 0
    %2646 = vmatprep.subr.bf16.mxu0 0
    %2647 = vmatpush1.bf16.xpose.msra.mxu0 0
    %2648 = vmatprep.subr.bf16.mxu0 0
    %2649 = vmatpush1.bf16.xpose.msra.mxu0 0
    %2650 = vmatprep.subr.bf16.mxu0 0
    %2651 = vmatpush1.bf16.xpose.msra.mxu0 0
    %2652 = vmatprep.subr.bf16.mxu0 0
    %2653 = vmatpush1.bf16.xpose.msra.mxu0 0
    %2654 = vmatprep.subr.bf16.mxu0 0
    %2655 = vmatpush1.bf16.xpose.msra.mxu0 0
    %2656 = vmatprep.subr.bf16.mxu0 0
    %2657 = vmatpush1.bf16.xpose.msra.mxu0 0
    %2658 = vmatprep.subr.bf16.mxu0 0
    %2659 = vmatpush1.bf16.xpose.msra.mxu0 0
    %2660 = vmatprep.subr.bf16.mxu0 0
    %2661 = vmatpush1.bf16.xpose.msra.mxu0 0
    %2662 = vmatprep.subr.bf16.mxu0 0
    %2663 = vmatpush1.bf16.xpose.msra.mxu0 0
    %2664 = vmatprep.subr.bf16.mxu0 0
    %2665 = vmatpush1.bf16.xpose.msra.mxu0 0
    %2666 = vmatprep.mubr.bf16.mxu0 0
    %2667 = vmatmul.mubr.bf16.gmra.mrb[0].mxu0 %v2620
    %v2668 = vpop.f32.mrb[0].mxu0
    %v2669 = vadd.f32 0.0, %v2668
    %v2670 = vpop.f32.mrb[0].mxu0
    %v2671 = vpop.f32.mrb[0].mxu0
    %v2672 = vadd.f32 0.0, %v2671
    %v2673 = vpop.f32.mrb[0].mxu0
    %2674 = vmatprep.mubr.bf16.mxu0 0
    %2675 = vmatmul.mubr.bf16.gmra.mrb[0].mxu0 %v2623
    %v2676 = vpop.f32.mrb[0].mxu0
    %v2677 = vadd.f32 0.0, %v2676
    %v2678 = vpop.f32.mrb[0].mxu0
    %v2679 = vpop.f32.mrb[0].mxu0
    %v2680 = vadd.f32 0.0, %v2679
    %v2681 = vpop.f32.mrb[0].mxu0
    %2682 = vmatprep.mubr.bf16.mxu0 0
    %2683 = vmatmul.mubr.bf16.gmra.mrb[0].mxu0 %v2626
    %v2684 = vpop.f32.mrb[0].mxu0
    %v2685 = vadd.f32 0.0, %v2684
    %v2686 = vpop.f32.mrb[0].mxu0
    %v2687 = vpop.f32.mrb[0].mxu0
    %v2688 = vadd.f32 0.0, %v2687
    %v2689 = vpop.f32.mrb[0].mxu0
    %2690 = vmatprep.mubr.bf16.mxu0 0
    %2691 = vmatmul.mubr.bf16.gmra.mrb[0].mxu0 %v2629
    %v2692 = vpop.f32.mrb[0].mxu0
    %v2693 = vadd.f32 0.0, %v2692
    %v2694 = vpop.f32.mrb[0].mxu0
    %v2695 = vpop.f32.mrb[0].mxu0
    %v2696 = vadd.f32 0.0, %v2695
    %v2697 = vpop.f32.mrb[0].mxu0
    %2698 = vdwg.mxu0
    %v2700 = vsel %vm762, %v2584, 0
    %v2703 = vsel %vm762, %v2586, 0
    %v2706 = vsel %vm762, %v2588, 0
    %v2709 = vsel %vm762, %v2590, 0
    %v2712 = vsel %vm762, %v2606, 0
    %2714 = vmatprep.subr.bf16.mxu0 0
    %2715 = vmatpush1.bf16.xpose.msra.mxu0 %v2712
    %2716 = vmatprep.subr.bf16.mxu0 0
    %2717 = vmatpush1.bf16.xpose.msra.mxu0 0
    %2718 = vmatprep.subr.bf16.mxu0 0
    %2719 = vmatpush1.bf16.xpose.msra.mxu0 0
    %2720 = vmatprep.subr.bf16.mxu0 0
    %2721 = vmatpush1.bf16.xpose.msra.mxu0 0
    %2722 = vmatprep.subr.bf16.mxu0 0
    %2723 = vmatpush1.bf16.xpose.msra.mxu0 0
    %2724 = vmatprep.subr.bf16.mxu0 0
    %2725 = vmatpush1.bf16.xpose.msra.mxu0 0
    %2726 = vmatprep.subr.bf16.mxu0 0
    %2727 = vmatpush1.bf16.xpose.msra.mxu0 0
    %2728 = vmatprep.subr.bf16.mxu0 0
    %2729 = vmatpush1.bf16.xpose.msra.mxu0 0
    %2730 = vmatprep.subr.bf16.mxu0 0
    %2731 = vmatpush1.bf16.xpose.msra.mxu0 0
    %2732 = vmatprep.subr.bf16.mxu0 0
    %2733 = vmatpush1.bf16.xpose.msra.mxu0 0
    %2734 = vmatprep.subr.bf16.mxu0 0
    %2735 = vmatpush1.bf16.xpose.msra.mxu0 0
    %2736 = vmatprep.subr.bf16.mxu0 0
    %2737 = vmatpush1.bf16.xpose.msra.mxu0 0
    %2738 = vmatprep.subr.bf16.mxu0 0
    %2739 = vmatpush1.bf16.xpose.msra.mxu0 0
    %2740 = vmatprep.subr.bf16.mxu0 0
    %2741 = vmatpush1.bf16.xpose.msra.mxu0 0
    %2742 = vmatprep.subr.bf16.mxu0 0
    %2743 = vmatpush1.bf16.xpose.msra.mxu0 0
    %2744 = vmatprep.subr.bf16.mxu0 0
    %2745 = vmatpush1.bf16.xpose.msra.mxu0 0
    %2746 = vmatprep.mubr.bf16.mxu0 0
    %2747 = vmatmul.mubr.bf16.gmra.mrb[0].mxu0 %v2700
    %v2748 = vpop.f32.mrb[0].mxu0
    %v2749 = vadd.f32 0.0, %v2748
    %v2750 = vpop.f32.mrb[0].mxu0
    %v2751 = vpop.f32.mrb[0].mxu0
    %v2752 = vadd.f32 0.0, %v2751
    %v2753 = vpop.f32.mrb[0].mxu0
    %2754 = vmatprep.mubr.bf16.mxu0 0
    %2755 = vmatmul.mubr.bf16.gmra.mrb[0].mxu0 %v2703
    %v2756 = vpop.f32.mrb[0].mxu0
    %v2757 = vadd.f32 0.0, %v2756
    %v2758 = vpop.f32.mrb[0].mxu0
    %v2759 = vpop.f32.mrb[0].mxu0
    %v2760 = vadd.f32 0.0, %v2759
    %v2761 = vpop.f32.mrb[0].mxu0
    %2762 = vmatprep.mubr.bf16.mxu0 0
    %2763 = vmatmul.mubr.bf16.gmra.mrb[0].mxu0 %v2706
    %v2764 = vpop.f32.mrb[0].mxu0
    %v2765 = vadd.f32 0.0, %v2764
    %v2766 = vpop.f32.mrb[0].mxu0
    %v2767 = vpop.f32.mrb[0].mxu0
    %v2768 = vadd.f32 0.0, %v2767
    %v2769 = vpop.f32.mrb[0].mxu0
    %2770 = vmatprep.mubr.bf16.mxu0 0
    %2771 = vmatmul.mubr.bf16.gmra.mrb[0].mxu0 %v2709
    %v2772 = vpop.f32.mrb[0].mxu0
    %v2773 = vadd.f32 0.0, %v2772
    %v2774 = vpop.f32.mrb[0].mxu0
    %v2775 = vpop.f32.mrb[0].mxu0
    %v2776 = vadd.f32 0.0, %v2775
    %v2777 = vpop.f32.mrb[0].mxu0
    %2778 = vdwg.mxu0
    %v2780 = vsel %vm762, %v2571, 0
    %v2783 = vsel %vm762, %v2572, 0
    %v2786 = vsel %vm762, %v2573, 0
    %v2789 = vsel %vm762, %v2574, 0
    %v2792 = vsel %vm762, %v2604, 0
    %2794 = vmatprep.subr.bf16.mxu0 0
    %2795 = vmatpush1.bf16.xpose.msra.mxu0 %v2792
    %2796 = vmatprep.subr.bf16.mxu0 0
    %2797 = vmatpush1.bf16.xpose.msra.mxu0 0
    %2798 = vmatprep.subr.bf16.mxu0 0
    %2799 = vmatpush1.bf16.xpose.msra.mxu0 0
    %2800 = vmatprep.subr.bf16.mxu0 0
    %2801 = vmatpush1.bf16.xpose.msra.mxu0 0
    %2802 = vmatprep.subr.bf16.mxu0 0
    %2803 = vmatpush1.bf16.xpose.msra.mxu0 0
    %2804 = vmatprep.subr.bf16.mxu0 0
    %2805 = vmatpush1.bf16.xpose.msra.mxu0 0
    %2806 = vmatprep.subr.bf16.mxu0 0
    %2807 = vmatpush1.bf16.xpose.msra.mxu0 0
    %2808 = vmatprep.subr.bf16.mxu0 0
    %2809 = vmatpush1.bf16.xpose.msra.mxu0 0
    %2810 = vmatprep.subr.bf16.mxu0 0
    %2811 = vmatpush1.bf16.xpose.msra.mxu0 0
    %2812 = vmatprep.subr.bf16.mxu0 0
    %2813 = vmatpush1.bf16.xpose.msra.mxu0 0
    %2814 = vmatprep.subr.bf16.mxu0 0
    %2815 = vmatpush1.bf16.xpose.msra.mxu0 0
    %2816 = vmatprep.subr.bf16.mxu0 0
    %2817 = vmatpush1.bf16.xpose.msra.mxu0 0
    %2818 = vmatprep.subr.bf16.mxu0 0
    %2819 = vmatpush1.bf16.xpose.msra.mxu0 0
    %2820 = vmatprep.subr.bf16.mxu0 0
    %2821 = vmatpush1.bf16.xpose.msra.mxu0 0
    %2822 = vmatprep.subr.bf16.mxu0 0
    %2823 = vmatpush1.bf16.xpose.msra.mxu0 0
    %2824 = vmatprep.subr.bf16.mxu0 0
    %2825 = vmatpush1.bf16.xpose.msra.mxu0 0
    %2826 = vmatprep.mubr.bf16.mxu0 0
    %2827 = vmatmul.mubr.bf16.gmra.mrb[0].mxu0 %v2780
    %v2828 = vpop.f32.mrb[0].mxu0
    %v2829 = vadd.f32 0.0, %v2828
    %v2830 = vpop.f32.mrb[0].mxu0
    %v2831 = vpop.f32.mrb[0].mxu0
    %v2832 = vadd.f32 0.0, %v2831
    %v2833 = vpop.f32.mrb[0].mxu0
    %2834 = vmatprep.mubr.bf16.mxu0 0
    %2835 = vmatmul.mubr.bf16.gmra.mrb[0].mxu0 %v2783
    %v2836 = vpop.f32.mrb[0].mxu0
    %v2837 = vadd.f32 0.0, %v2836
    %v2838 = vpop.f32.mrb[0].mxu0
    %v2839 = vpop.f32.mrb[0].mxu0
    %v2840 = vadd.f32 0.0, %v2839
    %v2841 = vpop.f32.mrb[0].mxu0
    %2842 = vmatprep.mubr.bf16.mxu0 0
    %2843 = vmatmul.mubr.bf16.gmra.mrb[0].mxu0 %v2786
    %v2844 = vpop.f32.mrb[0].mxu0
    %v2845 = vadd.f32 0.0, %v2844
    %v2846 = vpop.f32.mrb[0].mxu0
    %v2847 = vpop.f32.mrb[0].mxu0
    %v2848 = vadd.f32 0.0, %v2847
    %v2849 = vpop.f32.mrb[0].mxu0
    %2850 = vmatprep.mubr.bf16.mxu0 0
    %2851 = vmatmul.mubr.bf16.gmra.mrb[0].mxu0 %v2789
    %v2852 = vpop.f32.mrb[0].mxu0
    %v2853 = vadd.f32 0.0, %v2852
    %v2854 = vpop.f32.mrb[0].mxu0
    %v2855 = vpop.f32.mrb[0].mxu0
    %v2856 = vadd.f32 0.0, %v2855
    %v2857 = vpop.f32.mrb[0].mxu0
    %2858 = vdwg.mxu0
    %v2860 = vsel %vm762, %v2592, 0
    %v2863 = vsel %vm762, %v2594, 0
    %v2866 = vsel %vm762, %v2596, 0
    %v2869 = vsel %vm762, %v2598, 0
    %v2872 = vsel %vm762, %v2608, 0
    %2874 = vmatprep.subr.bf16.mxu0 0
    %2875 = vmatpush1.bf16.xpose.msra.mxu0 %v2872
    %2876 = vmatprep.subr.bf16.mxu0 0
    %2877 = vmatpush1.bf16.xpose.msra.mxu0 0
    %2878 = vmatprep.subr.bf16.mxu0 0
    %2879 = vmatpush1.bf16.xpose.msra.mxu0 0
    %2880 = vmatprep.subr.bf16.mxu0 0
    %2881 = vmatpush1.bf16.xpose.msra.mxu0 0
    %2882 = vmatprep.subr.bf16.mxu0 0
    %2883 = vmatpush1.bf16.xpose.msra.mxu0 0
    %2884 = vmatprep.subr.bf16.mxu0 0
    %2885 = vmatpush1.bf16.xpose.msra.mxu0 0
    %2886 = vmatprep.subr.bf16.mxu0 0
    %2887 = vmatpush1.bf16.xpose.msra.mxu0 0
    %2888 = vmatprep.subr.bf16.mxu0 0
    %2889 = vmatpush1.bf16.xpose.msra.mxu0 0
    %2890 = vmatprep.subr.bf16.mxu0 0
    %2891 = vmatpush1.bf16.xpose.msra.mxu0 0
    %2892 = vmatprep.subr.bf16.mxu0 0
    %2893 = vmatpush1.bf16.xpose.msra.mxu0 0
    %2894 = vmatprep.subr.bf16.mxu0 0
    %2895 = vmatpush1.bf16.xpose.msra.mxu0 0
    %2896 = vmatprep.subr.bf16.mxu0 0
    %2897 = vmatpush1.bf16.xpose.msra.mxu0 0
    %2898 = vmatprep.subr.bf16.mxu0 0
    %2899 = vmatpush1.bf16.xpose.msra.mxu0 0
    %2900 = vmatprep.subr.bf16.mxu0 0
    %2901 = vmatpush1.bf16.xpose.msra.mxu0 0
    %2902 = vmatprep.subr.bf16.mxu0 0
    %2903 = vmatpush1.bf16.xpose.msra.mxu0 0
    %2904 = vmatprep.subr.bf16.mxu0 0
    %2905 = vmatpush1.bf16.xpose.msra.mxu0 0
    %2906 = vmatprep.mubr.bf16.mxu0 0
    %2907 = vmatmul.mubr.bf16.gmra.mrb[0].mxu0 %v2860
    %v2908 = vpop.f32.mrb[0].mxu0
    %v2909 = vadd.f32 0.0, %v2908
    %v2910 = vpop.f32.mrb[0].mxu0
    %v2911 = vpop.f32.mrb[0].mxu0
    %v2912 = vadd.f32 0.0, %v2911
    %v2913 = vpop.f32.mrb[0].mxu0
    %2914 = vmatprep.mubr.bf16.mxu0 0
    %2915 = vmatmul.mubr.bf16.gmra.mrb[0].mxu0 %v2863
    %v2916 = vpop.f32.mrb[0].mxu0
    %v2917 = vadd.f32 0.0, %v2916
    %v2918 = vpop.f32.mrb[0].mxu0
    %v2919 = vpop.f32.mrb[0].mxu0
    %v2920 = vadd.f32 0.0, %v2919
    %v2921 = vpop.f32.mrb[0].mxu0
    %2922 = vmatprep.mubr.bf16.mxu0 0
    %2923 = vmatmul.mubr.bf16.gmra.mrb[0].mxu0 %v2866
    %v2924 = vpop.f32.mrb[0].mxu0
    %v2925 = vadd.f32 0.0, %v2924
    %v2926 = vpop.f32.mrb[0].mxu0
    %v2927 = vpop.f32.mrb[0].mxu0
    %v2928 = vadd.f32 0.0, %v2927
    %v2929 = vpop.f32.mrb[0].mxu0
    %2930 = vmatprep.mubr.bf16.mxu0 0
    %2931 = vmatmul.mubr.bf16.gmra.mrb[0].mxu0 %v2869
    %v2932 = vpop.f32.mrb[0].mxu0
    %v2933 = vadd.f32 0.0, %v2932
    %v2934 = vpop.f32.mrb[0].mxu0
    %v2935 = vpop.f32.mrb[0].mxu0
    %v2936 = vadd.f32 0.0, %v2935
    %v2937 = vpop.f32.mrb[0].mxu0
    %2938 = vdwg.mxu0
    %v2939 = vsel %vm1771, %v2669, -inf
    %2940 = vmax.xlane.f32.xlu0 %v2939
    %v2941 = vpop.xlane.xlu0 %2940
    %v2942 = vsel %vm1771, %v2672, -inf
    %2943 = vmax.xlane.f32.xlu0 %v2942
    %v2944 = vpop.xlane.xlu0 %2943
    %v2945 = vsel %vm1771, %v2677, -inf
    %2946 = vmax.xlane.f32.xlu0 %v2945
    %v2947 = vpop.xlane.xlu0 %2946
    %v2948 = vsel %vm1771, %v2680, -inf
    %2949 = vmax.xlane.f32.xlu0 %v2948
    %v2950 = vpop.xlane.xlu0 %2949
    %v2951 = vsel %vm1771, %v2685, -inf
    %2952 = vmax.xlane.f32.xlu0 %v2951
    %v2953 = vpop.xlane.xlu0 %2952
    %v2954 = vsel %vm1771, %v2688, -inf
    %2955 = vmax.xlane.f32.xlu0 %v2954
    %v2956 = vpop.xlane.xlu0 %2955
    %v2957 = vsel %vm1771, %v2693, -inf
    %2958 = vmax.xlane.f32.xlu0 %v2957
    %v2959 = vpop.xlane.xlu0 %2958
    %v2960 = vsel %vm1771, %v2696, -inf
    %2961 = vmax.xlane.f32.xlu0 %v2960
    %v2962 = vpop.xlane.xlu0 %2961
    %v2963 = vsel %vm1771, %v2749, -inf
    %2964 = vmax.xlane.f32.xlu0 %v2963
    %v2965 = vpop.xlane.xlu0 %2964
    %v2966 = vsel %vm1771, %v2752, -inf
    %2967 = vmax.xlane.f32.xlu0 %v2966
    %v2968 = vpop.xlane.xlu0 %2967
    %v2969 = vsel %vm1771, %v2757, -inf
    %2970 = vmax.xlane.f32.xlu0 %v2969
    %v2971 = vpop.xlane.xlu0 %2970
    %v2972 = vsel %vm1771, %v2760, -inf
    %2973 = vmax.xlane.f32.xlu0 %v2972
    %v2974 = vpop.xlane.xlu0 %2973
    %v2975 = vsel %vm1771, %v2765, -inf
    %2976 = vmax.xlane.f32.xlu0 %v2975
    %v2977 = vpop.xlane.xlu0 %2976
    %v2978 = vsel %vm1771, %v2768, -inf
    %2979 = vmax.xlane.f32.xlu0 %v2978
    %v2980 = vpop.xlane.xlu0 %2979
    %v2981 = vsel %vm1771, %v2773, -inf
    %2982 = vmax.xlane.f32.xlu0 %v2981
    %v2983 = vpop.xlane.xlu0 %2982
    %v2984 = vsel %vm1771, %v2776, -inf
    %2985 = vmax.xlane.f32.xlu0 %v2984
    %v2986 = vpop.xlane.xlu0 %2985
    %v2987 = vsel %vm1771, %v2829, -inf
    %2988 = vmax.xlane.f32.xlu0 %v2987
    %v2989 = vpop.xlane.xlu0 %2988
    %v2990 = vsel %vm1771, %v2832, -inf
    %2991 = vmax.xlane.f32.xlu0 %v2990
    %v2992 = vpop.xlane.xlu0 %2991
    %v2993 = vsel %vm1771, %v2837, -inf
    %2994 = vmax.xlane.f32.xlu0 %v2993
    %v2995 = vpop.xlane.xlu0 %2994
    %v2996 = vsel %vm1771, %v2840, -inf
    %2997 = vmax.xlane.f32.xlu0 %v2996
    %v2998 = vpop.xlane.xlu0 %2997
    %v2999 = vsel %vm1771, %v2845, -inf
    %3000 = vmax.xlane.f32.xlu0 %v2999
    %v3001 = vpop.xlane.xlu0 %3000
    %v3002 = vsel %vm1771, %v2848, -inf
    %3003 = vmax.xlane.f32.xlu0 %v3002
    %v3004 = vpop.xlane.xlu0 %3003
    %v3005 = vsel %vm1771, %v2853, -inf
    %3006 = vmax.xlane.f32.xlu0 %v3005
    %v3007 = vpop.xlane.xlu0 %3006
    %v3008 = vsel %vm1771, %v2856, -inf
    %3009 = vmax.xlane.f32.xlu0 %v3008
    %v3010 = vpop.xlane.xlu0 %3009
    %v3011 = vsel %vm1771, %v2909, -inf
    %3012 = vmax.xlane.f32.xlu0 %v3011
    %v3013 = vpop.xlane.xlu0 %3012
    %v3014 = vsel %vm1771, %v2912, -inf
    %3015 = vmax.xlane.f32.xlu0 %v3014
    %v3016 = vpop.xlane.xlu0 %3015
    %v3017 = vsel %vm1771, %v2917, -inf
    %3018 = vmax.xlane.f32.xlu0 %v3017
    %v3019 = vpop.xlane.xlu0 %3018
    %v3020 = vsel %vm1771, %v2920, -inf
    %3021 = vmax.xlane.f32.xlu0 %v3020
    %v3022 = vpop.xlane.xlu0 %3021
    %v3023 = vsel %vm1771, %v2925, -inf
    %3024 = vmax.xlane.f32.xlu0 %v3023
    %v3025 = vpop.xlane.xlu0 %3024
    %v3026 = vsel %vm1771, %v2928, -inf
    %3027 = vmax.xlane.f32.xlu0 %v3026
    %v3028 = vpop.xlane.xlu0 %3027
    %v3029 = vsel %vm1771, %v2933, -inf
    %3030 = vmax.xlane.f32.xlu0 %v3029
    %v3031 = vpop.xlane.xlu0 %3030
    %v3032 = vsel %vm1771, %v2936, -inf
    %3033 = vmax.xlane.f32.xlu0 %v3032
    %v3034 = vpop.xlane.xlu0 %3033
    %v3035 = vsub.f32 %v2669, %v2941
    %v3036 = vsub.f32 %v2672, %v2944
    %v3037 = vsub.f32 %v2677, %v2947
    %v3038 = vsub.f32 %v2680, %v2950
    %v3039 = vsub.f32 %v2685, %v2953
    %v3040 = vsub.f32 %v2688, %v2956
    %v3041 = vsub.f32 %v2693, %v2959
    %v3042 = vsub.f32 %v2696, %v2962
    %v3043 = vsub.f32 %v2749, %v2965
    %v3044 = vsub.f32 %v2752, %v2968
    %v3045 = vsub.f32 %v2757, %v2971
    %v3046 = vsub.f32 %v2760, %v2974
    %v3047 = vsub.f32 %v2765, %v2977
    %v3048 = vsub.f32 %v2768, %v2980
    %v3049 = vsub.f32 %v2773, %v2983
    %v3050 = vsub.f32 %v2776, %v2986
    %v3051 = vsub.f32 %v2829, %v2989
    %v3052 = vsub.f32 %v2832, %v2992
    %v3053 = vsub.f32 %v2837, %v2995
    %v3054 = vsub.f32 %v2840, %v2998
    %v3055 = vsub.f32 %v2845, %v3001
    %v3056 = vsub.f32 %v2848, %v3004
    %v3057 = vsub.f32 %v2853, %v3007
    %v3058 = vsub.f32 %v2856, %v3010
    %v3059 = vsub.f32 %v2909, %v3013
    %v3060 = vsub.f32 %v2912, %v3016
    %v3061 = vsub.f32 %v2917, %v3019
    %v3062 = vsub.f32 %v2920, %v3022
    %v3063 = vsub.f32 %v2925, %v3025
    %v3064 = vsub.f32 %v2928, %v3028
    %v3065 = vsub.f32 %v2933, %v3031
    %v3066 = vsub.f32 %v2936, %v3034
    %v3067 = vmul.f32 %v3035, 1.442695
    %v3068 = vpow.pop %v3067
    %v3069 = vmul.f32 %v3036, 1.442695
    %v3070 = vpow.pop %v3069
    %v3071 = vmul.f32 %v3037, 1.442695
    %v3072 = vpow.pop %v3071
    %v3073 = vmul.f32 %v3038, 1.442695
    %v3074 = vpow.pop %v3073
    %v3075 = vmul.f32 %v3039, 1.442695
    %v3076 = vpow.pop %v3075
    %v3077 = vmul.f32 %v3040, 1.442695
    %v3078 = vpow.pop %v3077
    %v3079 = vmul.f32 %v3041, 1.442695
    %v3080 = vpow.pop %v3079
    %v3081 = vmul.f32 %v3042, 1.442695
    %v3082 = vpow.pop %v3081
    %v3083 = vmul.f32 %v3043, 1.442695
    %v3084 = vpow.pop %v3083
    %v3085 = vmul.f32 %v3044, 1.442695
    %v3086 = vpow.pop %v3085
    %v3087 = vmul.f32 %v3045, 1.442695
    %v3088 = vpow.pop %v3087
    %v3089 = vmul.f32 %v3046, 1.442695
    %v3090 = vpow.pop %v3089
    %v3091 = vmul.f32 %v3047, 1.442695
    %v3092 = vpow.pop %v3091
    %v3093 = vmul.f32 %v3048, 1.442695
    %v3094 = vpow.pop %v3093
    %v3095 = vmul.f32 %v3049, 1.442695
    %v3096 = vpow.pop %v3095
    %v3097 = vmul.f32 %v3050, 1.442695
    %v3098 = vpow.pop %v3097
    %v3099 = vmul.f32 %v3051, 1.442695
    %v3100 = vpow.pop %v3099
    %v3101 = vmul.f32 %v3052, 1.442695
    %v3102 = vpow.pop %v3101
    %v3103 = vmul.f32 %v3053, 1.442695
    %v3104 = vpow.pop %v3103
    %v3105 = vmul.f32 %v3054, 1.442695
    %v3106 = vpow.pop %v3105
    %v3107 = vmul.f32 %v3055, 1.442695
    %v3108 = vpow.pop %v3107
    %v3109 = vmul.f32 %v3056, 1.442695
    %v3110 = vpow.pop %v3109
    %v3111 = vmul.f32 %v3057, 1.442695
    %v3112 = vpow.pop %v3111
    %v3113 = vmul.f32 %v3058, 1.442695
    %v3114 = vpow.pop %v3113
    %v3115 = vmul.f32 %v3059, 1.442695
    %v3116 = vpow.pop %v3115
    %v3117 = vmul.f32 %v3060, 1.442695
    %v3118 = vpow.pop %v3117
    %v3119 = vmul.f32 %v3061, 1.442695
    %v3120 = vpow.pop %v3119
    %v3121 = vmul.f32 %v3062, 1.442695
    %v3122 = vpow.pop %v3121
    %v3123 = vmul.f32 %v3063, 1.442695
    %v3124 = vpow.pop %v3123
    %v3125 = vmul.f32 %v3064, 1.442695
    %v3126 = vpow.pop %v3125
    %v3127 = vmul.f32 %v3065, 1.442695
    %v3128 = vpow.pop %v3127
    %v3129 = vmul.f32 %v3066, 1.442695
    %v3130 = vpow.pop %v3129
    %v3131 = vsel %vm1771, %v3068, 0.0
    %3132 = vadd.xlane.f32.xlu0 %v3131
    %v3133 = vpop.xlane.xlu0 %3132
    %v3134 = vsel %vm1771, %v3070, 0.0
    %3135 = vadd.xlane.f32.xlu0 %v3134
    %v3136 = vpop.xlane.xlu0 %3135
    %v3137 = vsel %vm1771, %v3072, 0.0
    %3138 = vadd.xlane.f32.xlu0 %v3137
    %v3139 = vpop.xlane.xlu0 %3138
    %v3140 = vsel %vm1771, %v3074, 0.0
    %3141 = vadd.xlane.f32.xlu0 %v3140
    %v3142 = vpop.xlane.xlu0 %3141
    %v3143 = vsel %vm1771, %v3076, 0.0
    %3144 = vadd.xlane.f32.xlu0 %v3143
    %v3145 = vpop.xlane.xlu0 %3144
    %v3146 = vsel %vm1771, %v3078, 0.0
    %3147 = vadd.xlane.f32.xlu0 %v3146
    %v3148 = vpop.xlane.xlu0 %3147
    %v3149 = vsel %vm1771, %v3080, 0.0
    %3150 = vadd.xlane.f32.xlu0 %v3149
    %v3151 = vpop.xlane.xlu0 %3150
    %v3152 = vsel %vm1771, %v3082, 0.0
    %3153 = vadd.xlane.f32.xlu0 %v3152
    %v3154 = vpop.xlane.xlu0 %3153
    %v3155 = vsel %vm1771, %v3084, 0.0
    %3156 = vadd.xlane.f32.xlu0 %v3155
    %v3157 = vpop.xlane.xlu0 %3156
    %v3158 = vsel %vm1771, %v3086, 0.0
    %3159 = vadd.xlane.f32.xlu0 %v3158
    %v3160 = vpop.xlane.xlu0 %3159
    %v3161 = vsel %vm1771, %v3088, 0.0
    %3162 = vadd.xlane.f32.xlu0 %v3161
    %v3163 = vpop.xlane.xlu0 %3162
    %v3164 = vsel %vm1771, %v3090, 0.0
    %3165 = vadd.xlane.f32.xlu0 %v3164
    %v3166 = vpop.xlane.xlu0 %3165
    %v3167 = vsel %vm1771, %v3092, 0.0
    %3168 = vadd.xlane.f32.xlu0 %v3167
    %v3169 = vpop.xlane.xlu0 %3168
    %v3170 = vsel %vm1771, %v3094, 0.0
    %3171 = vadd.xlane.f32.xlu0 %v3170
    %v3172 = vpop.xlane.xlu0 %3171
    %v3173 = vsel %vm1771, %v3096, 0.0
    %3174 = vadd.xlane.f32.xlu0 %v3173
    %v3175 = vpop.xlane.xlu0 %3174
    %v3176 = vsel %vm1771, %v3098, 0.0
    %3177 = vadd.xlane.f32.xlu0 %v3176
    %v3178 = vpop.xlane.xlu0 %3177
    %v3179 = vsel %vm1771, %v3100, 0.0
    %3180 = vadd.xlane.f32.xlu0 %v3179
    %v3181 = vpop.xlane.xlu0 %3180
    %v3182 = vsel %vm1771, %v3102, 0.0
    %3183 = vadd.xlane.f32.xlu0 %v3182
    %v3184 = vpop.xlane.xlu0 %3183
    %v3185 = vsel %vm1771, %v3104, 0.0
    %3186 = vadd.xlane.f32.xlu0 %v3185
    %v3187 = vpop.xlane.xlu0 %3186
    %v3188 = vsel %vm1771, %v3106, 0.0
    %3189 = vadd.xlane.f32.xlu0 %v3188
    %v3190 = vpop.xlane.xlu0 %3189
    %v3191 = vsel %vm1771, %v3108, 0.0
    %3192 = vadd.xlane.f32.xlu0 %v3191
    %v3193 = vpop.xlane.xlu0 %3192
    %v3194 = vsel %vm1771, %v3110, 0.0
    %3195 = vadd.xlane.f32.xlu0 %v3194
    %v3196 = vpop.xlane.xlu0 %3195
    %v3197 = vsel %vm1771, %v3112, 0.0
    %3198 = vadd.xlane.f32.xlu0 %v3197
    %v3199 = vpop.xlane.xlu0 %3198
    %v3200 = vsel %vm1771, %v3114, 0.0
    %3201 = vadd.xlane.f32.xlu0 %v3200
    %v3202 = vpop.xlane.xlu0 %3201
    %v3203 = vsel %vm1771, %v3116, 0.0
    %3204 = vadd.xlane.f32.xlu0 %v3203
    %v3205 = vpop.xlane.xlu0 %3204
    %v3206 = vsel %vm1771, %v3118, 0.0
    %3207 = vadd.xlane.f32.xlu0 %v3206
    %v3208 = vpop.xlane.xlu0 %3207
    %v3209 = vsel %vm1771, %v3120, 0.0
    %3210 = vadd.xlane.f32.xlu0 %v3209
    %v3211 = vpop.xlane.xlu0 %3210
    %v3212 = vsel %vm1771, %v3122, 0.0
    %3213 = vadd.xlane.f32.xlu0 %v3212
    %v3214 = vpop.xlane.xlu0 %3213
    %v3215 = vsel %vm1771, %v3124, 0.0
    %3216 = vadd.xlane.f32.xlu0 %v3215
    %v3217 = vpop.xlane.xlu0 %3216
    %v3218 = vsel %vm1771, %v3126, 0.0
    %3219 = vadd.xlane.f32.xlu0 %v3218
    %v3220 = vpop.xlane.xlu0 %3219
    %v3221 = vsel %vm1771, %v3128, 0.0
    %3222 = vadd.xlane.f32.xlu0 %v3221
    %v3223 = vpop.xlane.xlu0 %3222
    %v3224 = vsel %vm1771, %v3130, 0.0
    %3225 = vadd.xlane.f32.xlu0 %v3224
    %v3226 = vpop.xlane.xlu0 %3225
    %v3227 = vrcp.pop %v3133
    %v3228 = vrcp.pop %v3136
    %v3229 = vrcp.pop %v3139
    %v3230 = vrcp.pop %v3142
    %v3231 = vrcp.pop %v3145
    %v3232 = vrcp.pop %v3148
    %v3233 = vrcp.pop %v3151
    %v3234 = vrcp.pop %v3154
    %v3235 = vrcp.pop %v3157
    %v3236 = vrcp.pop %v3160
    %v3237 = vrcp.pop %v3163
    %v3238 = vrcp.pop %v3166
    %v3239 = vrcp.pop %v3169
    %v3240 = vrcp.pop %v3172
    %v3241 = vrcp.pop %v3175
    %v3242 = vrcp.pop %v3178
    %v3243 = vrcp.pop %v3181
    %v3244 = vrcp.pop %v3184
    %v3245 = vrcp.pop %v3187
    %v3246 = vrcp.pop %v3190
    %v3247 = vrcp.pop %v3193
    %v3248 = vrcp.pop %v3196
    %v3249 = vrcp.pop %v3199
    %v3250 = vrcp.pop %v3202
    %v3251 = vrcp.pop %v3205
    %v3252 = vrcp.pop %v3208
    %v3253 = vrcp.pop %v3211
    %v3254 = vrcp.pop %v3214
    %v3255 = vrcp.pop %v3217
    %v3256 = vrcp.pop %v3220
    %v3257 = vrcp.pop %v3223
    %v3258 = vrcp.pop %v3226
    %v3259 = vmul.f32 %v3068, %v3227
    %v3260 = vmul.f32 %v3070, %v3228
    %v3261 = vmul.f32 %v3072, %v3229
    %v3262 = vmul.f32 %v3074, %v3230
    %v3263 = vmul.f32 %v3076, %v3231
    %v3264 = vmul.f32 %v3078, %v3232
    %v3265 = vmul.f32 %v3080, %v3233
    %v3266 = vmul.f32 %v3082, %v3234
    %v3267 = vmul.f32 %v3084, %v3235
    %v3268 = vmul.f32 %v3086, %v3236
    %v3269 = vmul.f32 %v3088, %v3237
    %v3270 = vmul.f32 %v3090, %v3238
    %v3271 = vmul.f32 %v3092, %v3239
    %v3272 = vmul.f32 %v3094, %v3240
    %v3273 = vmul.f32 %v3096, %v3241
    %v3274 = vmul.f32 %v3098, %v3242
    %v3275 = vmul.f32 %v3100, %v3243
    %v3276 = vmul.f32 %v3102, %v3244
    %v3277 = vmul.f32 %v3104, %v3245
    %v3278 = vmul.f32 %v3106, %v3246
    %v3279 = vmul.f32 %v3108, %v3247
    %v3280 = vmul.f32 %v3110, %v3248
    %v3281 = vmul.f32 %v3112, %v3249
    %v3282 = vmul.f32 %v3114, %v3250
    %v3283 = vmul.f32 %v3116, %v3251
    %v3284 = vmul.f32 %v3118, %v3252
    %v3285 = vmul.f32 %v3120, %v3253
    %v3286 = vmul.f32 %v3122, %v3254
    %v3287 = vmul.f32 %v3124, %v3255
    %v3288 = vmul.f32 %v3126, %v3256
    %v3289 = vmul.f32 %v3128, %v3257
    %v3290 = vmul.f32 %v3130, %v3258
    %v3291 = vpack.c.bf16 %v3260, %v3259
    %v3292 = vpack.c.bf16 %v3262, %v3261
    %v3293 = vpack.c.bf16 %v3264, %v3263
    %v3294 = vpack.c.bf16 %v3266, %v3265
    %v3295 = vpack.c.bf16 %v3268, %v3267
    %v3296 = vpack.c.bf16 %v3270, %v3269
    %v3297 = vpack.c.bf16 %v3272, %v3271
    %v3298 = vpack.c.bf16 %v3274, %v3273
    %v3299 = vpack.c.bf16 %v3276, %v3275
    %v3300 = vpack.c.bf16 %v3278, %v3277
    %v3301 = vpack.c.bf16 %v3280, %v3279
    %v3302 = vpack.c.bf16 %v3282, %v3281
    %v3303 = vpack.c.bf16 %v3284, %v3283
    %v3304 = vpack.c.bf16 %v3286, %v3285
    %v3305 = vpack.c.bf16 %v3288, %v3287
    %v3306 = vpack.c.bf16 %v3290, %v3289
    %v3308 = vsel %vm1771, %v3291, 0
    %v3311 = vsel %vm1771, %v3292, 0
    %v3314 = vsel %vm1771, %v3293, 0
    %v3317 = vsel %vm1771, %v3294, 0
    %v3320 = vsel %vm1823, %v2613, 0
    %3322 = vmatprep.subr.bf16.mxu0 0
    %3323 = vmatpush1.bf16.msra.mxu0 %v3320
    %3324 = vmatprep.subr.bf16.mxu0 0
    %3325 = vmatpush1.bf16.msra.mxu0 0
    %3326 = vmatprep.subr.bf16.mxu0 0
    %3327 = vmatpush1.bf16.msra.mxu0 0
    %3328 = vmatprep.subr.bf16.mxu0 0
    %3329 = vmatpush1.bf16.msra.mxu0 0
    %3330 = vmatprep.subr.bf16.mxu0 0
    %3331 = vmatpush1.bf16.msra.mxu0 0
    %3332 = vmatprep.subr.bf16.mxu0 0
    %3333 = vmatpush1.bf16.msra.mxu0 0
    %3334 = vmatprep.subr.bf16.mxu0 0
    %3335 = vmatpush1.bf16.msra.mxu0 0
    %3336 = vmatprep.subr.bf16.mxu0 0
    %3337 = vmatpush1.bf16.msra.mxu0 0
    %3338 = vmatprep.subr.bf16.mxu0 0
    %3339 = vmatpush1.bf16.msra.mxu0 0
    %3340 = vmatprep.subr.bf16.mxu0 0
    %3341 = vmatpush1.bf16.msra.mxu0 0
    %3342 = vmatprep.subr.bf16.mxu0 0
    %3343 = vmatpush1.bf16.msra.mxu0 0
    %3344 = vmatprep.subr.bf16.mxu0 0
    %3345 = vmatpush1.bf16.msra.mxu0 0
    %3346 = vmatprep.subr.bf16.mxu0 0
    %3347 = vmatpush1.bf16.msra.mxu0 0
    %3348 = vmatprep.subr.bf16.mxu0 0
    %3349 = vmatpush1.bf16.msra.mxu0 0
    %3350 = vmatprep.subr.bf16.mxu0 0
    %3351 = vmatpush1.bf16.msra.mxu0 0
    %3352 = vmatprep.subr.bf16.mxu0 0
    %3353 = vmatpush1.bf16.msra.mxu0 0
    %3354 = vmatprep.mubr.bf16.mxu0 0
    %3355 = vmatmul.mubr.bf16.gmra.mrb[0].mxu0 %v3308
    %v3356 = vpop.f32.mrb[0].mxu0
    %v3357 = vadd.f32 0.0, %v3356
    %v3358 = vpop.f32.mrb[0].mxu0
    %v3359 = vpop.f32.mrb[0].mxu0
    %v3360 = vadd.f32 0.0, %v3359
    %v3361 = vpop.f32.mrb[0].mxu0
    %3362 = vmatprep.mubr.bf16.mxu0 0
    %3363 = vmatmul.mubr.bf16.gmra.mrb[0].mxu0 %v3311
    %v3364 = vpop.f32.mrb[0].mxu0
    %v3365 = vadd.f32 0.0, %v3364
    %v3366 = vpop.f32.mrb[0].mxu0
    %v3367 = vpop.f32.mrb[0].mxu0
    %v3368 = vadd.f32 0.0, %v3367
    %v3369 = vpop.f32.mrb[0].mxu0
    %3370 = vmatprep.mubr.bf16.mxu0 0
    %3371 = vmatmul.mubr.bf16.gmra.mrb[0].mxu0 %v3314
    %v3372 = vpop.f32.mrb[0].mxu0
    %v3373 = vadd.f32 0.0, %v3372
    %v3374 = vpop.f32.mrb[0].mxu0
    %v3375 = vpop.f32.mrb[0].mxu0
    %v3376 = vadd.f32 0.0, %v3375
    %v3377 = vpop.f32.mrb[0].mxu0
    %3378 = vmatprep.mubr.bf16.mxu0 0
    %3379 = vmatmul.mubr.bf16.gmra.mrb[0].mxu0 %v3317
    %v3380 = vpop.f32.mrb[0].mxu0
    %v3381 = vadd.f32 0.0, %v3380
    %v3382 = vpop.f32.mrb[0].mxu0
    %v3383 = vpop.f32.mrb[0].mxu0
    %v3384 = vadd.f32 0.0, %v3383
    %v3385 = vpop.f32.mrb[0].mxu0
    %3386 = vdwg.mxu0
    %v3388 = vsel %vm1771, %v3295, 0
    %v3391 = vsel %vm1771, %v3296, 0
    %v3394 = vsel %vm1771, %v3297, 0
    %v3397 = vsel %vm1771, %v3298, 0
    %v3400 = vsel %vm1823, %v2616, 0
    %3402 = vmatprep.subr.bf16.mxu0 0
    %3403 = vmatpush1.bf16.msra.mxu0 %v3400
    %3404 = vmatprep.subr.bf16.mxu0 0
    %3405 = vmatpush1.bf16.msra.mxu0 0
    %3406 = vmatprep.subr.bf16.mxu0 0
    %3407 = vmatpush1.bf16.msra.mxu0 0
    %3408 = vmatprep.subr.bf16.mxu0 0
    %3409 = vmatpush1.bf16.msra.mxu0 0
    %3410 = vmatprep.subr.bf16.mxu0 0
    %3411 = vmatpush1.bf16.msra.mxu0 0
    %3412 = vmatprep.subr.bf16.mxu0 0
    %3413 = vmatpush1.bf16.msra.mxu0 0
    %3414 = vmatprep.subr.bf16.mxu0 0
    %3415 = vmatpush1.bf16.msra.mxu0 0
    %3416 = vmatprep.subr.bf16.mxu0 0
    %3417 = vmatpush1.bf16.msra.mxu0 0
    %3418 = vmatprep.subr.bf16.mxu0 0
    %3419 = vmatpush1.bf16.msra.mxu0 0
    %3420 = vmatprep.subr.bf16.mxu0 0
    %3421 = vmatpush1.bf16.msra.mxu0 0
    %3422 = vmatprep.subr.bf16.mxu0 0
    %3423 = vmatpush1.bf16.msra.mxu0 0
    %3424 = vmatprep.subr.bf16.mxu0 0
    %3425 = vmatpush1.bf16.msra.mxu0 0
    %3426 = vmatprep.subr.bf16.mxu0 0
    %3427 = vmatpush1.bf16.msra.mxu0 0
    %3428 = vmatprep.subr.bf16.mxu0 0
    %3429 = vmatpush1.bf16.msra.mxu0 0
    %3430 = vmatprep.subr.bf16.mxu0 0
    %3431 = vmatpush1.bf16.msra.mxu0 0
    %3432 = vmatprep.subr.bf16.mxu0 0
    %3433 = vmatpush1.bf16.msra.mxu0 0
    %3434 = vmatprep.mubr.bf16.mxu0 0
    %3435 = vmatmul.mubr.bf16.gmra.mrb[0].mxu0 %v3388
    %v3436 = vpop.f32.mrb[0].mxu0
    %v3437 = vadd.f32 0.0, %v3436
    %v3438 = vpop.f32.mrb[0].mxu0
    %v3439 = vpop.f32.mrb[0].mxu0
    %v3440 = vadd.f32 0.0, %v3439
    %v3441 = vpop.f32.mrb[0].mxu0
    %3442 = vmatprep.mubr.bf16.mxu0 0
    %3443 = vmatmul.mubr.bf16.gmra.mrb[0].mxu0 %v3391
    %v3444 = vpop.f32.mrb[0].mxu0
    %v3445 = vadd.f32 0.0, %v3444
    %v3446 = vpop.f32.mrb[0].mxu0
    %v3447 = vpop.f32.mrb[0].mxu0
    %v3448 = vadd.f32 0.0, %v3447
    %v3449 = vpop.f32.mrb[0].mxu0
    %3450 = vmatprep.mubr.bf16.mxu0 0
    %3451 = vmatmul.mubr.bf16.gmra.mrb[0].mxu0 %v3394
    %v3452 = vpop.f32.mrb[0].mxu0
    %v3453 = vadd.f32 0.0, %v3452
    %v3454 = vpop.f32.mrb[0].mxu0
    %v3455 = vpop.f32.mrb[0].mxu0
    %v3456 = vadd.f32 0.0, %v3455
    %v3457 = vpop.f32.mrb[0].mxu0
    %3458 = vmatprep.mubr.bf16.mxu0 0
    %3459 = vmatmul.mubr.bf16.gmra.mrb[0].mxu0 %v3397
    %v3460 = vpop.f32.mrb[0].mxu0
    %v3461 = vadd.f32 0.0, %v3460
    %v3462 = vpop.f32.mrb[0].mxu0
    %v3463 = vpop.f32.mrb[0].mxu0
    %v3464 = vadd.f32 0.0, %v3463
    %v3465 = vpop.f32.mrb[0].mxu0
    %3466 = vdwg.mxu0
    %v3468 = vsel %vm1771, %v3299, 0
    %v3471 = vsel %vm1771, %v3300, 0
    %v3474 = vsel %vm1771, %v3301, 0
    %v3477 = vsel %vm1771, %v3302, 0
    %v3480 = vsel %vm1823, %v2614, 0
    %3482 = vmatprep.subr.bf16.mxu0 0
    %3483 = vmatpush1.bf16.msra.mxu0 %v3480
    %3484 = vmatprep.subr.bf16.mxu0 0
    %3485 = vmatpush1.bf16.msra.mxu0 0
    %3486 = vmatprep.subr.bf16.mxu0 0
    %3487 = vmatpush1.bf16.msra.mxu0 0
    %3488 = vmatprep.subr.bf16.mxu0 0
    %3489 = vmatpush1.bf16.msra.mxu0 0
    %3490 = vmatprep.subr.bf16.mxu0 0
    %3491 = vmatpush1.bf16.msra.mxu0 0
    %3492 = vmatprep.subr.bf16.mxu0 0
    %3493 = vmatpush1.bf16.msra.mxu0 0
    %3494 = vmatprep.subr.bf16.mxu0 0
    %3495 = vmatpush1.bf16.msra.mxu0 0
    %3496 = vmatprep.subr.bf16.mxu0 0
    %3497 = vmatpush1.bf16.msra.mxu0 0
    %3498 = vmatprep.subr.bf16.mxu0 0
    %3499 = vmatpush1.bf16.msra.mxu0 0
    %3500 = vmatprep.subr.bf16.mxu0 0
    %3501 = vmatpush1.bf16.msra.mxu0 0
    %3502 = vmatprep.subr.bf16.mxu0 0
    %3503 = vmatpush1.bf16.msra.mxu0 0
    %3504 = vmatprep.subr.bf16.mxu0 0
    %3505 = vmatpush1.bf16.msra.mxu0 0
    %3506 = vmatprep.subr.bf16.mxu0 0
    %3507 = vmatpush1.bf16.msra.mxu0 0
    %3508 = vmatprep.subr.bf16.mxu0 0
    %3509 = vmatpush1.bf16.msra.mxu0 0
    %3510 = vmatprep.subr.bf16.mxu0 0
    %3511 = vmatpush1.bf16.msra.mxu0 0
    %3512 = vmatprep.subr.bf16.mxu0 0
    %3513 = vmatpush1.bf16.msra.mxu0 0
    %3514 = vmatprep.mubr.bf16.mxu0 0
    %3515 = vmatmul.mubr.bf16.gmra.mrb[0].mxu0 %v3468
    %v3516 = vpop.f32.mrb[0].mxu0
    %v3517 = vadd.f32 0.0, %v3516
    %v3518 = vpop.f32.mrb[0].mxu0
    %v3519 = vpop.f32.mrb[0].mxu0
    %v3520 = vadd.f32 0.0, %v3519
    %v3521 = vpop.f32.mrb[0].mxu0
    %3522 = vmatprep.mubr.bf16.mxu0 0
    %3523 = vmatmul.mubr.bf16.gmra.mrb[0].mxu0 %v3471
    %v3524 = vpop.f32.mrb[0].mxu0
    %v3525 = vadd.f32 0.0, %v3524
    %v3526 = vpop.f32.mrb[0].mxu0
    %v3527 = vpop.f32.mrb[0].mxu0
    %v3528 = vadd.f32 0.0, %v3527
    %v3529 = vpop.f32.mrb[0].mxu0
    %3530 = vmatprep.mubr.bf16.mxu0 0
    %3531 = vmatmul.mubr.bf16.gmra.mrb[0].mxu0 %v3474
    %v3532 = vpop.f32.mrb[0].mxu0
    %v3533 = vadd.f32 0.0, %v3532
    %v3534 = vpop.f32.mrb[0].mxu0
    %v3535 = vpop.f32.mrb[0].mxu0
    %v3536 = vadd.f32 0.0, %v3535
    %v3537 = vpop.f32.mrb[0].mxu0
    %3538 = vmatprep.mubr.bf16.mxu0 0
    %3539 = vmatmul.mubr.bf16.gmra.mrb[0].mxu0 %v3477
    %v3540 = vpop.f32.mrb[0].mxu0
    %v3541 = vadd.f32 0.0, %v3540
    %v3542 = vpop.f32.mrb[0].mxu0
    %v3543 = vpop.f32.mrb[0].mxu0
    %v3544 = vadd.f32 0.0, %v3543
    %v3545 = vpop.f32.mrb[0].mxu0
    %3546 = vdwg.mxu0
    %v3548 = vsel %vm1771, %v3303, 0
    %v3551 = vsel %vm1771, %v3304, 0
    %v3554 = vsel %vm1771, %v3305, 0
    %v3557 = vsel %vm1771, %v3306, 0
    %v3560 = vsel %vm1823, %v2618, 0
    %3562 = vmatprep.subr.bf16.mxu0 0
    %3563 = vmatpush1.bf16.msra.mxu0 %v3560
    %3564 = vmatprep.subr.bf16.mxu0 0
    %3565 = vmatpush1.bf16.msra.mxu0 0
    %3566 = vmatprep.subr.bf16.mxu0 0
    %3567 = vmatpush1.bf16.msra.mxu0 0
    %3568 = vmatprep.subr.bf16.mxu0 0
    %3569 = vmatpush1.bf16.msra.mxu0 0
    %3570 = vmatprep.subr.bf16.mxu0 0
    %3571 = vmatpush1.bf16.msra.mxu0 0
    %3572 = vmatprep.subr.bf16.mxu0 0
    %3573 = vmatpush1.bf16.msra.mxu0 0
    %3574 = vmatprep.subr.bf16.mxu0 0
    %3575 = vmatpush1.bf16.msra.mxu0 0
    %3576 = vmatprep.subr.bf16.mxu0 0
    %3577 = vmatpush1.bf16.msra.mxu0 0
    %3578 = vmatprep.subr.bf16.mxu0 0
    %3579 = vmatpush1.bf16.msra.mxu0 0
    %3580 = vmatprep.subr.bf16.mxu0 0
    %3581 = vmatpush1.bf16.msra.mxu0 0
    %3582 = vmatprep.subr.bf16.mxu0 0
    %3583 = vmatpush1.bf16.msra.mxu0 0
    %3584 = vmatprep.subr.bf16.mxu0 0
    %3585 = vmatpush1.bf16.msra.mxu0 0
    %3586 = vmatprep.subr.bf16.mxu0 0
    %3587 = vmatpush1.bf16.msra.mxu0 0
    %3588 = vmatprep.subr.bf16.mxu0 0
    %3589 = vmatpush1.bf16.msra.mxu0 0
    %3590 = vmatprep.subr.bf16.mxu0 0
    %3591 = vmatpush1.bf16.msra.mxu0 0
    %3592 = vmatprep.subr.bf16.mxu0 0
    %3593 = vmatpush1.bf16.msra.mxu0 0
    %3594 = vmatprep.mubr.bf16.mxu0 0
    %3595 = vmatmul.mubr.bf16.gmra.mrb[0].mxu0 %v3548
    %v3596 = vpop.f32.mrb[0].mxu0
    %v3597 = vadd.f32 0.0, %v3596
    %v3598 = vpop.f32.mrb[0].mxu0
    %v3599 = vpop.f32.mrb[0].mxu0
    %v3600 = vadd.f32 0.0, %v3599
    %v3601 = vpop.f32.mrb[0].mxu0
    %3602 = vmatprep.mubr.bf16.mxu0 0
    %3603 = vmatmul.mubr.bf16.gmra.mrb[0].mxu0 %v3551
    %v3604 = vpop.f32.mrb[0].mxu0
    %v3605 = vadd.f32 0.0, %v3604
    %v3606 = vpop.f32.mrb[0].mxu0
    %v3607 = vpop.f32.mrb[0].mxu0
    %v3608 = vadd.f32 0.0, %v3607
    %v3609 = vpop.f32.mrb[0].mxu0
    %3610 = vmatprep.mubr.bf16.mxu0 0
    %3611 = vmatmul.mubr.bf16.gmra.mrb[0].mxu0 %v3554
    %v3612 = vpop.f32.mrb[0].mxu0
    %v3613 = vadd.f32 0.0, %v3612
    %v3614 = vpop.f32.mrb[0].mxu0
    %v3615 = vpop.f32.mrb[0].mxu0
    %v3616 = vadd.f32 0.0, %v3615
    %v3617 = vpop.f32.mrb[0].mxu0
    %3618 = vmatprep.mubr.bf16.mxu0 0
    %3619 = vmatmul.mubr.bf16.gmra.mrb[0].mxu0 %v3557
    %v3620 = vpop.f32.mrb[0].mxu0
    %v3621 = vadd.f32 0.0, %v3620
    %v3622 = vpop.f32.mrb[0].mxu0
    %v3623 = vpop.f32.mrb[0].mxu0
    %v3624 = vadd.f32 0.0, %v3623
    %v3625 = vpop.f32.mrb[0].mxu0
    %3626 = vdwg.mxu0
    %s3627 = scalar_lea.vmem [#allocation13], 176
    %v3628 = vld [vmem:[%s3627] sm:$0xf]
    %v3629 = vld [vmem:[%s3627 + $0x4] sm:$0xf]
    %v3630 = vld [vmem:[%s3627 + $0x8] sm:$0xf]
    %v3631 = vld [vmem:[%s3627 + $0xc] sm:$0xf]
    %v3632 = vpack.c.bf16 %v3360, %v3357
    %v3633 = vpack.c.bf16 %v3368, %v3365
    %v3634 = vpack.c.bf16 %v3376, %v3373
    %v3635 = vpack.c.bf16 %v3384, %v3381
    %v3636 = vpack.c.bf16 %v3520, %v3517
    %v3637 = vpack.c.bf16 %v3528, %v3525
    %v3638 = vpack.c.bf16 %v3536, %v3533
    %v3639 = vpack.c.bf16 %v3544, %v3541
    %v3640 = vpack.c.bf16 %v3440, %v3437
    %v3641 = vpack.c.bf16 %v3448, %v3445
    %v3642 = vpack.c.bf16 %v3456, %v3453
    %v3643 = vpack.c.bf16 %v3464, %v3461
    %v3644 = vpack.c.bf16 %v3600, %v3597
    %v3645 = vpack.c.bf16 %v3608, %v3605
    %v3646 = vpack.c.bf16 %v3616, %v3613
    %v3647 = vpack.c.bf16 %v3624, %v3621
    %v3650 = vunpack.c.l.b16 %v3630
    %v3651 = vunpack.c.l.b16 %v3631
    %v3652 = vpack.c.b16 %v3651, %v3650
    %v3655 = vsel %vm762, %v3640, 0
    %v3658 = vsel %vm762, %v3641, 0
    %v3661 = vsel %vm762, %v3642, 0
    %v3664 = vsel %vm762, %v3643, 0
    %v3667 = vsel %vm762, %v3644, 0
    %v3670 = vsel %vm762, %v3645, 0
    %v3673 = vsel %vm762, %v3646, 0
    %v3676 = vsel %vm762, %v3647, 0
    %3678 = vmatprep.subr.bf16.mxu0 0
    %3679 = vmatpush1.bf16.msra.mxu0 %v3652
    %3680 = vmatprep.subr.bf16.mxu0 0
    %3681 = vmatpush1.bf16.msra.mxu0 0
    %3682 = vmatprep.subr.bf16.mxu0 0
    %3683 = vmatpush1.bf16.msra.mxu0 0
    %3684 = vmatprep.subr.bf16.mxu0 0
    %3685 = vmatpush1.bf16.msra.mxu0 0
    %3686 = vmatprep.subr.bf16.mxu0 0
    %3687 = vmatpush1.bf16.msra.mxu0 0
    %3688 = vmatprep.subr.bf16.mxu0 0
    %3689 = vmatpush1.bf16.msra.mxu0 0
    %3690 = vmatprep.subr.bf16.mxu0 0
    %3691 = vmatpush1.bf16.msra.mxu0 0
    %3692 = vmatprep.subr.bf16.mxu0 0
    %3693 = vmatpush1.bf16.msra.mxu0 0
    %3694 = vmatprep.subr.bf16.mxu0 0
    %3695 = vmatpush1.bf16.msra.mxu0 0
    %3696 = vmatprep.subr.bf16.mxu0 0
    %3697 = vmatpush1.bf16.msra.mxu0 0
    %3698 = vmatprep.subr.bf16.mxu0 0
    %3699 = vmatpush1.bf16.msra.mxu0 0
    %3700 = vmatprep.subr.bf16.mxu0 0
    %3701 = vmatpush1.bf16.msra.mxu0 0
    %3702 = vmatprep.subr.bf16.mxu0 0
    %3703 = vmatpush1.bf16.msra.mxu0 0
    %3704 = vmatprep.subr.bf16.mxu0 0
    %3705 = vmatpush1.bf16.msra.mxu0 0
    %3706 = vmatprep.subr.bf16.mxu0 0
    %3707 = vmatpush1.bf16.msra.mxu0 0
    %3708 = vmatprep.subr.bf16.mxu0 0
    %3709 = vmatpush1.bf16.msra.mxu0 0
    %3710 = vmatprep.mubr.bf16.mxu0 0
    %3711 = vmatmul.mubr.bf16.gmra.mrb[0].mxu0 %v3655
    %v3712 = vpop.f32.mrb[0].mxu0
    %v3713 = vadd.f32 0.0, %v3712
    %v3714 = vpop.f32.mrb[0].mxu0
    %v3715 = vpop.f32.mrb[0].mxu0
    %v3716 = vadd.f32 0.0, %v3715
    %v3717 = vpop.f32.mrb[0].mxu0
    %3718 = vmatprep.mubr.bf16.mxu0 0
    %3719 = vmatmul.mubr.bf16.gmra.mrb[0].mxu0 %v3658
    %v3720 = vpop.f32.mrb[0].mxu0
    %v3721 = vadd.f32 0.0, %v3720
    %v3722 = vpop.f32.mrb[0].mxu0
    %v3723 = vpop.f32.mrb[0].mxu0
    %v3724 = vadd.f32 0.0, %v3723
    %v3725 = vpop.f32.mrb[0].mxu0
    %3726 = vmatprep.mubr.bf16.mxu0 0
    %3727 = vmatmul.mubr.bf16.gmra.mrb[0].mxu0 %v3661
    %v3728 = vpop.f32.mrb[0].mxu0
    %v3729 = vadd.f32 0.0, %v3728
    %v3730 = vpop.f32.mrb[0].mxu0
    %v3731 = vpop.f32.mrb[0].mxu0
    %v3732 = vadd.f32 0.0, %v3731
    %v3733 = vpop.f32.mrb[0].mxu0
    %3734 = vmatprep.mubr.bf16.mxu0 0
    %3735 = vmatmul.mubr.bf16.gmra.mrb[0].mxu0 %v3664
    %v3736 = vpop.f32.mrb[0].mxu0
    %v3737 = vadd.f32 0.0, %v3736
    %v3738 = vpop.f32.mrb[0].mxu0
    %v3739 = vpop.f32.mrb[0].mxu0
    %v3740 = vadd.f32 0.0, %v3739
    %v3741 = vpop.f32.mrb[0].mxu0
    %3742 = vmatprep.mubr.bf16.mxu0 0
    %3743 = vmatmul.mubr.bf16.gmra.mrb[0].mxu0 %v3667
    %v3744 = vpop.f32.mrb[0].mxu0
    %v3745 = vadd.f32 0.0, %v3744
    %v3746 = vpop.f32.mrb[0].mxu0
    %v3747 = vpop.f32.mrb[0].mxu0
    %v3748 = vadd.f32 0.0, %v3747
    %v3749 = vpop.f32.mrb[0].mxu0
    %3750 = vmatprep.mubr.bf16.mxu0 0
    %3751 = vmatmul.mubr.bf16.gmra.mrb[0].mxu0 %v3670
    %v3752 = vpop.f32.mrb[0].mxu0
    %v3753 = vadd.f32 0.0, %v3752
    %v3754 = vpop.f32.mrb[0].mxu0
    %v3755 = vpop.f32.mrb[0].mxu0
    %v3756 = vadd.f32 0.0, %v3755
    %v3757 = vpop.f32.mrb[0].mxu0
    %3758 = vmatprep.mubr.bf16.mxu0 0
    %3759 = vmatmul.mubr.bf16.gmra.mrb[0].mxu0 %v3673
    %v3760 = vpop.f32.mrb[0].mxu0
    %v3761 = vadd.f32 0.0, %v3760
    %v3762 = vpop.f32.mrb[0].mxu0
    %v3763 = vpop.f32.mrb[0].mxu0
    %v3764 = vadd.f32 0.0, %v3763
    %v3765 = vpop.f32.mrb[0].mxu0
    %3766 = vmatprep.mubr.bf16.mxu0 0
    %3767 = vmatmul.mubr.bf16.gmra.mrb[0].mxu0 %v3676
    %v3768 = vpop.f32.mrb[0].mxu0
    %v3769 = vadd.f32 0.0, %v3768
    %v3770 = vpop.f32.mrb[0].mxu0
    %v3771 = vpop.f32.mrb[0].mxu0
    %v3772 = vadd.f32 0.0, %v3771
    %v3773 = vpop.f32.mrb[0].mxu0
    %3774 = vdwg.mxu0
    %v3777 = vunpack.c.l.b16 %v3628
    %v3778 = vunpack.c.l.b16 %v3629
    %v3779 = vpack.c.b16 %v3778, %v3777
    %v3782 = vsel %vm762, %v3632, 0
    %v3785 = vsel %vm762, %v3633, 0
    %v3788 = vsel %vm762, %v3634, 0
    %v3791 = vsel %vm762, %v3635, 0
    %v3794 = vsel %vm762, %v3636, 0
    %v3797 = vsel %vm762, %v3637, 0
    %v3800 = vsel %vm762, %v3638, 0
    %v3803 = vsel %vm762, %v3639, 0
    %3805 = vmatprep.subr.bf16.mxu0 0
    %3806 = vmatpush1.bf16.msra.mxu0 %v3779
    %3807 = vmatprep.subr.bf16.mxu0 0
    %3808 = vmatpush1.bf16.msra.mxu0 0
    %3809 = vmatprep.subr.bf16.mxu0 0
    %3810 = vmatpush1.bf16.msra.mxu0 0
    %3811 = vmatprep.subr.bf16.mxu0 0
    %3812 = vmatpush1.bf16.msra.mxu0 0
    %3813 = vmatprep.subr.bf16.mxu0 0
    %3814 = vmatpush1.bf16.msra.mxu0 0
    %3815 = vmatprep.subr.bf16.mxu0 0
    %3816 = vmatpush1.bf16.msra.mxu0 0
    %3817 = vmatprep.subr.bf16.mxu0 0
    %3818 = vmatpush1.bf16.msra.mxu0 0
    %3819 = vmatprep.subr.bf16.mxu0 0
    %3820 = vmatpush1.bf16.msra.mxu0 0
    %3821 = vmatprep.subr.bf16.mxu0 0
    %3822 = vmatpush1.bf16.msra.mxu0 0
    %3823 = vmatprep.subr.bf16.mxu0 0
    %3824 = vmatpush1.bf16.msra.mxu0 0
    %3825 = vmatprep.subr.bf16.mxu0 0
    %3826 = vmatpush1.bf16.msra.mxu0 0
    %3827 = vmatprep.subr.bf16.mxu0 0
    %3828 = vmatpush1.bf16.msra.mxu0 0
    %3829 = vmatprep.subr.bf16.mxu0 0
    %3830 = vmatpush1.bf16.msra.mxu0 0
    %3831 = vmatprep.subr.bf16.mxu0 0
    %3832 = vmatpush1.bf16.msra.mxu0 0
    %3833 = vmatprep.subr.bf16.mxu0 0
    %3834 = vmatpush1.bf16.msra.mxu0 0
    %3835 = vmatprep.subr.bf16.mxu0 0
    %3836 = vmatpush1.bf16.msra.mxu0 0
    %3837 = vmatprep.mubr.bf16.mxu0 0
    %3838 = vmatmul.mubr.bf16.gmra.mrb[0].mxu0 %v3782
    %v3839 = vpop.f32.mrb[0].mxu0
    %v3840 = vadd.f32 %v3713, %v3839
    %v3841 = vpop.f32.mrb[0].mxu0
    %v3842 = vpop.f32.mrb[0].mxu0
    %v3843 = vadd.f32 %v3716, %v3842
    %v3844 = vpop.f32.mrb[0].mxu0
    %3845 = vmatprep.mubr.bf16.mxu0 0
    %3846 = vmatmul.mubr.bf16.gmra.mrb[0].mxu0 %v3785
    %v3847 = vpop.f32.mrb[0].mxu0
    %v3848 = vadd.f32 %v3721, %v3847
    %v3849 = vpop.f32.mrb[0].mxu0
    %v3850 = vpop.f32.mrb[0].mxu0
    %v3851 = vadd.f32 %v3724, %v3850
    %v3852 = vpop.f32.mrb[0].mxu0
    %3853 = vmatprep.mubr.bf16.mxu0 0
    %3854 = vmatmul.mubr.bf16.gmra.mrb[0].mxu0 %v3788
    %v3855 = vpop.f32.mrb[0].mxu0
    %v3856 = vadd.f32 %v3729, %v3855
    %v3857 = vpop.f32.mrb[0].mxu0
    %v3858 = vpop.f32.mrb[0].mxu0
    %v3859 = vadd.f32 %v3732, %v3858
    %v3860 = vpop.f32.mrb[0].mxu0
    %3861 = vmatprep.mubr.bf16.mxu0 0
    %3862 = vmatmul.mubr.bf16.gmra.mrb[0].mxu0 %v3791
    %v3863 = vpop.f32.mrb[0].mxu0
    %v3864 = vadd.f32 %v3737, %v3863
    %v3865 = vpop.f32.mrb[0].mxu0
    %v3866 = vpop.f32.mrb[0].mxu0
    %v3867 = vadd.f32 %v3740, %v3866
    %v3868 = vpop.f32.mrb[0].mxu0
    %3869 = vmatprep.mubr.bf16.mxu0 0
    %3870 = vmatmul.mubr.bf16.gmra.mrb[0].mxu0 %v3794
    %v3871 = vpop.f32.mrb[0].mxu0
    %v3872 = vadd.f32 %v3745, %v3871
    %v3873 = vpop.f32.mrb[0].mxu0
    %v3874 = vpop.f32.mrb[0].mxu0
    %v3875 = vadd.f32 %v3748, %v3874
    %v3876 = vpop.f32.mrb[0].mxu0
    %3877 = vmatprep.mubr.bf16.mxu0 0
    %3878 = vmatmul.mubr.bf16.gmra.mrb[0].mxu0 %v3797
    %v3879 = vpop.f32.mrb[0].mxu0
    %v3880 = vadd.f32 %v3753, %v3879
    %v3881 = vpop.f32.mrb[0].mxu0
    %v3882 = vpop.f32.mrb[0].mxu0
    %v3883 = vadd.f32 %v3756, %v3882
    %v3884 = vpop.f32.mrb[0].mxu0
    %3885 = vmatprep.mubr.bf16.mxu0 0
    %3886 = vmatmul.mubr.bf16.gmra.mrb[0].mxu0 %v3800
    %v3887 = vpop.f32.mrb[0].mxu0
    %v3888 = vadd.f32 %v3761, %v3887
    %v3889 = vpop.f32.mrb[0].mxu0
    %v3890 = vpop.f32.mrb[0].mxu0
    %v3891 = vadd.f32 %v3764, %v3890
    %v3892 = vpop.f32.mrb[0].mxu0
    %3893 = vmatprep.mubr.bf16.mxu0 0
    %3894 = vmatmul.mubr.bf16.gmra.mrb[0].mxu0 %v3803
    %v3895 = vpop.f32.mrb[0].mxu0
    %v3896 = vadd.f32 %v3769, %v3895
    %v3897 = vpop.f32.mrb[0].mxu0
    %v3898 = vpop.f32.mrb[0].mxu0
    %v3899 = vadd.f32 %v3772, %v3898
    %v3900 = vpop.f32.mrb[0].mxu0
    %3901 = vdwg.mxu0
    %v3902 = vlaneseq
    %v3903 = vshrl.u32 %v3902, 7
    %v3904 = vsub.s32 2, %v3903
    %v3905 = vrot.slane %v256, %v3904
    %v3906 = vadd.f32 %v3840, %v3905
    %v3907 = vadd.f32 %v3843, %v3905
    %v3908 = vadd.f32 %v3848, %v3905
    %v3909 = vadd.f32 %v3851, %v3905
    %v3910 = vadd.f32 %v3856, %v3905
    %v3911 = vadd.f32 %v3859, %v3905
    %v3912 = vadd.f32 %v3864, %v3905
    %v3913 = vadd.f32 %v3867, %v3905
    %v3914 = vadd.f32 %v3872, %v3905
    %v3915 = vadd.f32 %v3875, %v3905
    %v3916 = vadd.f32 %v3880, %v3905
    %v3917 = vadd.f32 %v3883, %v3905
    %v3918 = vadd.f32 %v3888, %v3905
    %v3919 = vadd.f32 %v3891, %v3905
    %v3920 = vadd.f32 %v3896, %v3905
    %v3921 = vadd.f32 %v3899, %v3905
    %v3922 = vadd.f32 %v214, %v3906
    %v3923 = vadd.f32 %v215, %v3907
    %v3924 = vadd.f32 %v216, %v3908
    %v3925 = vadd.f32 %v217, %v3909
    %v3926 = vadd.f32 %v218, %v3910
    %v3927 = vadd.f32 %v219, %v3911
    %v3928 = vadd.f32 %v220, %v3912
    %v3929 = vadd.f32 %v221, %v3913
    %v3930 = vadd.f32 %v222, %v3914
    %v3931 = vadd.f32 %v223, %v3915
    %v3932 = vadd.f32 %v224, %v3916
    %v3933 = vadd.f32 %v225, %v3917
    %v3934 = vadd.f32 %v226, %v3918
    %v3935 = vadd.f32 %v227, %v3919
    %v3936 = vadd.f32 %v228, %v3920
    %v3937 = vadd.f32 %v229, %v3921
    %3938 = vxpose.xlu0.b32.start [1/16] %v3259, 128
    %3939 = vxpose.xlu0.b32.cont [2/16] %v3260, 128
    %3940 = vxpose.xlu0.b32.cont [3/16] %v3261, 128
    %3941 = vxpose.xlu0.b32.cont [4/16] %v3262, 128
    %3942 = vxpose.xlu0.b32.cont [5/16] %v3263, 128
    %3943 = vxpose.xlu0.b32.cont [6/16] %v3264, 128
    %3944 = vxpose.xlu0.b32.cont [7/16] %v3265, 128
    %3945 = vxpose.xlu0.b32.cont [8/16] %v3266, 128
    %3946 = vxpose.xlu0.b32.cont [9/16] 0.0, 128
    %3947 = vxpose.xlu0.b32.cont [10/16] 0.0, 128
    %3948 = vxpose.xlu0.b32.cont [11/16] 0.0, 128
    %3949 = vxpose.xlu0.b32.cont [12/16] 0.0, 128
    %3950 = vxpose.xlu0.b32.cont [13/16] 0.0, 128
    %3951 = vxpose.xlu0.b32.cont [14/16] 0.0, 128
    %3952 = vxpose.xlu0.b32.cont [15/16] 0.0, 128
    %3953 = vxpose.xlu0.b32.end [16/16] 0.0, 128
    %v3954 = vpop.trf.xlu0
    %v3955 = vpop.trf.xlu0
    %v3956 = vpop.trf.xlu0
    %v3957 = vpop.trf.xlu0
    %v3958 = vpop.trf.xlu0
    %v3959 = vpop.trf.xlu0
    %v3960 = vpop.trf.xlu0
    %v3961 = vpop.trf.xlu0
    %v3962 = vpop.trf.xlu0
    %v3963 = vpop.trf.xlu0
    %v3964 = vpop.trf.xlu0
    %v3965 = vpop.trf.xlu0
    %v3966 = vpop.trf.xlu0
    %v3967 = vpop.trf.xlu0
    %v3968 = vpop.trf.xlu0
    %v3969 = vpop.trf.xlu0
    %3970 = vxpose.xlu0.b32.start [1/16] %v3267, 128
    %3971 = vxpose.xlu0.b32.cont [2/16] %v3268, 128
    %3972 = vxpose.xlu0.b32.cont [3/16] %v3269, 128
    %3973 = vxpose.xlu0.b32.cont [4/16] %v3270, 128
    %3974 = vxpose.xlu0.b32.cont [5/16] %v3271, 128
    %3975 = vxpose.xlu0.b32.cont [6/16] %v3272, 128
    %3976 = vxpose.xlu0.b32.cont [7/16] %v3273, 128
    %3977 = vxpose.xlu0.b32.cont [8/16] %v3274, 128
    %3978 = vxpose.xlu0.b32.cont [9/16] 0.0, 128
    %3979 = vxpose.xlu0.b32.cont [10/16] 0.0, 128
    %3980 = vxpose.xlu0.b32.cont [11/16] 0.0, 128
    %3981 = vxpose.xlu0.b32.cont [12/16] 0.0, 128
    %3982 = vxpose.xlu0.b32.cont [13/16] 0.0, 128
    %3983 = vxpose.xlu0.b32.cont [14/16] 0.0, 128
    %3984 = vxpose.xlu0.b32.cont [15/16] 0.0, 128
    %3985 = vxpose.xlu0.b32.end [16/16] 0.0, 128
    %v3986 = vpop.trf.xlu0
    %v3987 = vpop.trf.xlu0
    %v3988 = vpop.trf.xlu0
    %v3989 = vpop.trf.xlu0
    %v3990 = vpop.trf.xlu0
    %v3991 = vpop.trf.xlu0
    %v3992 = vpop.trf.xlu0
    %v3993 = vpop.trf.xlu0
    %v3994 = vpop.trf.xlu0
    %v3995 = vpop.trf.xlu0
    %v3996 = vpop.trf.xlu0
    %v3997 = vpop.trf.xlu0
    %v3998 = vpop.trf.xlu0
    %v3999 = vpop.trf.xlu0
    %v4000 = vpop.trf.xlu0
    %v4001 = vpop.trf.xlu0
    %4002 = vxpose.xlu0.b32.start [1/16] %v3275, 128
    %4003 = vxpose.xlu0.b32.cont [2/16] %v3276, 128
    %4004 = vxpose.xlu0.b32.cont [3/16] %v3277, 128
    %4005 = vxpose.xlu0.b32.cont [4/16] %v3278, 128
    %4006 = vxpose.xlu0.b32.cont [5/16] %v3279, 128
    %4007 = vxpose.xlu0.b32.cont [6/16] %v3280, 128
    %4008 = vxpose.xlu0.b32.cont [7/16] %v3281, 128
    %4009 = vxpose.xlu0.b32.cont [8/16] %v3282, 128
    %4010 = vxpose.xlu0.b32.cont [9/16] 0.0, 128
    %4011 = vxpose.xlu0.b32.cont [10/16] 0.0, 128
    %4012 = vxpose.xlu0.b32.cont [11/16] 0.0, 128
    %4013 = vxpose.xlu0.b32.cont [12/16] 0.0, 128
    %4014 = vxpose.xlu0.b32.cont [13/16] 0.0, 128
    %4015 = vxpose.xlu0.b32.cont [14/16] 0.0, 128
    %4016 = vxpose.xlu0.b32.cont [15/16] 0.0, 128
    %4017 = vxpose.xlu0.b32.end [16/16] 0.0, 128
    %v4018 = vpop.trf.xlu0
    %v4019 = vpop.trf.xlu0
    %v4020 = vpop.trf.xlu0
    %v4021 = vpop.trf.xlu0
    %v4022 = vpop.trf.xlu0
    %v4023 = vpop.trf.xlu0
    %v4024 = vpop.trf.xlu0
    %v4025 = vpop.trf.xlu0
    %v4026 = vpop.trf.xlu0
    %v4027 = vpop.trf.xlu0
    %v4028 = vpop.trf.xlu0
    %v4029 = vpop.trf.xlu0
    %v4030 = vpop.trf.xlu0
    %v4031 = vpop.trf.xlu0
    %v4032 = vpop.trf.xlu0
    %v4033 = vpop.trf.xlu0
    %4034 = vxpose.xlu0.b32.start [1/16] %v3283, 128
    %4035 = vxpose.xlu0.b32.cont [2/16] %v3284, 128
    %4036 = vxpose.xlu0.b32.cont [3/16] %v3285, 128
    %4037 = vxpose.xlu0.b32.cont [4/16] %v3286, 128
    %4038 = vxpose.xlu0.b32.cont [5/16] %v3287, 128
    %4039 = vxpose.xlu0.b32.cont [6/16] %v3288, 128
    %4040 = vxpose.xlu0.b32.cont [7/16] %v3289, 128
    %4041 = vxpose.xlu0.b32.cont [8/16] %v3290, 128
    %4042 = vxpose.xlu0.b32.cont [9/16] 0.0, 128
    %4043 = vxpose.xlu0.b32.cont [10/16] 0.0, 128
    %4044 = vxpose.xlu0.b32.cont [11/16] 0.0, 128
    %4045 = vxpose.xlu0.b32.cont [12/16] 0.0, 128
    %4046 = vxpose.xlu0.b32.cont [13/16] 0.0, 128
    %4047 = vxpose.xlu0.b32.cont [14/16] 0.0, 128
    %4048 = vxpose.xlu0.b32.cont [15/16] 0.0, 128
    %4049 = vxpose.xlu0.b32.end [16/16] 0.0, 128
    %v4050 = vpop.trf.xlu0
    %v4051 = vpop.trf.xlu0
    %v4052 = vpop.trf.xlu0
    %v4053 = vpop.trf.xlu0
    %v4054 = vpop.trf.xlu0
    %v4055 = vpop.trf.xlu0
    %v4056 = vpop.trf.xlu0
    %v4057 = vpop.trf.xlu0
    %v4058 = vpop.trf.xlu0
    %v4059 = vpop.trf.xlu0
    %v4060 = vpop.trf.xlu0
    %v4061 = vpop.trf.xlu0
    %v4062 = vpop.trf.xlu0
    %v4063 = vpop.trf.xlu0
    %v4064 = vpop.trf.xlu0
    %v4065 = vpop.trf.xlu0
    %4066 = vst.msk [vmem:[#allocation26] sm:$0xff] %vm983, %v3954
    %4067 = vst.msk [vmem:[#allocation26 + $0x8] sm:$0xff] %vm983, %v3986
    %4068 = vst.msk [vmem:[#allocation26 + $0x10] sm:$0xff] %vm983, %v4018
    %4069 = vst.msk [vmem:[#allocation26 + $0x18] sm:$0xff] %vm983, %v4050
    %v4070 = vadd.f32 %v214, %v3922
    %v4071 = vadd.f32 %v215, %v3923
    %v4072 = vadd.f32 %v216, %v3924
    %v4073 = vadd.f32 %v217, %v3925
    %v4074 = vadd.f32 %v218, %v3926
    %v4075 = vadd.f32 %v219, %v3927
    %v4076 = vadd.f32 %v220, %v3928
    %v4077 = vadd.f32 %v221, %v3929
    %v4078 = vadd.f32 %v222, %v3930
    %v4079 = vadd.f32 %v223, %v3931
    %v4080 = vadd.f32 %v224, %v3932
    %v4081 = vadd.f32 %v225, %v3933
    %v4082 = vadd.f32 %v226, %v3934
    %v4083 = vadd.f32 %v227, %v3935
    %v4084 = vadd.f32 %v228, %v3936
    %v4085 = vadd.f32 %v229, %v3937
    %v4086 = vld [vmem:[#allocation20] sm:$0xff]
    %v4087 = vld [vmem:[#allocation20 + $0x8] sm:$0xff]
    %v4088 = vld [vmem:[#allocation20 + $0x10] sm:$0xff]
    %v4089 = vld [vmem:[#allocation20 + $0x18] sm:$0xff]
    %v4090 = vld [vmem:[#allocation20 + $0x20] sm:$0x3]
    %v4091 = vmax.f32 %v4070, 0.0
    %v4092 = vmax.f32 %v4071, 0.0
    %v4093 = vmax.f32 %v4072, 0.0
    %v4094 = vmax.f32 %v4073, 0.0
    %v4095 = vmax.f32 %v4074, 0.0
    %v4096 = vmax.f32 %v4075, 0.0
    %v4097 = vmax.f32 %v4076, 0.0
    %v4098 = vmax.f32 %v4077, 0.0
    %v4108 = vrot.slane 0.0, 7
    %v4109 = vrot.slane %v4091, 7
    %v4110 = vrot.slane %v4092, 7
    %v4111 = vrot.slane %v4093, 7
    %v4112 = vrot.slane %v4094, 7
    %v4113 = vrot.slane %v4095, 7
    %v4114 = vrot.slane %v4096, 7
    %v4115 = vrot.slane %v4097, 7
    %v4116 = vrot.slane %v4098, 7
    %vm4126 = vcmask 1040384
    %v4127 = vsel %vm4126, 0.0, %v4108
    %v4128 = vsel %vm4126, 0.0, %v4109
    %v4129 = vsel %vm4126, 0.0, %v4110
    %v4130 = vsel %vm4126, 0.0, %v4111
    %v4131 = vsel %vm4126, 0.0, %v4112
    %v4132 = vsel %vm4126, 0.0, %v4113
    %v4133 = vsel %vm4126, 0.0, %v4114
    %v4134 = vsel %vm4126, 0.0, %v4115
    %v4135 = vsel %vm4126, 0.0, %v4116
    %v4136 = vsel %vm4126, %v4108, 0.0
    %v4137 = vsel %vm4126, %v4109, 0.0
    %v4138 = vsel %vm4126, %v4110, 0.0
    %v4139 = vsel %vm4126, %v4111, 0.0
    %v4140 = vsel %vm4126, %v4112, 0.0
    %v4141 = vsel %vm4126, %v4113, 0.0
    %v4142 = vsel %vm4126, %v4114, 0.0
    %v4143 = vsel %vm4126, %v4115, 0.0
    %v4144 = vsel %vm4126, %v4116, 0.0
    %v4145 = vpack.c.bf16 %v4128, %v4127
    %v4146 = vpack.c.bf16 %v4130, %v4129
    %v4147 = vpack.c.bf16 %v4132, %v4131
    %v4148 = vpack.c.bf16 %v4134, %v4133
    %v4149 = vld [vmem:[#allocation19] sm:$0xf]
    %v4150 = vld [vmem:[#allocation19 + $0x4] sm:$0xf]
    %v4151 = vld [vmem:[#allocation19 + $0x8] sm:$0xf]
    %v4152 = vld [vmem:[#allocation19 + $0xc] sm:$0xf]
    %vm4169 = vcmask 1046528
    %v4170 = vrot.slane %v4127, 1
    %v4171 = vrot.slane %v4136, 1
    %v4172 = vsel %vm4169, %v4170, %v4171
    %v4173 = vrot.slane %v4128, 1
    %v4174 = vrot.slane %v4137, 1
    %v4175 = vsel %vm4169, %v4173, %v4174
    %v4176 = vrot.slane %v4129, 1
    %v4177 = vrot.slane %v4138, 1
    %v4178 = vsel %vm4169, %v4176, %v4177
    %v4179 = vrot.slane %v4130, 1
    %v4180 = vrot.slane %v4139, 1
    %v4181 = vsel %vm4169, %v4179, %v4180
    %v4182 = vrot.slane %v4131, 1
    %v4183 = vrot.slane %v4140, 1
    %v4184 = vsel %vm4169, %v4182, %v4183
    %v4185 = vrot.slane %v4132, 1
    %v4186 = vrot.slane %v4141, 1
    %v4187 = vsel %vm4169, %v4185, %v4186
    %v4188 = vrot.slane %v4133, 1
    %v4189 = vrot.slane %v4142, 1
    %v4190 = vsel %vm4169, %v4188, %v4189
    %v4191 = vrot.slane %v4134, 1
    %v4192 = vrot.slane %v4143, 1
    %v4193 = vsel %vm4169, %v4191, %v4192
    %v4202 = vpack.c.bf16 %v4175, %v4172
    %v4203 = vpack.c.bf16 %v4181, %v4178
    %v4204 = vpack.c.bf16 %v4187, %v4184
    %v4205 = vpack.c.bf16 %v4193, %v4190
    %v4206 = vld [vmem:[#allocation19 + $0x10] sm:$0xf]
    %v4207 = vld [vmem:[#allocation19 + $0x14] sm:$0xf]
    %v4208 = vld [vmem:[#allocation19 + $0x18] sm:$0xf]
    %v4209 = vld [vmem:[#allocation19 + $0x1c] sm:$0xf]
    %v4214 = vunpack.c.l.b16 %v4206
    %v4215 = vunpack.c.l.b16 %v4207
    %v4216 = vunpack.c.l.b16 %v4208
    %v4217 = vunpack.c.l.b16 %v4209
    %v4218 = vpack.c.b16 %v4215, %v4214
    %v4219 = vpack.c.b16 %v4217, %v4216
    %v4223 = vsel %vm257, %v4202, 0
    %v4226 = vsel %vm257, %v4203, 0
    %v4229 = vsel %vm257, %v4204, 0
    %v4232 = vsel %vm257, %v4205, 0
    %4234 = vmatprep.subr.bf16.mxu0 0
    %4235 = vmatpush1.bf16.msra.mxu0 %v4218
    %4236 = vmatprep.subr.bf16.mxu0 0
    %4237 = vmatpush1.bf16.msra.mxu0 %v4219
    %4238 = vmatprep.subr.bf16.mxu0 0
    %4239 = vmatpush1.bf16.msra.mxu0 0
    %4240 = vmatprep.subr.bf16.mxu0 0
    %4241 = vmatpush1.bf16.msra.mxu0 0
    %4242 = vmatprep.subr.bf16.mxu0 0
    %4243 = vmatpush1.bf16.msra.mxu0 0
    %4244 = vmatprep.subr.bf16.mxu0 0
    %4245 = vmatpush1.bf16.msra.mxu0 0
    %4246 = vmatprep.subr.bf16.mxu0 0
    %4247 = vmatpush1.bf16.msra.mxu0 0
    %4248 = vmatprep.subr.bf16.mxu0 0
    %4249 = vmatpush1.bf16.msra.mxu0 0
    %4250 = vmatprep.subr.bf16.mxu0 0
    %4251 = vmatpush1.bf16.msra.mxu0 0
    %4252 = vmatprep.subr.bf16.mxu0 0
    %4253 = vmatpush1.bf16.msra.mxu0 0
    %4254 = vmatprep.subr.bf16.mxu0 0
    %4255 = vmatpush1.bf16.msra.mxu0 0
    %4256 = vmatprep.subr.bf16.mxu0 0
    %4257 = vmatpush1.bf16.msra.mxu0 0
    %4258 = vmatprep.subr.bf16.mxu0 0
    %4259 = vmatpush1.bf16.msra.mxu0 0
    %4260 = vmatprep.subr.bf16.mxu0 0
    %4261 = vmatpush1.bf16.msra.mxu0 0
    %4262 = vmatprep.subr.bf16.mxu0 0
    %4263 = vmatpush1.bf16.msra.mxu0 0
    %4264 = vmatprep.subr.bf16.mxu0 0
    %4265 = vmatpush1.bf16.msra.mxu0 0
    %4266 = vmatprep.mubr.bf16.mxu0 0
    %4267 = vmatmul.mubr.bf16.gmra.mrb[0].mxu0 %v4223
    %v4268 = vpop.f32.mrb[0].mxu0
    %v4269 = vadd.f32 0.0, %v4268
    %v4270 = vpop.f32.mrb[0].mxu0
    %v4271 = vpop.f32.mrb[0].mxu0
    %v4272 = vadd.f32 0.0, %v4271
    %v4273 = vpop.f32.mrb[0].mxu0
    %4274 = vmatprep.mubr.bf16.mxu0 0
    %4275 = vmatmul.mubr.bf16.gmra.mrb[0].mxu0 %v4226
    %v4276 = vpop.f32.mrb[0].mxu0
    %v4277 = vadd.f32 0.0, %v4276
    %v4278 = vpop.f32.mrb[0].mxu0
    %v4279 = vpop.f32.mrb[0].mxu0
    %v4280 = vadd.f32 0.0, %v4279
    %v4281 = vpop.f32.mrb[0].mxu0
    %4282 = vmatprep.mubr.bf16.mxu0 0
    %4283 = vmatmul.mubr.bf16.gmra.mrb[0].mxu0 %v4229
    %v4284 = vpop.f32.mrb[0].mxu0
    %v4285 = vadd.f32 0.0, %v4284
    %v4286 = vpop.f32.mrb[0].mxu0
    %v4287 = vpop.f32.mrb[0].mxu0
    %v4288 = vadd.f32 0.0, %v4287
    %v4289 = vpop.f32.mrb[0].mxu0
    %4290 = vmatprep.mubr.bf16.mxu0 0
    %4291 = vmatmul.mubr.bf16.gmra.mrb[0].mxu0 %v4232
    %v4292 = vpop.f32.mrb[0].mxu0
    %v4293 = vadd.f32 0.0, %v4292
    %v4294 = vpop.f32.mrb[0].mxu0
    %v4295 = vpop.f32.mrb[0].mxu0
    %v4296 = vadd.f32 0.0, %v4295
    %v4297 = vpop.f32.mrb[0].mxu0
    %4298 = vdwg.mxu0
    %v4303 = vunpack.c.l.b16 %v4149
    %v4304 = vunpack.c.l.b16 %v4150
    %v4305 = vunpack.c.l.b16 %v4151
    %v4306 = vunpack.c.l.b16 %v4152
    %v4307 = vpack.c.b16 %v4304, %v4303
    %v4308 = vpack.c.b16 %v4306, %v4305
    %v4312 = vsel %vm257, %v4145, 0
    %v4315 = vsel %vm257, %v4146, 0
    %v4318 = vsel %vm257, %v4147, 0
    %v4321 = vsel %vm257, %v4148, 0
    %4323 = vmatprep.subr.bf16.mxu0 0
    %4324 = vmatpush1.bf16.msra.mxu0 %v4307
    %4325 = vmatprep.subr.bf16.mxu0 0
    %4326 = vmatpush1.bf16.msra.mxu0 %v4308
    %4327 = vmatprep.subr.bf16.mxu0 0
    %4328 = vmatpush1.bf16.msra.mxu0 0
    %4329 = vmatprep.subr.bf16.mxu0 0
    %4330 = vmatpush1.bf16.msra.mxu0 0
    %4331 = vmatprep.subr.bf16.mxu0 0
    %4332 = vmatpush1.bf16.msra.mxu0 0
    %4333 = vmatprep.subr.bf16.mxu0 0
    %4334 = vmatpush1.bf16.msra.mxu0 0
    %4335 = vmatprep.subr.bf16.mxu0 0
    %4336 = vmatpush1.bf16.msra.mxu0 0
    %4337 = vmatprep.subr.bf16.mxu0 0
    %4338 = vmatpush1.bf16.msra.mxu0 0
    %4339 = vmatprep.subr.bf16.mxu0 0
    %4340 = vmatpush1.bf16.msra.mxu0 0
    %4341 = vmatprep.subr.bf16.mxu0 0
    %4342 = vmatpush1.bf16.msra.mxu0 0
    %4343 = vmatprep.subr.bf16.mxu0 0
    %4344 = vmatpush1.bf16.msra.mxu0 0
    %4345 = vmatprep.subr.bf16.mxu0 0
    %4346 = vmatpush1.bf16.msra.mxu0 0
    %4347 = vmatprep.subr.bf16.mxu0 0
    %4348 = vmatpush1.bf16.msra.mxu0 0
    %4349 = vmatprep.subr.bf16.mxu0 0
    %4350 = vmatpush1.bf16.msra.mxu0 0
    %4351 = vmatprep.subr.bf16.mxu0 0
    %4352 = vmatpush1.bf16.msra.mxu0 0
    %4353 = vmatprep.subr.bf16.mxu0 0
    %4354 = vmatpush1.bf16.msra.mxu0 0
    %4355 = vmatprep.mubr.bf16.mxu0 0
    %4356 = vmatmul.mubr.bf16.gmra.mrb[0].mxu0 %v4312
    %v4357 = vpop.f32.mrb[0].mxu0
    %v4358 = vadd.f32 %v4269, %v4357
    %v4359 = vpop.f32.mrb[0].mxu0
    %v4360 = vpop.f32.mrb[0].mxu0
    %v4361 = vadd.f32 %v4272, %v4360
    %v4362 = vpop.f32.mrb[0].mxu0
    %4363 = vmatprep.mubr.bf16.mxu0 0
    %4364 = vmatmul.mubr.bf16.gmra.mrb[0].mxu0 %v4315
    %v4365 = vpop.f32.mrb[0].mxu0
    %v4366 = vadd.f32 %v4277, %v4365
    %v4367 = vpop.f32.mrb[0].mxu0
    %v4368 = vpop.f32.mrb[0].mxu0
    %v4369 = vadd.f32 %v4280, %v4368
    %v4370 = vpop.f32.mrb[0].mxu0
    %4371 = vmatprep.mubr.bf16.mxu0 0
    %4372 = vmatmul.mubr.bf16.gmra.mrb[0].mxu0 %v4318
    %v4373 = vpop.f32.mrb[0].mxu0
    %v4374 = vadd.f32 %v4285, %v4373
    %v4375 = vpop.f32.mrb[0].mxu0
    %v4376 = vpop.f32.mrb[0].mxu0
    %v4377 = vadd.f32 %v4288, %v4376
    %v4378 = vpop.f32.mrb[0].mxu0
    %4379 = vmatprep.mubr.bf16.mxu0 0
    %4380 = vmatmul.mubr.bf16.gmra.mrb[0].mxu0 %v4321
    %v4381 = vpop.f32.mrb[0].mxu0
    %v4382 = vadd.f32 %v4293, %v4381
    %v4383 = vpop.f32.mrb[0].mxu0
    %v4384 = vpop.f32.mrb[0].mxu0
    %v4385 = vadd.f32 %v4296, %v4384
    %v4386 = vpop.f32.mrb[0].mxu0
    %4387 = vdwg.mxu0
    %vm4388 = vcmask 1045504
    %v4389 = vrot.slane %v4127, 2
    %v4390 = vrot.slane %v4136, 2
    %v4391 = vsel %vm4388, %v4389, %v4390
    %v4392 = vrot.slane %v4128, 2
    %v4393 = vrot.slane %v4137, 2
    %v4394 = vsel %vm4388, %v4392, %v4393
    %v4395 = vrot.slane %v4129, 2
    %v4396 = vrot.slane %v4138, 2
    %v4397 = vsel %vm4388, %v4395, %v4396
    %v4398 = vrot.slane %v4130, 2
    %v4399 = vrot.slane %v4139, 2
    %v4400 = vsel %vm4388, %v4398, %v4399
    %v4401 = vrot.slane %v4131, 2
    %v4402 = vrot.slane %v4140, 2
    %v4403 = vsel %vm4388, %v4401, %v4402
    %v4404 = vrot.slane %v4132, 2
    %v4405 = vrot.slane %v4141, 2
    %v4406 = vsel %vm4388, %v4404, %v4405
    %v4407 = vrot.slane %v4133, 2
    %v4408 = vrot.slane %v4142, 2
    %v4409 = vsel %vm4388, %v4407, %v4408
    %v4410 = vrot.slane %v4134, 2
    %v4411 = vrot.slane %v4143, 2
    %v4412 = vsel %vm4388, %v4410, %v4411
    %v4421 = vpack.c.bf16 %v4394, %v4391
    %v4422 = vpack.c.bf16 %v4400, %v4397
    %v4423 = vpack.c.bf16 %v4406, %v4403
    %v4424 = vpack.c.bf16 %v4412, %v4409
    %v4425 = vld [vmem:[#allocation19 + $0x20] sm:$0xf]
    %v4426 = vld [vmem:[#allocation19 + $0x24] sm:$0xf]
    %v4427 = vld [vmem:[#allocation19 + $0x28] sm:$0xf]
    %v4428 = vld [vmem:[#allocation19 + $0x2c] sm:$0xf]
    %v4433 = vunpack.c.l.b16 %v4425
    %v4434 = vunpack.c.l.b16 %v4426
    %v4435 = vunpack.c.l.b16 %v4427
    %v4436 = vunpack.c.l.b16 %v4428
    %v4437 = vpack.c.b16 %v4434, %v4433
    %v4438 = vpack.c.b16 %v4436, %v4435
    %v4442 = vsel %vm257, %v4421, 0
    %v4445 = vsel %vm257, %v4422, 0
    %v4448 = vsel %vm257, %v4423, 0
    %v4451 = vsel %vm257, %v4424, 0
    %4453 = vmatprep.subr.bf16.mxu0 0
    %4454 = vmatpush1.bf16.msra.mxu0 %v4437
    %4455 = vmatprep.subr.bf16.mxu0 0
    %4456 = vmatpush1.bf16.msra.mxu0 %v4438
    %4457 = vmatprep.subr.bf16.mxu0 0
    %4458 = vmatpush1.bf16.msra.mxu0 0
    %4459 = vmatprep.subr.bf16.mxu0 0
    %4460 = vmatpush1.bf16.msra.mxu0 0
    %4461 = vmatprep.subr.bf16.mxu0 0
    %4462 = vmatpush1.bf16.msra.mxu0 0
    %4463 = vmatprep.subr.bf16.mxu0 0
    %4464 = vmatpush1.bf16.msra.mxu0 0
    %4465 = vmatprep.subr.bf16.mxu0 0
    %4466 = vmatpush1.bf16.msra.mxu0 0
    %4467 = vmatprep.subr.bf16.mxu0 0
    %4468 = vmatpush1.bf16.msra.mxu0 0
    %4469 = vmatprep.subr.bf16.mxu0 0
    %4470 = vmatpush1.bf16.msra.mxu0 0
    %4471 = vmatprep.subr.bf16.mxu0 0
    %4472 = vmatpush1.bf16.msra.mxu0 0
    %4473 = vmatprep.subr.bf16.mxu0 0
    %4474 = vmatpush1.bf16.msra.mxu0 0
    %4475 = vmatprep.subr.bf16.mxu0 0
    %4476 = vmatpush1.bf16.msra.mxu0 0
    %4477 = vmatprep.subr.bf16.mxu0 0
    %4478 = vmatpush1.bf16.msra.mxu0 0
    %4479 = vmatprep.subr.bf16.mxu0 0
    %4480 = vmatpush1.bf16.msra.mxu0 0
    %4481 = vmatprep.subr.bf16.mxu0 0
    %4482 = vmatpush1.bf16.msra.mxu0 0
    %4483 = vmatprep.subr.bf16.mxu0 0
    %4484 = vmatpush1.bf16.msra.mxu0 0
    %4485 = vmatprep.mubr.bf16.mxu0 0
    %4486 = vmatmul.mubr.bf16.gmra.mrb[0].mxu0 %v4442
    %v4487 = vpop.f32.mrb[0].mxu0
    %v4488 = vadd.f32 0.0, %v4487
    %v4489 = vpop.f32.mrb[0].mxu0
    %v4490 = vpop.f32.mrb[0].mxu0
    %v4491 = vadd.f32 0.0, %v4490
    %v4492 = vpop.f32.mrb[0].mxu0
    %4493 = vmatprep.mubr.bf16.mxu0 0
    %4494 = vmatmul.mubr.bf16.gmra.mrb[0].mxu0 %v4445
    %v4495 = vpop.f32.mrb[0].mxu0
    %v4496 = vadd.f32 0.0, %v4495
    %v4497 = vpop.f32.mrb[0].mxu0
    %v4498 = vpop.f32.mrb[0].mxu0
    %v4499 = vadd.f32 0.0, %v4498
    %v4500 = vpop.f32.mrb[0].mxu0
    %4501 = vmatprep.mubr.bf16.mxu0 0
    %4502 = vmatmul.mubr.bf16.gmra.mrb[0].mxu0 %v4448
    %v4503 = vpop.f32.mrb[0].mxu0
    %v4504 = vadd.f32 0.0, %v4503
    %v4505 = vpop.f32.mrb[0].mxu0
    %v4506 = vpop.f32.mrb[0].mxu0
    %v4507 = vadd.f32 0.0, %v4506
    %v4508 = vpop.f32.mrb[0].mxu0
    %4509 = vmatprep.mubr.bf16.mxu0 0
    %4510 = vmatmul.mubr.bf16.gmra.mrb[0].mxu0 %v4451
    %v4511 = vpop.f32.mrb[0].mxu0
    %v4512 = vadd.f32 0.0, %v4511
    %v4513 = vpop.f32.mrb[0].mxu0
    %v4514 = vpop.f32.mrb[0].mxu0
    %v4515 = vadd.f32 0.0, %v4514
    %v4516 = vpop.f32.mrb[0].mxu0
    %4517 = vdwg.mxu0
    %v4518 = vadd.f32 %v4358, %v4488
    %v4519 = vadd.f32 %v4361, %v4491
    %v4520 = vadd.f32 %v4366, %v4496
    %v4521 = vadd.f32 %v4369, %v4499
    %v4522 = vadd.f32 %v4374, %v4504
    %v4523 = vadd.f32 %v4377, %v4507
    %v4524 = vadd.f32 %v4382, %v4512
    %v4525 = vadd.f32 %v4385, %v4515
    %v4526 = vpack.c.bf16 %v4129, %v4128
    %v4527 = vpack.c.bf16 %v4131, %v4130
    %v4528 = vpack.c.bf16 %v4133, %v4132
    %v4529 = vpack.c.bf16 %v4135, %v4134
    %v4530 = vld [vmem:[#allocation19 + $0x30] sm:$0xf]
    %v4531 = vld [vmem:[#allocation19 + $0x34] sm:$0xf]
    %v4532 = vld [vmem:[#allocation19 + $0x38] sm:$0xf]
    %v4533 = vld [vmem:[#allocation19 + $0x3c] sm:$0xf]
    %v4538 = vunpack.c.l.b16 %v4530
    %v4539 = vunpack.c.l.b16 %v4531
    %v4540 = vunpack.c.l.b16 %v4532
    %v4541 = vunpack.c.l.b16 %v4533
    %v4542 = vpack.c.b16 %v4539, %v4538
    %v4543 = vpack.c.b16 %v4541, %v4540
    %v4547 = vsel %vm257, %v4526, 0
    %v4550 = vsel %vm257, %v4527, 0
    %v4553 = vsel %vm257, %v4528, 0
    %v4556 = vsel %vm257, %v4529, 0
    %4558 = vmatprep.subr.bf16.mxu0 0
    %4559 = vmatpush1.bf16.msra.mxu0 %v4542
    %4560 = vmatprep.subr.bf16.mxu0 0
    %4561 = vmatpush1.bf16.msra.mxu0 %v4543
    %4562 = vmatprep.subr.bf16.mxu0 0
    %4563 = vmatpush1.bf16.msra.mxu0 0
    %4564 = vmatprep.subr.bf16.mxu0 0
    %4565 = vmatpush1.bf16.msra.mxu0 0
    %4566 = vmatprep.subr.bf16.mxu0 0
    %4567 = vmatpush1.bf16.msra.mxu0 0
    %4568 = vmatprep.subr.bf16.mxu0 0
    %4569 = vmatpush1.bf16.msra.mxu0 0
    %4570 = vmatprep.subr.bf16.mxu0 0
    %4571 = vmatpush1.bf16.msra.mxu0 0
    %4572 = vmatprep.subr.bf16.mxu0 0
    %4573 = vmatpush1.bf16.msra.mxu0 0
    %4574 = vmatprep.subr.bf16.mxu0 0
    %4575 = vmatpush1.bf16.msra.mxu0 0
    %4576 = vmatprep.subr.bf16.mxu0 0
    %4577 = vmatpush1.bf16.msra.mxu0 0
    %4578 = vmatprep.subr.bf16.mxu0 0
    %4579 = vmatpush1.bf16.msra.mxu0 0
    %4580 = vmatprep.subr.bf16.mxu0 0
    %4581 = vmatpush1.bf16.msra.mxu0 0
    %4582 = vmatprep.subr.bf16.mxu0 0
    %4583 = vmatpush1.bf16.msra.mxu0 0
    %4584 = vmatprep.subr.bf16.mxu0 0
    %4585 = vmatpush1.bf16.msra.mxu0 0
    %4586 = vmatprep.subr.bf16.mxu0 0
    %4587 = vmatpush1.bf16.msra.mxu0 0
    %4588 = vmatprep.subr.bf16.mxu0 0
    %4589 = vmatpush1.bf16.msra.mxu0 0
    %4590 = vmatprep.mubr.bf16.mxu0 0
    %4591 = vmatmul.mubr.bf16.gmra.mrb[0].mxu0 %v4547
    %v4592 = vpop.f32.mrb[0].mxu0
    %v4593 = vadd.f32 0.0, %v4592
    %v4594 = vpop.f32.mrb[0].mxu0
    %v4595 = vpop.f32.mrb[0].mxu0
    %v4596 = vadd.f32 0.0, %v4595
    %v4597 = vpop.f32.mrb[0].mxu0
    %4598 = vmatprep.mubr.bf16.mxu0 0
    %4599 = vmatmul.mubr.bf16.gmra.mrb[0].mxu0 %v4550
    %v4600 = vpop.f32.mrb[0].mxu0
    %v4601 = vadd.f32 0.0, %v4600
    %v4602 = vpop.f32.mrb[0].mxu0
    %v4603 = vpop.f32.mrb[0].mxu0
    %v4604 = vadd.f32 0.0, %v4603
    %v4605 = vpop.f32.mrb[0].mxu0
    %4606 = vmatprep.mubr.bf16.mxu0 0
    %4607 = vmatmul.mubr.bf16.gmra.mrb[0].mxu0 %v4553
    %v4608 = vpop.f32.mrb[0].mxu0
    %v4609 = vadd.f32 0.0, %v4608
    %v4610 = vpop.f32.mrb[0].mxu0
    %v4611 = vpop.f32.mrb[0].mxu0
    %v4612 = vadd.f32 0.0, %v4611
    %v4613 = vpop.f32.mrb[0].mxu0
    %4614 = vmatprep.mubr.bf16.mxu0 0
    %4615 = vmatmul.mubr.bf16.gmra.mrb[0].mxu0 %v4556
    %v4616 = vpop.f32.mrb[0].mxu0
    %v4617 = vadd.f32 0.0, %v4616
    %v4618 = vpop.f32.mrb[0].mxu0
    %v4619 = vpop.f32.mrb[0].mxu0
    %v4620 = vadd.f32 0.0, %v4619
    %v4621 = vpop.f32.mrb[0].mxu0
    %4622 = vdwg.mxu0
    %v4623 = vadd.f32 %v4518, %v4593
    %v4624 = vadd.f32 %v4519, %v4596
    %v4625 = vadd.f32 %v4520, %v4601
    %v4626 = vadd.f32 %v4521, %v4604
    %v4627 = vadd.f32 %v4522, %v4609
    %v4628 = vadd.f32 %v4523, %v4612
    %v4629 = vadd.f32 %v4524, %v4617
    %v4630 = vadd.f32 %v4525, %v4620
    %v4633 = vrot.slane %v4135, 1
    %v4634 = vrot.slane %v4144, 1
    %v4635 = vsel %vm4169, %v4633, %v4634
    %v4637 = vpack.c.bf16 %v4178, %v4175
    %v4638 = vpack.c.bf16 %v4184, %v4181
    %v4639 = vpack.c.bf16 %v4190, %v4187
    %v4640 = vpack.c.bf16 %v4635, %v4193
    %v4641 = vld [vmem:[#allocation19 + $0x40] sm:$0xf]
    %v4642 = vld [vmem:[#allocation19 + $0x44] sm:$0xf]
    %v4643 = vld [vmem:[#allocation19 + $0x48] sm:$0xf]
    %v4644 = vld [vmem:[#allocation19 + $0x4c] sm:$0xf]
    %v4649 = vunpack.c.l.b16 %v4641
    %v4650 = vunpack.c.l.b16 %v4642
    %v4651 = vunpack.c.l.b16 %v4643
    %v4652 = vunpack.c.l.b16 %v4644
    %v4653 = vpack.c.b16 %v4650, %v4649
    %v4654 = vpack.c.b16 %v4652, %v4651
    %v4658 = vsel %vm257, %v4637, 0
    %v4661 = vsel %vm257, %v4638, 0
    %v4664 = vsel %vm257, %v4639, 0
    %v4667 = vsel %vm257, %v4640, 0
    %4669 = vmatprep.subr.bf16.mxu0 0
    %4670 = vmatpush1.bf16.msra.mxu0 %v4653
    %4671 = vmatprep.subr.bf16.mxu0 0
    %4672 = vmatpush1.bf16.msra.mxu0 %v4654
    %4673 = vmatprep.subr.bf16.mxu0 0
    %4674 = vmatpush1.bf16.msra.mxu0 0
    %4675 = vmatprep.subr.bf16.mxu0 0
    %4676 = vmatpush1.bf16.msra.mxu0 0
    %4677 = vmatprep.subr.bf16.mxu0 0
    %4678 = vmatpush1.bf16.msra.mxu0 0
    %4679 = vmatprep.subr.bf16.mxu0 0
    %4680 = vmatpush1.bf16.msra.mxu0 0
    %4681 = vmatprep.subr.bf16.mxu0 0
    %4682 = vmatpush1.bf16.msra.mxu0 0
    %4683 = vmatprep.subr.bf16.mxu0 0
    %4684 = vmatpush1.bf16.msra.mxu0 0
    %4685 = vmatprep.subr.bf16.mxu0 0
    %4686 = vmatpush1.bf16.msra.mxu0 0
    %4687 = vmatprep.subr.bf16.mxu0 0
    %4688 = vmatpush1.bf16.msra.mxu0 0
    %4689 = vmatprep.subr.bf16.mxu0 0
    %4690 = vmatpush1.bf16.msra.mxu0 0
    %4691 = vmatprep.subr.bf16.mxu0 0
    %4692 = vmatpush1.bf16.msra.mxu0 0
    %4693 = vmatprep.subr.bf16.mxu0 0
    %4694 = vmatpush1.bf16.msra.mxu0 0
    %4695 = vmatprep.subr.bf16.mxu0 0
    %4696 = vmatpush1.bf16.msra.mxu0 0
    %4697 = vmatprep.subr.bf16.mxu0 0
    %4698 = vmatpush1.bf16.msra.mxu0 0
    %4699 = vmatprep.subr.bf16.mxu0 0
    %4700 = vmatpush1.bf16.msra.mxu0 0
    %4701 = vmatprep.mubr.bf16.mxu0 0
    %4702 = vmatmul.mubr.bf16.gmra.mrb[0].mxu0 %v4658
    %v4703 = vpop.f32.mrb[0].mxu0
    %v4704 = vadd.f32 0.0, %v4703
    %v4705 = vpop.f32.mrb[0].mxu0
    %v4706 = vpop.f32.mrb[0].mxu0
    %v4707 = vadd.f32 0.0, %v4706
    %v4708 = vpop.f32.mrb[0].mxu0
    %4709 = vmatprep.mubr.bf16.mxu0 0
    %4710 = vmatmul.mubr.bf16.gmra.mrb[0].mxu0 %v4661
    %v4711 = vpop.f32.mrb[0].mxu0
    %v4712 = vadd.f32 0.0, %v4711
    %v4713 = vpop.f32.mrb[0].mxu0
    %v4714 = vpop.f32.mrb[0].mxu0
    %v4715 = vadd.f32 0.0, %v4714
    %v4716 = vpop.f32.mrb[0].mxu0
    %4717 = vmatprep.mubr.bf16.mxu0 0
    %4718 = vmatmul.mubr.bf16.gmra.mrb[0].mxu0 %v4664
    %v4719 = vpop.f32.mrb[0].mxu0
    %v4720 = vadd.f32 0.0, %v4719
    %v4721 = vpop.f32.mrb[0].mxu0
    %v4722 = vpop.f32.mrb[0].mxu0
    %v4723 = vadd.f32 0.0, %v4722
    %v4724 = vpop.f32.mrb[0].mxu0
    %4725 = vmatprep.mubr.bf16.mxu0 0
    %4726 = vmatmul.mubr.bf16.gmra.mrb[0].mxu0 %v4667
    %v4727 = vpop.f32.mrb[0].mxu0
    %v4728 = vadd.f32 0.0, %v4727
    %v4729 = vpop.f32.mrb[0].mxu0
    %v4730 = vpop.f32.mrb[0].mxu0
    %v4731 = vadd.f32 0.0, %v4730
    %v4732 = vpop.f32.mrb[0].mxu0
    %4733 = vdwg.mxu0
    %v4734 = vadd.f32 %v4623, %v4704
    %v4735 = vadd.f32 %v4624, %v4707
    %v4736 = vadd.f32 %v4625, %v4712
    %v4737 = vadd.f32 %v4626, %v4715
    %v4738 = vadd.f32 %v4627, %v4720
    %v4739 = vadd.f32 %v4628, %v4723
    %v4740 = vadd.f32 %v4629, %v4728
    %v4741 = vadd.f32 %v4630, %v4731
    %v4742 = vrot.slane %v4135, 2
    %v4743 = vrot.slane %v4144, 2
    %v4744 = vsel %vm4388, %v4742, %v4743
    %v4746 = vpack.c.bf16 %v4397, %v4394
    %v4747 = vpack.c.bf16 %v4403, %v4400
    %v4748 = vpack.c.bf16 %v4409, %v4406
    %v4749 = vpack.c.bf16 %v4744, %v4412
    %v4750 = vld [vmem:[#allocation19 + $0x50] sm:$0xf]
    %v4751 = vld [vmem:[#allocation19 + $0x54] sm:$0xf]
    %v4752 = vld [vmem:[#allocation19 + $0x58] sm:$0xf]
    %v4753 = vld [vmem:[#allocation19 + $0x5c] sm:$0xf]
    %v4758 = vunpack.c.l.b16 %v4750
    %v4759 = vunpack.c.l.b16 %v4751
    %v4760 = vunpack.c.l.b16 %v4752
    %v4761 = vunpack.c.l.b16 %v4753
    %v4762 = vpack.c.b16 %v4759, %v4758
    %v4763 = vpack.c.b16 %v4761, %v4760
    %v4767 = vsel %vm257, %v4746, 0
    %v4770 = vsel %vm257, %v4747, 0
    %v4773 = vsel %vm257, %v4748, 0
    %v4776 = vsel %vm257, %v4749, 0
    %4778 = vmatprep.subr.bf16.mxu0 0
    %4779 = vmatpush1.bf16.msra.mxu0 %v4762
    %4780 = vmatprep.subr.bf16.mxu0 0
    %4781 = vmatpush1.bf16.msra.mxu0 %v4763
    %4782 = vmatprep.subr.bf16.mxu0 0
    %4783 = vmatpush1.bf16.msra.mxu0 0
    %4784 = vmatprep.subr.bf16.mxu0 0
    %4785 = vmatpush1.bf16.msra.mxu0 0
    %4786 = vmatprep.subr.bf16.mxu0 0
    %4787 = vmatpush1.bf16.msra.mxu0 0
    %4788 = vmatprep.subr.bf16.mxu0 0
    %4789 = vmatpush1.bf16.msra.mxu0 0
    %4790 = vmatprep.subr.bf16.mxu0 0
    %4791 = vmatpush1.bf16.msra.mxu0 0
    %4792 = vmatprep.subr.bf16.mxu0 0
    %4793 = vmatpush1.bf16.msra.mxu0 0
    %4794 = vmatprep.subr.bf16.mxu0 0
    %4795 = vmatpush1.bf16.msra.mxu0 0
    %4796 = vmatprep.subr.bf16.mxu0 0
    %4797 = vmatpush1.bf16.msra.mxu0 0
    %4798 = vmatprep.subr.bf16.mxu0 0
    %4799 = vmatpush1.bf16.msra.mxu0 0
    %4800 = vmatprep.subr.bf16.mxu0 0
    %4801 = vmatpush1.bf16.msra.mxu0 0
    %4802 = vmatprep.subr.bf16.mxu0 0
    %4803 = vmatpush1.bf16.msra.mxu0 0
    %4804 = vmatprep.subr.bf16.mxu0 0
    %4805 = vmatpush1.bf16.msra.mxu0 0
    %4806 = vmatprep.subr.bf16.mxu0 0
    %4807 = vmatpush1.bf16.msra.mxu0 0
    %4808 = vmatprep.subr.bf16.mxu0 0
    %4809 = vmatpush1.bf16.msra.mxu0 0
    %4810 = vmatprep.mubr.bf16.mxu0 0
    %4811 = vmatmul.mubr.bf16.gmra.mrb[0].mxu0 %v4767
    %v4812 = vpop.f32.mrb[0].mxu0
    %v4813 = vadd.f32 0.0, %v4812
    %v4814 = vpop.f32.mrb[0].mxu0
    %v4815 = vpop.f32.mrb[0].mxu0
    %v4816 = vadd.f32 0.0, %v4815
    %v4817 = vpop.f32.mrb[0].mxu0
    %4818 = vmatprep.mubr.bf16.mxu0 0
    %4819 = vmatmul.mubr.bf16.gmra.mrb[0].mxu0 %v4770
    %v4820 = vpop.f32.mrb[0].mxu0
    %v4821 = vadd.f32 0.0, %v4820
    %v4822 = vpop.f32.mrb[0].mxu0
    %v4823 = vpop.f32.mrb[0].mxu0
    %v4824 = vadd.f32 0.0, %v4823
    %v4825 = vpop.f32.mrb[0].mxu0
    %4826 = vmatprep.mubr.bf16.mxu0 0
    %4827 = vmatmul.mubr.bf16.gmra.mrb[0].mxu0 %v4773
    %v4828 = vpop.f32.mrb[0].mxu0
    %v4829 = vadd.f32 0.0, %v4828
    %v4830 = vpop.f32.mrb[0].mxu0
    %v4831 = vpop.f32.mrb[0].mxu0
    %v4832 = vadd.f32 0.0, %v4831
    %v4833 = vpop.f32.mrb[0].mxu0
    %4834 = vmatprep.mubr.bf16.mxu0 0
    %4835 = vmatmul.mubr.bf16.gmra.mrb[0].mxu0 %v4776
    %v4836 = vpop.f32.mrb[0].mxu0
    %v4837 = vadd.f32 0.0, %v4836
    %v4838 = vpop.f32.mrb[0].mxu0
    %v4839 = vpop.f32.mrb[0].mxu0
    %v4840 = vadd.f32 0.0, %v4839
    %v4841 = vpop.f32.mrb[0].mxu0
    %4842 = vdwg.mxu0
    %v4843 = vadd.f32 %v4734, %v4813
    %v4844 = vadd.f32 %v4735, %v4816
    %v4845 = vadd.f32 %v4736, %v4821
    %v4846 = vadd.f32 %v4737, %v4824
    %v4847 = vadd.f32 %v4738, %v4829
    %v4848 = vadd.f32 %v4739, %v4832
    %v4849 = vadd.f32 %v4740, %v4837
    %v4850 = vadd.f32 %v4741, %v4840
    %v4851 = vpack.c.bf16 %v4127, %v4135
    %v4852 = vld [vmem:[#allocation19 + $0x60] sm:$0xf]
    %v4853 = vld [vmem:[#allocation19 + $0x64] sm:$0xf]
    %v4854 = vld [vmem:[#allocation19 + $0x68] sm:$0xf]
    %v4855 = vld [vmem:[#allocation19 + $0x6c] sm:$0xf]
    %v4860 = vunpack.c.l.b16 %v4852
    %v4861 = vunpack.c.l.b16 %v4853
    %v4862 = vunpack.c.l.b16 %v4854
    %v4863 = vunpack.c.l.b16 %v4855
    %v4864 = vpack.c.b16 %v4861, %v4860
    %v4865 = vpack.c.b16 %v4863, %v4862
    %v4869 = vsel %vm257, %v4851, 0
    %4871 = vmatprep.subr.bf16.mxu0 0
    %4872 = vmatpush1.bf16.msra.mxu0 %v4864
    %4873 = vmatprep.subr.bf16.mxu0 0
    %4874 = vmatpush1.bf16.msra.mxu0 %v4865
    %4875 = vmatprep.subr.bf16.mxu0 0
    %4876 = vmatpush1.bf16.msra.mxu0 0
    %4877 = vmatprep.subr.bf16.mxu0 0
    %4878 = vmatpush1.bf16.msra.mxu0 0
    %4879 = vmatprep.subr.bf16.mxu0 0
    %4880 = vmatpush1.bf16.msra.mxu0 0
    %4881 = vmatprep.subr.bf16.mxu0 0
    %4882 = vmatpush1.bf16.msra.mxu0 0
    %4883 = vmatprep.subr.bf16.mxu0 0
    %4884 = vmatpush1.bf16.msra.mxu0 0
    %4885 = vmatprep.subr.bf16.mxu0 0
    %4886 = vmatpush1.bf16.msra.mxu0 0
    %4887 = vmatprep.subr.bf16.mxu0 0
    %4888 = vmatpush1.bf16.msra.mxu0 0
    %4889 = vmatprep.subr.bf16.mxu0 0
    %4890 = vmatpush1.bf16.msra.mxu0 0
    %4891 = vmatprep.subr.bf16.mxu0 0
    %4892 = vmatpush1.bf16.msra.mxu0 0
    %4893 = vmatprep.subr.bf16.mxu0 0
    %4894 = vmatpush1.bf16.msra.mxu0 0
    %4895 = vmatprep.subr.bf16.mxu0 0
    %4896 = vmatpush1.bf16.msra.mxu0 0
    %4897 = vmatprep.subr.bf16.mxu0 0
    %4898 = vmatpush1.bf16.msra.mxu0 0
    %4899 = vmatprep.subr.bf16.mxu0 0
    %4900 = vmatpush1.bf16.msra.mxu0 0
    %4901 = vmatprep.subr.bf16.mxu0 0
    %4902 = vmatpush1.bf16.msra.mxu0 0
    %4903 = vmatprep.mubr.bf16.mxu0 0
    %4904 = vmatmul.mubr.bf16.gmra.mrb[0].mxu0 %v4315
    %v4905 = vpop.f32.mrb[0].mxu0
    %v4906 = vadd.f32 0.0, %v4905
    %v4907 = vpop.f32.mrb[0].mxu0
    %v4908 = vpop.f32.mrb[0].mxu0
    %v4909 = vadd.f32 0.0, %v4908
    %v4910 = vpop.f32.mrb[0].mxu0
    %4911 = vmatprep.mubr.bf16.mxu0 0
    %4912 = vmatmul.mubr.bf16.gmra.mrb[0].mxu0 %v4318
    %v4913 = vpop.f32.mrb[0].mxu0
    %v4914 = vadd.f32 0.0, %v4913
    %v4915 = vpop.f32.mrb[0].mxu0
    %v4916 = vpop.f32.mrb[0].mxu0
    %v4917 = vadd.f32 0.0, %v4916
    %v4918 = vpop.f32.mrb[0].mxu0
    %4919 = vmatprep.mubr.bf16.mxu0 0
    %4920 = vmatmul.mubr.bf16.gmra.mrb[0].mxu0 %v4321
    %v4921 = vpop.f32.mrb[0].mxu0
    %v4922 = vadd.f32 0.0, %v4921
    %v4923 = vpop.f32.mrb[0].mxu0
    %v4924 = vpop.f32.mrb[0].mxu0
    %v4925 = vadd.f32 0.0, %v4924
    %v4926 = vpop.f32.mrb[0].mxu0
    %4927 = vmatprep.mubr.bf16.mxu0 0
    %4928 = vmatmul.mubr.bf16.gmra.mrb[0].mxu0 %v4869
    %v4929 = vpop.f32.mrb[0].mxu0
    %v4930 = vadd.f32 0.0, %v4929
    %v4931 = vpop.f32.mrb[0].mxu0
    %v4932 = vpop.f32.mrb[0].mxu0
    %v4933 = vadd.f32 0.0, %v4932
    %v4934 = vpop.f32.mrb[0].mxu0
    %4935 = vdwg.mxu0
    %v4936 = vadd.f32 %v4843, %v4906
    %v4937 = vadd.f32 %v4844, %v4909
    %v4938 = vadd.f32 %v4845, %v4914
    %v4939 = vadd.f32 %v4846, %v4917
    %v4940 = vadd.f32 %v4847, %v4922
    %v4941 = vadd.f32 %v4848, %v4925
    %v4942 = vadd.f32 %v4849, %v4930
    %v4943 = vadd.f32 %v4850, %v4933
    %v4944 = vpack.c.bf16 %v4172, %v4635
    %v4945 = vld [vmem:[#allocation19 + $0x70] sm:$0xf]
    %v4946 = vld [vmem:[#allocation19 + $0x74] sm:$0xf]
    %v4947 = vld [vmem:[#allocation19 + $0x78] sm:$0xf]
    %v4948 = vld [vmem:[#allocation19 + $0x7c] sm:$0xf]
    %v4953 = vunpack.c.l.b16 %v4945
    %v4954 = vunpack.c.l.b16 %v4946
    %v4955 = vunpack.c.l.b16 %v4947
    %v4956 = vunpack.c.l.b16 %v4948
    %v4957 = vpack.c.b16 %v4954, %v4953
    %v4958 = vpack.c.b16 %v4956, %v4955
    %v4962 = vsel %vm257, %v4944, 0
    %4964 = vmatprep.subr.bf16.mxu0 0
    %4965 = vmatpush1.bf16.msra.mxu0 %v4957
    %4966 = vmatprep.subr.bf16.mxu0 0
    %4967 = vmatpush1.bf16.msra.mxu0 %v4958
    %4968 = vmatprep.subr.bf16.mxu0 0
    %4969 = vmatpush1.bf16.msra.mxu0 0
    %4970 = vmatprep.subr.bf16.mxu0 0
    %4971 = vmatpush1.bf16.msra.mxu0 0
    %4972 = vmatprep.subr.bf16.mxu0 0
    %4973 = vmatpush1.bf16.msra.mxu0 0
    %4974 = vmatprep.subr.bf16.mxu0 0
    %4975 = vmatpush1.bf16.msra.mxu0 0
    %4976 = vmatprep.subr.bf16.mxu0 0
    %4977 = vmatpush1.bf16.msra.mxu0 0
    %4978 = vmatprep.subr.bf16.mxu0 0
    %4979 = vmatpush1.bf16.msra.mxu0 0
    %4980 = vmatprep.subr.bf16.mxu0 0
    %4981 = vmatpush1.bf16.msra.mxu0 0
    %4982 = vmatprep.subr.bf16.mxu0 0
    %4983 = vmatpush1.bf16.msra.mxu0 0
    %4984 = vmatprep.subr.bf16.mxu0 0
    %4985 = vmatpush1.bf16.msra.mxu0 0
    %4986 = vmatprep.subr.bf16.mxu0 0
    %4987 = vmatpush1.bf16.msra.mxu0 0
    %4988 = vmatprep.subr.bf16.mxu0 0
    %4989 = vmatpush1.bf16.msra.mxu0 0
    %4990 = vmatprep.subr.bf16.mxu0 0
    %4991 = vmatpush1.bf16.msra.mxu0 0
    %4992 = vmatprep.subr.bf16.mxu0 0
    %4993 = vmatpush1.bf16.msra.mxu0 0
    %4994 = vmatprep.subr.bf16.mxu0 0
    %4995 = vmatpush1.bf16.msra.mxu0 0
    %4996 = vmatprep.mubr.bf16.mxu0 0
    %4997 = vmatmul.mubr.bf16.gmra.mrb[0].mxu0 %v4226
    %v4998 = vpop.f32.mrb[0].mxu0
    %v4999 = vadd.f32 0.0, %v4998
    %v5000 = vpop.f32.mrb[0].mxu0
    %v5001 = vpop.f32.mrb[0].mxu0
    %v5002 = vadd.f32 0.0, %v5001
    %v5003 = vpop.f32.mrb[0].mxu0
    %5004 = vmatprep.mubr.bf16.mxu0 0
    %5005 = vmatmul.mubr.bf16.gmra.mrb[0].mxu0 %v4229
    %v5006 = vpop.f32.mrb[0].mxu0
    %v5007 = vadd.f32 0.0, %v5006
    %v5008 = vpop.f32.mrb[0].mxu0
    %v5009 = vpop.f32.mrb[0].mxu0
    %v5010 = vadd.f32 0.0, %v5009
    %v5011 = vpop.f32.mrb[0].mxu0
    %5012 = vmatprep.mubr.bf16.mxu0 0
    %5013 = vmatmul.mubr.bf16.gmra.mrb[0].mxu0 %v4232
    %v5014 = vpop.f32.mrb[0].mxu0
    %v5015 = vadd.f32 0.0, %v5014
    %v5016 = vpop.f32.mrb[0].mxu0
    %v5017 = vpop.f32.mrb[0].mxu0
    %v5018 = vadd.f32 0.0, %v5017
    %v5019 = vpop.f32.mrb[0].mxu0
    %5020 = vmatprep.mubr.bf16.mxu0 0
    %5021 = vmatmul.mubr.bf16.gmra.mrb[0].mxu0 %v4962
    %v5022 = vpop.f32.mrb[0].mxu0
    %v5023 = vadd.f32 0.0, %v5022
    %v5024 = vpop.f32.mrb[0].mxu0
    %v5025 = vpop.f32.mrb[0].mxu0
    %v5026 = vadd.f32 0.0, %v5025
    %v5027 = vpop.f32.mrb[0].mxu0
    %5028 = vdwg.mxu0
    %v5029 = vadd.f32 %v4936, %v4999
    %v5030 = vadd.f32 %v4937, %v5002
    %v5031 = vadd.f32 %v4938, %v5007
    %v5032 = vadd.f32 %v4939, %v5010
    %v5033 = vadd.f32 %v4940, %v5015
    %v5034 = vadd.f32 %v4941, %v5018
    %v5035 = vadd.f32 %v4942, %v5023
    %v5036 = vadd.f32 %v4943, %v5026
    %v5037 = vpack.c.bf16 %v4391, %v4744
    %v5038 = vld [vmem:[#allocation19 + $0x80] sm:$0xf]
    %v5039 = vld [vmem:[#allocation19 + $0x84] sm:$0xf]
    %v5040 = vld [vmem:[#allocation19 + $0x88] sm:$0xf]
    %v5041 = vld [vmem:[#allocation19 + $0x8c] sm:$0xf]
    %v5046 = vunpack.c.l.b16 %v5038
    %v5047 = vunpack.c.l.b16 %v5039
    %v5048 = vunpack.c.l.b16 %v5040
    %v5049 = vunpack.c.l.b16 %v5041
    %v5050 = vpack.c.b16 %v5047, %v5046
    %v5051 = vpack.c.b16 %v5049, %v5048
    %v5055 = vsel %vm257, %v5037, 0
    %5057 = vmatprep.subr.bf16.mxu0 0
    %5058 = vmatpush1.bf16.msra.mxu0 %v5050
    %5059 = vmatprep.subr.bf16.mxu0 0
    %5060 = vmatpush1.bf16.msra.mxu0 %v5051
    %5061 = vmatprep.subr.bf16.mxu0 0
    %5062 = vmatpush1.bf16.msra.mxu0 0
    %5063 = vmatprep.subr.bf16.mxu0 0
    %5064 = vmatpush1.bf16.msra.mxu0 0
    %5065 = vmatprep.subr.bf16.mxu0 0
    %5066 = vmatpush1.bf16.msra.mxu0 0
    %5067 = vmatprep.subr.bf16.mxu0 0
    %5068 = vmatpush1.bf16.msra.mxu0 0
    %5069 = vmatprep.subr.bf16.mxu0 0
    %5070 = vmatpush1.bf16.msra.mxu0 0
    %5071 = vmatprep.subr.bf16.mxu0 0
    %5072 = vmatpush1.bf16.msra.mxu0 0
    %5073 = vmatprep.subr.bf16.mxu0 0
    %5074 = vmatpush1.bf16.msra.mxu0 0
    %5075 = vmatprep.subr.bf16.mxu0 0
    %5076 = vmatpush1.bf16.msra.mxu0 0
    %5077 = vmatprep.subr.bf16.mxu0 0
    %5078 = vmatpush1.bf16.msra.mxu0 0
    %5079 = vmatprep.subr.bf16.mxu0 0
    %5080 = vmatpush1.bf16.msra.mxu0 0
    %5081 = vmatprep.subr.bf16.mxu0 0
    %5082 = vmatpush1.bf16.msra.mxu0 0
    %5083 = vmatprep.subr.bf16.mxu0 0
    %5084 = vmatpush1.bf16.msra.mxu0 0
    %5085 = vmatprep.subr.bf16.mxu0 0
    %5086 = vmatpush1.bf16.msra.mxu0 0
    %5087 = vmatprep.subr.bf16.mxu0 0
    %5088 = vmatpush1.bf16.msra.mxu0 0
    %5089 = vmatprep.mubr.bf16.mxu0 0
    %5090 = vmatmul.mubr.bf16.gmra.mrb[0].mxu0 %v4445
    %v5091 = vpop.f32.mrb[0].mxu0
    %v5092 = vadd.f32 0.0, %v5091
    %v5093 = vpop.f32.mrb[0].mxu0
    %v5094 = vpop.f32.mrb[0].mxu0
    %v5095 = vadd.f32 0.0, %v5094
    %v5096 = vpop.f32.mrb[0].mxu0
    %5097 = vmatprep.mubr.bf16.mxu0 0
    %5098 = vmatmul.mubr.bf16.gmra.mrb[0].mxu0 %v4448
    %v5099 = vpop.f32.mrb[0].mxu0
    %v5100 = vadd.f32 0.0, %v5099
    %v5101 = vpop.f32.mrb[0].mxu0
    %v5102 = vpop.f32.mrb[0].mxu0
    %v5103 = vadd.f32 0.0, %v5102
    %v5104 = vpop.f32.mrb[0].mxu0
    %5105 = vmatprep.mubr.bf16.mxu0 0
    %5106 = vmatmul.mubr.bf16.gmra.mrb[0].mxu0 %v4451
    %v5107 = vpop.f32.mrb[0].mxu0
    %v5108 = vadd.f32 0.0, %v5107
    %v5109 = vpop.f32.mrb[0].mxu0
    %v5110 = vpop.f32.mrb[0].mxu0
    %v5111 = vadd.f32 0.0, %v5110
    %v5112 = vpop.f32.mrb[0].mxu0
    %5113 = vmatprep.mubr.bf16.mxu0 0
    %5114 = vmatmul.mubr.bf16.gmra.mrb[0].mxu0 %v5055
    %v5115 = vpop.f32.mrb[0].mxu0
    %v5116 = vadd.f32 0.0, %v5115
    %v5117 = vpop.f32.mrb[0].mxu0
    %v5118 = vpop.f32.mrb[0].mxu0
    %v5119 = vadd.f32 0.0, %v5118
    %v5120 = vpop.f32.mrb[0].mxu0
    %5121 = vdwg.mxu0
    %v5122 = vadd.f32 %v5029, %v5092
    %v5123 = vadd.f32 %v5030, %v5095
    %v5124 = vadd.f32 %v5031, %v5100
    %v5125 = vadd.f32 %v5032, %v5103
    %v5126 = vadd.f32 %v5033, %v5108
    %v5127 = vadd.f32 %v5034, %v5111
    %v5128 = vadd.f32 %v5035, %v5116
    %v5129 = vadd.f32 %v5036, %v5119
    %v5130 = vlaneseq
    %v5131 = vshrl.u32 %v5130, 7
    %v5132 = vsub.s32 3, %v5131
    %v5133 = vrot.slane %v256, %v5132
    %v5134 = vadd.f32 %v5122, %v5133
    %v5135 = vadd.f32 %v5123, %v5133
    %v5136 = vadd.f32 %v5124, %v5133
    %v5137 = vadd.f32 %v5125, %v5133
    %v5138 = vadd.f32 %v5126, %v5133
    %v5139 = vadd.f32 %v5127, %v5133
    %v5140 = vadd.f32 %v5128, %v5133
    %v5141 = vadd.f32 %v5129, %v5133
    %v5142 = vmax.f32 %v5134, 0.0
    %v5143 = vmax.f32 %v5135, 0.0
    %v5144 = vmax.f32 %v5136, 0.0
    %v5145 = vmax.f32 %v5137, 0.0
    %v5146 = vmax.f32 %v5138, 0.0
    %v5147 = vmax.f32 %v5139, 0.0
    %v5148 = vmax.f32 %v5140, 0.0
    %v5149 = vmax.f32 %v5141, 0.0
    %v5158 = vrot.slane %v5142, 7
    %v5159 = vrot.slane %v5143, 7
    %v5160 = vrot.slane %v5144, 7
    %v5161 = vrot.slane %v5145, 7
    %v5162 = vrot.slane %v5146, 7
    %v5163 = vrot.slane %v5147, 7
    %v5164 = vrot.slane %v5148, 7
    %v5165 = vrot.slane %v5149, 7
    %v5174 = vsel %vm4126, 0.0, %v5158
    %v5175 = vsel %vm4126, 0.0, %v5159
    %v5176 = vsel %vm4126, 0.0, %v5160
    %v5177 = vsel %vm4126, 0.0, %v5161
    %v5178 = vsel %vm4126, 0.0, %v5162
    %v5179 = vsel %vm4126, 0.0, %v5163
    %v5180 = vsel %vm4126, 0.0, %v5164
    %v5181 = vsel %vm4126, 0.0, %v5165
    %v5182 = vsel %vm4126, %v5158, 0.0
    %v5183 = vsel %vm4126, %v5159, 0.0
    %v5184 = vsel %vm4126, %v5160, 0.0
    %v5185 = vsel %vm4126, %v5161, 0.0
    %v5186 = vsel %vm4126, %v5162, 0.0
    %v5187 = vsel %vm4126, %v5163, 0.0
    %v5188 = vsel %vm4126, %v5164, 0.0
    %v5189 = vsel %vm4126, %v5165, 0.0
    %v5190 = vpack.c.bf16 %v5174, %v4127
    %v5191 = vpack.c.bf16 %v5176, %v5175
    %v5192 = vpack.c.bf16 %v5178, %v5177
    %v5193 = vpack.c.bf16 %v5180, %v5179
    %s5194 = scalar_lea.vmem [#allocation19], 144
    %v5195 = vld [vmem:[%s5194] sm:$0xf]
    %v5196 = vld [vmem:[%s5194 + $0x4] sm:$0xf]
    %v5197 = vld [vmem:[%s5194 + $0x8] sm:$0xf]
    %v5198 = vld [vmem:[%s5194 + $0xc] sm:$0xf]
    %v5213 = vrot.slane %v5174, 1
    %v5214 = vrot.slane %v5182, 1
    %v5215 = vsel %vm4169, %v5213, %v5214
    %v5216 = vrot.slane %v5175, 1
    %v5217 = vrot.slane %v5183, 1
    %v5218 = vsel %vm4169, %v5216, %v5217
    %v5219 = vrot.slane %v5176, 1
    %v5220 = vrot.slane %v5184, 1
    %v5221 = vsel %vm4169, %v5219, %v5220
    %v5222 = vrot.slane %v5177, 1
    %v5223 = vrot.slane %v5185, 1
    %v5224 = vsel %vm4169, %v5222, %v5223
    %v5225 = vrot.slane %v5178, 1
    %v5226 = vrot.slane %v5186, 1
    %v5227 = vsel %vm4169, %v5225, %v5226
    %v5228 = vrot.slane %v5179, 1
    %v5229 = vrot.slane %v5187, 1
    %v5230 = vsel %vm4169, %v5228, %v5229
    %v5231 = vrot.slane %v5180, 1
    %v5232 = vrot.slane %v5188, 1
    %v5233 = vsel %vm4169, %v5231, %v5232
    %v5241 = vpack.c.bf16 %v5215, %v4172
    %v5242 = vpack.c.bf16 %v5221, %v5218
    %v5243 = vpack.c.bf16 %v5227, %v5224
    %v5244 = vpack.c.bf16 %v5233, %v5230
    %v5245 = vld [vmem:[%s5194 + $0x10] sm:$0xf]
    %v5246 = vld [vmem:[%s5194 + $0x14] sm:$0xf]
    %v5247 = vld [vmem:[%s5194 + $0x18] sm:$0xf]
    %v5248 = vld [vmem:[%s5194 + $0x1c] sm:$0xf]
    %v5253 = vunpack.c.l.b16 %v5245
    %v5254 = vunpack.c.l.b16 %v5246
    %v5255 = vunpack.c.l.b16 %v5247
    %v5256 = vunpack.c.l.b16 %v5248
    %v5257 = vpack.c.b16 %v5254, %v5253
    %v5258 = vpack.c.b16 %v5256, %v5255
    %v5262 = vsel %vm257, %v5241, 0
    %v5265 = vsel %vm257, %v5242, 0
    %v5268 = vsel %vm257, %v5243, 0
    %v5271 = vsel %vm257, %v5244, 0
    %5273 = vmatprep.subr.bf16.mxu0 0
    %5274 = vmatpush1.bf16.msra.mxu0 %v5257
    %5275 = vmatprep.subr.bf16.mxu0 0
    %5276 = vmatpush1.bf16.msra.mxu0 %v5258
    %5277 = vmatprep.subr.bf16.mxu0 0
    %5278 = vmatpush1.bf16.msra.mxu0 0
    %5279 = vmatprep.subr.bf16.mxu0 0
    %5280 = vmatpush1.bf16.msra.mxu0 0
    %5281 = vmatprep.subr.bf16.mxu0 0
    %5282 = vmatpush1.bf16.msra.mxu0 0
    %5283 = vmatprep.subr.bf16.mxu0 0
    %5284 = vmatpush1.bf16.msra.mxu0 0
    %5285 = vmatprep.subr.bf16.mxu0 0
    %5286 = vmatpush1.bf16.msra.mxu0 0
    %5287 = vmatprep.subr.bf16.mxu0 0
    %5288 = vmatpush1.bf16.msra.mxu0 0
    %5289 = vmatprep.subr.bf16.mxu0 0
    %5290 = vmatpush1.bf16.msra.mxu0 0
    %5291 = vmatprep.subr.bf16.mxu0 0
    %5292 = vmatpush1.bf16.msra.mxu0 0
    %5293 = vmatprep.subr.bf16.mxu0 0
    %5294 = vmatpush1.bf16.msra.mxu0 0
    %5295 = vmatprep.subr.bf16.mxu0 0
    %5296 = vmatpush1.bf16.msra.mxu0 0
    %5297 = vmatprep.subr.bf16.mxu0 0
    %5298 = vmatpush1.bf16.msra.mxu0 0
    %5299 = vmatprep.subr.bf16.mxu0 0
    %5300 = vmatpush1.bf16.msra.mxu0 0
    %5301 = vmatprep.subr.bf16.mxu0 0
    %5302 = vmatpush1.bf16.msra.mxu0 0
    %5303 = vmatprep.subr.bf16.mxu0 0
    %5304 = vmatpush1.bf16.msra.mxu0 0
    %5305 = vmatprep.mubr.bf16.mxu0 0
    %5306 = vmatmul.mubr.bf16.gmra.mrb[0].mxu0 %v5262
    %v5307 = vpop.f32.mrb[0].mxu0
    %v5308 = vadd.f32 0.0, %v5307
    %v5309 = vpop.f32.mrb[0].mxu0
    %v5310 = vpop.f32.mrb[0].mxu0
    %v5311 = vadd.f32 0.0, %v5310
    %v5312 = vpop.f32.mrb[0].mxu0
    %5313 = vmatprep.mubr.bf16.mxu0 0
    %5314 = vmatmul.mubr.bf16.gmra.mrb[0].mxu0 %v5265
    %v5315 = vpop.f32.mrb[0].mxu0
    %v5316 = vadd.f32 0.0, %v5315
    %v5317 = vpop.f32.mrb[0].mxu0
    %v5318 = vpop.f32.mrb[0].mxu0
    %v5319 = vadd.f32 0.0, %v5318
    %v5320 = vpop.f32.mrb[0].mxu0
    %5321 = vmatprep.mubr.bf16.mxu0 0
    %5322 = vmatmul.mubr.bf16.gmra.mrb[0].mxu0 %v5268
    %v5323 = vpop.f32.mrb[0].mxu0
    %v5324 = vadd.f32 0.0, %v5323
    %v5325 = vpop.f32.mrb[0].mxu0
    %v5326 = vpop.f32.mrb[0].mxu0
    %v5327 = vadd.f32 0.0, %v5326
    %v5328 = vpop.f32.mrb[0].mxu0
    %5329 = vmatprep.mubr.bf16.mxu0 0
    %5330 = vmatmul.mubr.bf16.gmra.mrb[0].mxu0 %v5271
    %v5331 = vpop.f32.mrb[0].mxu0
    %v5332 = vadd.f32 0.0, %v5331
    %v5333 = vpop.f32.mrb[0].mxu0
    %v5334 = vpop.f32.mrb[0].mxu0
    %v5335 = vadd.f32 0.0, %v5334
    %v5336 = vpop.f32.mrb[0].mxu0
    %5337 = vdwg.mxu0
    %v5342 = vunpack.c.l.b16 %v5195
    %v5343 = vunpack.c.l.b16 %v5196
    %v5344 = vunpack.c.l.b16 %v5197
    %v5345 = vunpack.c.l.b16 %v5198
    %v5346 = vpack.c.b16 %v5343, %v5342
    %v5347 = vpack.c.b16 %v5345, %v5344
    %v5351 = vsel %vm257, %v5190, 0
    %v5354 = vsel %vm257, %v5191, 0
    %v5357 = vsel %vm257, %v5192, 0
    %v5360 = vsel %vm257, %v5193, 0
    %5362 = vmatprep.subr.bf16.mxu0 0
    %5363 = vmatpush1.bf16.msra.mxu0 %v5346
    %5364 = vmatprep.subr.bf16.mxu0 0
    %5365 = vmatpush1.bf16.msra.mxu0 %v5347
    %5366 = vmatprep.subr.bf16.mxu0 0
    %5367 = vmatpush1.bf16.msra.mxu0 0
    %5368 = vmatprep.subr.bf16.mxu0 0
    %5369 = vmatpush1.bf16.msra.mxu0 0
    %5370 = vmatprep.subr.bf16.mxu0 0
    %5371 = vmatpush1.bf16.msra.mxu0 0
    %5372 = vmatprep.subr.bf16.mxu0 0
    %5373 = vmatpush1.bf16.msra.mxu0 0
    %5374 = vmatprep.subr.bf16.mxu0 0
    %5375 = vmatpush1.bf16.msra.mxu0 0
    %5376 = vmatprep.subr.bf16.mxu0 0
    %5377 = vmatpush1.bf16.msra.mxu0 0
    %5378 = vmatprep.subr.bf16.mxu0 0
    %5379 = vmatpush1.bf16.msra.mxu0 0
    %5380 = vmatprep.subr.bf16.mxu0 0
    %5381 = vmatpush1.bf16.msra.mxu0 0
    %5382 = vmatprep.subr.bf16.mxu0 0
    %5383 = vmatpush1.bf16.msra.mxu0 0
    %5384 = vmatprep.subr.bf16.mxu0 0
    %5385 = vmatpush1.bf16.msra.mxu0 0
    %5386 = vmatprep.subr.bf16.mxu0 0
    %5387 = vmatpush1.bf16.msra.mxu0 0
    %5388 = vmatprep.subr.bf16.mxu0 0
    %5389 = vmatpush1.bf16.msra.mxu0 0
    %5390 = vmatprep.subr.bf16.mxu0 0
    %5391 = vmatpush1.bf16.msra.mxu0 0
    %5392 = vmatprep.subr.bf16.mxu0 0
    %5393 = vmatpush1.bf16.msra.mxu0 0
    %5394 = vmatprep.mubr.bf16.mxu0 0
    %5395 = vmatmul.mubr.bf16.gmra.mrb[0].mxu0 %v5351
    %v5396 = vpop.f32.mrb[0].mxu0
    %v5397 = vadd.f32 %v5308, %v5396
    %v5398 = vpop.f32.mrb[0].mxu0
    %v5399 = vpop.f32.mrb[0].mxu0
    %v5400 = vadd.f32 %v5311, %v5399
    %v5401 = vpop.f32.mrb[0].mxu0
    %5402 = vmatprep.mubr.bf16.mxu0 0
    %5403 = vmatmul.mubr.bf16.gmra.mrb[0].mxu0 %v5354
    %v5404 = vpop.f32.mrb[0].mxu0
    %v5405 = vadd.f32 %v5316, %v5404
    %v5406 = vpop.f32.mrb[0].mxu0
    %v5407 = vpop.f32.mrb[0].mxu0
    %v5408 = vadd.f32 %v5319, %v5407
    %v5409 = vpop.f32.mrb[0].mxu0
    %5410 = vmatprep.mubr.bf16.mxu0 0
    %5411 = vmatmul.mubr.bf16.gmra.mrb[0].mxu0 %v5357
    %v5412 = vpop.f32.mrb[0].mxu0
    %v5413 = vadd.f32 %v5324, %v5412
    %v5414 = vpop.f32.mrb[0].mxu0
    %v5415 = vpop.f32.mrb[0].mxu0
    %v5416 = vadd.f32 %v5327, %v5415
    %v5417 = vpop.f32.mrb[0].mxu0
    %5418 = vmatprep.mubr.bf16.mxu0 0
    %5419 = vmatmul.mubr.bf16.gmra.mrb[0].mxu0 %v5360
    %v5420 = vpop.f32.mrb[0].mxu0
    %v5421 = vadd.f32 %v5332, %v5420
    %v5422 = vpop.f32.mrb[0].mxu0
    %v5423 = vpop.f32.mrb[0].mxu0
    %v5424 = vadd.f32 %v5335, %v5423
    %v5425 = vpop.f32.mrb[0].mxu0
    %5426 = vdwg.mxu0
    %v5427 = vrot.slane %v5174, 2
    %v5428 = vrot.slane %v5182, 2
    %v5429 = vsel %vm4388, %v5427, %v5428
    %v5430 = vrot.slane %v5175, 2
    %v5431 = vrot.slane %v5183, 2
    %v5432 = vsel %vm4388, %v5430, %v5431
    %v5433 = vrot.slane %v5176, 2
    %v5434 = vrot.slane %v5184, 2
    %v5435 = vsel %vm4388, %v5433, %v5434
    %v5436 = vrot.slane %v5177, 2
    %v5437 = vrot.slane %v5185, 2
    %v5438 = vsel %vm4388, %v5436, %v5437
    %v5439 = vrot.slane %v5178, 2
    %v5440 = vrot.slane %v5186, 2
    %v5441 = vsel %vm4388, %v5439, %v5440
    %v5442 = vrot.slane %v5179, 2
    %v5443 = vrot.slane %v5187, 2
    %v5444 = vsel %vm4388, %v5442, %v5443
    %v5445 = vrot.slane %v5180, 2
    %v5446 = vrot.slane %v5188, 2
    %v5447 = vsel %vm4388, %v5445, %v5446
    %v5455 = vpack.c.bf16 %v5429, %v4391
    %v5456 = vpack.c.bf16 %v5435, %v5432
    %v5457 = vpack.c.bf16 %v5441, %v5438
    %v5458 = vpack.c.bf16 %v5447, %v5444
    %v5459 = vld [vmem:[%s5194 + $0x20] sm:$0xf]
    %v5460 = vld [vmem:[%s5194 + $0x24] sm:$0xf]
    %v5461 = vld [vmem:[%s5194 + $0x28] sm:$0xf]
    %v5462 = vld [vmem:[%s5194 + $0x2c] sm:$0xf]
    %v5467 = vunpack.c.l.b16 %v5459
    %v5468 = vunpack.c.l.b16 %v5460
    %v5469 = vunpack.c.l.b16 %v5461
    %v5470 = vunpack.c.l.b16 %v5462
    %v5471 = vpack.c.b16 %v5468, %v5467
    %v5472 = vpack.c.b16 %v5470, %v5469
    %v5476 = vsel %vm257, %v5455, 0
    %v5479 = vsel %vm257, %v5456, 0
    %v5482 = vsel %vm257, %v5457, 0
    %v5485 = vsel %vm257, %v5458, 0
    %5487 = vmatprep.subr.bf16.mxu0 0
    %5488 = vmatpush1.bf16.msra.mxu0 %v5471
    %5489 = vmatprep.subr.bf16.mxu0 0
    %5490 = vmatpush1.bf16.msra.mxu0 %v5472
    %5491 = vmatprep.subr.bf16.mxu0 0
    %5492 = vmatpush1.bf16.msra.mxu0 0
    %5493 = vmatprep.subr.bf16.mxu0 0
    %5494 = vmatpush1.bf16.msra.mxu0 0
    %5495 = vmatprep.subr.bf16.mxu0 0
    %5496 = vmatpush1.bf16.msra.mxu0 0
    %5497 = vmatprep.subr.bf16.mxu0 0
    %5498 = vmatpush1.bf16.msra.mxu0 0
    %5499 = vmatprep.subr.bf16.mxu0 0
    %5500 = vmatpush1.bf16.msra.mxu0 0
    %5501 = vmatprep.subr.bf16.mxu0 0
    %5502 = vmatpush1.bf16.msra.mxu0 0
    %5503 = vmatprep.subr.bf16.mxu0 0
    %5504 = vmatpush1.bf16.msra.mxu0 0
    %5505 = vmatprep.subr.bf16.mxu0 0
    %5506 = vmatpush1.bf16.msra.mxu0 0
    %5507 = vmatprep.subr.bf16.mxu0 0
    %5508 = vmatpush1.bf16.msra.mxu0 0
    %5509 = vmatprep.subr.bf16.mxu0 0
    %5510 = vmatpush1.bf16.msra.mxu0 0
    %5511 = vmatprep.subr.bf16.mxu0 0
    %5512 = vmatpush1.bf16.msra.mxu0 0
    %5513 = vmatprep.subr.bf16.mxu0 0
    %5514 = vmatpush1.bf16.msra.mxu0 0
    %5515 = vmatprep.subr.bf16.mxu0 0
    %5516 = vmatpush1.bf16.msra.mxu0 0
    %5517 = vmatprep.subr.bf16.mxu0 0
    %5518 = vmatpush1.bf16.msra.mxu0 0
    %5519 = vmatprep.mubr.bf16.mxu0 0
    %5520 = vmatmul.mubr.bf16.gmra.mrb[0].mxu0 %v5476
    %v5521 = vpop.f32.mrb[0].mxu0
    %v5522 = vadd.f32 0.0, %v5521
    %v5523 = vpop.f32.mrb[0].mxu0
    %v5524 = vpop.f32.mrb[0].mxu0
    %v5525 = vadd.f32 0.0, %v5524
    %v5526 = vpop.f32.mrb[0].mxu0
    %5527 = vmatprep.mubr.bf16.mxu0 0
    %5528 = vmatmul.mubr.bf16.gmra.mrb[0].mxu0 %v5479
    %v5529 = vpop.f32.mrb[0].mxu0
    %v5530 = vadd.f32 0.0, %v5529
    %v5531 = vpop.f32.mrb[0].mxu0
    %v5532 = vpop.f32.mrb[0].mxu0
    %v5533 = vadd.f32 0.0, %v5532
    %v5534 = vpop.f32.mrb[0].mxu0
    %5535 = vmatprep.mubr.bf16.mxu0 0
    %5536 = vmatmul.mubr.bf16.gmra.mrb[0].mxu0 %v5482
    %v5537 = vpop.f32.mrb[0].mxu0
    %v5538 = vadd.f32 0.0, %v5537
    %v5539 = vpop.f32.mrb[0].mxu0
    %v5540 = vpop.f32.mrb[0].mxu0
    %v5541 = vadd.f32 0.0, %v5540
    %v5542 = vpop.f32.mrb[0].mxu0
    %5543 = vmatprep.mubr.bf16.mxu0 0
    %5544 = vmatmul.mubr.bf16.gmra.mrb[0].mxu0 %v5485
    %v5545 = vpop.f32.mrb[0].mxu0
    %v5546 = vadd.f32 0.0, %v5545
    %v5547 = vpop.f32.mrb[0].mxu0
    %v5548 = vpop.f32.mrb[0].mxu0
    %v5549 = vadd.f32 0.0, %v5548
    %v5550 = vpop.f32.mrb[0].mxu0
    %5551 = vdwg.mxu0
    %v5552 = vadd.f32 %v5397, %v5522
    %v5553 = vadd.f32 %v5400, %v5525
    %v5554 = vadd.f32 %v5405, %v5530
    %v5555 = vadd.f32 %v5408, %v5533
    %v5556 = vadd.f32 %v5413, %v5538
    %v5557 = vadd.f32 %v5416, %v5541
    %v5558 = vadd.f32 %v5421, %v5546
    %v5559 = vadd.f32 %v5424, %v5549
    %v5560 = vpack.c.bf16 %v5175, %v5174
    %v5561 = vpack.c.bf16 %v5177, %v5176
    %v5562 = vpack.c.bf16 %v5179, %v5178
    %v5563 = vpack.c.bf16 %v5181, %v5180
    %v5564 = vld [vmem:[%s5194 + $0x30] sm:$0xf]
    %v5565 = vld [vmem:[%s5194 + $0x34] sm:$0xf]
    %v5566 = vld [vmem:[%s5194 + $0x38] sm:$0xf]
    %v5567 = vld [vmem:[%s5194 + $0x3c] sm:$0xf]
    %v5572 = vunpack.c.l.b16 %v5564
    %v5573 = vunpack.c.l.b16 %v5565
    %v5574 = vunpack.c.l.b16 %v5566
    %v5575 = vunpack.c.l.b16 %v5567
    %v5576 = vpack.c.b16 %v5573, %v5572
    %v5577 = vpack.c.b16 %v5575, %v5574
    %v5581 = vsel %vm257, %v5560, 0
    %v5584 = vsel %vm257, %v5561, 0
    %v5587 = vsel %vm257, %v5562, 0
    %v5590 = vsel %vm257, %v5563, 0
    %5592 = vmatprep.subr.bf16.mxu0 0
    %5593 = vmatpush1.bf16.msra.mxu0 %v5576
    %5594 = vmatprep.subr.bf16.mxu0 0
    %5595 = vmatpush1.bf16.msra.mxu0 %v5577
    %5596 = vmatprep.subr.bf16.mxu0 0
    %5597 = vmatpush1.bf16.msra.mxu0 0
    %5598 = vmatprep.subr.bf16.mxu0 0
    %5599 = vmatpush1.bf16.msra.mxu0 0
    %5600 = vmatprep.subr.bf16.mxu0 0
    %5601 = vmatpush1.bf16.msra.mxu0 0
    %5602 = vmatprep.subr.bf16.mxu0 0
    %5603 = vmatpush1.bf16.msra.mxu0 0
    %5604 = vmatprep.subr.bf16.mxu0 0
    %5605 = vmatpush1.bf16.msra.mxu0 0
    %5606 = vmatprep.subr.bf16.mxu0 0
    %5607 = vmatpush1.bf16.msra.mxu0 0
    %5608 = vmatprep.subr.bf16.mxu0 0
    %5609 = vmatpush1.bf16.msra.mxu0 0
    %5610 = vmatprep.subr.bf16.mxu0 0
    %5611 = vmatpush1.bf16.msra.mxu0 0
    %5612 = vmatprep.subr.bf16.mxu0 0
    %5613 = vmatpush1.bf16.msra.mxu0 0
    %5614 = vmatprep.subr.bf16.mxu0 0
    %5615 = vmatpush1.bf16.msra.mxu0 0
    %5616 = vmatprep.subr.bf16.mxu0 0
    %5617 = vmatpush1.bf16.msra.mxu0 0
    %5618 = vmatprep.subr.bf16.mxu0 0
    %5619 = vmatpush1.bf16.msra.mxu0 0
    %5620 = vmatprep.subr.bf16.mxu0 0
    %5621 = vmatpush1.bf16.msra.mxu0 0
    %5622 = vmatprep.subr.bf16.mxu0 0
    %5623 = vmatpush1.bf16.msra.mxu0 0
    %5624 = vmatprep.mubr.bf16.mxu0 0
    %5625 = vmatmul.mubr.bf16.gmra.mrb[0].mxu0 %v5581
    %v5626 = vpop.f32.mrb[0].mxu0
    %v5627 = vadd.f32 0.0, %v5626
    %v5628 = vpop.f32.mrb[0].mxu0
    %v5629 = vpop.f32.mrb[0].mxu0
    %v5630 = vadd.f32 0.0, %v5629
    %v5631 = vpop.f32.mrb[0].mxu0
    %5632 = vmatprep.mubr.bf16.mxu0 0
    %5633 = vmatmul.mubr.bf16.gmra.mrb[0].mxu0 %v5584
    %v5634 = vpop.f32.mrb[0].mxu0
    %v5635 = vadd.f32 0.0, %v5634
    %v5636 = vpop.f32.mrb[0].mxu0
    %v5637 = vpop.f32.mrb[0].mxu0
    %v5638 = vadd.f32 0.0, %v5637
    %v5639 = vpop.f32.mrb[0].mxu0
    %5640 = vmatprep.mubr.bf16.mxu0 0
    %5641 = vmatmul.mubr.bf16.gmra.mrb[0].mxu0 %v5587
    %v5642 = vpop.f32.mrb[0].mxu0
    %v5643 = vadd.f32 0.0, %v5642
    %v5644 = vpop.f32.mrb[0].mxu0
    %v5645 = vpop.f32.mrb[0].mxu0
    %v5646 = vadd.f32 0.0, %v5645
    %v5647 = vpop.f32.mrb[0].mxu0
    %5648 = vmatprep.mubr.bf16.mxu0 0
    %5649 = vmatmul.mubr.bf16.gmra.mrb[0].mxu0 %v5590
    %v5650 = vpop.f32.mrb[0].mxu0
    %v5651 = vadd.f32 0.0, %v5650
    %v5652 = vpop.f32.mrb[0].mxu0
    %v5653 = vpop.f32.mrb[0].mxu0
    %v5654 = vadd.f32 0.0, %v5653
    %v5655 = vpop.f32.mrb[0].mxu0
    %5656 = vdwg.mxu0
    %v5657 = vadd.f32 %v5552, %v5627
    %v5658 = vadd.f32 %v5553, %v5630
    %v5659 = vadd.f32 %v5554, %v5635
    %v5660 = vadd.f32 %v5555, %v5638
    %v5661 = vadd.f32 %v5556, %v5643
    %v5662 = vadd.f32 %v5557, %v5646
    %v5663 = vadd.f32 %v5558, %v5651
    %v5664 = vadd.f32 %v5559, %v5654
    %v5667 = vrot.slane %v5181, 1
    %v5668 = vrot.slane %v5189, 1
    %v5669 = vsel %vm4169, %v5667, %v5668
    %v5671 = vpack.c.bf16 %v5218, %v5215
    %v5672 = vpack.c.bf16 %v5224, %v5221
    %v5673 = vpack.c.bf16 %v5230, %v5227
    %v5674 = vpack.c.bf16 %v5669, %v5233
    %v5675 = vld [vmem:[%s5194 + $0x40] sm:$0xf]
    %v5676 = vld [vmem:[%s5194 + $0x44] sm:$0xf]
    %v5677 = vld [vmem:[%s5194 + $0x48] sm:$0xf]
    %v5678 = vld [vmem:[%s5194 + $0x4c] sm:$0xf]
    %v5683 = vunpack.c.l.b16 %v5675
    %v5684 = vunpack.c.l.b16 %v5676
    %v5685 = vunpack.c.l.b16 %v5677
    %v5686 = vunpack.c.l.b16 %v5678
    %v5687 = vpack.c.b16 %v5684, %v5683
    %v5688 = vpack.c.b16 %v5686, %v5685
    %v5692 = vsel %vm257, %v5671, 0
    %v5695 = vsel %vm257, %v5672, 0
    %v5698 = vsel %vm257, %v5673, 0
    %v5701 = vsel %vm257, %v5674, 0
    %5703 = vmatprep.subr.bf16.mxu0 0
    %5704 = vmatpush1.bf16.msra.mxu0 %v5687
    %5705 = vmatprep.subr.bf16.mxu0 0
    %5706 = vmatpush1.bf16.msra.mxu0 %v5688
    %5707 = vmatprep.subr.bf16.mxu0 0
    %5708 = vmatpush1.bf16.msra.mxu0 0
    %5709 = vmatprep.subr.bf16.mxu0 0
    %5710 = vmatpush1.bf16.msra.mxu0 0
    %5711 = vmatprep.subr.bf16.mxu0 0
    %5712 = vmatpush1.bf16.msra.mxu0 0
    %5713 = vmatprep.subr.bf16.mxu0 0
    %5714 = vmatpush1.bf16.msra.mxu0 0
    %5715 = vmatprep.subr.bf16.mxu0 0
    %5716 = vmatpush1.bf16.msra.mxu0 0
    %5717 = vmatprep.subr.bf16.mxu0 0
    %5718 = vmatpush1.bf16.msra.mxu0 0
    %5719 = vmatprep.subr.bf16.mxu0 0
    %5720 = vmatpush1.bf16.msra.mxu0 0
    %5721 = vmatprep.subr.bf16.mxu0 0
    %5722 = vmatpush1.bf16.msra.mxu0 0
    %5723 = vmatprep.subr.bf16.mxu0 0
    %5724 = vmatpush1.bf16.msra.mxu0 0
    %5725 = vmatprep.subr.bf16.mxu0 0
    %5726 = vmatpush1.bf16.msra.mxu0 0
    %5727 = vmatprep.subr.bf16.mxu0 0
    %5728 = vmatpush1.bf16.msra.mxu0 0
    %5729 = vmatprep.subr.bf16.mxu0 0
    %5730 = vmatpush1.bf16.msra.mxu0 0
    %5731 = vmatprep.subr.bf16.mxu0 0
    %5732 = vmatpush1.bf16.msra.mxu0 0
    %5733 = vmatprep.subr.bf16.mxu0 0
    %5734 = vmatpush1.bf16.msra.mxu0 0
    %5735 = vmatprep.mubr.bf16.mxu0 0
    %5736 = vmatmul.mubr.bf16.gmra.mrb[0].mxu0 %v5692
    %v5737 = vpop.f32.mrb[0].mxu0
    %v5738 = vadd.f32 0.0, %v5737
    %v5739 = vpop.f32.mrb[0].mxu0
    %v5740 = vpop.f32.mrb[0].mxu0
    %v5741 = vadd.f32 0.0, %v5740
    %v5742 = vpop.f32.mrb[0].mxu0
    %5743 = vmatprep.mubr.bf16.mxu0 0
    %5744 = vmatmul.mubr.bf16.gmra.mrb[0].mxu0 %v5695
    %v5745 = vpop.f32.mrb[0].mxu0
    %v5746 = vadd.f32 0.0, %v5745
    %v5747 = vpop.f32.mrb[0].mxu0
    %v5748 = vpop.f32.mrb[0].mxu0
    %v5749 = vadd.f32 0.0, %v5748
    %v5750 = vpop.f32.mrb[0].mxu0
    %5751 = vmatprep.mubr.bf16.mxu0 0
    %5752 = vmatmul.mubr.bf16.gmra.mrb[0].mxu0 %v5698
    %v5753 = vpop.f32.mrb[0].mxu0
    %v5754 = vadd.f32 0.0, %v5753
    %v5755 = vpop.f32.mrb[0].mxu0
    %v5756 = vpop.f32.mrb[0].mxu0
    %v5757 = vadd.f32 0.0, %v5756
    %v5758 = vpop.f32.mrb[0].mxu0
    %5759 = vmatprep.mubr.bf16.mxu0 0
    %5760 = vmatmul.mubr.bf16.gmra.mrb[0].mxu0 %v5701
    %v5761 = vpop.f32.mrb[0].mxu0
    %v5762 = vadd.f32 0.0, %v5761
    %v5763 = vpop.f32.mrb[0].mxu0
    %v5764 = vpop.f32.mrb[0].mxu0
    %v5765 = vadd.f32 0.0, %v5764
    %v5766 = vpop.f32.mrb[0].mxu0
    %5767 = vdwg.mxu0
    %v5768 = vadd.f32 %v5657, %v5738
    %v5769 = vadd.f32 %v5658, %v5741
    %v5770 = vadd.f32 %v5659, %v5746
    %v5771 = vadd.f32 %v5660, %v5749
    %v5772 = vadd.f32 %v5661, %v5754
    %v5773 = vadd.f32 %v5662, %v5757
    %v5774 = vadd.f32 %v5663, %v5762
    %v5775 = vadd.f32 %v5664, %v5765
    %v5776 = vrot.slane %v5181, 2
    %v5777 = vrot.slane %v5189, 2
    %v5778 = vsel %vm4388, %v5776, %v5777
    %v5780 = vpack.c.bf16 %v5432, %v5429
    %v5781 = vpack.c.bf16 %v5438, %v5435
    %v5782 = vpack.c.bf16 %v5444, %v5441
    %v5783 = vpack.c.bf16 %v5778, %v5447
    %v5784 = vld [vmem:[%s5194 + $0x50] sm:$0xf]
    %v5785 = vld [vmem:[%s5194 + $0x54] sm:$0xf]
    %v5786 = vld [vmem:[%s5194 + $0x58] sm:$0xf]
    %v5787 = vld [vmem:[%s5194 + $0x5c] sm:$0xf]
    %v5792 = vunpack.c.l.b16 %v5784
    %v5793 = vunpack.c.l.b16 %v5785
    %v5794 = vunpack.c.l.b16 %v5786
    %v5795 = vunpack.c.l.b16 %v5787
    %v5796 = vpack.c.b16 %v5793, %v5792
    %v5797 = vpack.c.b16 %v5795, %v5794
    %v5801 = vsel %vm257, %v5780, 0
    %v5804 = vsel %vm257, %v5781, 0
    %v5807 = vsel %vm257, %v5782, 0
    %v5810 = vsel %vm257, %v5783, 0
    %5812 = vmatprep.subr.bf16.mxu0 0
    %5813 = vmatpush1.bf16.msra.mxu0 %v5796
    %5814 = vmatprep.subr.bf16.mxu0 0
    %5815 = vmatpush1.bf16.msra.mxu0 %v5797
    %5816 = vmatprep.subr.bf16.mxu0 0
    %5817 = vmatpush1.bf16.msra.mxu0 0
    %5818 = vmatprep.subr.bf16.mxu0 0
    %5819 = vmatpush1.bf16.msra.mxu0 0
    %5820 = vmatprep.subr.bf16.mxu0 0
    %5821 = vmatpush1.bf16.msra.mxu0 0
    %5822 = vmatprep.subr.bf16.mxu0 0
    %5823 = vmatpush1.bf16.msra.mxu0 0
    %5824 = vmatprep.subr.bf16.mxu0 0
    %5825 = vmatpush1.bf16.msra.mxu0 0
    %5826 = vmatprep.subr.bf16.mxu0 0
    %5827 = vmatpush1.bf16.msra.mxu0 0
    %5828 = vmatprep.subr.bf16.mxu0 0
    %5829 = vmatpush1.bf16.msra.mxu0 0
    %5830 = vmatprep.subr.bf16.mxu0 0
    %5831 = vmatpush1.bf16.msra.mxu0 0
    %5832 = vmatprep.subr.bf16.mxu0 0
    %5833 = vmatpush1.bf16.msra.mxu0 0
    %5834 = vmatprep.subr.bf16.mxu0 0
    %5835 = vmatpush1.bf16.msra.mxu0 0
    %5836 = vmatprep.subr.bf16.mxu0 0
    %5837 = vmatpush1.bf16.msra.mxu0 0
    %5838 = vmatprep.subr.bf16.mxu0 0
    %5839 = vmatpush1.bf16.msra.mxu0 0
    %5840 = vmatprep.subr.bf16.mxu0 0
    %5841 = vmatpush1.bf16.msra.mxu0 0
    %5842 = vmatprep.subr.bf16.mxu0 0
    %5843 = vmatpush1.bf16.msra.mxu0 0
    %5844 = vmatprep.mubr.bf16.mxu0 0
    %5845 = vmatmul.mubr.bf16.gmra.mrb[0].mxu0 %v5801
    %v5846 = vpop.f32.mrb[0].mxu0
    %v5847 = vadd.f32 0.0, %v5846
    %v5848 = vpop.f32.mrb[0].mxu0
    %v5849 = vpop.f32.mrb[0].mxu0
    %v5850 = vadd.f32 0.0, %v5849
    %v5851 = vpop.f32.mrb[0].mxu0
    %5852 = vmatprep.mubr.bf16.mxu0 0
    %5853 = vmatmul.mubr.bf16.gmra.mrb[0].mxu0 %v5804
    %v5854 = vpop.f32.mrb[0].mxu0
    %v5855 = vadd.f32 0.0, %v5854
    %v5856 = vpop.f32.mrb[0].mxu0
    %v5857 = vpop.f32.mrb[0].mxu0
    %v5858 = vadd.f32 0.0, %v5857
    %v5859 = vpop.f32.mrb[0].mxu0
    %5860 = vmatprep.mubr.bf16.mxu0 0
    %5861 = vmatmul.mubr.bf16.gmra.mrb[0].mxu0 %v5807
    %v5862 = vpop.f32.mrb[0].mxu0
    %v5863 = vadd.f32 0.0, %v5862
    %v5864 = vpop.f32.mrb[0].mxu0
    %v5865 = vpop.f32.mrb[0].mxu0
    %v5866 = vadd.f32 0.0, %v5865
    %v5867 = vpop.f32.mrb[0].mxu0
    %5868 = vmatprep.mubr.bf16.mxu0 0
    %5869 = vmatmul.mubr.bf16.gmra.mrb[0].mxu0 %v5810
    %v5870 = vpop.f32.mrb[0].mxu0
    %v5871 = vadd.f32 0.0, %v5870
    %v5872 = vpop.f32.mrb[0].mxu0
    %v5873 = vpop.f32.mrb[0].mxu0
    %v5874 = vadd.f32 0.0, %v5873
    %v5875 = vpop.f32.mrb[0].mxu0
    %5876 = vdwg.mxu0
    %v5877 = vadd.f32 %v5768, %v5847
    %v5878 = vadd.f32 %v5769, %v5850
    %v5879 = vadd.f32 %v5770, %v5855
    %v5880 = vadd.f32 %v5771, %v5858
    %v5881 = vadd.f32 %v5772, %v5863
    %v5882 = vadd.f32 %v5773, %v5866
    %v5883 = vadd.f32 %v5774, %v5871
    %v5884 = vadd.f32 %v5775, %v5874
    %v5885 = vpack.c.bf16 %v4127, %v5181
    %v5886 = vld [vmem:[%s5194 + $0x60] sm:$0xf]
    %v5887 = vld [vmem:[%s5194 + $0x64] sm:$0xf]
    %v5888 = vld [vmem:[%s5194 + $0x68] sm:$0xf]
    %v5889 = vld [vmem:[%s5194 + $0x6c] sm:$0xf]
    %v5894 = vunpack.c.l.b16 %v5886
    %v5895 = vunpack.c.l.b16 %v5887
    %v5896 = vunpack.c.l.b16 %v5888
    %v5897 = vunpack.c.l.b16 %v5889
    %v5898 = vpack.c.b16 %v5895, %v5894
    %v5899 = vpack.c.b16 %v5897, %v5896
    %v5903 = vsel %vm257, %v5885, 0
    %5905 = vmatprep.subr.bf16.mxu0 0
    %5906 = vmatpush1.bf16.msra.mxu0 %v5898
    %5907 = vmatprep.subr.bf16.mxu0 0
    %5908 = vmatpush1.bf16.msra.mxu0 %v5899
    %5909 = vmatprep.subr.bf16.mxu0 0
    %5910 = vmatpush1.bf16.msra.mxu0 0
    %5911 = vmatprep.subr.bf16.mxu0 0
    %5912 = vmatpush1.bf16.msra.mxu0 0
    %5913 = vmatprep.subr.bf16.mxu0 0
    %5914 = vmatpush1.bf16.msra.mxu0 0
    %5915 = vmatprep.subr.bf16.mxu0 0
    %5916 = vmatpush1.bf16.msra.mxu0 0
    %5917 = vmatprep.subr.bf16.mxu0 0
    %5918 = vmatpush1.bf16.msra.mxu0 0
    %5919 = vmatprep.subr.bf16.mxu0 0
    %5920 = vmatpush1.bf16.msra.mxu0 0
    %5921 = vmatprep.subr.bf16.mxu0 0
    %5922 = vmatpush1.bf16.msra.mxu0 0
    %5923 = vmatprep.subr.bf16.mxu0 0
    %5924 = vmatpush1.bf16.msra.mxu0 0
    %5925 = vmatprep.subr.bf16.mxu0 0
    %5926 = vmatpush1.bf16.msra.mxu0 0
    %5927 = vmatprep.subr.bf16.mxu0 0
    %5928 = vmatpush1.bf16.msra.mxu0 0
    %5929 = vmatprep.subr.bf16.mxu0 0
    %5930 = vmatpush1.bf16.msra.mxu0 0
    %5931 = vmatprep.subr.bf16.mxu0 0
    %5932 = vmatpush1.bf16.msra.mxu0 0
    %5933 = vmatprep.subr.bf16.mxu0 0
    %5934 = vmatpush1.bf16.msra.mxu0 0
    %5935 = vmatprep.subr.bf16.mxu0 0
    %5936 = vmatpush1.bf16.msra.mxu0 0
    %5937 = vmatprep.mubr.bf16.mxu0 0
    %5938 = vmatmul.mubr.bf16.gmra.mrb[0].mxu0 %v5354
    %v5939 = vpop.f32.mrb[0].mxu0
    %v5940 = vadd.f32 0.0, %v5939
    %v5941 = vpop.f32.mrb[0].mxu0
    %v5942 = vpop.f32.mrb[0].mxu0
    %v5943 = vadd.f32 0.0, %v5942
    %v5944 = vpop.f32.mrb[0].mxu0
    %5945 = vmatprep.mubr.bf16.mxu0 0
    %5946 = vmatmul.mubr.bf16.gmra.mrb[0].mxu0 %v5357
    %v5947 = vpop.f32.mrb[0].mxu0
    %v5948 = vadd.f32 0.0, %v5947
    %v5949 = vpop.f32.mrb[0].mxu0
    %v5950 = vpop.f32.mrb[0].mxu0
    %v5951 = vadd.f32 0.0, %v5950
    %v5952 = vpop.f32.mrb[0].mxu0
    %5953 = vmatprep.mubr.bf16.mxu0 0
    %5954 = vmatmul.mubr.bf16.gmra.mrb[0].mxu0 %v5360
    %v5955 = vpop.f32.mrb[0].mxu0
    %v5956 = vadd.f32 0.0, %v5955
    %v5957 = vpop.f32.mrb[0].mxu0
    %v5958 = vpop.f32.mrb[0].mxu0
    %v5959 = vadd.f32 0.0, %v5958
    %v5960 = vpop.f32.mrb[0].mxu0
    %5961 = vmatprep.mubr.bf16.mxu0 0
    %5962 = vmatmul.mubr.bf16.gmra.mrb[0].mxu0 %v5903
    %v5963 = vpop.f32.mrb[0].mxu0
    %v5964 = vadd.f32 0.0, %v5963
    %v5965 = vpop.f32.mrb[0].mxu0
    %v5966 = vpop.f32.mrb[0].mxu0
    %v5967 = vadd.f32 0.0, %v5966
    %v5968 = vpop.f32.mrb[0].mxu0
    %5969 = vdwg.mxu0
    %v5970 = vadd.f32 %v5877, %v5940
    %v5971 = vadd.f32 %v5878, %v5943
    %v5972 = vadd.f32 %v5879, %v5948
    %v5973 = vadd.f32 %v5880, %v5951
    %v5974 = vadd.f32 %v5881, %v5956
    %v5975 = vadd.f32 %v5882, %v5959
    %v5976 = vadd.f32 %v5883, %v5964
    %v5977 = vadd.f32 %v5884, %v5967
    %v5978 = vpack.c.bf16 %v4172, %v5669
    %v5979 = vld [vmem:[%s5194 + $0x70] sm:$0xf]
    %v5980 = vld [vmem:[%s5194 + $0x74] sm:$0xf]
    %v5981 = vld [vmem:[%s5194 + $0x78] sm:$0xf]
    %v5982 = vld [vmem:[%s5194 + $0x7c] sm:$0xf]
    %v5987 = vunpack.c.l.b16 %v5979
    %v5988 = vunpack.c.l.b16 %v5980
    %v5989 = vunpack.c.l.b16 %v5981
    %v5990 = vunpack.c.l.b16 %v5982
    %v5991 = vpack.c.b16 %v5988, %v5987
    %v5992 = vpack.c.b16 %v5990, %v5989
    %v5996 = vsel %vm257, %v5978, 0
    %5998 = vmatprep.subr.bf16.mxu0 0
    %5999 = vmatpush1.bf16.msra.mxu0 %v5991
    %6000 = vmatprep.subr.bf16.mxu0 0
    %6001 = vmatpush1.bf16.msra.mxu0 %v5992
    %6002 = vmatprep.subr.bf16.mxu0 0
    %6003 = vmatpush1.bf16.msra.mxu0 0
    %6004 = vmatprep.subr.bf16.mxu0 0
    %6005 = vmatpush1.bf16.msra.mxu0 0
    %6006 = vmatprep.subr.bf16.mxu0 0
    %6007 = vmatpush1.bf16.msra.mxu0 0
    %6008 = vmatprep.subr.bf16.mxu0 0
    %6009 = vmatpush1.bf16.msra.mxu0 0
    %6010 = vmatprep.subr.bf16.mxu0 0
    %6011 = vmatpush1.bf16.msra.mxu0 0
    %6012 = vmatprep.subr.bf16.mxu0 0
    %6013 = vmatpush1.bf16.msra.mxu0 0
    %6014 = vmatprep.subr.bf16.mxu0 0
    %6015 = vmatpush1.bf16.msra.mxu0 0
    %6016 = vmatprep.subr.bf16.mxu0 0
    %6017 = vmatpush1.bf16.msra.mxu0 0
    %6018 = vmatprep.subr.bf16.mxu0 0
    %6019 = vmatpush1.bf16.msra.mxu0 0
    %6020 = vmatprep.subr.bf16.mxu0 0
    %6021 = vmatpush1.bf16.msra.mxu0 0
    %6022 = vmatprep.subr.bf16.mxu0 0
    %6023 = vmatpush1.bf16.msra.mxu0 0
    %6024 = vmatprep.subr.bf16.mxu0 0
    %6025 = vmatpush1.bf16.msra.mxu0 0
    %6026 = vmatprep.subr.bf16.mxu0 0
    %6027 = vmatpush1.bf16.msra.mxu0 0
    %6028 = vmatprep.subr.bf16.mxu0 0
    %6029 = vmatpush1.bf16.msra.mxu0 0
    %6030 = vmatprep.mubr.bf16.mxu0 0
    %6031 = vmatmul.mubr.bf16.gmra.mrb[0].mxu0 %v5265
    %v6032 = vpop.f32.mrb[0].mxu0
    %v6033 = vadd.f32 0.0, %v6032
    %v6034 = vpop.f32.mrb[0].mxu0
    %v6035 = vpop.f32.mrb[0].mxu0
    %v6036 = vadd.f32 0.0, %v6035
    %v6037 = vpop.f32.mrb[0].mxu0
    %6038 = vmatprep.mubr.bf16.mxu0 0
    %6039 = vmatmul.mubr.bf16.gmra.mrb[0].mxu0 %v5268
    %v6040 = vpop.f32.mrb[0].mxu0
    %v6041 = vadd.f32 0.0, %v6040
    %v6042 = vpop.f32.mrb[0].mxu0
    %v6043 = vpop.f32.mrb[0].mxu0
    %v6044 = vadd.f32 0.0, %v6043
    %v6045 = vpop.f32.mrb[0].mxu0
    %6046 = vmatprep.mubr.bf16.mxu0 0
    %6047 = vmatmul.mubr.bf16.gmra.mrb[0].mxu0 %v5271
    %v6048 = vpop.f32.mrb[0].mxu0
    %v6049 = vadd.f32 0.0, %v6048
    %v6050 = vpop.f32.mrb[0].mxu0
    %v6051 = vpop.f32.mrb[0].mxu0
    %v6052 = vadd.f32 0.0, %v6051
    %v6053 = vpop.f32.mrb[0].mxu0
    %6054 = vmatprep.mubr.bf16.mxu0 0
    %6055 = vmatmul.mubr.bf16.gmra.mrb[0].mxu0 %v5996
    %v6056 = vpop.f32.mrb[0].mxu0
    %v6057 = vadd.f32 0.0, %v6056
    %v6058 = vpop.f32.mrb[0].mxu0
    %v6059 = vpop.f32.mrb[0].mxu0
    %v6060 = vadd.f32 0.0, %v6059
    %v6061 = vpop.f32.mrb[0].mxu0
    %6062 = vdwg.mxu0
    %v6063 = vadd.f32 %v5970, %v6033
    %v6064 = vadd.f32 %v5971, %v6036
    %v6065 = vadd.f32 %v5972, %v6041
    %v6066 = vadd.f32 %v5973, %v6044
    %v6067 = vadd.f32 %v5974, %v6049
    %v6068 = vadd.f32 %v5975, %v6052
    %v6069 = vadd.f32 %v5976, %v6057
    %v6070 = vadd.f32 %v5977, %v6060
    %v6071 = vpack.c.bf16 %v4391, %v5778
    %v6072 = vld [vmem:[%s5194 + $0x80] sm:$0xf]
    %v6073 = vld [vmem:[%s5194 + $0x84] sm:$0xf]
    %v6074 = vld [vmem:[%s5194 + $0x88] sm:$0xf]
    %v6075 = vld [vmem:[%s5194 + $0x8c] sm:$0xf]
    %v6080 = vunpack.c.l.b16 %v6072
    %v6081 = vunpack.c.l.b16 %v6073
    %v6082 = vunpack.c.l.b16 %v6074
    %v6083 = vunpack.c.l.b16 %v6075
    %v6084 = vpack.c.b16 %v6081, %v6080
    %v6085 = vpack.c.b16 %v6083, %v6082
    %v6089 = vsel %vm257, %v6071, 0
    %6091 = vmatprep.subr.bf16.mxu0 0
    %6092 = vmatpush1.bf16.msra.mxu0 %v6084
    %6093 = vmatprep.subr.bf16.mxu0 0
    %6094 = vmatpush1.bf16.msra.mxu0 %v6085
    %6095 = vmatprep.subr.bf16.mxu0 0
    %6096 = vmatpush1.bf16.msra.mxu0 0
    %6097 = vmatprep.subr.bf16.mxu0 0
    %6098 = vmatpush1.bf16.msra.mxu0 0
    %6099 = vmatprep.subr.bf16.mxu0 0
    %6100 = vmatpush1.bf16.msra.mxu0 0
    %6101 = vmatprep.subr.bf16.mxu0 0
    %6102 = vmatpush1.bf16.msra.mxu0 0
    %6103 = vmatprep.subr.bf16.mxu0 0
    %6104 = vmatpush1.bf16.msra.mxu0 0
    %6105 = vmatprep.subr.bf16.mxu0 0
    %6106 = vmatpush1.bf16.msra.mxu0 0
    %6107 = vmatprep.subr.bf16.mxu0 0
    %6108 = vmatpush1.bf16.msra.mxu0 0
    %6109 = vmatprep.subr.bf16.mxu0 0
    %6110 = vmatpush1.bf16.msra.mxu0 0
    %6111 = vmatprep.subr.bf16.mxu0 0
    %6112 = vmatpush1.bf16.msra.mxu0 0
    %6113 = vmatprep.subr.bf16.mxu0 0
    %6114 = vmatpush1.bf16.msra.mxu0 0
    %6115 = vmatprep.subr.bf16.mxu0 0
    %6116 = vmatpush1.bf16.msra.mxu0 0
    %6117 = vmatprep.subr.bf16.mxu0 0
    %6118 = vmatpush1.bf16.msra.mxu0 0
    %6119 = vmatprep.subr.bf16.mxu0 0
    %6120 = vmatpush1.bf16.msra.mxu0 0
    %6121 = vmatprep.subr.bf16.mxu0 0
    %6122 = vmatpush1.bf16.msra.mxu0 0
    %6123 = vmatprep.mubr.bf16.mxu0 0
    %6124 = vmatmul.mubr.bf16.gmra.mrb[0].mxu0 %v5479
    %v6125 = vpop.f32.mrb[0].mxu0
    %v6126 = vadd.f32 0.0, %v6125
    %v6127 = vpop.f32.mrb[0].mxu0
    %v6128 = vpop.f32.mrb[0].mxu0
    %v6129 = vadd.f32 0.0, %v6128
    %v6130 = vpop.f32.mrb[0].mxu0
    %6131 = vmatprep.mubr.bf16.mxu0 0
    %6132 = vmatmul.mubr.bf16.gmra.mrb[0].mxu0 %v5482
    %v6133 = vpop.f32.mrb[0].mxu0
    %v6134 = vadd.f32 0.0, %v6133
    %v6135 = vpop.f32.mrb[0].mxu0
    %v6136 = vpop.f32.mrb[0].mxu0
    %v6137 = vadd.f32 0.0, %v6136
    %v6138 = vpop.f32.mrb[0].mxu0
    %6139 = vmatprep.mubr.bf16.mxu0 0
    %6140 = vmatmul.mubr.bf16.gmra.mrb[0].mxu0 %v5485
    %v6141 = vpop.f32.mrb[0].mxu0
    %v6142 = vadd.f32 0.0, %v6141
    %v6143 = vpop.f32.mrb[0].mxu0
    %v6144 = vpop.f32.mrb[0].mxu0
    %v6145 = vadd.f32 0.0, %v6144
    %v6146 = vpop.f32.mrb[0].mxu0
    %6147 = vmatprep.mubr.bf16.mxu0 0
    %6148 = vmatmul.mubr.bf16.gmra.mrb[0].mxu0 %v6089
    %v6149 = vpop.f32.mrb[0].mxu0
    %v6150 = vadd.f32 0.0, %v6149
    %v6151 = vpop.f32.mrb[0].mxu0
    %v6152 = vpop.f32.mrb[0].mxu0
    %v6153 = vadd.f32 0.0, %v6152
    %v6154 = vpop.f32.mrb[0].mxu0
    %6155 = vdwg.mxu0
    %v6156 = vadd.f32 %v6063, %v6126
    %v6157 = vadd.f32 %v6064, %v6129
    %v6158 = vadd.f32 %v6065, %v6134
    %v6159 = vadd.f32 %v6066, %v6137
    %v6160 = vadd.f32 %v6067, %v6142
    %v6161 = vadd.f32 %v6068, %v6145
    %v6162 = vadd.f32 %v6069, %v6150
    %v6163 = vadd.f32 %v6070, %v6153
    %v6164 = vlaneseq
    %v6165 = vshrl.u32 %v6164, 7
    %v6166 = vsub.s32 4, %v6165
    %v6167 = vrot.slane %v256, %v6166
    %v6168 = vadd.f32 %v6156, %v6167
    %v6169 = vadd.f32 %v6157, %v6167
    %v6170 = vadd.f32 %v6158, %v6167
    %v6171 = vadd.f32 %v6159, %v6167
    %v6172 = vadd.f32 %v6160, %v6167
    %v6173 = vadd.f32 %v6161, %v6167
    %v6174 = vadd.f32 %v6162, %v6167
    %v6175 = vadd.f32 %v6163, %v6167
    %v6176 = vsel %vm257, %v6168, 0.0
    %v6177 = vsel %vm257, %v6169, 0.0
    %v6178 = vadd.f32 %v6176, %v6177
    %v6179 = vsel %vm257, %v6170, 0.0
    %v6180 = vadd.f32 %v6178, %v6179
    %v6181 = vsel %vm257, %v6171, 0.0
    %v6182 = vadd.f32 %v6180, %v6181
    %v6183 = vsel %vm257, %v6172, 0.0
    %v6184 = vadd.f32 %v6182, %v6183
    %v6185 = vsel %vm257, %v6173, 0.0
    %v6186 = vadd.f32 %v6184, %v6185
    %v6187 = vsel %vm257, %v6174, 0.0
    %v6188 = vadd.f32 %v6186, %v6187
    %v6189 = vsel %vm257, %v6175, 0.0
    %v6190 = vadd.f32 %v6188, %v6189
    %v6191 = vrot.slane %v6190, 4
    %v6192 = vadd.f32 %v6190, %v6191
    %v6193 = vrot.slane %v6192, 2
    %v6194 = vadd.f32 %v6192, %v6193
    %v6195 = vrot.slane %v6194, 1
    %v6196 = vadd.f32 %v6194, %v6195
    %v6197 = vrcp.pop 64.0
    %v6198 = vmul.f32 %v6196, %v6197
    %6200 = vrot.lane.b32.xlu0 %v6198, 1
    %v6201 = vpop.permute.xlu0 %6200
    %vm6203 = vcmask 7168
    %v6204 = vsel %vm6203, 0.0, %v6201
    %vm6205 = vcmask 269312
    %v6206 = vsel %vm6205, %v6204, 0.0
    %vm6207 = vcmask 277504
    %v6209 = vsel %vm6207, %v6206, 0
    %vm6211 = vcmask 1041408
    %v6213 = vsel %vm6211, %v4090, 0
    %6215 = vmatprep.subr.mxu0 0.0
    %6216 = vmatpush1.msra.mxu0 %v4086
    %6217 = vmatprep.subr.mxu0 0.0
    %6218 = vmatpush1.msra.mxu0 %v4087
    %6219 = vmatprep.subr.mxu0 0.0
    %6220 = vmatpush1.msra.mxu0 %v4088
    %6221 = vmatprep.subr.mxu0 0.0
    %6222 = vmatpush1.msra.mxu0 %v4089
    %6223 = vmatprep.subr.mxu0 0.0
    %6224 = vmatpush1.msra.mxu0 %v6213
    %6225 = vmatprep.subr.mxu0 0.0
    %6226 = vmatpush1.msra.mxu0 0.0
    %6227 = vmatprep.subr.mxu0 0.0
    %6228 = vmatpush1.msra.mxu0 0.0
    %6229 = vmatprep.subr.mxu0 0.0
    %6230 = vmatpush1.msra.mxu0 0.0
    %6231 = vmatprep.subr.mxu0 0.0
    %6232 = vmatpush1.msra.mxu0 0.0
    %6233 = vmatprep.subr.mxu0 0.0
    %6234 = vmatpush1.msra.mxu0 0.0
    %6235 = vmatprep.subr.mxu0 0.0
    %6236 = vmatpush1.msra.mxu0 0.0
    %6237 = vmatprep.subr.mxu0 0.0
    %6238 = vmatpush1.msra.mxu0 0.0
    %6239 = vmatprep.subr.mxu0 0.0
    %6240 = vmatpush1.msra.mxu0 0.0
    %6241 = vmatprep.subr.mxu0 0.0
    %6242 = vmatpush1.msra.mxu0 0.0
    %6243 = vmatprep.subr.mxu0 0.0
    %6244 = vmatpush1.msra.mxu0 0.0
    %6245 = vmatprep.subr.mxu0 0.0
    %6246 = vmatpush1.msra.mxu0 0.0
    %6247 = vmatprep.subr.mxu0 0.0
    %6248 = vmatpush1.msra.mxu0 0.0
    %6249 = vmatprep.subr.mxu0 0.0
    %6250 = vmatpush1.msra.mxu0 0.0
    %6251 = vmatprep.subr.mxu0 0.0
    %6252 = vmatpush1.msra.mxu0 0.0
    %6253 = vmatprep.subr.mxu0 0.0
    %6254 = vmatpush1.msra.mxu0 0.0
    %6255 = vmatprep.subr.mxu0 0.0
    %6256 = vmatpush1.msra.mxu0 0.0
    %6257 = vmatprep.subr.mxu0 0.0
    %6258 = vmatpush1.msra.mxu0 0.0
    %6259 = vmatprep.subr.mxu0 0.0
    %6260 = vmatpush1.msra.mxu0 0.0
    %6261 = vmatprep.subr.mxu0 0.0
    %6262 = vmatpush1.msra.mxu0 0.0
    %6263 = vmatprep.subr.mxu0 0.0
    %6264 = vmatpush1.msra.mxu0 0.0
    %6265 = vmatprep.subr.mxu0 0.0
    %6266 = vmatpush1.msra.mxu0 0.0
    %6267 = vmatprep.subr.mxu0 0.0
    %6268 = vmatpush1.msra.mxu0 0.0
    %6269 = vmatprep.subr.mxu0 0.0
    %6270 = vmatpush1.msra.mxu0 0.0
    %6271 = vmatprep.subr.mxu0 0.0
    %6272 = vmatpush1.msra.mxu0 0.0
    %6273 = vmatprep.subr.mxu0 0.0
    %6274 = vmatpush1.msra.mxu0 0.0
    %6275 = vmatprep.subr.mxu0 0.0
    %6276 = vmatpush1.msra.mxu0 0.0
    %6277 = vmatprep.subr.mxu0 0.0
    %6278 = vmatpush1.msra.mxu0 0.0
    %6279 = vmatprep.mubr.f32.mxu0 0.0
    %6280 = vmatmul.mubr.f32.gmra.mrb[0].mxu0 %v6209
    %v6281 = vpop.f32.mrb[0].mxu0
    %v6282 = vadd.f32 0.0, %v6281
    %v6283 = vpop.f32.mrb[0].mxu0
    %6284 = vdwg.mxu0
    %v6285 = vxor.u32 %v6282, 2147483648
    %v6286 = vmul.f32 %v6285, 1.442695
    %v6287 = vpow.pop %v6286
    %v6288 = vadd.f32 %v6287, 1.0
    %v6289 = vrcp.pop %v6288
    %v6290 = vmul.f32 1.0, %v6289
    %v6291 = vlaneseq
    %v6292 = vshrl.u32 %v6291, 7
    %v6293 = vsub.s32 0, %v6292
    %v6294 = vrot.slane %v6290, %v6293
    %v6295 = vmul.f32 %v6168, %v6294
    %v6296 = vmul.f32 %v6169, %v6294
    %v6297 = vmul.f32 %v6170, %v6294
    %v6298 = vmul.f32 %v6171, %v6294
    %v6299 = vmul.f32 %v6172, %v6294
    %v6300 = vmul.f32 %v6173, %v6294
    %v6301 = vmul.f32 %v6174, %v6294
    %v6302 = vmul.f32 %v6175, %v6294
    %v6303 = vadd.f32 %v6295, %v4070
    %v6304 = vadd.f32 %v6296, %v4071
    %v6305 = vadd.f32 %v6297, %v4072
    %v6306 = vadd.f32 %v6298, %v4073
    %v6307 = vadd.f32 %v6299, %v4074
    %v6308 = vadd.f32 %v6300, %v4075
    %v6309 = vadd.f32 %v6301, %v4076
    %v6310 = vadd.f32 %v6302, %v4077
    %6311 = vst.msk [vmem:[#allocation23] sm:$0xff] %vm257, %v6303
    %6312 = vst.msk [vmem:[#allocation23 + $0x8] sm:$0xff] %vm257, %v6304
    %6313 = vst.msk [vmem:[#allocation23 + $0x10] sm:$0xff] %vm257, %v6305
    %6314 = vst.msk [vmem:[#allocation23 + $0x18] sm:$0xff] %vm257, %v6306
    %6315 = vst.msk [vmem:[#allocation23 + $0x20] sm:$0xff] %vm257, %v6307
    %6316 = vst.msk [vmem:[#allocation23 + $0x28] sm:$0xff] %vm257, %v6308
    %6317 = vst.msk [vmem:[#allocation23 + $0x30] sm:$0xff] %vm257, %v6309
    %6318 = vst.msk [vmem:[#allocation23 + $0x38] sm:$0xff] %vm257, %v6310
    %v6319 = vmax.f32 %v4078, 0.0
    %v6320 = vmax.f32 %v4079, 0.0
    %v6321 = vmax.f32 %v4080, 0.0
    %v6322 = vmax.f32 %v4081, 0.0
    %v6323 = vmax.f32 %v4082, 0.0
    %v6324 = vmax.f32 %v4083, 0.0
    %v6325 = vmax.f32 %v4084, 0.0
    %v6326 = vmax.f32 %v4085, 0.0
    %v6335 = vrot.slane %v6319, 7
    %v6336 = vrot.slane %v6320, 7
    %v6337 = vrot.slane %v6321, 7
    %v6338 = vrot.slane %v6322, 7
    %v6339 = vrot.slane %v6323, 7
    %v6340 = vrot.slane %v6324, 7
    %v6341 = vrot.slane %v6325, 7
    %v6342 = vrot.slane %v6326, 7
    %v6351 = vsel %vm4126, 0.0, %v6335
    %v6352 = vsel %vm4126, 0.0, %v6336
    %v6353 = vsel %vm4126, 0.0, %v6337
    %v6354 = vsel %vm4126, 0.0, %v6338
    %v6355 = vsel %vm4126, 0.0, %v6339
    %v6356 = vsel %vm4126, 0.0, %v6340
    %v6357 = vsel %vm4126, 0.0, %v6341
    %v6358 = vsel %vm4126, 0.0, %v6342
    %v6359 = vsel %vm4126, %v6335, 0.0
    %v6360 = vsel %vm4126, %v6336, 0.0
    %v6361 = vsel %vm4126, %v6337, 0.0
    %v6362 = vsel %vm4126, %v6338, 0.0
    %v6363 = vsel %vm4126, %v6339, 0.0
    %v6364 = vsel %vm4126, %v6340, 0.0
    %v6365 = vsel %vm4126, %v6341, 0.0
    %v6366 = vsel %vm4126, %v6342, 0.0
    %v6367 = vpack.c.bf16 %v6351, %v4127
    %v6368 = vpack.c.bf16 %v6353, %v6352
    %v6369 = vpack.c.bf16 %v6355, %v6354
    %v6370 = vpack.c.bf16 %v6357, %v6356
    %v6371 = vld [vmem:[#allocation19] sm:$0xf]
    %v6372 = vld [vmem:[#allocation19 + $0x4] sm:$0xf]
    %v6373 = vld [vmem:[#allocation19 + $0x8] sm:$0xf]
    %v6374 = vld [vmem:[#allocation19 + $0xc] sm:$0xf]
    %v6389 = vrot.slane %v6351, 1
    %v6390 = vrot.slane %v6359, 1
    %v6391 = vsel %vm4169, %v6389, %v6390
    %v6392 = vrot.slane %v6352, 1
    %v6393 = vrot.slane %v6360, 1
    %v6394 = vsel %vm4169, %v6392, %v6393
    %v6395 = vrot.slane %v6353, 1
    %v6396 = vrot.slane %v6361, 1
    %v6397 = vsel %vm4169, %v6395, %v6396
    %v6398 = vrot.slane %v6354, 1
    %v6399 = vrot.slane %v6362, 1
    %v6400 = vsel %vm4169, %v6398, %v6399
    %v6401 = vrot.slane %v6355, 1
    %v6402 = vrot.slane %v6363, 1
    %v6403 = vsel %vm4169, %v6401, %v6402
    %v6404 = vrot.slane %v6356, 1
    %v6405 = vrot.slane %v6364, 1
    %v6406 = vsel %vm4169, %v6404, %v6405
    %v6407 = vrot.slane %v6357, 1
    %v6408 = vrot.slane %v6365, 1
    %v6409 = vsel %vm4169, %v6407, %v6408
    %v6417 = vpack.c.bf16 %v6391, %v4172
    %v6418 = vpack.c.bf16 %v6397, %v6394
    %v6419 = vpack.c.bf16 %v6403, %v6400
    %v6420 = vpack.c.bf16 %v6409, %v6406
    %v6421 = vld [vmem:[#allocation19 + $0x10] sm:$0xf]
    %v6422 = vld [vmem:[#allocation19 + $0x14] sm:$0xf]
    %v6423 = vld [vmem:[#allocation19 + $0x18] sm:$0xf]
    %v6424 = vld [vmem:[#allocation19 + $0x1c] sm:$0xf]
    %v6429 = vunpack.c.l.b16 %v6421
    %v6430 = vunpack.c.l.b16 %v6422
    %v6431 = vunpack.c.l.b16 %v6423
    %v6432 = vunpack.c.l.b16 %v6424
    %v6433 = vpack.c.b16 %v6430, %v6429
    %v6434 = vpack.c.b16 %v6432, %v6431
    %v6438 = vsel %vm257, %v6417, 0
    %v6441 = vsel %vm257, %v6418, 0
    %v6444 = vsel %vm257, %v6419, 0
    %v6447 = vsel %vm257, %v6420, 0
    %6449 = vmatprep.subr.bf16.mxu0 0
    %6450 = vmatpush1.bf16.msra.mxu0 %v6433
    %6451 = vmatprep.subr.bf16.mxu0 0
    %6452 = vmatpush1.bf16.msra.mxu0 %v6434
    %6453 = vmatprep.subr.bf16.mxu0 0
    %6454 = vmatpush1.bf16.msra.mxu0 0
    %6455 = vmatprep.subr.bf16.mxu0 0
    %6456 = vmatpush1.bf16.msra.mxu0 0
    %6457 = vmatprep.subr.bf16.mxu0 0
    %6458 = vmatpush1.bf16.msra.mxu0 0
    %6459 = vmatprep.subr.bf16.mxu0 0
    %6460 = vmatpush1.bf16.msra.mxu0 0
    %6461 = vmatprep.subr.bf16.mxu0 0
    %6462 = vmatpush1.bf16.msra.mxu0 0
    %6463 = vmatprep.subr.bf16.mxu0 0
    %6464 = vmatpush1.bf16.msra.mxu0 0
    %6465 = vmatprep.subr.bf16.mxu0 0
    %6466 = vmatpush1.bf16.msra.mxu0 0
    %6467 = vmatprep.subr.bf16.mxu0 0
    %6468 = vmatpush1.bf16.msra.mxu0 0
    %6469 = vmatprep.subr.bf16.mxu0 0
    %6470 = vmatpush1.bf16.msra.mxu0 0
    %6471 = vmatprep.subr.bf16.mxu0 0
    %6472 = vmatpush1.bf16.msra.mxu0 0
    %6473 = vmatprep.subr.bf16.mxu0 0
    %6474 = vmatpush1.bf16.msra.mxu0 0
    %6475 = vmatprep.subr.bf16.mxu0 0
    %6476 = vmatpush1.bf16.msra.mxu0 0
    %6477 = vmatprep.subr.bf16.mxu0 0
    %6478 = vmatpush1.bf16.msra.mxu0 0
    %6479 = vmatprep.subr.bf16.mxu0 0
    %6480 = vmatpush1.bf16.msra.mxu0 0
    %6481 = vmatprep.mubr.bf16.mxu0 0
    %6482 = vmatmul.mubr.bf16.gmra.mrb[0].mxu0 %v6438
    %v6483 = vpop.f32.mrb[0].mxu0
    %v6484 = vadd.f32 0.0, %v6483
    %v6485 = vpop.f32.mrb[0].mxu0
    %v6486 = vpop.f32.mrb[0].mxu0
    %v6487 = vadd.f32 0.0, %v6486
    %v6488 = vpop.f32.mrb[0].mxu0
    %6489 = vmatprep.mubr.bf16.mxu0 0
    %6490 = vmatmul.mubr.bf16.gmra.mrb[0].mxu0 %v6441
    %v6491 = vpop.f32.mrb[0].mxu0
    %v6492 = vadd.f32 0.0, %v6491
    %v6493 = vpop.f32.mrb[0].mxu0
    %v6494 = vpop.f32.mrb[0].mxu0
    %v6495 = vadd.f32 0.0, %v6494
    %v6496 = vpop.f32.mrb[0].mxu0
    %6497 = vmatprep.mubr.bf16.mxu0 0
    %6498 = vmatmul.mubr.bf16.gmra.mrb[0].mxu0 %v6444
    %v6499 = vpop.f32.mrb[0].mxu0
    %v6500 = vadd.f32 0.0, %v6499
    %v6501 = vpop.f32.mrb[0].mxu0
    %v6502 = vpop.f32.mrb[0].mxu0
    %v6503 = vadd.f32 0.0, %v6502
    %v6504 = vpop.f32.mrb[0].mxu0
    %6505 = vmatprep.mubr.bf16.mxu0 0
    %6506 = vmatmul.mubr.bf16.gmra.mrb[0].mxu0 %v6447
    %v6507 = vpop.f32.mrb[0].mxu0
    %v6508 = vadd.f32 0.0, %v6507
    %v6509 = vpop.f32.mrb[0].mxu0
    %v6510 = vpop.f32.mrb[0].mxu0
    %v6511 = vadd.f32 0.0, %v6510
    %v6512 = vpop.f32.mrb[0].mxu0
    %6513 = vdwg.mxu0
    %v6518 = vunpack.c.l.b16 %v6371
    %v6519 = vunpack.c.l.b16 %v6372
    %v6520 = vunpack.c.l.b16 %v6373
    %v6521 = vunpack.c.l.b16 %v6374
    %v6522 = vpack.c.b16 %v6519, %v6518
    %v6523 = vpack.c.b16 %v6521, %v6520
    %v6527 = vsel %vm257, %v6367, 0
    %v6530 = vsel %vm257, %v6368, 0
    %v6533 = vsel %vm257, %v6369, 0
    %v6536 = vsel %vm257, %v6370, 0
    %6538 = vmatprep.subr.bf16.mxu0 0
    %6539 = vmatpush1.bf16.msra.mxu0 %v6522
    %6540 = vmatprep.subr.bf16.mxu0 0
    %6541 = vmatpush1.bf16.msra.mxu0 %v6523
    %6542 = vmatprep.subr.bf16.mxu0 0
    %6543 = vmatpush1.bf16.msra.mxu0 0
    %6544 = vmatprep.subr.bf16.mxu0 0
    %6545 = vmatpush1.bf16.msra.mxu0 0
    %6546 = vmatprep.subr.bf16.mxu0 0
    %6547 = vmatpush1.bf16.msra.mxu0 0
    %6548 = vmatprep.subr.bf16.mxu0 0
    %6549 = vmatpush1.bf16.msra.mxu0 0
    %6550 = vmatprep.subr.bf16.mxu0 0
    %6551 = vmatpush1.bf16.msra.mxu0 0
    %6552 = vmatprep.subr.bf16.mxu0 0
    %6553 = vmatpush1.bf16.msra.mxu0 0
    %6554 = vmatprep.subr.bf16.mxu0 0
    %6555 = vmatpush1.bf16.msra.mxu0 0
    %6556 = vmatprep.subr.bf16.mxu0 0
    %6557 = vmatpush1.bf16.msra.mxu0 0
    %6558 = vmatprep.subr.bf16.mxu0 0
    %6559 = vmatpush1.bf16.msra.mxu0 0
    %6560 = vmatprep.subr.bf16.mxu0 0
    %6561 = vmatpush1.bf16.msra.mxu0 0
    %6562 = vmatprep.subr.bf16.mxu0 0
    %6563 = vmatpush1.bf16.msra.mxu0 0
    %6564 = vmatprep.subr.bf16.mxu0 0
    %6565 = vmatpush1.bf16.msra.mxu0 0
    %6566 = vmatprep.subr.bf16.mxu0 0
    %6567 = vmatpush1.bf16.msra.mxu0 0
    %6568 = vmatprep.subr.bf16.mxu0 0
    %6569 = vmatpush1.bf16.msra.mxu0 0
    %6570 = vmatprep.mubr.bf16.mxu0 0
    %6571 = vmatmul.mubr.bf16.gmra.mrb[0].mxu0 %v6527
    %v6572 = vpop.f32.mrb[0].mxu0
    %v6573 = vadd.f32 %v6484, %v6572
    %v6574 = vpop.f32.mrb[0].mxu0
    %v6575 = vpop.f32.mrb[0].mxu0
    %v6576 = vadd.f32 %v6487, %v6575
    %v6577 = vpop.f32.mrb[0].mxu0
    %6578 = vmatprep.mubr.bf16.mxu0 0
    %6579 = vmatmul.mubr.bf16.gmra.mrb[0].mxu0 %v6530
    %v6580 = vpop.f32.mrb[0].mxu0
    %v6581 = vadd.f32 %v6492, %v6580
    %v6582 = vpop.f32.mrb[0].mxu0
    %v6583 = vpop.f32.mrb[0].mxu0
    %v6584 = vadd.f32 %v6495, %v6583
    %v6585 = vpop.f32.mrb[0].mxu0
    %6586 = vmatprep.mubr.bf16.mxu0 0
    %6587 = vmatmul.mubr.bf16.gmra.mrb[0].mxu0 %v6533
    %v6588 = vpop.f32.mrb[0].mxu0
    %v6589 = vadd.f32 %v6500, %v6588
    %v6590 = vpop.f32.mrb[0].mxu0
    %v6591 = vpop.f32.mrb[0].mxu0
    %v6592 = vadd.f32 %v6503, %v6591
    %v6593 = vpop.f32.mrb[0].mxu0
    %6594 = vmatprep.mubr.bf16.mxu0 0
    %6595 = vmatmul.mubr.bf16.gmra.mrb[0].mxu0 %v6536
    %v6596 = vpop.f32.mrb[0].mxu0
    %v6597 = vadd.f32 %v6508, %v6596
    %v6598 = vpop.f32.mrb[0].mxu0
    %v6599 = vpop.f32.mrb[0].mxu0
    %v6600 = vadd.f32 %v6511, %v6599
    %v6601 = vpop.f32.mrb[0].mxu0
    %6602 = vdwg.mxu0
    %v6603 = vrot.slane %v6351, 2
    %v6604 = vrot.slane %v6359, 2
    %v6605 = vsel %vm4388, %v6603, %v6604
    %v6606 = vrot.slane %v6352, 2
    %v6607 = vrot.slane %v6360, 2
    %v6608 = vsel %vm4388, %v6606, %v6607
    %v6609 = vrot.slane %v6353, 2
    %v6610 = vrot.slane %v6361, 2
    %v6611 = vsel %vm4388, %v6609, %v6610
    %v6612 = vrot.slane %v6354, 2
    %v6613 = vrot.slane %v6362, 2
    %v6614 = vsel %vm4388, %v6612, %v6613
    %v6615 = vrot.slane %v6355, 2
    %v6616 = vrot.slane %v6363, 2
    %v6617 = vsel %vm4388, %v6615, %v6616
    %v6618 = vrot.slane %v6356, 2
    %v6619 = vrot.slane %v6364, 2
    %v6620 = vsel %vm4388, %v6618, %v6619
    %v6621 = vrot.slane %v6357, 2
    %v6622 = vrot.slane %v6365, 2
    %v6623 = vsel %vm4388, %v6621, %v6622
    %v6631 = vpack.c.bf16 %v6605, %v4391
    %v6632 = vpack.c.bf16 %v6611, %v6608
    %v6633 = vpack.c.bf16 %v6617, %v6614
    %v6634 = vpack.c.bf16 %v6623, %v6620
    %v6635 = vld [vmem:[#allocation19 + $0x20] sm:$0xf]
    %v6636 = vld [vmem:[#allocation19 + $0x24] sm:$0xf]
    %v6637 = vld [vmem:[#allocation19 + $0x28] sm:$0xf]
    %v6638 = vld [vmem:[#allocation19 + $0x2c] sm:$0xf]
    %v6643 = vunpack.c.l.b16 %v6635
    %v6644 = vunpack.c.l.b16 %v6636
    %v6645 = vunpack.c.l.b16 %v6637
    %v6646 = vunpack.c.l.b16 %v6638
    %v6647 = vpack.c.b16 %v6644, %v6643
    %v6648 = vpack.c.b16 %v6646, %v6645
    %v6652 = vsel %vm257, %v6631, 0
    %v6655 = vsel %vm257, %v6632, 0
    %v6658 = vsel %vm257, %v6633, 0
    %v6661 = vsel %vm257, %v6634, 0
    %6663 = vmatprep.subr.bf16.mxu0 0
    %6664 = vmatpush1.bf16.msra.mxu0 %v6647
    %6665 = vmatprep.subr.bf16.mxu0 0
    %6666 = vmatpush1.bf16.msra.mxu0 %v6648
    %6667 = vmatprep.subr.bf16.mxu0 0
    %6668 = vmatpush1.bf16.msra.mxu0 0
    %6669 = vmatprep.subr.bf16.mxu0 0
    %6670 = vmatpush1.bf16.msra.mxu0 0
    %6671 = vmatprep.subr.bf16.mxu0 0
    %6672 = vmatpush1.bf16.msra.mxu0 0
    %6673 = vmatprep.subr.bf16.mxu0 0
    %6674 = vmatpush1.bf16.msra.mxu0 0
    %6675 = vmatprep.subr.bf16.mxu0 0
    %6676 = vmatpush1.bf16.msra.mxu0 0
    %6677 = vmatprep.subr.bf16.mxu0 0
    %6678 = vmatpush1.bf16.msra.mxu0 0
    %6679 = vmatprep.subr.bf16.mxu0 0
    %6680 = vmatpush1.bf16.msra.mxu0 0
    %6681 = vmatprep.subr.bf16.mxu0 0
    %6682 = vmatpush1.bf16.msra.mxu0 0
    %6683 = vmatprep.subr.bf16.mxu0 0
    %6684 = vmatpush1.bf16.msra.mxu0 0
    %6685 = vmatprep.subr.bf16.mxu0 0
    %6686 = vmatpush1.bf16.msra.mxu0 0
    %6687 = vmatprep.subr.bf16.mxu0 0
    %6688 = vmatpush1.bf16.msra.mxu0 0
    %6689 = vmatprep.subr.bf16.mxu0 0
    %6690 = vmatpush1.bf16.msra.mxu0 0
    %6691 = vmatprep.subr.bf16.mxu0 0
    %6692 = vmatpush1.bf16.msra.mxu0 0
    %6693 = vmatprep.subr.bf16.mxu0 0
    %6694 = vmatpush1.bf16.msra.mxu0 0
    %6695 = vmatprep.mubr.bf16.mxu0 0
    %6696 = vmatmul.mubr.bf16.gmra.mrb[0].mxu0 %v6652
    %v6697 = vpop.f32.mrb[0].mxu0
    %v6698 = vadd.f32 0.0, %v6697
    %v6699 = vpop.f32.mrb[0].mxu0
    %v6700 = vpop.f32.mrb[0].mxu0
    %v6701 = vadd.f32 0.0, %v6700
    %v6702 = vpop.f32.mrb[0].mxu0
    %6703 = vmatprep.mubr.bf16.mxu0 0
    %6704 = vmatmul.mubr.bf16.gmra.mrb[0].mxu0 %v6655
    %v6705 = vpop.f32.mrb[0].mxu0
    %v6706 = vadd.f32 0.0, %v6705
    %v6707 = vpop.f32.mrb[0].mxu0
    %v6708 = vpop.f32.mrb[0].mxu0
    %v6709 = vadd.f32 0.0, %v6708
    %v6710 = vpop.f32.mrb[0].mxu0
    %6711 = vmatprep.mubr.bf16.mxu0 0
    %6712 = vmatmul.mubr.bf16.gmra.mrb[0].mxu0 %v6658
    %v6713 = vpop.f32.mrb[0].mxu0
    %v6714 = vadd.f32 0.0, %v6713
    %v6715 = vpop.f32.mrb[0].mxu0
    %v6716 = vpop.f32.mrb[0].mxu0
    %v6717 = vadd.f32 0.0, %v6716
    %v6718 = vpop.f32.mrb[0].mxu0
    %6719 = vmatprep.mubr.bf16.mxu0 0
    %6720 = vmatmul.mubr.bf16.gmra.mrb[0].mxu0 %v6661
    %v6721 = vpop.f32.mrb[0].mxu0
    %v6722 = vadd.f32 0.0, %v6721
    %v6723 = vpop.f32.mrb[0].mxu0
    %v6724 = vpop.f32.mrb[0].mxu0
    %v6725 = vadd.f32 0.0, %v6724
    %v6726 = vpop.f32.mrb[0].mxu0
    %6727 = vdwg.mxu0
    %v6728 = vadd.f32 %v6573, %v6698
    %v6729 = vadd.f32 %v6576, %v6701
    %v6730 = vadd.f32 %v6581, %v6706
    %v6731 = vadd.f32 %v6584, %v6709
    %v6732 = vadd.f32 %v6589, %v6714
    %v6733 = vadd.f32 %v6592, %v6717
    %v6734 = vadd.f32 %v6597, %v6722
    %v6735 = vadd.f32 %v6600, %v6725
    %v6736 = vpack.c.bf16 %v6352, %v6351
    %v6737 = vpack.c.bf16 %v6354, %v6353
    %v6738 = vpack.c.bf16 %v6356, %v6355
    %v6739 = vpack.c.bf16 %v6358, %v6357
    %v6740 = vld [vmem:[#allocation19 + $0x30] sm:$0xf]
    %v6741 = vld [vmem:[#allocation19 + $0x34] sm:$0xf]
    %v6742 = vld [vmem:[#allocation19 + $0x38] sm:$0xf]
    %v6743 = vld [vmem:[#allocation19 + $0x3c] sm:$0xf]
    %v6748 = vunpack.c.l.b16 %v6740
    %v6749 = vunpack.c.l.b16 %v6741
    %v6750 = vunpack.c.l.b16 %v6742
    %v6751 = vunpack.c.l.b16 %v6743
    %v6752 = vpack.c.b16 %v6749, %v6748
    %v6753 = vpack.c.b16 %v6751, %v6750
    %v6757 = vsel %vm257, %v6736, 0
    %v6760 = vsel %vm257, %v6737, 0
    %v6763 = vsel %vm257, %v6738, 0
    %v6766 = vsel %vm257, %v6739, 0
    %6768 = vmatprep.subr.bf16.mxu0 0
    %6769 = vmatpush1.bf16.msra.mxu0 %v6752
    %6770 = vmatprep.subr.bf16.mxu0 0
    %6771 = vmatpush1.bf16.msra.mxu0 %v6753
    %6772 = vmatprep.subr.bf16.mxu0 0
    %6773 = vmatpush1.bf16.msra.mxu0 0
    %6774 = vmatprep.subr.bf16.mxu0 0
    %6775 = vmatpush1.bf16.msra.mxu0 0
    %6776 = vmatprep.subr.bf16.mxu0 0
    %6777 = vmatpush1.bf16.msra.mxu0 0
    %6778 = vmatprep.subr.bf16.mxu0 0
    %6779 = vmatpush1.bf16.msra.mxu0 0
    %6780 = vmatprep.subr.bf16.mxu0 0
    %6781 = vmatpush1.bf16.msra.mxu0 0
    %6782 = vmatprep.subr.bf16.mxu0 0
    %6783 = vmatpush1.bf16.msra.mxu0 0
    %6784 = vmatprep.subr.bf16.mxu0 0
    %6785 = vmatpush1.bf16.msra.mxu0 0
    %6786 = vmatprep.subr.bf16.mxu0 0
    %6787 = vmatpush1.bf16.msra.mxu0 0
    %6788 = vmatprep.subr.bf16.mxu0 0
    %6789 = vmatpush1.bf16.msra.mxu0 0
    %6790 = vmatprep.subr.bf16.mxu0 0
    %6791 = vmatpush1.bf16.msra.mxu0 0
    %6792 = vmatprep.subr.bf16.mxu0 0
    %6793 = vmatpush1.bf16.msra.mxu0 0
    %6794 = vmatprep.subr.bf16.mxu0 0
    %6795 = vmatpush1.bf16.msra.mxu0 0
    %6796 = vmatprep.subr.bf16.mxu0 0
    %6797 = vmatpush1.bf16.msra.mxu0 0
    %6798 = vmatprep.subr.bf16.mxu0 0
    %6799 = vmatpush1.bf16.msra.mxu0 0
    %6800 = vmatprep.mubr.bf16.mxu0 0
    %6801 = vmatmul.mubr.bf16.gmra.mrb[0].mxu0 %v6757
    %v6802 = vpop.f32.mrb[0].mxu0
    %v6803 = vadd.f32 0.0, %v6802
    %v6804 = vpop.f32.mrb[0].mxu0
    %v6805 = vpop.f32.mrb[0].mxu0
    %v6806 = vadd.f32 0.0, %v6805
    %v6807 = vpop.f32.mrb[0].mxu0
    %6808 = vmatprep.mubr.bf16.mxu0 0
    %6809 = vmatmul.mubr.bf16.gmra.mrb[0].mxu0 %v6760
    %v6810 = vpop.f32.mrb[0].mxu0
    %v6811 = vadd.f32 0.0, %v6810
    %v6812 = vpop.f32.mrb[0].mxu0
    %v6813 = vpop.f32.mrb[0].mxu0
    %v6814 = vadd.f32 0.0, %v6813
    %v6815 = vpop.f32.mrb[0].mxu0
    %6816 = vmatprep.mubr.bf16.mxu0 0
    %6817 = vmatmul.mubr.bf16.gmra.mrb[0].mxu0 %v6763
    %v6818 = vpop.f32.mrb[0].mxu0
    %v6819 = vadd.f32 0.0, %v6818
    %v6820 = vpop.f32.mrb[0].mxu0
    %v6821 = vpop.f32.mrb[0].mxu0
    %v6822 = vadd.f32 0.0, %v6821
    %v6823 = vpop.f32.mrb[0].mxu0
    %6824 = vmatprep.mubr.bf16.mxu0 0
    %6825 = vmatmul.mubr.bf16.gmra.mrb[0].mxu0 %v6766
    %v6826 = vpop.f32.mrb[0].mxu0
    %v6827 = vadd.f32 0.0, %v6826
    %v6828 = vpop.f32.mrb[0].mxu0
    %v6829 = vpop.f32.mrb[0].mxu0
    %v6830 = vadd.f32 0.0, %v6829
    %v6831 = vpop.f32.mrb[0].mxu0
    %6832 = vdwg.mxu0
    %v6833 = vadd.f32 %v6728, %v6803
    %v6834 = vadd.f32 %v6729, %v6806
    %v6835 = vadd.f32 %v6730, %v6811
    %v6836 = vadd.f32 %v6731, %v6814
    %v6837 = vadd.f32 %v6732, %v6819
    %v6838 = vadd.f32 %v6733, %v6822
    %v6839 = vadd.f32 %v6734, %v6827
    %v6840 = vadd.f32 %v6735, %v6830
    %v6843 = vrot.slane %v6358, 1
    %v6844 = vrot.slane %v6366, 1
    %v6845 = vsel %vm4169, %v6843, %v6844
    %v6847 = vpack.c.bf16 %v6394, %v6391
    %v6848 = vpack.c.bf16 %v6400, %v6397
    %v6849 = vpack.c.bf16 %v6406, %v6403
    %v6850 = vpack.c.bf16 %v6845, %v6409
    %v6851 = vld [vmem:[#allocation19 + $0x40] sm:$0xf]
    %v6852 = vld [vmem:[#allocation19 + $0x44] sm:$0xf]
    %v6853 = vld [vmem:[#allocation19 + $0x48] sm:$0xf]
    %v6854 = vld [vmem:[#allocation19 + $0x4c] sm:$0xf]
    %v6859 = vunpack.c.l.b16 %v6851
    %v6860 = vunpack.c.l.b16 %v6852
    %v6861 = vunpack.c.l.b16 %v6853
    %v6862 = vunpack.c.l.b16 %v6854
    %v6863 = vpack.c.b16 %v6860, %v6859
    %v6864 = vpack.c.b16 %v6862, %v6861
    %v6868 = vsel %vm257, %v6847, 0
    %v6871 = vsel %vm257, %v6848, 0
    %v6874 = vsel %vm257, %v6849, 0
    %v6877 = vsel %vm257, %v6850, 0
    %6879 = vmatprep.subr.bf16.mxu0 0
    %6880 = vmatpush1.bf16.msra.mxu0 %v6863
    %6881 = vmatprep.subr.bf16.mxu0 0
    %6882 = vmatpush1.bf16.msra.mxu0 %v6864
    %6883 = vmatprep.subr.bf16.mxu0 0
    %6884 = vmatpush1.bf16.msra.mxu0 0
    %6885 = vmatprep.subr.bf16.mxu0 0
    %6886 = vmatpush1.bf16.msra.mxu0 0
    %6887 = vmatprep.subr.bf16.mxu0 0
    %6888 = vmatpush1.bf16.msra.mxu0 0
    %6889 = vmatprep.subr.bf16.mxu0 0
    %6890 = vmatpush1.bf16.msra.mxu0 0
    %6891 = vmatprep.subr.bf16.mxu0 0
    %6892 = vmatpush1.bf16.msra.mxu0 0
    %6893 = vmatprep.subr.bf16.mxu0 0
    %6894 = vmatpush1.bf16.msra.mxu0 0
    %6895 = vmatprep.subr.bf16.mxu0 0
    %6896 = vmatpush1.bf16.msra.mxu0 0
    %6897 = vmatprep.subr.bf16.mxu0 0
    %6898 = vmatpush1.bf16.msra.mxu0 0
    %6899 = vmatprep.subr.bf16.mxu0 0
    %6900 = vmatpush1.bf16.msra.mxu0 0
    %6901 = vmatprep.subr.bf16.mxu0 0
    %6902 = vmatpush1.bf16.msra.mxu0 0
    %6903 = vmatprep.subr.bf16.mxu0 0
    %6904 = vmatpush1.bf16.msra.mxu0 0
    %6905 = vmatprep.subr.bf16.mxu0 0
    %6906 = vmatpush1.bf16.msra.mxu0 0
    %6907 = vmatprep.subr.bf16.mxu0 0
    %6908 = vmatpush1.bf16.msra.mxu0 0
    %6909 = vmatprep.subr.bf16.mxu0 0
    %6910 = vmatpush1.bf16.msra.mxu0 0
    %6911 = vmatprep.mubr.bf16.mxu0 0
    %6912 = vmatmul.mubr.bf16.gmra.mrb[0].mxu0 %v6868
    %v6913 = vpop.f32.mrb[0].mxu0
    %v6914 = vadd.f32 0.0, %v6913
    %v6915 = vpop.f32.mrb[0].mxu0
    %v6916 = vpop.f32.mrb[0].mxu0
    %v6917 = vadd.f32 0.0, %v6916
    %v6918 = vpop.f32.mrb[0].mxu0
    %6919 = vmatprep.mubr.bf16.mxu0 0
    %6920 = vmatmul.mubr.bf16.gmra.mrb[0].mxu0 %v6871
    %v6921 = vpop.f32.mrb[0].mxu0
    %v6922 = vadd.f32 0.0, %v6921
    %v6923 = vpop.f32.mrb[0].mxu0
    %v6924 = vpop.f32.mrb[0].mxu0
    %v6925 = vadd.f32 0.0, %v6924
    %v6926 = vpop.f32.mrb[0].mxu0
    %6927 = vmatprep.mubr.bf16.mxu0 0
    %6928 = vmatmul.mubr.bf16.gmra.mrb[0].mxu0 %v6874
    %v6929 = vpop.f32.mrb[0].mxu0
    %v6930 = vadd.f32 0.0, %v6929
    %v6931 = vpop.f32.mrb[0].mxu0
    %v6932 = vpop.f32.mrb[0].mxu0
    %v6933 = vadd.f32 0.0, %v6932
    %v6934 = vpop.f32.mrb[0].mxu0
    %6935 = vmatprep.mubr.bf16.mxu0 0
    %6936 = vmatmul.mubr.bf16.gmra.mrb[0].mxu0 %v6877
    %v6937 = vpop.f32.mrb[0].mxu0
    %v6938 = vadd.f32 0.0, %v6937
    %v6939 = vpop.f32.mrb[0].mxu0
    %v6940 = vpop.f32.mrb[0].mxu0
    %v6941 = vadd.f32 0.0, %v6940
    %v6942 = vpop.f32.mrb[0].mxu0
    %6943 = vdwg.mxu0
    %v6944 = vadd.f32 %v6833, %v6914
    %v6945 = vadd.f32 %v6834, %v6917
    %v6946 = vadd.f32 %v6835, %v6922
    %v6947 = vadd.f32 %v6836, %v6925
    %v6948 = vadd.f32 %v6837, %v6930
    %v6949 = vadd.f32 %v6838, %v6933
    %v6950 = vadd.f32 %v6839, %v6938
    %v6951 = vadd.f32 %v6840, %v6941
    %v6952 = vrot.slane %v6358, 2
    %v6953 = vrot.slane %v6366, 2
    %v6954 = vsel %vm4388, %v6952, %v6953
    %v6956 = vpack.c.bf16 %v6608, %v6605
    %v6957 = vpack.c.bf16 %v6614, %v6611
    %v6958 = vpack.c.bf16 %v6620, %v6617
    %v6959 = vpack.c.bf16 %v6954, %v6623
    %v6960 = vld [vmem:[#allocation19 + $0x50] sm:$0xf]
    %v6961 = vld [vmem:[#allocation19 + $0x54] sm:$0xf]
    %v6962 = vld [vmem:[#allocation19 + $0x58] sm:$0xf]
    %v6963 = vld [vmem:[#allocation19 + $0x5c] sm:$0xf]
    %v6968 = vunpack.c.l.b16 %v6960
    %v6969 = vunpack.c.l.b16 %v6961
    %v6970 = vunpack.c.l.b16 %v6962
    %v6971 = vunpack.c.l.b16 %v6963
    %v6972 = vpack.c.b16 %v6969, %v6968
    %v6973 = vpack.c.b16 %v6971, %v6970
    %v6977 = vsel %vm257, %v6956, 0
    %v6980 = vsel %vm257, %v6957, 0
    %v6983 = vsel %vm257, %v6958, 0
    %v6986 = vsel %vm257, %v6959, 0
    %6988 = vmatprep.subr.bf16.mxu0 0
    %6989 = vmatpush1.bf16.msra.mxu0 %v6972
    %6990 = vmatprep.subr.bf16.mxu0 0
    %6991 = vmatpush1.bf16.msra.mxu0 %v6973
    %6992 = vmatprep.subr.bf16.mxu0 0
    %6993 = vmatpush1.bf16.msra.mxu0 0
    %6994 = vmatprep.subr.bf16.mxu0 0
    %6995 = vmatpush1.bf16.msra.mxu0 0
    %6996 = vmatprep.subr.bf16.mxu0 0
    %6997 = vmatpush1.bf16.msra.mxu0 0
    %6998 = vmatprep.subr.bf16.mxu0 0
    %6999 = vmatpush1.bf16.msra.mxu0 0
    %7000 = vmatprep.subr.bf16.mxu0 0
    %7001 = vmatpush1.bf16.msra.mxu0 0
    %7002 = vmatprep.subr.bf16.mxu0 0
    %7003 = vmatpush1.bf16.msra.mxu0 0
    %7004 = vmatprep.subr.bf16.mxu0 0
    %7005 = vmatpush1.bf16.msra.mxu0 0
    %7006 = vmatprep.subr.bf16.mxu0 0
    %7007 = vmatpush1.bf16.msra.mxu0 0
    %7008 = vmatprep.subr.bf16.mxu0 0
    %7009 = vmatpush1.bf16.msra.mxu0 0
    %7010 = vmatprep.subr.bf16.mxu0 0
    %7011 = vmatpush1.bf16.msra.mxu0 0
    %7012 = vmatprep.subr.bf16.mxu0 0
    %7013 = vmatpush1.bf16.msra.mxu0 0
    %7014 = vmatprep.subr.bf16.mxu0 0
    %7015 = vmatpush1.bf16.msra.mxu0 0
    %7016 = vmatprep.subr.bf16.mxu0 0
    %7017 = vmatpush1.bf16.msra.mxu0 0
    %7018 = vmatprep.subr.bf16.mxu0 0
    %7019 = vmatpush1.bf16.msra.mxu0 0
    %7020 = vmatprep.mubr.bf16.mxu0 0
    %7021 = vmatmul.mubr.bf16.gmra.mrb[0].mxu0 %v6977
    %v7022 = vpop.f32.mrb[0].mxu0
    %v7023 = vadd.f32 0.0, %v7022
    %v7024 = vpop.f32.mrb[0].mxu0
    %v7025 = vpop.f32.mrb[0].mxu0
    %v7026 = vadd.f32 0.0, %v7025
    %v7027 = vpop.f32.mrb[0].mxu0
    %7028 = vmatprep.mubr.bf16.mxu0 0
    %7029 = vmatmul.mubr.bf16.gmra.mrb[0].mxu0 %v6980
    %v7030 = vpop.f32.mrb[0].mxu0
    %v7031 = vadd.f32 0.0, %v7030
    %v7032 = vpop.f32.mrb[0].mxu0
    %v7033 = vpop.f32.mrb[0].mxu0
    %v7034 = vadd.f32 0.0, %v7033
    %v7035 = vpop.f32.mrb[0].mxu0
    %7036 = vmatprep.mubr.bf16.mxu0 0
    %7037 = vmatmul.mubr.bf16.gmra.mrb[0].mxu0 %v6983
    %v7038 = vpop.f32.mrb[0].mxu0
    %v7039 = vadd.f32 0.0, %v7038
    %v7040 = vpop.f32.mrb[0].mxu0
    %v7041 = vpop.f32.mrb[0].mxu0
    %v7042 = vadd.f32 0.0, %v7041
    %v7043 = vpop.f32.mrb[0].mxu0
    %7044 = vmatprep.mubr.bf16.mxu0 0
    %7045 = vmatmul.mubr.bf16.gmra.mrb[0].mxu0 %v6986
    %v7046 = vpop.f32.mrb[0].mxu0
    %v7047 = vadd.f32 0.0, %v7046
    %v7048 = vpop.f32.mrb[0].mxu0
    %v7049 = vpop.f32.mrb[0].mxu0
    %v7050 = vadd.f32 0.0, %v7049
    %v7051 = vpop.f32.mrb[0].mxu0
    %7052 = vdwg.mxu0
    %v7053 = vadd.f32 %v6944, %v7023
    %v7054 = vadd.f32 %v6945, %v7026
    %v7055 = vadd.f32 %v6946, %v7031
    %v7056 = vadd.f32 %v6947, %v7034
    %v7057 = vadd.f32 %v6948, %v7039
    %v7058 = vadd.f32 %v6949, %v7042
    %v7059 = vadd.f32 %v6950, %v7047
    %v7060 = vadd.f32 %v6951, %v7050
    %v7061 = vpack.c.bf16 %v4127, %v6358
    %v7062 = vld [vmem:[#allocation19 + $0x60] sm:$0xf]
    %v7063 = vld [vmem:[#allocation19 + $0x64] sm:$0xf]
    %v7064 = vld [vmem:[#allocation19 + $0x68] sm:$0xf]
    %v7065 = vld [vmem:[#allocation19 + $0x6c] sm:$0xf]
    %v7070 = vunpack.c.l.b16 %v7062
    %v7071 = vunpack.c.l.b16 %v7063
    %v7072 = vunpack.c.l.b16 %v7064
    %v7073 = vunpack.c.l.b16 %v7065
    %v7074 = vpack.c.b16 %v7071, %v7070
    %v7075 = vpack.c.b16 %v7073, %v7072
    %v7079 = vsel %vm257, %v7061, 0
    %7081 = vmatprep.subr.bf16.mxu0 0
    %7082 = vmatpush1.bf16.msra.mxu0 %v7074
    %7083 = vmatprep.subr.bf16.mxu0 0
    %7084 = vmatpush1.bf16.msra.mxu0 %v7075
    %7085 = vmatprep.subr.bf16.mxu0 0
    %7086 = vmatpush1.bf16.msra.mxu0 0
    %7087 = vmatprep.subr.bf16.mxu0 0
    %7088 = vmatpush1.bf16.msra.mxu0 0
    %7089 = vmatprep.subr.bf16.mxu0 0
    %7090 = vmatpush1.bf16.msra.mxu0 0
    %7091 = vmatprep.subr.bf16.mxu0 0
    %7092 = vmatpush1.bf16.msra.mxu0 0
    %7093 = vmatprep.subr.bf16.mxu0 0
    %7094 = vmatpush1.bf16.msra.mxu0 0
    %7095 = vmatprep.subr.bf16.mxu0 0
    %7096 = vmatpush1.bf16.msra.mxu0 0
    %7097 = vmatprep.subr.bf16.mxu0 0
    %7098 = vmatpush1.bf16.msra.mxu0 0
    %7099 = vmatprep.subr.bf16.mxu0 0
    %7100 = vmatpush1.bf16.msra.mxu0 0
    %7101 = vmatprep.subr.bf16.mxu0 0
    %7102 = vmatpush1.bf16.msra.mxu0 0
    %7103 = vmatprep.subr.bf16.mxu0 0
    %7104 = vmatpush1.bf16.msra.mxu0 0
    %7105 = vmatprep.subr.bf16.mxu0 0
    %7106 = vmatpush1.bf16.msra.mxu0 0
    %7107 = vmatprep.subr.bf16.mxu0 0
    %7108 = vmatpush1.bf16.msra.mxu0 0
    %7109 = vmatprep.subr.bf16.mxu0 0
    %7110 = vmatpush1.bf16.msra.mxu0 0
    %7111 = vmatprep.subr.bf16.mxu0 0
    %7112 = vmatpush1.bf16.msra.mxu0 0
    %7113 = vmatprep.mubr.bf16.mxu0 0
    %7114 = vmatmul.mubr.bf16.gmra.mrb[0].mxu0 %v6530
    %v7115 = vpop.f32.mrb[0].mxu0
    %v7116 = vadd.f32 0.0, %v7115
    %v7117 = vpop.f32.mrb[0].mxu0
    %v7118 = vpop.f32.mrb[0].mxu0
    %v7119 = vadd.f32 0.0, %v7118
    %v7120 = vpop.f32.mrb[0].mxu0
    %7121 = vmatprep.mubr.bf16.mxu0 0
    %7122 = vmatmul.mubr.bf16.gmra.mrb[0].mxu0 %v6533
    %v7123 = vpop.f32.mrb[0].mxu0
    %v7124 = vadd.f32 0.0, %v7123
    %v7125 = vpop.f32.mrb[0].mxu0
    %v7126 = vpop.f32.mrb[0].mxu0
    %v7127 = vadd.f32 0.0, %v7126
    %v7128 = vpop.f32.mrb[0].mxu0
    %7129 = vmatprep.mubr.bf16.mxu0 0
    %7130 = vmatmul.mubr.bf16.gmra.mrb[0].mxu0 %v6536
    %v7131 = vpop.f32.mrb[0].mxu0
    %v7132 = vadd.f32 0.0, %v7131
    %v7133 = vpop.f32.mrb[0].mxu0
    %v7134 = vpop.f32.mrb[0].mxu0
    %v7135 = vadd.f32 0.0, %v7134
    %v7136 = vpop.f32.mrb[0].mxu0
    %7137 = vmatprep.mubr.bf16.mxu0 0
    %7138 = vmatmul.mubr.bf16.gmra.mrb[0].mxu0 %v7079
    %v7139 = vpop.f32.mrb[0].mxu0
    %v7140 = vadd.f32 0.0, %v7139
    %v7141 = vpop.f32.mrb[0].mxu0
    %v7142 = vpop.f32.mrb[0].mxu0
    %v7143 = vadd.f32 0.0, %v7142
    %v7144 = vpop.f32.mrb[0].mxu0
    %7145 = vdwg.mxu0
    %v7146 = vadd.f32 %v7053, %v7116
    %v7147 = vadd.f32 %v7054, %v7119
    %v7148 = vadd.f32 %v7055, %v7124
    %v7149 = vadd.f32 %v7056, %v7127
    %v7150 = vadd.f32 %v7057, %v7132
    %v7151 = vadd.f32 %v7058, %v7135
    %v7152 = vadd.f32 %v7059, %v7140
    %v7153 = vadd.f32 %v7060, %v7143
    %v7154 = vpack.c.bf16 %v4172, %v6845
    %v7155 = vld [vmem:[#allocation19 + $0x70] sm:$0xf]
    %v7156 = vld [vmem:[#allocation19 + $0x74] sm:$0xf]
    %v7157 = vld [vmem:[#allocation19 + $0x78] sm:$0xf]
    %v7158 = vld [vmem:[#allocation19 + $0x7c] sm:$0xf]
    %v7163 = vunpack.c.l.b16 %v7155
    %v7164 = vunpack.c.l.b16 %v7156
    %v7165 = vunpack.c.l.b16 %v7157
    %v7166 = vunpack.c.l.b16 %v7158
    %v7167 = vpack.c.b16 %v7164, %v7163
    %v7168 = vpack.c.b16 %v7166, %v7165
    %v7172 = vsel %vm257, %v7154, 0
    %7174 = vmatprep.subr.bf16.mxu0 0
    %7175 = vmatpush1.bf16.msra.mxu0 %v7167
    %7176 = vmatprep.subr.bf16.mxu0 0
    %7177 = vmatpush1.bf16.msra.mxu0 %v7168
    %7178 = vmatprep.subr.bf16.mxu0 0
    %7179 = vmatpush1.bf16.msra.mxu0 0
    %7180 = vmatprep.subr.bf16.mxu0 0
    %7181 = vmatpush1.bf16.msra.mxu0 0
    %7182 = vmatprep.subr.bf16.mxu0 0
    %7183 = vmatpush1.bf16.msra.mxu0 0
    %7184 = vmatprep.subr.bf16.mxu0 0
    %7185 = vmatpush1.bf16.msra.mxu0 0
    %7186 = vmatprep.subr.bf16.mxu0 0
    %7187 = vmatpush1.bf16.msra.mxu0 0
    %7188 = vmatprep.subr.bf16.mxu0 0
    %7189 = vmatpush1.bf16.msra.mxu0 0
    %7190 = vmatprep.subr.bf16.mxu0 0
    %7191 = vmatpush1.bf16.msra.mxu0 0
    %7192 = vmatprep.subr.bf16.mxu0 0
    %7193 = vmatpush1.bf16.msra.mxu0 0
    %7194 = vmatprep.subr.bf16.mxu0 0
    %7195 = vmatpush1.bf16.msra.mxu0 0
    %7196 = vmatprep.subr.bf16.mxu0 0
    %7197 = vmatpush1.bf16.msra.mxu0 0
    %7198 = vmatprep.subr.bf16.mxu0 0
    %7199 = vmatpush1.bf16.msra.mxu0 0
    %7200 = vmatprep.subr.bf16.mxu0 0
    %7201 = vmatpush1.bf16.msra.mxu0 0
    %7202 = vmatprep.subr.bf16.mxu0 0
    %7203 = vmatpush1.bf16.msra.mxu0 0
    %7204 = vmatprep.subr.bf16.mxu0 0
    %7205 = vmatpush1.bf16.msra.mxu0 0
    %7206 = vmatprep.mubr.bf16.mxu0 0
    %7207 = vmatmul.mubr.bf16.gmra.mrb[0].mxu0 %v6441
    %v7208 = vpop.f32.mrb[0].mxu0
    %v7209 = vadd.f32 0.0, %v7208
    %v7210 = vpop.f32.mrb[0].mxu0
    %v7211 = vpop.f32.mrb[0].mxu0
    %v7212 = vadd.f32 0.0, %v7211
    %v7213 = vpop.f32.mrb[0].mxu0
    %7214 = vmatprep.mubr.bf16.mxu0 0
    %7215 = vmatmul.mubr.bf16.gmra.mrb[0].mxu0 %v6444
    %v7216 = vpop.f32.mrb[0].mxu0
    %v7217 = vadd.f32 0.0, %v7216
    %v7218 = vpop.f32.mrb[0].mxu0
    %v7219 = vpop.f32.mrb[0].mxu0
    %v7220 = vadd.f32 0.0, %v7219
    %v7221 = vpop.f32.mrb[0].mxu0
    %7222 = vmatprep.mubr.bf16.mxu0 0
    %7223 = vmatmul.mubr.bf16.gmra.mrb[0].mxu0 %v6447
    %v7224 = vpop.f32.mrb[0].mxu0
    %v7225 = vadd.f32 0.0, %v7224
    %v7226 = vpop.f32.mrb[0].mxu0
    %v7227 = vpop.f32.mrb[0].mxu0
    %v7228 = vadd.f32 0.0, %v7227
    %v7229 = vpop.f32.mrb[0].mxu0
    %7230 = vmatprep.mubr.bf16.mxu0 0
    %7231 = vmatmul.mubr.bf16.gmra.mrb[0].mxu0 %v7172
    %v7232 = vpop.f32.mrb[0].mxu0
    %v7233 = vadd.f32 0.0, %v7232
    %v7234 = vpop.f32.mrb[0].mxu0
    %v7235 = vpop.f32.mrb[0].mxu0
    %v7236 = vadd.f32 0.0, %v7235
    %v7237 = vpop.f32.mrb[0].mxu0
    %7238 = vdwg.mxu0
    %v7239 = vadd.f32 %v7146, %v7209
    %v7240 = vadd.f32 %v7147, %v7212
    %v7241 = vadd.f32 %v7148, %v7217
    %v7242 = vadd.f32 %v7149, %v7220
    %v7243 = vadd.f32 %v7150, %v7225
    %v7244 = vadd.f32 %v7151, %v7228
    %v7245 = vadd.f32 %v7152, %v7233
    %v7246 = vadd.f32 %v7153, %v7236
    %v7247 = vpack.c.bf16 %v4391, %v6954
    %v7248 = vld [vmem:[#allocation19 + $0x80] sm:$0xf]
    %v7249 = vld [vmem:[#allocation19 + $0x84] sm:$0xf]
    %v7250 = vld [vmem:[#allocation19 + $0x88] sm:$0xf]
    %v7251 = vld [vmem:[#allocation19 + $0x8c] sm:$0xf]
    %v7256 = vunpack.c.l.b16 %v7248
    %v7257 = vunpack.c.l.b16 %v7249
    %v7258 = vunpack.c.l.b16 %v7250
    %v7259 = vunpack.c.l.b16 %v7251
    %v7260 = vpack.c.b16 %v7257, %v7256
    %v7261 = vpack.c.b16 %v7259, %v7258
    %v7265 = vsel %vm257, %v7247, 0
    %7267 = vmatprep.subr.bf16.mxu0 0
    %7268 = vmatpush1.bf16.msra.mxu0 %v7260
    %7269 = vmatprep.subr.bf16.mxu0 0
    %7270 = vmatpush1.bf16.msra.mxu0 %v7261
    %7271 = vmatprep.subr.bf16.mxu0 0
    %7272 = vmatpush1.bf16.msra.mxu0 0
    %7273 = vmatprep.subr.bf16.mxu0 0
    %7274 = vmatpush1.bf16.msra.mxu0 0
    %7275 = vmatprep.subr.bf16.mxu0 0
    %7276 = vmatpush1.bf16.msra.mxu0 0
    %7277 = vmatprep.subr.bf16.mxu0 0
    %7278 = vmatpush1.bf16.msra.mxu0 0
    %7279 = vmatprep.subr.bf16.mxu0 0
    %7280 = vmatpush1.bf16.msra.mxu0 0
    %7281 = vmatprep.subr.bf16.mxu0 0
    %7282 = vmatpush1.bf16.msra.mxu0 0
    %7283 = vmatprep.subr.bf16.mxu0 0
    %7284 = vmatpush1.bf16.msra.mxu0 0
    %7285 = vmatprep.subr.bf16.mxu0 0
    %7286 = vmatpush1.bf16.msra.mxu0 0
    %7287 = vmatprep.subr.bf16.mxu0 0
    %7288 = vmatpush1.bf16.msra.mxu0 0
    %7289 = vmatprep.subr.bf16.mxu0 0
    %7290 = vmatpush1.bf16.msra.mxu0 0
    %7291 = vmatprep.subr.bf16.mxu0 0
    %7292 = vmatpush1.bf16.msra.mxu0 0
    %7293 = vmatprep.subr.bf16.mxu0 0
    %7294 = vmatpush1.bf16.msra.mxu0 0
    %7295 = vmatprep.subr.bf16.mxu0 0
    %7296 = vmatpush1.bf16.msra.mxu0 0
    %7297 = vmatprep.subr.bf16.mxu0 0
    %7298 = vmatpush1.bf16.msra.mxu0 0
    %7299 = vmatprep.mubr.bf16.mxu0 0
    %7300 = vmatmul.mubr.bf16.gmra.mrb[0].mxu0 %v6655
    %v7301 = vpop.f32.mrb[0].mxu0
    %v7302 = vadd.f32 0.0, %v7301
    %v7303 = vpop.f32.mrb[0].mxu0
    %v7304 = vpop.f32.mrb[0].mxu0
    %v7305 = vadd.f32 0.0, %v7304
    %v7306 = vpop.f32.mrb[0].mxu0
    %7307 = vmatprep.mubr.bf16.mxu0 0
    %7308 = vmatmul.mubr.bf16.gmra.mrb[0].mxu0 %v6658
    %v7309 = vpop.f32.mrb[0].mxu0
    %v7310 = vadd.f32 0.0, %v7309
    %v7311 = vpop.f32.mrb[0].mxu0
    %v7312 = vpop.f32.mrb[0].mxu0
    %v7313 = vadd.f32 0.0, %v7312
    %v7314 = vpop.f32.mrb[0].mxu0
    %7315 = vmatprep.mubr.bf16.mxu0 0
    %7316 = vmatmul.mubr.bf16.gmra.mrb[0].mxu0 %v6661
    %v7317 = vpop.f32.mrb[0].mxu0
    %v7318 = vadd.f32 0.0, %v7317
    %v7319 = vpop.f32.mrb[0].mxu0
    %v7320 = vpop.f32.mrb[0].mxu0
    %v7321 = vadd.f32 0.0, %v7320
    %v7322 = vpop.f32.mrb[0].mxu0
    %7323 = vmatprep.mubr.bf16.mxu0 0
    %7324 = vmatmul.mubr.bf16.gmra.mrb[0].mxu0 %v7265
    %v7325 = vpop.f32.mrb[0].mxu0
    %v7326 = vadd.f32 0.0, %v7325
    %v7327 = vpop.f32.mrb[0].mxu0
    %v7328 = vpop.f32.mrb[0].mxu0
    %v7329 = vadd.f32 0.0, %v7328
    %v7330 = vpop.f32.mrb[0].mxu0
    %7331 = vdwg.mxu0
    %v7332 = vadd.f32 %v7239, %v7302
    %v7333 = vadd.f32 %v7240, %v7305
    %v7334 = vadd.f32 %v7241, %v7310
    %v7335 = vadd.f32 %v7242, %v7313
    %v7336 = vadd.f32 %v7243, %v7318
    %v7337 = vadd.f32 %v7244, %v7321
    %v7338 = vadd.f32 %v7245, %v7326
    %v7339 = vadd.f32 %v7246, %v7329
    %v7340 = vadd.f32 %v7332, %v5133
    %v7341 = vadd.f32 %v7333, %v5133
    %v7342 = vadd.f32 %v7334, %v5133
    %v7343 = vadd.f32 %v7335, %v5133
    %v7344 = vadd.f32 %v7336, %v5133
    %v7345 = vadd.f32 %v7337, %v5133
    %v7346 = vadd.f32 %v7338, %v5133
    %v7347 = vadd.f32 %v7339, %v5133
    %v7348 = vmax.f32 %v7340, 0.0
    %v7349 = vmax.f32 %v7341, 0.0
    %v7350 = vmax.f32 %v7342, 0.0
    %v7351 = vmax.f32 %v7343, 0.0
    %v7352 = vmax.f32 %v7344, 0.0
    %v7353 = vmax.f32 %v7345, 0.0
    %v7354 = vmax.f32 %v7346, 0.0
    %v7355 = vmax.f32 %v7347, 0.0
    %v7364 = vrot.slane %v7348, 7
    %v7365 = vrot.slane %v7349, 7
    %v7366 = vrot.slane %v7350, 7
    %v7367 = vrot.slane %v7351, 7
    %v7368 = vrot.slane %v7352, 7
    %v7369 = vrot.slane %v7353, 7
    %v7370 = vrot.slane %v7354, 7
    %v7371 = vrot.slane %v7355, 7
    %v7380 = vsel %vm4126, 0.0, %v7364
    %v7381 = vsel %vm4126, 0.0, %v7365
    %v7382 = vsel %vm4126, 0.0, %v7366
    %v7383 = vsel %vm4126, 0.0, %v7367
    %v7384 = vsel %vm4126, 0.0, %v7368
    %v7385 = vsel %vm4126, 0.0, %v7369
    %v7386 = vsel %vm4126, 0.0, %v7370
    %v7387 = vsel %vm4126, 0.0, %v7371
    %v7388 = vsel %vm4126, %v7364, 0.0
    %v7389 = vsel %vm4126, %v7365, 0.0
    %v7390 = vsel %vm4126, %v7366, 0.0
    %v7391 = vsel %vm4126, %v7367, 0.0
    %v7392 = vsel %vm4126, %v7368, 0.0
    %v7393 = vsel %vm4126, %v7369, 0.0
    %v7394 = vsel %vm4126, %v7370, 0.0
    %v7395 = vsel %vm4126, %v7371, 0.0
    %v7396 = vpack.c.bf16 %v7380, %v4127
    %v7397 = vpack.c.bf16 %v7382, %v7381
    %v7398 = vpack.c.bf16 %v7384, %v7383
    %v7399 = vpack.c.bf16 %v7386, %v7385
    %v7400 = vld [vmem:[%s5194] sm:$0xf]
    %v7401 = vld [vmem:[%s5194 + $0x4] sm:$0xf]
    %v7402 = vld [vmem:[%s5194 + $0x8] sm:$0xf]
    %v7403 = vld [vmem:[%s5194 + $0xc] sm:$0xf]
    %v7418 = vrot.slane %v7380, 1
    %v7419 = vrot.slane %v7388, 1
    %v7420 = vsel %vm4169, %v7418, %v7419
    %v7421 = vrot.slane %v7381, 1
    %v7422 = vrot.slane %v7389, 1
    %v7423 = vsel %vm4169, %v7421, %v7422
    %v7424 = vrot.slane %v7382, 1
    %v7425 = vrot.slane %v7390, 1
    %v7426 = vsel %vm4169, %v7424, %v7425
    %v7427 = vrot.slane %v7383, 1
    %v7428 = vrot.slane %v7391, 1
    %v7429 = vsel %vm4169, %v7427, %v7428
    %v7430 = vrot.slane %v7384, 1
    %v7431 = vrot.slane %v7392, 1
    %v7432 = vsel %vm4169, %v7430, %v7431
    %v7433 = vrot.slane %v7385, 1
    %v7434 = vrot.slane %v7393, 1
    %v7435 = vsel %vm4169, %v7433, %v7434
    %v7436 = vrot.slane %v7386, 1
    %v7437 = vrot.slane %v7394, 1
    %v7438 = vsel %vm4169, %v7436, %v7437
    %v7446 = vpack.c.bf16 %v7420, %v4172
    %v7447 = vpack.c.bf16 %v7426, %v7423
    %v7448 = vpack.c.bf16 %v7432, %v7429
    %v7449 = vpack.c.bf16 %v7438, %v7435
    %v7450 = vld [vmem:[%s5194 + $0x10] sm:$0xf]
    %v7451 = vld [vmem:[%s5194 + $0x14] sm:$0xf]
    %v7452 = vld [vmem:[%s5194 + $0x18] sm:$0xf]
    %v7453 = vld [vmem:[%s5194 + $0x1c] sm:$0xf]
    %v7458 = vunpack.c.l.b16 %v7450
    %v7459 = vunpack.c.l.b16 %v7451
    %v7460 = vunpack.c.l.b16 %v7452
    %v7461 = vunpack.c.l.b16 %v7453
    %v7462 = vpack.c.b16 %v7459, %v7458
    %v7463 = vpack.c.b16 %v7461, %v7460
    %v7467 = vsel %vm257, %v7446, 0
    %v7470 = vsel %vm257, %v7447, 0
    %v7473 = vsel %vm257, %v7448, 0
    %v7476 = vsel %vm257, %v7449, 0
    %7478 = vmatprep.subr.bf16.mxu0 0
    %7479 = vmatpush1.bf16.msra.mxu0 %v7462
    %7480 = vmatprep.subr.bf16.mxu0 0
    %7481 = vmatpush1.bf16.msra.mxu0 %v7463
    %7482 = vmatprep.subr.bf16.mxu0 0
    %7483 = vmatpush1.bf16.msra.mxu0 0
    %7484 = vmatprep.subr.bf16.mxu0 0
    %7485 = vmatpush1.bf16.msra.mxu0 0
    %7486 = vmatprep.subr.bf16.mxu0 0
    %7487 = vmatpush1.bf16.msra.mxu0 0
    %7488 = vmatprep.subr.bf16.mxu0 0
    %7489 = vmatpush1.bf16.msra.mxu0 0
    %7490 = vmatprep.subr.bf16.mxu0 0
    %7491 = vmatpush1.bf16.msra.mxu0 0
    %7492 = vmatprep.subr.bf16.mxu0 0
    %7493 = vmatpush1.bf16.msra.mxu0 0
    %7494 = vmatprep.subr.bf16.mxu0 0
    %7495 = vmatpush1.bf16.msra.mxu0 0
    %7496 = vmatprep.subr.bf16.mxu0 0
    %7497 = vmatpush1.bf16.msra.mxu0 0
    %7498 = vmatprep.subr.bf16.mxu0 0
    %7499 = vmatpush1.bf16.msra.mxu0 0
    %7500 = vmatprep.subr.bf16.mxu0 0
    %7501 = vmatpush1.bf16.msra.mxu0 0
    %7502 = vmatprep.subr.bf16.mxu0 0
    %7503 = vmatpush1.bf16.msra.mxu0 0
    %7504 = vmatprep.subr.bf16.mxu0 0
    %7505 = vmatpush1.bf16.msra.mxu0 0
    %7506 = vmatprep.subr.bf16.mxu0 0
    %7507 = vmatpush1.bf16.msra.mxu0 0
    %7508 = vmatprep.subr.bf16.mxu0 0
    %7509 = vmatpush1.bf16.msra.mxu0 0
    %7510 = vmatprep.mubr.bf16.mxu0 0
    %7511 = vmatmul.mubr.bf16.gmra.mrb[0].mxu0 %v7467
    %v7512 = vpop.f32.mrb[0].mxu0
    %v7513 = vadd.f32 0.0, %v7512
    %v7514 = vpop.f32.mrb[0].mxu0
    %v7515 = vpop.f32.mrb[0].mxu0
    %v7516 = vadd.f32 0.0, %v7515
    %v7517 = vpop.f32.mrb[0].mxu0
    %7518 = vmatprep.mubr.bf16.mxu0 0
    %7519 = vmatmul.mubr.bf16.gmra.mrb[0].mxu0 %v7470
    %v7520 = vpop.f32.mrb[0].mxu0
    %v7521 = vadd.f32 0.0, %v7520
    %v7522 = vpop.f32.mrb[0].mxu0
    %v7523 = vpop.f32.mrb[0].mxu0
    %v7524 = vadd.f32 0.0, %v7523
    %v7525 = vpop.f32.mrb[0].mxu0
    %7526 = vmatprep.mubr.bf16.mxu0 0
    %7527 = vmatmul.mubr.bf16.gmra.mrb[0].mxu0 %v7473
    %v7528 = vpop.f32.mrb[0].mxu0
    %v7529 = vadd.f32 0.0, %v7528
    %v7530 = vpop.f32.mrb[0].mxu0
    %v7531 = vpop.f32.mrb[0].mxu0
    %v7532 = vadd.f32 0.0, %v7531
    %v7533 = vpop.f32.mrb[0].mxu0
    %7534 = vmatprep.mubr.bf16.mxu0 0
    %7535 = vmatmul.mubr.bf16.gmra.mrb[0].mxu0 %v7476
    %v7536 = vpop.f32.mrb[0].mxu0
    %v7537 = vadd.f32 0.0, %v7536
    %v7538 = vpop.f32.mrb[0].mxu0
    %v7539 = vpop.f32.mrb[0].mxu0
    %v7540 = vadd.f32 0.0, %v7539
    %v7541 = vpop.f32.mrb[0].mxu0
    %7542 = vdwg.mxu0
    %v7547 = vunpack.c.l.b16 %v7400
    %v7548 = vunpack.c.l.b16 %v7401
    %v7549 = vunpack.c.l.b16 %v7402
    %v7550 = vunpack.c.l.b16 %v7403
    %v7551 = vpack.c.b16 %v7548, %v7547
    %v7552 = vpack.c.b16 %v7550, %v7549
    %v7556 = vsel %vm257, %v7396, 0
    %v7559 = vsel %vm257, %v7397, 0
    %v7562 = vsel %vm257, %v7398, 0
    %v7565 = vsel %vm257, %v7399, 0
    %7567 = vmatprep.subr.bf16.mxu0 0
    %7568 = vmatpush1.bf16.msra.mxu0 %v7551
    %7569 = vmatprep.subr.bf16.mxu0 0
    %7570 = vmatpush1.bf16.msra.mxu0 %v7552
    %7571 = vmatprep.subr.bf16.mxu0 0
    %7572 = vmatpush1.bf16.msra.mxu0 0
    %7573 = vmatprep.subr.bf16.mxu0 0
    %7574 = vmatpush1.bf16.msra.mxu0 0
    %7575 = vmatprep.subr.bf16.mxu0 0
    %7576 = vmatpush1.bf16.msra.mxu0 0
    %7577 = vmatprep.subr.bf16.mxu0 0
    %7578 = vmatpush1.bf16.msra.mxu0 0
    %7579 = vmatprep.subr.bf16.mxu0 0
    %7580 = vmatpush1.bf16.msra.mxu0 0
    %7581 = vmatprep.subr.bf16.mxu0 0
    %7582 = vmatpush1.bf16.msra.mxu0 0
    %7583 = vmatprep.subr.bf16.mxu0 0
    %7584 = vmatpush1.bf16.msra.mxu0 0
    %7585 = vmatprep.subr.bf16.mxu0 0
    %7586 = vmatpush1.bf16.msra.mxu0 0
    %7587 = vmatprep.subr.bf16.mxu0 0
    %7588 = vmatpush1.bf16.msra.mxu0 0
    %7589 = vmatprep.subr.bf16.mxu0 0
    %7590 = vmatpush1.bf16.msra.mxu0 0
    %7591 = vmatprep.subr.bf16.mxu0 0
    %7592 = vmatpush1.bf16.msra.mxu0 0
    %7593 = vmatprep.subr.bf16.mxu0 0
    %7594 = vmatpush1.bf16.msra.mxu0 0
    %7595 = vmatprep.subr.bf16.mxu0 0
    %7596 = vmatpush1.bf16.msra.mxu0 0
    %7597 = vmatprep.subr.bf16.mxu0 0
    %7598 = vmatpush1.bf16.msra.mxu0 0
    %7599 = vmatprep.mubr.bf16.mxu0 0
    %7600 = vmatmul.mubr.bf16.gmra.mrb[0].mxu0 %v7556
    %v7601 = vpop.f32.mrb[0].mxu0
    %v7602 = vadd.f32 %v7513, %v7601
    %v7603 = vpop.f32.mrb[0].mxu0
    %v7604 = vpop.f32.mrb[0].mxu0
    %v7605 = vadd.f32 %v7516, %v7604
    %v7606 = vpop.f32.mrb[0].mxu0
    %7607 = vmatprep.mubr.bf16.mxu0 0
    %7608 = vmatmul.mubr.bf16.gmra.mrb[0].mxu0 %v7559
    %v7609 = vpop.f32.mrb[0].mxu0
    %v7610 = vadd.f32 %v7521, %v7609
    %v7611 = vpop.f32.mrb[0].mxu0
    %v7612 = vpop.f32.mrb[0].mxu0
    %v7613 = vadd.f32 %v7524, %v7612
    %v7614 = vpop.f32.mrb[0].mxu0
    %7615 = vmatprep.mubr.bf16.mxu0 0
    %7616 = vmatmul.mubr.bf16.gmra.mrb[0].mxu0 %v7562
    %v7617 = vpop.f32.mrb[0].mxu0
    %v7618 = vadd.f32 %v7529, %v7617
    %v7619 = vpop.f32.mrb[0].mxu0
    %v7620 = vpop.f32.mrb[0].mxu0
    %v7621 = vadd.f32 %v7532, %v7620
    %v7622 = vpop.f32.mrb[0].mxu0
    %7623 = vmatprep.mubr.bf16.mxu0 0
    %7624 = vmatmul.mubr.bf16.gmra.mrb[0].mxu0 %v7565
    %v7625 = vpop.f32.mrb[0].mxu0
    %v7626 = vadd.f32 %v7537, %v7625
    %v7627 = vpop.f32.mrb[0].mxu0
    %v7628 = vpop.f32.mrb[0].mxu0
    %v7629 = vadd.f32 %v7540, %v7628
    %v7630 = vpop.f32.mrb[0].mxu0
    %7631 = vdwg.mxu0
    %v7632 = vrot.slane %v7380, 2
    %v7633 = vrot.slane %v7388, 2
    %v7634 = vsel %vm4388, %v7632, %v7633
    %v7635 = vrot.slane %v7381, 2
    %v7636 = vrot.slane %v7389, 2
    %v7637 = vsel %vm4388, %v7635, %v7636
    %v7638 = vrot.slane %v7382, 2
    %v7639 = vrot.slane %v7390, 2
    %v7640 = vsel %vm4388, %v7638, %v7639
    %v7641 = vrot.slane %v7383, 2
    %v7642 = vrot.slane %v7391, 2
    %v7643 = vsel %vm4388, %v7641, %v7642
    %v7644 = vrot.slane %v7384, 2
    %v7645 = vrot.slane %v7392, 2
    %v7646 = vsel %vm4388, %v7644, %v7645
    %v7647 = vrot.slane %v7385, 2
    %v7648 = vrot.slane %v7393, 2
    %v7649 = vsel %vm4388, %v7647, %v7648
    %v7650 = vrot.slane %v7386, 2
    %v7651 = vrot.slane %v7394, 2
    %v7652 = vsel %vm4388, %v7650, %v7651
    %v7660 = vpack.c.bf16 %v7634, %v4391
    %v7661 = vpack.c.bf16 %v7640, %v7637
    %v7662 = vpack.c.bf16 %v7646, %v7643
    %v7663 = vpack.c.bf16 %v7652, %v7649
    %v7664 = vld [vmem:[%s5194 + $0x20] sm:$0xf]
    %v7665 = vld [vmem:[%s5194 + $0x24] sm:$0xf]
    %v7666 = vld [vmem:[%s5194 + $0x28] sm:$0xf]
    %v7667 = vld [vmem:[%s5194 + $0x2c] sm:$0xf]
    %v7672 = vunpack.c.l.b16 %v7664
    %v7673 = vunpack.c.l.b16 %v7665
    %v7674 = vunpack.c.l.b16 %v7666
    %v7675 = vunpack.c.l.b16 %v7667
    %v7676 = vpack.c.b16 %v7673, %v7672
    %v7677 = vpack.c.b16 %v7675, %v7674
    %v7681 = vsel %vm257, %v7660, 0
    %v7684 = vsel %vm257, %v7661, 0
    %v7687 = vsel %vm257, %v7662, 0
    %v7690 = vsel %vm257, %v7663, 0
    %7692 = vmatprep.subr.bf16.mxu0 0
    %7693 = vmatpush1.bf16.msra.mxu0 %v7676
    %7694 = vmatprep.subr.bf16.mxu0 0
    %7695 = vmatpush1.bf16.msra.mxu0 %v7677
    %7696 = vmatprep.subr.bf16.mxu0 0
    %7697 = vmatpush1.bf16.msra.mxu0 0
    %7698 = vmatprep.subr.bf16.mxu0 0
    %7699 = vmatpush1.bf16.msra.mxu0 0
    %7700 = vmatprep.subr.bf16.mxu0 0
    %7701 = vmatpush1.bf16.msra.mxu0 0
    %7702 = vmatprep.subr.bf16.mxu0 0
    %7703 = vmatpush1.bf16.msra.mxu0 0
    %7704 = vmatprep.subr.bf16.mxu0 0
    %7705 = vmatpush1.bf16.msra.mxu0 0
    %7706 = vmatprep.subr.bf16.mxu0 0
    %7707 = vmatpush1.bf16.msra.mxu0 0
    %7708 = vmatprep.subr.bf16.mxu0 0
    %7709 = vmatpush1.bf16.msra.mxu0 0
    %7710 = vmatprep.subr.bf16.mxu0 0
    %7711 = vmatpush1.bf16.msra.mxu0 0
    %7712 = vmatprep.subr.bf16.mxu0 0
    %7713 = vmatpush1.bf16.msra.mxu0 0
    %7714 = vmatprep.subr.bf16.mxu0 0
    %7715 = vmatpush1.bf16.msra.mxu0 0
    %7716 = vmatprep.subr.bf16.mxu0 0
    %7717 = vmatpush1.bf16.msra.mxu0 0
    %7718 = vmatprep.subr.bf16.mxu0 0
    %7719 = vmatpush1.bf16.msra.mxu0 0
    %7720 = vmatprep.subr.bf16.mxu0 0
    %7721 = vmatpush1.bf16.msra.mxu0 0
    %7722 = vmatprep.subr.bf16.mxu0 0
    %7723 = vmatpush1.bf16.msra.mxu0 0
    %7724 = vmatprep.mubr.bf16.mxu0 0
    %7725 = vmatmul.mubr.bf16.gmra.mrb[0].mxu0 %v7681
    %v7726 = vpop.f32.mrb[0].mxu0
    %v7727 = vadd.f32 0.0, %v7726
    %v7728 = vpop.f32.mrb[0].mxu0
    %v7729 = vpop.f32.mrb[0].mxu0
    %v7730 = vadd.f32 0.0, %v7729
    %v7731 = vpop.f32.mrb[0].mxu0
    %7732 = vmatprep.mubr.bf16.mxu0 0
    %7733 = vmatmul.mubr.bf16.gmra.mrb[0].mxu0 %v7684
    %v7734 = vpop.f32.mrb[0].mxu0
    %v7735 = vadd.f32 0.0, %v7734
    %v7736 = vpop.f32.mrb[0].mxu0
    %v7737 = vpop.f32.mrb[0].mxu0
    %v7738 = vadd.f32 0.0, %v7737
    %v7739 = vpop.f32.mrb[0].mxu0
    %7740 = vmatprep.mubr.bf16.mxu0 0
    %7741 = vmatmul.mubr.bf16.gmra.mrb[0].mxu0 %v7687
    %v7742 = vpop.f32.mrb[0].mxu0
    %v7743 = vadd.f32 0.0, %v7742
    %v7744 = vpop.f32.mrb[0].mxu0
    %v7745 = vpop.f32.mrb[0].mxu0
    %v7746 = vadd.f32 0.0, %v7745
    %v7747 = vpop.f32.mrb[0].mxu0
    %7748 = vmatprep.mubr.bf16.mxu0 0
    %7749 = vmatmul.mubr.bf16.gmra.mrb[0].mxu0 %v7690
    %v7750 = vpop.f32.mrb[0].mxu0
    %v7751 = vadd.f32 0.0, %v7750
    %v7752 = vpop.f32.mrb[0].mxu0
    %v7753 = vpop.f32.mrb[0].mxu0
    %v7754 = vadd.f32 0.0, %v7753
    %v7755 = vpop.f32.mrb[0].mxu0
    %7756 = vdwg.mxu0
    %v7757 = vadd.f32 %v7602, %v7727
    %v7758 = vadd.f32 %v7605, %v7730
    %v7759 = vadd.f32 %v7610, %v7735
    %v7760 = vadd.f32 %v7613, %v7738
    %v7761 = vadd.f32 %v7618, %v7743
    %v7762 = vadd.f32 %v7621, %v7746
    %v7763 = vadd.f32 %v7626, %v7751
    %v7764 = vadd.f32 %v7629, %v7754
    %v7765 = vpack.c.bf16 %v7381, %v7380
    %v7766 = vpack.c.bf16 %v7383, %v7382
    %v7767 = vpack.c.bf16 %v7385, %v7384
    %v7768 = vpack.c.bf16 %v7387, %v7386
    %v7769 = vld [vmem:[%s5194 + $0x30] sm:$0xf]
    %v7770 = vld [vmem:[%s5194 + $0x34] sm:$0xf]
    %v7771 = vld [vmem:[%s5194 + $0x38] sm:$0xf]
    %v7772 = vld [vmem:[%s5194 + $0x3c] sm:$0xf]
    %v7777 = vunpack.c.l.b16 %v7769
    %v7778 = vunpack.c.l.b16 %v7770
    %v7779 = vunpack.c.l.b16 %v7771
    %v7780 = vunpack.c.l.b16 %v7772
    %v7781 = vpack.c.b16 %v7778, %v7777
    %v7782 = vpack.c.b16 %v7780, %v7779
    %v7786 = vsel %vm257, %v7765, 0
    %v7789 = vsel %vm257, %v7766, 0
    %v7792 = vsel %vm257, %v7767, 0
    %v7795 = vsel %vm257, %v7768, 0
    %7797 = vmatprep.subr.bf16.mxu0 0
    %7798 = vmatpush1.bf16.msra.mxu0 %v7781
    %7799 = vmatprep.subr.bf16.mxu0 0
    %7800 = vmatpush1.bf16.msra.mxu0 %v7782
    %7801 = vmatprep.subr.bf16.mxu0 0
    %7802 = vmatpush1.bf16.msra.mxu0 0
    %7803 = vmatprep.subr.bf16.mxu0 0
    %7804 = vmatpush1.bf16.msra.mxu0 0
    %7805 = vmatprep.subr.bf16.mxu0 0
    %7806 = vmatpush1.bf16.msra.mxu0 0
    %7807 = vmatprep.subr.bf16.mxu0 0
    %7808 = vmatpush1.bf16.msra.mxu0 0
    %7809 = vmatprep.subr.bf16.mxu0 0
    %7810 = vmatpush1.bf16.msra.mxu0 0
    %7811 = vmatprep.subr.bf16.mxu0 0
    %7812 = vmatpush1.bf16.msra.mxu0 0
    %7813 = vmatprep.subr.bf16.mxu0 0
    %7814 = vmatpush1.bf16.msra.mxu0 0
    %7815 = vmatprep.subr.bf16.mxu0 0
    %7816 = vmatpush1.bf16.msra.mxu0 0
    %7817 = vmatprep.subr.bf16.mxu0 0
    %7818 = vmatpush1.bf16.msra.mxu0 0
    %7819 = vmatprep.subr.bf16.mxu0 0
    %7820 = vmatpush1.bf16.msra.mxu0 0
    %7821 = vmatprep.subr.bf16.mxu0 0
    %7822 = vmatpush1.bf16.msra.mxu0 0
    %7823 = vmatprep.subr.bf16.mxu0 0
    %7824 = vmatpush1.bf16.msra.mxu0 0
    %7825 = vmatprep.subr.bf16.mxu0 0
    %7826 = vmatpush1.bf16.msra.mxu0 0
    %7827 = vmatprep.subr.bf16.mxu0 0
    %7828 = vmatpush1.bf16.msra.mxu0 0
    %7829 = vmatprep.mubr.bf16.mxu0 0
    %7830 = vmatmul.mubr.bf16.gmra.mrb[0].mxu0 %v7786
    %v7831 = vpop.f32.mrb[0].mxu0
    %v7832 = vadd.f32 0.0, %v7831
    %v7833 = vpop.f32.mrb[0].mxu0
    %v7834 = vpop.f32.mrb[0].mxu0
    %v7835 = vadd.f32 0.0, %v7834
    %v7836 = vpop.f32.mrb[0].mxu0
    %7837 = vmatprep.mubr.bf16.mxu0 0
    %7838 = vmatmul.mubr.bf16.gmra.mrb[0].mxu0 %v7789
    %v7839 = vpop.f32.mrb[0].mxu0
    %v7840 = vadd.f32 0.0, %v7839
    %v7841 = vpop.f32.mrb[0].mxu0
    %v7842 = vpop.f32.mrb[0].mxu0
    %v7843 = vadd.f32 0.0, %v7842
    %v7844 = vpop.f32.mrb[0].mxu0
    %7845 = vmatprep.mubr.bf16.mxu0 0
    %7846 = vmatmul.mubr.bf16.gmra.mrb[0].mxu0 %v7792
    %v7847 = vpop.f32.mrb[0].mxu0
    %v7848 = vadd.f32 0.0, %v7847
    %v7849 = vpop.f32.mrb[0].mxu0
    %v7850 = vpop.f32.mrb[0].mxu0
    %v7851 = vadd.f32 0.0, %v7850
    %v7852 = vpop.f32.mrb[0].mxu0
    %7853 = vmatprep.mubr.bf16.mxu0 0
    %7854 = vmatmul.mubr.bf16.gmra.mrb[0].mxu0 %v7795
    %v7855 = vpop.f32.mrb[0].mxu0
    %v7856 = vadd.f32 0.0, %v7855
    %v7857 = vpop.f32.mrb[0].mxu0
    %v7858 = vpop.f32.mrb[0].mxu0
    %v7859 = vadd.f32 0.0, %v7858
    %v7860 = vpop.f32.mrb[0].mxu0
    %7861 = vdwg.mxu0
    %v7862 = vadd.f32 %v7757, %v7832
    %v7863 = vadd.f32 %v7758, %v7835
    %v7864 = vadd.f32 %v7759, %v7840
    %v7865 = vadd.f32 %v7760, %v7843
    %v7866 = vadd.f32 %v7761, %v7848
    %v7867 = vadd.f32 %v7762, %v7851
    %v7868 = vadd.f32 %v7763, %v7856
    %v7869 = vadd.f32 %v7764, %v7859
    %v7872 = vrot.slane %v7387, 1
    %v7873 = vrot.slane %v7395, 1
    %v7874 = vsel %vm4169, %v7872, %v7873
    %v7876 = vpack.c.bf16 %v7423, %v7420
    %v7877 = vpack.c.bf16 %v7429, %v7426
    %v7878 = vpack.c.bf16 %v7435, %v7432
    %v7879 = vpack.c.bf16 %v7874, %v7438
    %v7880 = vld [vmem:[%s5194 + $0x40] sm:$0xf]
    %v7881 = vld [vmem:[%s5194 + $0x44] sm:$0xf]
    %v7882 = vld [vmem:[%s5194 + $0x48] sm:$0xf]
    %v7883 = vld [vmem:[%s5194 + $0x4c] sm:$0xf]
    %v7888 = vunpack.c.l.b16 %v7880
    %v7889 = vunpack.c.l.b16 %v7881
    %v7890 = vunpack.c.l.b16 %v7882
    %v7891 = vunpack.c.l.b16 %v7883
    %v7892 = vpack.c.b16 %v7889, %v7888
    %v7893 = vpack.c.b16 %v7891, %v7890
    %v7897 = vsel %vm257, %v7876, 0
    %v7900 = vsel %vm257, %v7877, 0
    %v7903 = vsel %vm257, %v7878, 0
    %v7906 = vsel %vm257, %v7879, 0
    %7908 = vmatprep.subr.bf16.mxu0 0
    %7909 = vmatpush1.bf16.msra.mxu0 %v7892
    %7910 = vmatprep.subr.bf16.mxu0 0
    %7911 = vmatpush1.bf16.msra.mxu0 %v7893
    %7912 = vmatprep.subr.bf16.mxu0 0
    %7913 = vmatpush1.bf16.msra.mxu0 0
    %7914 = vmatprep.subr.bf16.mxu0 0
    %7915 = vmatpush1.bf16.msra.mxu0 0
    %7916 = vmatprep.subr.bf16.mxu0 0
    %7917 = vmatpush1.bf16.msra.mxu0 0
    %7918 = vmatprep.subr.bf16.mxu0 0
    %7919 = vmatpush1.bf16.msra.mxu0 0
    %7920 = vmatprep.subr.bf16.mxu0 0
    %7921 = vmatpush1.bf16.msra.mxu0 0
    %7922 = vmatprep.subr.bf16.mxu0 0
    %7923 = vmatpush1.bf16.msra.mxu0 0
    %7924 = vmatprep.subr.bf16.mxu0 0
    %7925 = vmatpush1.bf16.msra.mxu0 0
    %7926 = vmatprep.subr.bf16.mxu0 0
    %7927 = vmatpush1.bf16.msra.mxu0 0
    %7928 = vmatprep.subr.bf16.mxu0 0
    %7929 = vmatpush1.bf16.msra.mxu0 0
    %7930 = vmatprep.subr.bf16.mxu0 0
    %7931 = vmatpush1.bf16.msra.mxu0 0
    %7932 = vmatprep.subr.bf16.mxu0 0
    %7933 = vmatpush1.bf16.msra.mxu0 0
    %7934 = vmatprep.subr.bf16.mxu0 0
    %7935 = vmatpush1.bf16.msra.mxu0 0
    %7936 = vmatprep.subr.bf16.mxu0 0
    %7937 = vmatpush1.bf16.msra.mxu0 0
    %7938 = vmatprep.subr.bf16.mxu0 0
    %7939 = vmatpush1.bf16.msra.mxu0 0
    %7940 = vmatprep.mubr.bf16.mxu0 0
    %7941 = vmatmul.mubr.bf16.gmra.mrb[0].mxu0 %v7897
    %v7942 = vpop.f32.mrb[0].mxu0
    %v7943 = vadd.f32 0.0, %v7942
    %v7944 = vpop.f32.mrb[0].mxu0
    %v7945 = vpop.f32.mrb[0].mxu0
    %v7946 = vadd.f32 0.0, %v7945
    %v7947 = vpop.f32.mrb[0].mxu0
    %7948 = vmatprep.mubr.bf16.mxu0 0
    %7949 = vmatmul.mubr.bf16.gmra.mrb[0].mxu0 %v7900
    %v7950 = vpop.f32.mrb[0].mxu0
    %v7951 = vadd.f32 0.0, %v7950
    %v7952 = vpop.f32.mrb[0].mxu0
    %v7953 = vpop.f32.mrb[0].mxu0
    %v7954 = vadd.f32 0.0, %v7953
    %v7955 = vpop.f32.mrb[0].mxu0
    %7956 = vmatprep.mubr.bf16.mxu0 0
    %7957 = vmatmul.mubr.bf16.gmra.mrb[0].mxu0 %v7903
    %v7958 = vpop.f32.mrb[0].mxu0
    %v7959 = vadd.f32 0.0, %v7958
    %v7960 = vpop.f32.mrb[0].mxu0
    %v7961 = vpop.f32.mrb[0].mxu0
    %v7962 = vadd.f32 0.0, %v7961
    %v7963 = vpop.f32.mrb[0].mxu0
    %7964 = vmatprep.mubr.bf16.mxu0 0
    %7965 = vmatmul.mubr.bf16.gmra.mrb[0].mxu0 %v7906
    %v7966 = vpop.f32.mrb[0].mxu0
    %v7967 = vadd.f32 0.0, %v7966
    %v7968 = vpop.f32.mrb[0].mxu0
    %v7969 = vpop.f32.mrb[0].mxu0
    %v7970 = vadd.f32 0.0, %v7969
    %v7971 = vpop.f32.mrb[0].mxu0
    %7972 = vdwg.mxu0
    %v7973 = vadd.f32 %v7862, %v7943
    %v7974 = vadd.f32 %v7863, %v7946
    %v7975 = vadd.f32 %v7864, %v7951
    %v7976 = vadd.f32 %v7865, %v7954
    %v7977 = vadd.f32 %v7866, %v7959
    %v7978 = vadd.f32 %v7867, %v7962
    %v7979 = vadd.f32 %v7868, %v7967
    %v7980 = vadd.f32 %v7869, %v7970
    %v7981 = vrot.slane %v7387, 2
    %v7982 = vrot.slane %v7395, 2
    %v7983 = vsel %vm4388, %v7981, %v7982
    %v7985 = vpack.c.bf16 %v7637, %v7634
    %v7986 = vpack.c.bf16 %v7643, %v7640
    %v7987 = vpack.c.bf16 %v7649, %v7646
    %v7988 = vpack.c.bf16 %v7983, %v7652
    %v7989 = vld [vmem:[%s5194 + $0x50] sm:$0xf]
    %v7990 = vld [vmem:[%s5194 + $0x54] sm:$0xf]
    %v7991 = vld [vmem:[%s5194 + $0x58] sm:$0xf]
    %v7992 = vld [vmem:[%s5194 + $0x5c] sm:$0xf]
    %v7997 = vunpack.c.l.b16 %v7989
    %v7998 = vunpack.c.l.b16 %v7990
    %v7999 = vunpack.c.l.b16 %v7991
    %v8000 = vunpack.c.l.b16 %v7992
    %v8001 = vpack.c.b16 %v7998, %v7997
    %v8002 = vpack.c.b16 %v8000, %v7999
    %v8006 = vsel %vm257, %v7985, 0
    %v8009 = vsel %vm257, %v7986, 0
    %v8012 = vsel %vm257, %v7987, 0
    %v8015 = vsel %vm257, %v7988, 0
    %8017 = vmatprep.subr.bf16.mxu0 0
    %8018 = vmatpush1.bf16.msra.mxu0 %v8001
    %8019 = vmatprep.subr.bf16.mxu0 0
    %8020 = vmatpush1.bf16.msra.mxu0 %v8002
    %8021 = vmatprep.subr.bf16.mxu0 0
    %8022 = vmatpush1.bf16.msra.mxu0 0
    %8023 = vmatprep.subr.bf16.mxu0 0
    %8024 = vmatpush1.bf16.msra.mxu0 0
    %8025 = vmatprep.subr.bf16.mxu0 0
    %8026 = vmatpush1.bf16.msra.mxu0 0
    %8027 = vmatprep.subr.bf16.mxu0 0
    %8028 = vmatpush1.bf16.msra.mxu0 0
    %8029 = vmatprep.subr.bf16.mxu0 0
    %8030 = vmatpush1.bf16.msra.mxu0 0
    %8031 = vmatprep.subr.bf16.mxu0 0
    %8032 = vmatpush1.bf16.msra.mxu0 0
    %8033 = vmatprep.subr.bf16.mxu0 0
    %8034 = vmatpush1.bf16.msra.mxu0 0
    %8035 = vmatprep.subr.bf16.mxu0 0
    %8036 = vmatpush1.bf16.msra.mxu0 0
    %8037 = vmatprep.subr.bf16.mxu0 0
    %8038 = vmatpush1.bf16.msra.mxu0 0
    %8039 = vmatprep.subr.bf16.mxu0 0
    %8040 = vmatpush1.bf16.msra.mxu0 0
    %8041 = vmatprep.subr.bf16.mxu0 0
    %8042 = vmatpush1.bf16.msra.mxu0 0
    %8043 = vmatprep.subr.bf16.mxu0 0
    %8044 = vmatpush1.bf16.msra.mxu0 0
    %8045 = vmatprep.subr.bf16.mxu0 0
    %8046 = vmatpush1.bf16.msra.mxu0 0
    %8047 = vmatprep.subr.bf16.mxu0 0
    %8048 = vmatpush1.bf16.msra.mxu0 0
    %8049 = vmatprep.mubr.bf16.mxu0 0
    %8050 = vmatmul.mubr.bf16.gmra.mrb[0].mxu0 %v8006
    %v8051 = vpop.f32.mrb[0].mxu0
    %v8052 = vadd.f32 0.0, %v8051
    %v8053 = vpop.f32.mrb[0].mxu0
    %v8054 = vpop.f32.mrb[0].mxu0
    %v8055 = vadd.f32 0.0, %v8054
    %v8056 = vpop.f32.mrb[0].mxu0
    %8057 = vmatprep.mubr.bf16.mxu0 0
    %8058 = vmatmul.mubr.bf16.gmra.mrb[0].mxu0 %v8009
    %v8059 = vpop.f32.mrb[0].mxu0
    %v8060 = vadd.f32 0.0, %v8059
    %v8061 = vpop.f32.mrb[0].mxu0
    %v8062 = vpop.f32.mrb[0].mxu0
    %v8063 = vadd.f32 0.0, %v8062
    %v8064 = vpop.f32.mrb[0].mxu0
    %8065 = vmatprep.mubr.bf16.mxu0 0
    %8066 = vmatmul.mubr.bf16.gmra.mrb[0].mxu0 %v8012
    %v8067 = vpop.f32.mrb[0].mxu0
    %v8068 = vadd.f32 0.0, %v8067
    %v8069 = vpop.f32.mrb[0].mxu0
    %v8070 = vpop.f32.mrb[0].mxu0
    %v8071 = vadd.f32 0.0, %v8070
    %v8072 = vpop.f32.mrb[0].mxu0
    %8073 = vmatprep.mubr.bf16.mxu0 0
    %8074 = vmatmul.mubr.bf16.gmra.mrb[0].mxu0 %v8015
    %v8075 = vpop.f32.mrb[0].mxu0
    %v8076 = vadd.f32 0.0, %v8075
    %v8077 = vpop.f32.mrb[0].mxu0
    %v8078 = vpop.f32.mrb[0].mxu0
    %v8079 = vadd.f32 0.0, %v8078
    %v8080 = vpop.f32.mrb[0].mxu0
    %8081 = vdwg.mxu0
    %v8082 = vadd.f32 %v7973, %v8052
    %v8083 = vadd.f32 %v7974, %v8055
    %v8084 = vadd.f32 %v7975, %v8060
    %v8085 = vadd.f32 %v7976, %v8063
    %v8086 = vadd.f32 %v7977, %v8068
    %v8087 = vadd.f32 %v7978, %v8071
    %v8088 = vadd.f32 %v7979, %v8076
    %v8089 = vadd.f32 %v7980, %v8079
    %v8090 = vpack.c.bf16 %v4127, %v7387
    %v8091 = vld [vmem:[%s5194 + $0x60] sm:$0xf]
    %v8092 = vld [vmem:[%s5194 + $0x64] sm:$0xf]
    %v8093 = vld [vmem:[%s5194 + $0x68] sm:$0xf]
    %v8094 = vld [vmem:[%s5194 + $0x6c] sm:$0xf]
    %v8099 = vunpack.c.l.b16 %v8091
    %v8100 = vunpack.c.l.b16 %v8092
    %v8101 = vunpack.c.l.b16 %v8093
    %v8102 = vunpack.c.l.b16 %v8094
    %v8103 = vpack.c.b16 %v8100, %v8099
    %v8104 = vpack.c.b16 %v8102, %v8101
    %v8108 = vsel %vm257, %v8090, 0
    %8110 = vmatprep.subr.bf16.mxu0 0
    %8111 = vmatpush1.bf16.msra.mxu0 %v8103
    %8112 = vmatprep.subr.bf16.mxu0 0
    %8113 = vmatpush1.bf16.msra.mxu0 %v8104
    %8114 = vmatprep.subr.bf16.mxu0 0
    %8115 = vmatpush1.bf16.msra.mxu0 0
    %8116 = vmatprep.subr.bf16.mxu0 0
    %8117 = vmatpush1.bf16.msra.mxu0 0
    %8118 = vmatprep.subr.bf16.mxu0 0
    %8119 = vmatpush1.bf16.msra.mxu0 0
    %8120 = vmatprep.subr.bf16.mxu0 0
    %8121 = vmatpush1.bf16.msra.mxu0 0
    %8122 = vmatprep.subr.bf16.mxu0 0
    %8123 = vmatpush1.bf16.msra.mxu0 0
    %8124 = vmatprep.subr.bf16.mxu0 0
    %8125 = vmatpush1.bf16.msra.mxu0 0
    %8126 = vmatprep.subr.bf16.mxu0 0
    %8127 = vmatpush1.bf16.msra.mxu0 0
    %8128 = vmatprep.subr.bf16.mxu0 0
    %8129 = vmatpush1.bf16.msra.mxu0 0
    %8130 = vmatprep.subr.bf16.mxu0 0
    %8131 = vmatpush1.bf16.msra.mxu0 0
    %8132 = vmatprep.subr.bf16.mxu0 0
    %8133 = vmatpush1.bf16.msra.mxu0 0
    %8134 = vmatprep.subr.bf16.mxu0 0
    %8135 = vmatpush1.bf16.msra.mxu0 0
    %8136 = vmatprep.subr.bf16.mxu0 0
    %8137 = vmatpush1.bf16.msra.mxu0 0
    %8138 = vmatprep.subr.bf16.mxu0 0
    %8139 = vmatpush1.bf16.msra.mxu0 0
    %8140 = vmatprep.subr.bf16.mxu0 0
    %8141 = vmatpush1.bf16.msra.mxu0 0
    %8142 = vmatprep.mubr.bf16.mxu0 0
    %8143 = vmatmul.mubr.bf16.gmra.mrb[0].mxu0 %v7559
    %v8144 = vpop.f32.mrb[0].mxu0
    %v8145 = vadd.f32 0.0, %v8144
    %v8146 = vpop.f32.mrb[0].mxu0
    %v8147 = vpop.f32.mrb[0].mxu0
    %v8148 = vadd.f32 0.0, %v8147
    %v8149 = vpop.f32.mrb[0].mxu0
    %8150 = vmatprep.mubr.bf16.mxu0 0
    %8151 = vmatmul.mubr.bf16.gmra.mrb[0].mxu0 %v7562
    %v8152 = vpop.f32.mrb[0].mxu0
    %v8153 = vadd.f32 0.0, %v8152
    %v8154 = vpop.f32.mrb[0].mxu0
    %v8155 = vpop.f32.mrb[0].mxu0
    %v8156 = vadd.f32 0.0, %v8155
    %v8157 = vpop.f32.mrb[0].mxu0
    %8158 = vmatprep.mubr.bf16.mxu0 0
    %8159 = vmatmul.mubr.bf16.gmra.mrb[0].mxu0 %v7565
    %v8160 = vpop.f32.mrb[0].mxu0
    %v8161 = vadd.f32 0.0, %v8160
    %v8162 = vpop.f32.mrb[0].mxu0
    %v8163 = vpop.f32.mrb[0].mxu0
    %v8164 = vadd.f32 0.0, %v8163
    %v8165 = vpop.f32.mrb[0].mxu0
    %8166 = vmatprep.mubr.bf16.mxu0 0
    %8167 = vmatmul.mubr.bf16.gmra.mrb[0].mxu0 %v8108
    %v8168 = vpop.f32.mrb[0].mxu0
    %v8169 = vadd.f32 0.0, %v8168
    %v8170 = vpop.f32.mrb[0].mxu0
    %v8171 = vpop.f32.mrb[0].mxu0
    %v8172 = vadd.f32 0.0, %v8171
    %v8173 = vpop.f32.mrb[0].mxu0
    %8174 = vdwg.mxu0
    %v8175 = vadd.f32 %v8082, %v8145
    %v8176 = vadd.f32 %v8083, %v8148
    %v8177 = vadd.f32 %v8084, %v8153
    %v8178 = vadd.f32 %v8085, %v8156
    %v8179 = vadd.f32 %v8086, %v8161
    %v8180 = vadd.f32 %v8087, %v8164
    %v8181 = vadd.f32 %v8088, %v8169
    %v8182 = vadd.f32 %v8089, %v8172
    %v8183 = vpack.c.bf16 %v4172, %v7874
    %v8184 = vld [vmem:[%s5194 + $0x70] sm:$0xf]
    %v8185 = vld [vmem:[%s5194 + $0x74] sm:$0xf]
    %v8186 = vld [vmem:[%s5194 + $0x78] sm:$0xf]
    %v8187 = vld [vmem:[%s5194 + $0x7c] sm:$0xf]
    %v8192 = vunpack.c.l.b16 %v8184
    %v8193 = vunpack.c.l.b16 %v8185
    %v8194 = vunpack.c.l.b16 %v8186
    %v8195 = vunpack.c.l.b16 %v8187
    %v8196 = vpack.c.b16 %v8193, %v8192
    %v8197 = vpack.c.b16 %v8195, %v8194
    %v8201 = vsel %vm257, %v8183, 0
    %8203 = vmatprep.subr.bf16.mxu0 0
    %8204 = vmatpush1.bf16.msra.mxu0 %v8196
    %8205 = vmatprep.subr.bf16.mxu0 0
    %8206 = vmatpush1.bf16.msra.mxu0 %v8197
    %8207 = vmatprep.subr.bf16.mxu0 0
    %8208 = vmatpush1.bf16.msra.mxu0 0
    %8209 = vmatprep.subr.bf16.mxu0 0
    %8210 = vmatpush1.bf16.msra.mxu0 0
    %8211 = vmatprep.subr.bf16.mxu0 0
    %8212 = vmatpush1.bf16.msra.mxu0 0
    %8213 = vmatprep.subr.bf16.mxu0 0
    %8214 = vmatpush1.bf16.msra.mxu0 0
    %8215 = vmatprep.subr.bf16.mxu0 0
    %8216 = vmatpush1.bf16.msra.mxu0 0
    %8217 = vmatprep.subr.bf16.mxu0 0
    %8218 = vmatpush1.bf16.msra.mxu0 0
    %8219 = vmatprep.subr.bf16.mxu0 0
    %8220 = vmatpush1.bf16.msra.mxu0 0
    %8221 = vmatprep.subr.bf16.mxu0 0
    %8222 = vmatpush1.bf16.msra.mxu0 0
    %8223 = vmatprep.subr.bf16.mxu0 0
    %8224 = vmatpush1.bf16.msra.mxu0 0
    %8225 = vmatprep.subr.bf16.mxu0 0
    %8226 = vmatpush1.bf16.msra.mxu0 0
    %8227 = vmatprep.subr.bf16.mxu0 0
    %8228 = vmatpush1.bf16.msra.mxu0 0
    %8229 = vmatprep.subr.bf16.mxu0 0
    %8230 = vmatpush1.bf16.msra.mxu0 0
    %8231 = vmatprep.subr.bf16.mxu0 0
    %8232 = vmatpush1.bf16.msra.mxu0 0
    %8233 = vmatprep.subr.bf16.mxu0 0
    %8234 = vmatpush1.bf16.msra.mxu0 0
    %8235 = vmatprep.mubr.bf16.mxu0 0
    %8236 = vmatmul.mubr.bf16.gmra.mrb[0].mxu0 %v7470
    %v8237 = vpop.f32.mrb[0].mxu0
    %v8238 = vadd.f32 0.0, %v8237
    %v8239 = vpop.f32.mrb[0].mxu0
    %v8240 = vpop.f32.mrb[0].mxu0
    %v8241 = vadd.f32 0.0, %v8240
    %v8242 = vpop.f32.mrb[0].mxu0
    %8243 = vmatprep.mubr.bf16.mxu0 0
    %8244 = vmatmul.mubr.bf16.gmra.mrb[0].mxu0 %v7473
    %v8245 = vpop.f32.mrb[0].mxu0
    %v8246 = vadd.f32 0.0, %v8245
    %v8247 = vpop.f32.mrb[0].mxu0
    %v8248 = vpop.f32.mrb[0].mxu0
    %v8249 = vadd.f32 0.0, %v8248
    %v8250 = vpop.f32.mrb[0].mxu0
    %8251 = vmatprep.mubr.bf16.mxu0 0
    %8252 = vmatmul.mubr.bf16.gmra.mrb[0].mxu0 %v7476
    %v8253 = vpop.f32.mrb[0].mxu0
    %v8254 = vadd.f32 0.0, %v8253
    %v8255 = vpop.f32.mrb[0].mxu0
    %v8256 = vpop.f32.mrb[0].mxu0
    %v8257 = vadd.f32 0.0, %v8256
    %v8258 = vpop.f32.mrb[0].mxu0
    %8259 = vmatprep.mubr.bf16.mxu0 0
    %8260 = vmatmul.mubr.bf16.gmra.mrb[0].mxu0 %v8201
    %v8261 = vpop.f32.mrb[0].mxu0
    %v8262 = vadd.f32 0.0, %v8261
    %v8263 = vpop.f32.mrb[0].mxu0
    %v8264 = vpop.f32.mrb[0].mxu0
    %v8265 = vadd.f32 0.0, %v8264
    %v8266 = vpop.f32.mrb[0].mxu0
    %8267 = vdwg.mxu0
    %v8268 = vadd.f32 %v8175, %v8238
    %v8269 = vadd.f32 %v8176, %v8241
    %v8270 = vadd.f32 %v8177, %v8246
    %v8271 = vadd.f32 %v8178, %v8249
    %v8272 = vadd.f32 %v8179, %v8254
    %v8273 = vadd.f32 %v8180, %v8257
    %v8274 = vadd.f32 %v8181, %v8262
    %v8275 = vadd.f32 %v8182, %v8265
    %v8276 = vpack.c.bf16 %v4391, %v7983
    %v8277 = vld [vmem:[%s5194 + $0x80] sm:$0xf]
    %v8278 = vld [vmem:[%s5194 + $0x84] sm:$0xf]
    %v8279 = vld [vmem:[%s5194 + $0x88] sm:$0xf]
    %v8280 = vld [vmem:[%s5194 + $0x8c] sm:$0xf]
    %v8285 = vunpack.c.l.b16 %v8277
    %v8286 = vunpack.c.l.b16 %v8278
    %v8287 = vunpack.c.l.b16 %v8279
    %v8288 = vunpack.c.l.b16 %v8280
    %v8289 = vpack.c.b16 %v8286, %v8285
    %v8290 = vpack.c.b16 %v8288, %v8287
    %v8294 = vsel %vm257, %v8276, 0
    %8296 = vmatprep.subr.bf16.mxu0 0
    %8297 = vmatpush1.bf16.msra.mxu0 %v8289
    %8298 = vmatprep.subr.bf16.mxu0 0
    %8299 = vmatpush1.bf16.msra.mxu0 %v8290
    %8300 = vmatprep.subr.bf16.mxu0 0
    %8301 = vmatpush1.bf16.msra.mxu0 0
    %8302 = vmatprep.subr.bf16.mxu0 0
    %8303 = vmatpush1.bf16.msra.mxu0 0
    %8304 = vmatprep.subr.bf16.mxu0 0
    %8305 = vmatpush1.bf16.msra.mxu0 0
    %8306 = vmatprep.subr.bf16.mxu0 0
    %8307 = vmatpush1.bf16.msra.mxu0 0
    %8308 = vmatprep.subr.bf16.mxu0 0
    %8309 = vmatpush1.bf16.msra.mxu0 0
    %8310 = vmatprep.subr.bf16.mxu0 0
    %8311 = vmatpush1.bf16.msra.mxu0 0
    %8312 = vmatprep.subr.bf16.mxu0 0
    %8313 = vmatpush1.bf16.msra.mxu0 0
    %8314 = vmatprep.subr.bf16.mxu0 0
    %8315 = vmatpush1.bf16.msra.mxu0 0
    %8316 = vmatprep.subr.bf16.mxu0 0
    %8317 = vmatpush1.bf16.msra.mxu0 0
    %8318 = vmatprep.subr.bf16.mxu0 0
    %8319 = vmatpush1.bf16.msra.mxu0 0
    %8320 = vmatprep.subr.bf16.mxu0 0
    %8321 = vmatpush1.bf16.msra.mxu0 0
    %8322 = vmatprep.subr.bf16.mxu0 0
    %8323 = vmatpush1.bf16.msra.mxu0 0
    %8324 = vmatprep.subr.bf16.mxu0 0
    %8325 = vmatpush1.bf16.msra.mxu0 0
    %8326 = vmatprep.subr.bf16.mxu0 0
    %8327 = vmatpush1.bf16.msra.mxu0 0
    %8328 = vmatprep.mubr.bf16.mxu0 0
    %8329 = vmatmul.mubr.bf16.gmra.mrb[0].mxu0 %v7684
    %v8330 = vpop.f32.mrb[0].mxu0
    %v8331 = vadd.f32 0.0, %v8330
    %v8332 = vpop.f32.mrb[0].mxu0
    %v8333 = vpop.f32.mrb[0].mxu0
    %v8334 = vadd.f32 0.0, %v8333
    %v8335 = vpop.f32.mrb[0].mxu0
    %8336 = vmatprep.mubr.bf16.mxu0 0
    %8337 = vmatmul.mubr.bf16.gmra.mrb[0].mxu0 %v7687
    %v8338 = vpop.f32.mrb[0].mxu0
    %v8339 = vadd.f32 0.0, %v8338
    %v8340 = vpop.f32.mrb[0].mxu0
    %v8341 = vpop.f32.mrb[0].mxu0
    %v8342 = vadd.f32 0.0, %v8341
    %v8343 = vpop.f32.mrb[0].mxu0
    %8344 = vmatprep.mubr.bf16.mxu0 0
    %8345 = vmatmul.mubr.bf16.gmra.mrb[0].mxu0 %v7690
    %v8346 = vpop.f32.mrb[0].mxu0
    %v8347 = vadd.f32 0.0, %v8346
    %v8348 = vpop.f32.mrb[0].mxu0
    %v8349 = vpop.f32.mrb[0].mxu0
    %v8350 = vadd.f32 0.0, %v8349
    %v8351 = vpop.f32.mrb[0].mxu0
    %8352 = vmatprep.mubr.bf16.mxu0 0
    %8353 = vmatmul.mubr.bf16.gmra.mrb[0].mxu0 %v8294
    %v8354 = vpop.f32.mrb[0].mxu0
    %v8355 = vadd.f32 0.0, %v8354
    %v8356 = vpop.f32.mrb[0].mxu0
    %v8357 = vpop.f32.mrb[0].mxu0
    %v8358 = vadd.f32 0.0, %v8357
    %v8359 = vpop.f32.mrb[0].mxu0
    %8360 = vdwg.mxu0
    %v8361 = vadd.f32 %v8268, %v8331
    %v8362 = vadd.f32 %v8269, %v8334
    %v8363 = vadd.f32 %v8270, %v8339
    %v8364 = vadd.f32 %v8271, %v8342
    %v8365 = vadd.f32 %v8272, %v8347
    %v8366 = vadd.f32 %v8273, %v8350
    %v8367 = vadd.f32 %v8274, %v8355
    %v8368 = vadd.f32 %v8275, %v8358
    %v8369 = vadd.f32 %v8361, %v6167
    %v8370 = vadd.f32 %v8362, %v6167
    %v8371 = vadd.f32 %v8363, %v6167
    %v8372 = vadd.f32 %v8364, %v6167
    %v8373 = vadd.f32 %v8365, %v6167
    %v8374 = vadd.f32 %v8366, %v6167
    %v8375 = vadd.f32 %v8367, %v6167
    %v8376 = vadd.f32 %v8368, %v6167
    %v8377 = vsel %vm257, %v8369, 0.0
    %v8378 = vsel %vm257, %v8370, 0.0
    %v8379 = vadd.f32 %v8377, %v8378
    %v8380 = vsel %vm257, %v8371, 0.0
    %v8381 = vadd.f32 %v8379, %v8380
    %v8382 = vsel %vm257, %v8372, 0.0
    %v8383 = vadd.f32 %v8381, %v8382
    %v8384 = vsel %vm257, %v8373, 0.0
    %v8385 = vadd.f32 %v8383, %v8384
    %v8386 = vsel %vm257, %v8374, 0.0
    %v8387 = vadd.f32 %v8385, %v8386
    %v8388 = vsel %vm257, %v8375, 0.0
    %v8389 = vadd.f32 %v8387, %v8388
    %v8390 = vsel %vm257, %v8376, 0.0
    %v8391 = vadd.f32 %v8389, %v8390
    %v8392 = vrot.slane %v8391, 4
    %v8393 = vadd.f32 %v8391, %v8392
    %v8394 = vrot.slane %v8393, 2
    %v8395 = vadd.f32 %v8393, %v8394
    %v8396 = vrot.slane %v8395, 1
    %v8397 = vadd.f32 %v8395, %v8396
    %v8398 = vmul.f32 %v8397, %v6197
    %8400 = vrot.lane.b32.xlu0 %v8398, 1
    %v8401 = vpop.permute.xlu0 %8400
    %v8403 = vsel %vm6203, 0.0, %v8401
    %v8404 = vsel %vm6205, %v8403, 0.0
    %v8406 = vsel %vm6207, %v8404, 0
    %8408 = vmatprep.subr.mxu0 0.0
    %8409 = vmatpush1.msra.mxu0 %v4086
    %8410 = vmatprep.subr.mxu0 0.0
    %8411 = vmatpush1.msra.mxu0 %v4087
    %8412 = vmatprep.subr.mxu0 0.0
    %8413 = vmatpush1.msra.mxu0 %v4088
    %8414 = vmatprep.subr.mxu0 0.0
    %8415 = vmatpush1.msra.mxu0 %v4089
    %8416 = vmatprep.subr.mxu0 0.0
    %8417 = vmatpush1.msra.mxu0 %v6213
    %8418 = vmatprep.subr.mxu0 0.0
    %8419 = vmatpush1.msra.mxu0 0.0
    %8420 = vmatprep.subr.mxu0 0.0
    %8421 = vmatpush1.msra.mxu0 0.0
    %8422 = vmatprep.subr.mxu0 0.0
    %8423 = vmatpush1.msra.mxu0 0.0
    %8424 = vmatprep.subr.mxu0 0.0
    %8425 = vmatpush1.msra.mxu0 0.0
    %8426 = vmatprep.subr.mxu0 0.0
    %8427 = vmatpush1.msra.mxu0 0.0
    %8428 = vmatprep.subr.mxu0 0.0
    %8429 = vmatpush1.msra.mxu0 0.0
    %8430 = vmatprep.subr.mxu0 0.0
    %8431 = vmatpush1.msra.mxu0 0.0
    %8432 = vmatprep.subr.mxu0 0.0
    %8433 = vmatpush1.msra.mxu0 0.0
    %8434 = vmatprep.subr.mxu0 0.0
    %8435 = vmatpush1.msra.mxu0 0.0
    %8436 = vmatprep.subr.mxu0 0.0
    %8437 = vmatpush1.msra.mxu0 0.0
    %8438 = vmatprep.subr.mxu0 0.0
    %8439 = vmatpush1.msra.mxu0 0.0
    %8440 = vmatprep.subr.mxu0 0.0
    %8441 = vmatpush1.msra.mxu0 0.0
    %8442 = vmatprep.subr.mxu0 0.0
    %8443 = vmatpush1.msra.mxu0 0.0
    %8444 = vmatprep.subr.mxu0 0.0
    %8445 = vmatpush1.msra.mxu0 0.0
    %8446 = vmatprep.subr.mxu0 0.0
    %8447 = vmatpush1.msra.mxu0 0.0
    %8448 = vmatprep.subr.mxu0 0.0
    %8449 = vmatpush1.msra.mxu0 0.0
    %8450 = vmatprep.subr.mxu0 0.0
    %8451 = vmatpush1.msra.mxu0 0.0
    %8452 = vmatprep.subr.mxu0 0.0
    %8453 = vmatpush1.msra.mxu0 0.0
    %8454 = vmatprep.subr.mxu0 0.0
    %8455 = vmatpush1.msra.mxu0 0.0
    %8456 = vmatprep.subr.mxu0 0.0
    %8457 = vmatpush1.msra.mxu0 0.0
    %8458 = vmatprep.subr.mxu0 0.0
    %8459 = vmatpush1.msra.mxu0 0.0
    %8460 = vmatprep.subr.mxu0 0.0
    %8461 = vmatpush1.msra.mxu0 0.0
    %8462 = vmatprep.subr.mxu0 0.0
    %8463 = vmatpush1.msra.mxu0 0.0
    %8464 = vmatprep.subr.mxu0 0.0
    %8465 = vmatpush1.msra.mxu0 0.0
    %8466 = vmatprep.subr.mxu0 0.0
    %8467 = vmatpush1.msra.mxu0 0.0
    %8468 = vmatprep.subr.mxu0 0.0
    %8469 = vmatpush1.msra.mxu0 0.0
    %8470 = vmatprep.subr.mxu0 0.0
    %8471 = vmatpush1.msra.mxu0 0.0
    %8472 = vmatprep.mubr.f32.mxu0 0.0
    %8473 = vmatmul.mubr.f32.gmra.mrb[0].mxu0 %v8406
    %v8474 = vpop.f32.mrb[0].mxu0
    %v8475 = vadd.f32 0.0, %v8474
    %v8476 = vpop.f32.mrb[0].mxu0
    %8477 = vdwg.mxu0
    %v8478 = vxor.u32 %v8475, 2147483648
    %v8479 = vmul.f32 %v8478, 1.442695
    %v8480 = vpow.pop %v8479
    %v8481 = vadd.f32 %v8480, 1.0
    %v8482 = vrcp.pop %v8481
    %v8483 = vmul.f32 1.0, %v8482
    %v8484 = vlaneseq
    %v8485 = vshrl.u32 %v8484, 7
    %v8486 = vsub.s32 0, %v8485
    %v8487 = vrot.slane %v8483, %v8486
    %v8488 = vmul.f32 %v8369, %v8487
    %v8489 = vmul.f32 %v8370, %v8487
    %v8490 = vmul.f32 %v8371, %v8487
    %v8491 = vmul.f32 %v8372, %v8487
    %v8492 = vmul.f32 %v8373, %v8487
    %v8493 = vmul.f32 %v8374, %v8487
    %v8494 = vmul.f32 %v8375, %v8487
    %v8495 = vmul.f32 %v8376, %v8487
    %v8496 = vadd.f32 %v8488, %v4078
    %v8497 = vadd.f32 %v8489, %v4079
    %v8498 = vadd.f32 %v8490, %v4080
    %v8499 = vadd.f32 %v8491, %v4081
    %v8500 = vadd.f32 %v8492, %v4082
    %v8501 = vadd.f32 %v8493, %v4083
    %v8502 = vadd.f32 %v8494, %v4084
    %v8503 = vadd.f32 %v8495, %v4085
    %s8504 = scalar_lea.vmem [#allocation23], 64
    %8505 = vst.msk [vmem:[%s8504] sm:$0xff] %vm257, %v8496
    %8506 = vst.msk [vmem:[%s8504 + $0x8] sm:$0xff] %vm257, %v8497
    %8507 = vst.msk [vmem:[%s8504 + $0x10] sm:$0xff] %vm257, %v8498
    %8508 = vst.msk [vmem:[%s8504 + $0x18] sm:$0xff] %vm257, %v8499
    %8509 = vst.msk [vmem:[%s8504 + $0x20] sm:$0xff] %vm257, %v8500
    %8510 = vst.msk [vmem:[%s8504 + $0x28] sm:$0xff] %vm257, %v8501
    %8511 = vst.msk [vmem:[%s8504 + $0x30] sm:$0xff] %vm257, %v8502
    %8512 = vst.msk [vmem:[%s8504 + $0x38] sm:$0xff] %vm257, %v8503
    // Predicated region
    $region98: #{query_transformer_block.1} parent=1 // pred_check
      _
    $region99: #{query_transformer_block.1} parent=1 // pred_check_branch
      %8514 = sbr.rel (0) target = $region101
    $region100: #{query_transformer_block.1} parent=1 // pred_region
      %s8516 = ssub.s32 256, 256
      %8517 = vsyncadd [#allocation4], %s8516
      %s8518 = sshll.u32 [#allocation22], 4
      %s8519 = int_to_ptr.vmem [resolvable:$true] %s8518
      %8524 = dma.vmem_to_hbm [thread:$0]  %s8519, 256, %s12, [#allocation4], 128, 128, 8
    $region101: #{query_transformer_block.1} parent=1 // pred_fallthru
      _
    // Predicated region
    $region102: #{query_transformer_block.1} parent=1 // pred_check
      _
    $region103: #{query_transformer_block.1} parent=1 // pred_check_branch
      %8526 = sbr.rel (0) target = $region105
    $region104: #{query_transformer_block.1} parent=1 // pred_region
      %s8528 = ssub.s32 2048, 2048
      %8529 = vsyncadd [#allocation24], %s8528
      %s8530 = sshll.u32 [#allocation23], 4
      %s8531 = int_to_ptr.vmem [resolvable:$true] %s8530
      %8536 = dma.vmem_to_hbm [thread:$0]  %s8531, 2048, %s13, [#allocation24], 128, 128, 8
    $region105: #{query_transformer_block.1} parent=1 // pred_fallthru
      _
    // Predicated region
    $region106: #{query_transformer_block.1} parent=1 // pred_check
      _
    $region107: #{query_transformer_block.1} parent=1 // pred_check_branch
      %8538 = sbr.rel (0) target = $region109
    $region108: #{query_transformer_block.1} parent=1 // pred_region
      %s8540 = ssub.s32 512, 512
      %8541 = vsyncadd [#allocation24], %s8540
      %s8542 = sshll.u32 [#allocation25], 4
      %s8543 = int_to_ptr.vmem [resolvable:$true] %s8542
      %8548 = dma.vmem_to_hbm [thread:$0]  %s8543, 512, %s14, [#allocation24], 128, 128, 8
    $region109: #{query_transformer_block.1} parent=1 // pred_fallthru
      _
    // Predicated region
    $region110: #{query_transformer_block.1} parent=1 // pred_check
      _
    $region111: #{query_transformer_block.1} parent=1 // pred_check_branch
      %8550 = sbr.rel (0) target = $region113
    $region112: #{query_transformer_block.1} parent=1 // pred_region
      %s8552 = ssub.s32 512, 512
      %8553 = vsyncadd [#allocation27], %s8552
      %s8554 = sshll.u32 [#allocation26], 4
      %s8555 = int_to_ptr.vmem [resolvable:$true] %s8554
      %8560 = dma.vmem_to_hbm [thread:$0]  %s8555, 512, %s15, [#allocation27], 128, 128, 8
    $region113: #{query_transformer_block.1} parent=1 // pred_fallthru
      _
    // Predicated region
    $region114: #{query_transformer_block.1} parent=1 // pred_check
      _
    $region115: #{query_transformer_block.1} parent=1 // pred_check_branch
      %8562 = sbr.rel (0) target = $region117
    $region116: #{query_transformer_block.1} parent=1 // pred_region
      %8563 = dma.done [#allocation4], 256
    $region117: #{query_transformer_block.1} parent=1 // pred_fallthru
      _
    // Predicated region
    $region118: #{query_transformer_block.1} parent=1 // pred_check
      _
    $region119: #{query_transformer_block.1} parent=1 // pred_check_branch
      %8565 = sbr.rel (0) target = $region121
    $region120: #{query_transformer_block.1} parent=1 // pred_region
      %8566 = dma.done [#allocation24], 2048
    $region121: #{query_transformer_block.1} parent=1 // pred_fallthru
      _
    // Predicated region
    $region122: #{query_transformer_block.1} parent=1 // pred_check
      _
    $region123: #{query_transformer_block.1} parent=1 // pred_check_branch
      %8568 = sbr.rel (0) target = $region125
    $region124: #{query_transformer_block.1} parent=1 // pred_region
      %8569 = dma.done [#allocation24], 512
    $region125: #{query_transformer_block.1} parent=1 // pred_fallthru
      _
    // Predicated region
    $region126: #{query_transformer_block.1} parent=1 // pred_check
      _
    $region127: #{query_transformer_block.1} parent=1 // pred_check_branch
      %8571 = sbr.rel (0) target = $region129
    $region128: #{query_transformer_block.1} parent=1 // pred_region
      %8572 = dma.done [#allocation27], 512
    $region129: #{query_transformer_block.1} parent=1 // pred_fallthru
      _
    %8573 = vsyncpa [#allocation3], 1
    %8574 = vsyncpa [#allocation6], 1
    %8575 = vsyncpa [#allocation9], 1
    %8576 = vsyncpa [#allocation12], 1
    %8577 = vsyncpa [#allocation15], 1
    %8578 = vsyncpa [#allocation18], 1
    %8579 = vsyncpa [#allocation21], 1
    %8580 = vsyncpa [#allocation4], 1
    %8581 = vsyncpa [#allocation24], 1
    %8582 = vsyncpa [#allocation27], 1

</llo_original>
